<compile_context>
chip_gen: v5e
topology: v5e:2x2
jax: 0.10.0
libtpu: 0.0.40
codegen_flags: <defaults>
</compile_context>

<pallas_src>
import numpy as np
import jax
import jax.numpy as jnp
from jax.experimental import pallas as pl
from jax.experimental.pallas import tpu as pltpu

GN_EPS = 1e-5          # PyTorch GroupNorm default eps
NUM_GROUPS = 8         # GroupNorm(8, C)


def _round_up(x, m):
    return (x + m - 1) // m * m


def _channel_pack(dtype):
    # sublane packing of the compute dtype: 8 rows for f32, 16 for bf16
    return max(8, 32 // jnp.dtype(dtype).itemsize)


def _frame_geom(H, W):
    S = W + 2                          # frame row length (1 left + 1 right pad col)
    HS = H * S                         # flattened interior length (incl. junk cols)
    Mo = _round_up(HS, 128)            # lane-padded interior length
    LEAD = _round_up(S + 1, 128)       # lane-aligned offset of interior pixel (0,0)
    Rf = _round_up(LEAD + Mo + S + 1, 128)   # total frame length (covers all taps)
    return S, HS, Mo, LEAD, Rf


# ---------------------------------------------------------------------------
# Frame <-> NCHW glue (done once per chain of residual blocks)
# ---------------------------------------------------------------------------
def frame_from_nchw(x, Cf, compute_dtype):
    """x: (N, C, H, W) -> zero-padded frame (N, Cf, Rf) in compute_dtype."""
    N, C, H, W = x.shape
    S, HS, Mo, LEAD, Rf = _frame_geom(H, W)
    xp = jnp.pad(x, ((0, 0), (0, Cf - C), (1, 1), (1, 1)))       # (N, Cf, H+2, S)
    xf = xp.reshape(N, Cf, (H + 2) * S)
    lead_pad = LEAD - (S + 1)
    xf = jnp.pad(xf, ((0, 0), (0, 0), (lead_pad, Rf - lead_pad - (H + 2) * S)))
    return xf.astype(compute_dtype)


def nchw_from_frame(yf, H, W):
    """frame (N, C, Rf) -> dense NCHW (N, C, H, W) float32."""
    N, C, _ = yf.shape
    S, HS, Mo, LEAD, Rf = _frame_geom(H, W)
    y = yf[:, :, LEAD:LEAD + HS].astype(jnp.float32)
    return y.reshape(N, C, H, S)[:, :, :, :W]


# ---------------------------------------------------------------------------
# Fused ResidualBlock kernel: frame in -> frame out, one grid step per sample.
# ---------------------------------------------------------------------------
def residual_block_frame(xf, params, *, H, W, compute_dtype):
    N, Cf, Rf_in = xf.shape
    S, HS, Mo, LEAD, Rf = _frame_geom(H, W)
    assert Rf_in == Rf, "input frame geometry mismatch"

    w1, b1 = params['w1'], params['b1']
    w2, b2 = params['w2'], params['b2']
    Cout, Cin = w1.shape[0], w1.shape[1]
    assert Cout % NUM_GROUPS == 0
    assert Cf >= Cin and Cf % 8 == 0
    conv_sc = 'wsc' in params
    if not conv_sc:
        assert Cin == Cout and Cf >= Cout

    Cmax = max(Cf, Cout)
    Cg = Cout // NUM_GROUPS
    inv_cnt = 1.0 / float(H * W * Cg)
    # constant flat offset of conv tap (dy, dx) relative to the output position
    offs = tuple(LEAD - (S + 1) + dy * S + dx for dy in range(3) for dx in range(3))

    # --- tiny host-precomputed constants (no per-step integer div/mod in-kernel)
    m = np.arange(Mo, dtype=np.int64)
    mask = jnp.asarray(((m % S) < W) & (m < HS), dtype=jnp.float32).reshape(1, Mo)
    gid = np.arange(Cout) // Cg
    gmat = jnp.asarray((gid[:, None] == gid[None, :]).astype(np.float32))  # (Cout,Cout)

    # --- weights reshaped for the im2col matmul: row index = tap*C + channel
    w1p = jnp.pad(w1, ((0, 0), (0, Cf - Cin), (0, 0), (0, 0)))
    w1r = w1p.transpose(0, 2, 3, 1).reshape(Cout, 9 * Cf).astype(compute_dtype)
    w2r = w2.transpose(0, 2, 3, 1).reshape(Cout, 9 * Cout).astype(compute_dtype)
    b1_2d = b1.reshape(Cout, 1).astype(jnp.float32)
    b2_2d = b2.reshape(Cout, 1).astype(jnp.float32)
    g1_2d = params['g1'].reshape(Cout, 1).astype(jnp.float32)
    be1_2d = params['be1'].reshape(Cout, 1).astype(jnp.float32)
    g2_2d = params['g2'].reshape(Cout, 1).astype(jnp.float32)
    be2_2d = params['be2'].reshape(Cout, 1).astype(jnp.float32)
    if conv_sc:
        wscr = jnp.pad(params['wsc'].reshape(Cout, Cin),
                       ((0, 0), (0, Cf - Cin))).astype(compute_dtype)
        bsc_2d = params['bsc'].reshape(Cout, 1).astype(jnp.float32)

    # --- VMEM budget guard for the fused per-sample path
    itemsize = jnp.dtype(compute_dtype).itemsize
    vmem_est = (2 * (Cf + Cout) * Rf * itemsize                 # in/out blocks (2x buf)
                + (9 * Cmax * Mo + Cout * Rf) * itemsize        # scratch
                + 2 * 9 * (Cf + Cout) * Cout * itemsize         # weights
                + 8 * Cout * Mo * 4)                            # f32 intermediates
    assert vmem_est < 12 * 1024 * 1024, (
        "per-sample working set too large for the fused VMEM-resident path")
    # TODO(synk): spatially-tiled fallback (manual DMA double buffer) for large images.

    def kernel(*refs):
        (x_ref, w1_ref, b1_ref, g1_ref, be1_ref,
         w2_ref, b2_ref, g2_ref, be2_ref, gmat_ref, mask_ref) = refs[:11]
        if conv_sc:
            wsc_ref, bsc_ref = refs[11], refs[12]
            out_ref, col_ref, fr2_ref = refs[13:]
        else:
            out_ref, col_ref, fr2_ref = refs[11:]

        msk = mask_ref[...]                      # (1, Mo) f32, broadcast over channels
        gm = gmat_ref[...]                       # (Cout, Cout) group-combine matrix

        def gn_affine(acc, g_ref, be_ref):
            # masked GroupNorm(8) stats straight from the f32 accumulator
            av = acc * msk
            s1 = jnp.sum(av, axis=1, keepdims=True)            # (Cout, 1)
            s2 = jnp.sum(av * av, axis=1, keepdims=True)
            mean = jnp.dot(gm, s1, preferred_element_type=jnp.float32) * inv_cnt
            ex2 = jnp.dot(gm, s2, preferred_element_type=jnp.float32) * inv_cnt
            var = jnp.maximum(ex2 - mean * mean, 0.0)          # cancellation guard
            scale = jax.lax.rsqrt(var + GN_EPS) * g_ref[...]
            shift = be_ref[...] - mean * scale
            return acc * scale + shift

        # ---- conv1: im2col (9*Cf, Mo) staged in VMEM, single K=9*Cf MXU matmul
        xw = x_ref[...]                                        # (Cf, Rf) resident frame
        for t in range(9):
            col_ref[pl.ds(t * Cf, Cf), :] = xw[:, offs[t]:offs[t] + Mo]
        acc1 = jnp.dot(w1_ref[...], col_ref[pl.ds(0, 9 * Cf), :],
                       preferred_element_type=jnp.float32) + b1_ref[...]

        # ---- GroupNorm1 + SiLU, re-framed with a zero halo for conv2
        a1 = gn_affine(acc1, g1_ref, be1_ref)
        a1 = a1 * jax.nn.sigmoid(a1)
        a1 = (a1 * msk).astype(fr2_ref.dtype)                  # zero junk cols / tail
        fr2_ref[...] = jnp.zeros_like(fr2_ref)
        fr2_ref[:, pl.ds(LEAD, Mo)] = a1                       # lane-aligned store

        # ---- conv2: same im2col trick on the freshly built frame
        f2 = fr2_ref[...]
        for t in range(9):
            col_ref[pl.ds(t * Cout, Cout), :] = f2[:, offs[t]:offs[t] + Mo]
        acc2 = jnp.dot(w2_ref[...], col_ref[pl.ds(0, 9 * Cout), :],
                       preferred_element_type=jnp.float32) + b2_ref[...]

        # ---- GroupNorm2 + shortcut + SiLU, written back in frame layout
        h2 = gn_affine(acc2, g2_ref, be2_ref)
        if conv_sc:
            res = xw[:, LEAD:LEAD + Mo]                        # (Cf, Mo)
            sc = jnp.dot(wsc_ref[...], res,
                         preferred_element_type=jnp.float32) + bsc_ref[...]
        else:
            sc = xw[0:Cout, LEAD:LEAD + Mo].astype(jnp.float32)
        z = h2 + sc
        y = (z * jax.nn.sigmoid(z)) * msk                      # valid frame interior

        out_ref[...] = jnp.zeros_like(out_ref)                 # zero halo / tail
        out_ref[:, pl.ds(LEAD, Mo)] = y.astype(out_ref.dtype)  # lane-aligned store

    in_specs = [
        pl.BlockSpec((None, Cf, Rf), lambda n: (n, 0, 0)),     # per-sample frame
        pl.BlockSpec((Cout, 9 * Cf), lambda n: (0, 0)),        # conv1 weights
        pl.BlockSpec((Cout, 1), lambda n: (0, 0)),             # b1
        pl.BlockSpec((Cout, 1), lambda n: (0, 0)),             # gamma1
        pl.BlockSpec((Cout, 1), lambda n: (0, 0)),             # beta1
        pl.BlockSpec((Cout, 9 * Cout), lambda n: (0, 0)),      # conv2 weights
        pl.BlockSpec((Cout, 1), lambda n: (0, 0)),             # b2
        pl.BlockSpec((Cout, 1), lambda n: (0, 0)),             # gamma2
        pl.BlockSpec((Cout, 1), lambda n: (0, 0)),             # beta2
        pl.BlockSpec((Cout, Cout), lambda n: (0, 0)),          # group-combine matrix
        pl.BlockSpec((1, Mo), lambda n: (0, 0)),               # validity mask
    ]
    args = [xf, w1r, b1_2d, g1_2d, be1_2d, w2r, b2_2d, g2_2d, be2_2d, gmat, mask]
    if conv_sc:
        in_specs += [pl.BlockSpec((Cout, Cf), lambda n: (0, 0)),
                     pl.BlockSpec((Cout, 1), lambda n: (0, 0))]
        args += [wscr, bsc_2d]

    return pl.pallas_call(
        kernel,
        out_shape=jax.ShapeDtypeStruct((N, Cout, Rf), compute_dtype),
        grid_spec=pltpu.PrefetchScalarGridSpec(
            num_scalar_prefetch=0,
            grid=(N,),
            in_specs=in_specs,
            out_specs=pl.BlockSpec((None, Cout, Rf), lambda n: (n, 0, 0)),
            scratch_shapes=[pltpu.VMEM((9 * Cmax, Mo), compute_dtype),  # im2col stage
                            pltpu.VMEM((Cout, Rf), compute_dtype)]),    # conv2 frame
        compiler_params=pltpu.CompilerParams(
            dimension_semantics=("parallel",)),   # samples shard across TCs (v7x)
    )(*args)


def residual_block_forward(x, params, *, compute_dtype=jnp.bfloat16):
    """Module-equivalent entry point: (N, Cin, H, W) f32 -> (N, Cout, H, W) f32."""
    N, Cin, H, W = x.shape
    Cf = _round_up(Cin, _channel_pack(compute_dtype))
    xf = frame_from_nchw(x, Cf, compute_dtype)
    yf = residual_block_frame(xf, params, H=H, W=W, compute_dtype=compute_dtype)
    return nchw_from_frame(yf, H, W)


# ---------------------------------------------------------------------------
# Parameters (PyTorch layout / default init) and pure-JAX reference
# ---------------------------------------------------------------------------
def init_residual_block(key, in_channels, out_channels):
    k1, k2, k3 = jax.random.split(key, 3)

    def conv_init(k, co, ci, kh, kw):
        kw_, kb_ = jax.random.split(k)
        bound = 1.0 / np.sqrt(ci * kh * kw)
        w = jax.random.uniform(kw_, (co, ci, kh, kw), jnp.float32, -bound, bound)
        b = jax.random.uniform(kb_, (co,), jnp.float32, -bound, bound)
        return w, b

    w1, b1 = conv_init(k1, out_channels, in_channels, 3, 3)
    w2, b2 = conv_init(k2, out_channels, out_channels, 3, 3)
    p = dict(w1=w1, b1=b1, w2=w2, b2=b2,
             g1=jnp.ones((out_channels,), jnp.float32),
             be1=jnp.zeros((out_channels,), jnp.float32),
             g2=jnp.ones((out_channels,), jnp.float32),
             be2=jnp.zeros((out_channels,), jnp.float32))
    if in_channels != out_channels:
        wsc, bsc = conv_init(k3, out_channels, in_channels, 1, 1)
        p['wsc'] = wsc
        p['bsc'] = bsc
    return p


def _ref_conv(x, w, b, pad):
    out = jax.lax.conv_general_dilated(
        x, w, window_strides=(1, 1), padding=((pad, pad), (pad, pad)),
        dimension_numbers=('NCHW', 'OIHW', 'NCHW'))
    return out + b[None, :, None, None]


def _ref_group_norm(x, g, b):
    N, C, H, W = x.shape
    xg = x.reshape(N, NUM_GROUPS, -1)
    mean = jnp.mean(xg, axis=-1, keepdims=True)
    var = jnp.var(xg, axis=-1, keepdims=True)
    xn = ((xg - mean) * jax.lax.rsqrt(var + GN_EPS)).reshape(N, C, H, W)
    return xn * g[None, :, None, None] + b[None, :, None, None]


def ref_residual_block(x, p):
    h = jax.nn.silu(_ref_group_norm(_ref_conv(x, p['w1'], p['b1'], 1),
                                    p['g1'], p['be1']))
    h = _ref_group_norm(_ref_conv(h, p['w2'], p['b2'], 1), p['g2'], p['be2'])
    sc = _ref_conv(x, p['wsc'], p['bsc'], 0) if 'wsc' in p else x
    return jax.nn.silu(h + sc)


# ---------------------------------------------------------------------------
# main
# ---------------------------------------------------------------------------
if __name__ == "__main__":
    key = jax.random.PRNGKey(0)
    kx, k1, k2 = jax.random.split(key, 3)

    # Small NCHW input consistent with the module: batch=2, channels=4, 16x16.
    x = jax.random.normal(kx, (2, 4, 16, 16), jnp.float32)

    # Two blocks: 4->32 exercises the 1x1-conv shortcut, 32->32 the identity one.
    p1 = init_residual_block(k1, 4, 32)
    p2 = init_residual_block(k2, 32, 32)

    def forward(x, p1, p2, dtype):
        # chained blocks stay in frame layout / compute dtype; de-frame once.
        N, Cin, H, W = x.shape
        Cf = _round_up(Cin, _channel_pack(dtype))
        hf = frame_from_nchw(x, Cf, dtype)
        hf = residual_block_frame(hf, p1, H=H, W=W, compute_dtype=dtype)
        hf = residual_block_frame(hf, p2, H=H, W=W, compute_dtype=dtype)
        return nchw_from_frame(hf, H, W)

    fwd = jax.jit(forward, static_argnames=('dtype',))

    ref = np.asarray(jax.block_until_ready(
        ref_residual_block(ref_residual_block(x, p1), p2)))

    # float32 run: tight correctness check of the fused kernel / frame index math.
    out_f32 = np.asarray(jax.block_until_ready(fwd(x, p1, p2, dtype=jnp.float32)))
    assert out_f32.shape == (2, 32, 16, 16), out_f32.shape
    np.testing.assert_allclose(out_f32, ref, rtol=2e-3, atol=2e-3)

    # bf16-storage / bf16-MXU run with f32 accumulation: the performance config.
    out_bf16 = np.asarray(jax.block_until_ready(fwd(x, p1, p2, dtype=jnp.bfloat16)))
    assert out_bf16.shape == (2, 32, 16, 16), out_bf16.shape
    assert np.all(np.isfinite(out_bf16))
    rel = np.linalg.norm(out_bf16 - ref) / np.linalg.norm(ref)
    assert rel < 0.05, f"bf16 run deviates too much: rel L2 = {rel}"

    print("KERNEL_OK")
</pallas_src>

<mosaic_0001>
module attributes {stable_mosaic.version = 11 : i64} {
  func.func @kernel(%arg0: i32, %arg1: memref<1x32x640xf32, #tpu.memory_space<vmem>>, %arg2: memref<32x288xf32, #tpu.memory_space<vmem>>, %arg3: memref<32x1xf32, #tpu.memory_space<vmem>>, %arg4: memref<32x1xf32, #tpu.memory_space<vmem>>, %arg5: memref<32x1xf32, #tpu.memory_space<vmem>>, %arg6: memref<32x288xf32, #tpu.memory_space<vmem>>, %arg7: memref<32x1xf32, #tpu.memory_space<vmem>>, %arg8: memref<32x1xf32, #tpu.memory_space<vmem>>, %arg9: memref<32x1xf32, #tpu.memory_space<vmem>>, %arg10: memref<32x32xf32, #tpu.memory_space<vmem>>, %arg11: memref<1x384xf32, #tpu.memory_space<vmem>>, %arg12: memref<1x32x640xf32, #tpu.memory_space<vmem>>, %arg13: memref<288x384xf32, #tpu.memory_space<vmem>>, %arg14: memref<32x640xf32, #tpu.memory_space<vmem>>) attributes {dimension_semantics = [#tpu.dimension_semantics<parallel>], iteration_bounds = array<i64: 2>, scalar_prefetch = 0 : i64, scratch_operands = 2 : i64, tpu.core_type = #tpu.core_type<tc>, window_params = [{transform_indices = @transform_0, window_bounds = array<i64: 1, 32, 640>}, {pipeline_mode = #tpu.pipeline_mode<synchronous>, transform_indices = @transform_1, window_bounds = array<i64: 32, 288>}, {pipeline_mode = #tpu.pipeline_mode<synchronous>, transform_indices = @transform_2, window_bounds = array<i64: 32, 1>}, {pipeline_mode = #tpu.pipeline_mode<synchronous>, transform_indices = @transform_3, window_bounds = array<i64: 32, 1>}, {pipeline_mode = #tpu.pipeline_mode<synchronous>, transform_indices = @transform_4, window_bounds = array<i64: 32, 1>}, {pipeline_mode = #tpu.pipeline_mode<synchronous>, transform_indices = @transform_5, window_bounds = array<i64: 32, 288>}, {pipeline_mode = #tpu.pipeline_mode<synchronous>, transform_indices = @transform_6, window_bounds = array<i64: 32, 1>}, {pipeline_mode = #tpu.pipeline_mode<synchronous>, transform_indices = @transform_7, window_bounds = array<i64: 32, 1>}, {pipeline_mode = #tpu.pipeline_mode<synchronous>, transform_indices = @transform_8, window_bounds = array<i64: 32, 1>}, {pipeline_mode = #tpu.pipeline_mode<synchronous>, transform_indices = @transform_9, window_bounds = array<i64: 32, 32>}, {pipeline_mode = #tpu.pipeline_mode<synchronous>, transform_indices = @transform_10, window_bounds = array<i64: 1, 384>}, {transform_indices = @transform_11, window_bounds = array<i64: 1, 32, 640>}]} {
    %c0 = arith.constant 0 : index
    %c0_0 = arith.constant 0 : index
    %0 = vector.load %arg11[%c0, %c0_0] : memref<1x384xf32, #tpu.memory_space<vmem>>, vector<1x384xf32>
    %c0_1 = arith.constant 0 : index
    %c0_2 = arith.constant 0 : index
    %1 = vector.load %arg10[%c0_1, %c0_2] : memref<32x32xf32, #tpu.memory_space<vmem>>, vector<32x32xf32>
    %c0_3 = arith.constant 0 : index
    %c0_4 = arith.constant 0 : index
    %c0_5 = arith.constant 0 : index
    %2 = vector.load %arg1[%c0_3, %c0_4, %c0_5] : memref<1x32x640xf32, #tpu.memory_space<vmem>>, vector<1x32x640xf32>
    %3 = vector.shape_cast %2 : vector<1x32x640xf32> to vector<32x640xf32>
    %4 = vector.extract_strided_slice %3 {offsets = [0, 109], sizes = [32, 384], strides = [1, 1]} : vector<32x640xf32> to vector<32x384xf32>
    %c0_6 = arith.constant 0 : index
    %c0_7 = arith.constant 0 : index
    %5 = vector.load %arg13[%c0_6, %c0_7] : memref<288x384xf32, #tpu.memory_space<vmem>>, vector<32x384xf32>
    tpu.vector_store %arg13[%c0_6, %c0_7], %4 {strides = array<i32>} : memref<288x384xf32, #tpu.memory_space<vmem>>, vector<32x384xf32>,
    %6 = vector.extract_strided_slice %3 {offsets = [0, 110], sizes = [32, 384], strides = [1, 1]} : vector<32x640xf32> to vector<32x384xf32>
    %c32 = arith.constant 32 : index
    %c0_8 = arith.constant 0 : index
    %7 = vector.load %arg13[%c32, %c0_8] : memref<288x384xf32, #tpu.memory_space<vmem>>, vector<32x384xf32>
    tpu.vector_store %arg13[%c32, %c0_8], %6 {strides = array<i32>} : memref<288x384xf32, #tpu.memory_space<vmem>>, vector<32x384xf32>,
    %8 = vector.extract_strided_slice %3 {offsets = [0, 111], sizes = [32, 384], strides = [1, 1]} : vector<32x640xf32> to vector<32x384xf32>
    %c64 = arith.constant 64 : index
    %c0_9 = arith.constant 0 : index
    %9 = vector.load %arg13[%c64, %c0_9] : memref<288x384xf32, #tpu.memory_space<vmem>>, vector<32x384xf32>
    tpu.vector_store %arg13[%c64, %c0_9], %8 {strides = array<i32>} : memref<288x384xf32, #tpu.memory_space<vmem>>, vector<32x384xf32>,
    %10 = vector.extract_strided_slice %3 {offsets = [0, 127], sizes = [32, 384], strides = [1, 1]} : vector<32x640xf32> to vector<32x384xf32>
    %c96 = arith.constant 96 : index
    %c0_10 = arith.constant 0 : index
    %11 = vector.load %arg13[%c96, %c0_10] : memref<288x384xf32, #tpu.memory_space<vmem>>, vector<32x384xf32>
    tpu.vector_store %arg13[%c96, %c0_10], %10 {strides = array<i32>} : memref<288x384xf32, #tpu.memory_space<vmem>>, vector<32x384xf32>,
    %12 = vector.extract_strided_slice %3 {offsets = [0, 128], sizes = [32, 384], strides = [1, 1]} : vector<32x640xf32> to vector<32x384xf32>
    %c128 = arith.constant 128 : index
    %c0_11 = arith.constant 0 : index
    %13 = vector.load %arg13[%c128, %c0_11] : memref<288x384xf32, #tpu.memory_space<vmem>>, vector<32x384xf32>
    tpu.vector_store %arg13[%c128, %c0_11], %12 {strides = array<i32>} : memref<288x384xf32, #tpu.memory_space<vmem>>, vector<32x384xf32>,
    %14 = vector.extract_strided_slice %3 {offsets = [0, 129], sizes = [32, 384], strides = [1, 1]} : vector<32x640xf32> to vector<32x384xf32>
    %c160 = arith.constant 160 : index
    %c0_12 = arith.constant 0 : index
    %15 = vector.load %arg13[%c160, %c0_12] : memref<288x384xf32, #tpu.memory_space<vmem>>, vector<32x384xf32>
    tpu.vector_store %arg13[%c160, %c0_12], %14 {strides = array<i32>} : memref<288x384xf32, #tpu.memory_space<vmem>>, vector<32x384xf32>,
    %16 = vector.extract_strided_slice %3 {offsets = [0, 145], sizes = [32, 384], strides = [1, 1]} : vector<32x640xf32> to vector<32x384xf32>
    %c192 = arith.constant 192 : index
    %c0_13 = arith.constant 0 : index
    %17 = vector.load %arg13[%c192, %c0_13] : memref<288x384xf32, #tpu.memory_space<vmem>>, vector<32x384xf32>
    tpu.vector_store %arg13[%c192, %c0_13], %16 {strides = array<i32>} : memref<288x384xf32, #tpu.memory_space<vmem>>, vector<32x384xf32>,
    %18 = vector.extract_strided_slice %3 {offsets = [0, 146], sizes = [32, 384], strides = [1, 1]} : vector<32x640xf32> to vector<32x384xf32>
    %c224 = arith.constant 224 : index
    %c0_14 = arith.constant 0 : index
    %19 = vector.load %arg13[%c224, %c0_14] : memref<288x384xf32, #tpu.memory_space<vmem>>, vector<32x384xf32>
    tpu.vector_store %arg13[%c224, %c0_14], %18 {strides = array<i32>} : memref<288x384xf32, #tpu.memory_space<vmem>>, vector<32x384xf32>,
    %20 = vector.extract_strided_slice %3 {offsets = [0, 147], sizes = [32, 384], strides = [1, 1]} : vector<32x640xf32> to vector<32x384xf32>
    %c256 = arith.constant 256 : index
    %c0_15 = arith.constant 0 : index
    %21 = vector.load %arg13[%c256, %c0_15] : memref<288x384xf32, #tpu.memory_space<vmem>>, vector<32x384xf32>
    tpu.vector_store %arg13[%c256, %c0_15], %20 {strides = array<i32>} : memref<288x384xf32, #tpu.memory_space<vmem>>, vector<32x384xf32>,
    %c0_16 = arith.constant 0 : index
    %c0_17 = arith.constant 0 : index
    %22 = vector.load %arg2[%c0_16, %c0_17] : memref<32x288xf32, #tpu.memory_space<vmem>>, vector<32x288xf32>
    %c0_18 = arith.constant 0 : index
    %c0_19 = arith.constant 0 : index
    %23 = vector.load %arg13[%c0_18, %c0_19] : memref<288x384xf32, #tpu.memory_space<vmem>>, vector<288x384xf32>
    %cst = arith.constant dense<0.000000e+00> : vector<32x384xf32>
    %24 = tpu.matmul %22, %23, %cst {dimension_numbers = #tpu.dot_dimension_numbers<[1], [0], [0], [1], [0, 0, 1, 1], [], []>} : vector<32x288xf32>, vector<288x384xf32>, vector<32x384xf32> -> vector<32x384xf32>
    %c0_20 = arith.constant 0 : index
    %c0_21 = arith.constant 0 : index
    %25 = vector.load %arg3[%c0_20, %c0_21] : memref<32x1xf32, #tpu.memory_space<vmem>>, vector<32x1xf32>
    %26 = vector.broadcast %25 : vector<32x1xf32> to vector<32x384xf32>
    %27 = arith.addf %24, %26 : vector<32x384xf32>
    %28 = vector.broadcast %0 : vector<1x384xf32> to vector<32x384xf32>
    %29 = arith.mulf %27, %28 : vector<32x384xf32>
    %cst_22 = arith.constant dense<0.000000e+00> : vector<32xf32>
    %30 = vector.multi_reduction <add>, %29, %cst_22 [1] : vector<32x384xf32> to vector<32xf32>
    %31 = vector.shape_cast %30 : vector<32xf32> to vector<32x1xf32>
    %32 = arith.mulf %29, %29 : vector<32x384xf32>
    %cst_23 = arith.constant dense<0.000000e+00> : vector<32xf32>
    %33 = vector.multi_reduction <add>, %32, %cst_23 [1] : vector<32x384xf32> to vector<32xf32>
    %34 = vector.shape_cast %33 : vector<32xf32> to vector<32x1xf32>
    %cst_24 = arith.constant dense<0.000000e+00> : vector<32x1xf32>
    %35 = tpu.matmul %1, %31, %cst_24 {dimension_numbers = #tpu.dot_dimension_numbers<[1], [0], [0], [1], [0, 0, 1, 1], [], []>} : vector<32x32xf32>, vector<32x1xf32>, vector<32x1xf32> -> vector<32x1xf32>
    %cst_25 = arith.constant 9.765625E-4 : f32
    %36 = vector.broadcast %cst_25 : f32 to vector<32x1xf32>
    %37 = arith.mulf %35, %36 : vector<32x1xf32>
    %cst_26 = arith.constant dense<0.000000e+00> : vector<32x1xf32>
    %38 = tpu.matmul %1, %34, %cst_26 {dimension_numbers = #tpu.dot_dimension_numbers<[1], [0], [0], [1], [0, 0, 1, 1], [], []>} : vector<32x32xf32>, vector<32x1xf32>, vector<32x1xf32> -> vector<32x1xf32>
    %cst_27 = arith.constant 9.765625E-4 : f32
    %39 = vector.broadcast %cst_27 : f32 to vector<32x1xf32>
    %40 = arith.mulf %38, %39 : vector<32x1xf32>
    %41 = arith.mulf %37, %37 : vector<32x1xf32>
    %42 = arith.subf %40, %41 : vector<32x1xf32>
    %cst_28 = arith.constant 0.000000e+00 : f32
    %43 = vector.broadcast %cst_28 : f32 to vector<32x1xf32>
    %44 = arith.maximumf %42, %43 : vector<32x1xf32>
    %cst_29 = arith.constant 9.99999974E-6 : f32
    %45 = vector.broadcast %cst_29 : f32 to vector<32x1xf32>
    %46 = arith.addf %44, %45 : vector<32x1xf32>
    %47 = math.rsqrt %46 : vector<32x1xf32>
    %c0_30 = arith.constant 0 : index
    %c0_31 = arith.constant 0 : index
    %48 = vector.load %arg4[%c0_30, %c0_31] : memref<32x1xf32, #tpu.memory_space<vmem>>, vector<32x1xf32>
    %49 = arith.mulf %47, %48 : vector<32x1xf32>
    %c0_32 = arith.constant 0 : index
    %c0_33 = arith.constant 0 : index
    %50 = vector.load %arg5[%c0_32, %c0_33] : memref<32x1xf32, #tpu.memory_space<vmem>>, vector<32x1xf32>
    %51 = arith.mulf %37, %49 : vector<32x1xf32>
    %52 = arith.subf %50, %51 : vector<32x1xf32>
    %53 = vector.broadcast %49 : vector<32x1xf32> to vector<32x384xf32>
    %54 = arith.mulf %27, %53 : vector<32x384xf32>
    %55 = vector.broadcast %52 : vector<32x1xf32> to vector<32x384xf32>
    %56 = arith.addf %54, %55 : vector<32x384xf32>
    %57 = arith.negf %56 : vector<32x384xf32>
    %58 = math.exp %57 : vector<32x384xf32>
    %cst_34 = arith.constant 1.000000e+00 : f32
    %59 = vector.broadcast %cst_34 : f32 to vector<32x384xf32>
    %60 = arith.addf %59, %58 : vector<32x384xf32>
    %61 = arith.divf %59, %60 : vector<32x384xf32>
    %62 = arith.mulf %56, %61 : vector<32x384xf32>
    %63 = vector.broadcast %0 : vector<1x384xf32> to vector<32x384xf32>
    %64 = arith.mulf %62, %63 : vector<32x384xf32>
    %cst_35 = arith.constant 0.000000e+00 : f32
    %65 = vector.broadcast %cst_35 : f32 to vector<32x640xf32>
    %c0_36 = arith.constant 0 : index
    %c0_37 = arith.constant 0 : index
    %66 = vector.load %arg14[%c0_36, %c0_37] : memref<32x640xf32, #tpu.memory_space<vmem>>, vector<32x640xf32>
    tpu.vector_store %arg14[%c0_36, %c0_37], %65 {strides = array<i32>} : memref<32x640xf32, #tpu.memory_space<vmem>>, vector<32x640xf32>,
    %c0_38 = arith.constant 0 : index
    %c128_39 = arith.constant 128 : index
    %67 = vector.load %arg14[%c0_38, %c128_39] : memref<32x640xf32, #tpu.memory_space<vmem>>, vector<32x384xf32>
    tpu.vector_store %arg14[%c0_38, %c128_39], %64 {strides = array<i32>} : memref<32x640xf32, #tpu.memory_space<vmem>>, vector<32x384xf32>,
    %c0_40 = arith.constant 0 : index
    %c0_41 = arith.constant 0 : index
    %68 = vector.load %arg14[%c0_40, %c0_41] : memref<32x640xf32, #tpu.memory_space<vmem>>, vector<32x640xf32>
    %69 = vector.extract_strided_slice %68 {offsets = [0, 109], sizes = [32, 384], strides = [1, 1]} : vector<32x640xf32> to vector<32x384xf32>
    %c0_42 = arith.constant 0 : index
    %c0_43 = arith.constant 0 : index
    %70 = vector.load %arg13[%c0_42, %c0_43] : memref<288x384xf32, #tpu.memory_space<vmem>>, vector<32x384xf32>
    tpu.vector_store %arg13[%c0_42, %c0_43], %69 {strides = array<i32>} : memref<288x384xf32, #tpu.memory_space<vmem>>, vector<32x384xf32>,
    %71 = vector.extract_strided_slice %68 {offsets = [0, 110], sizes = [32, 384], strides = [1, 1]} : vector<32x640xf32> to vector<32x384xf32>
    %c32_44 = arith.constant 32 : index
    %c0_45 = arith.constant 0 : index
    %72 = vector.load %arg13[%c32_44, %c0_45] : memref<288x384xf32, #tpu.memory_space<vmem>>, vector<32x384xf32>
    tpu.vector_store %arg13[%c32_44, %c0_45], %71 {strides = array<i32>} : memref<288x384xf32, #tpu.memory_space<vmem>>, vector<32x384xf32>,
    %73 = vector.extract_strided_slice %68 {offsets = [0, 111], sizes = [32, 384], strides = [1, 1]} : vector<32x640xf32> to vector<32x384xf32>
    %c64_46 = arith.constant 64 : index
    %c0_47 = arith.constant 0 : index
    %74 = vector.load %arg13[%c64_46, %c0_47] : memref<288x384xf32, #tpu.memory_space<vmem>>, vector<32x384xf32>
    tpu.vector_store %arg13[%c64_46, %c0_47], %73 {strides = array<i32>} : memref<288x384xf32, #tpu.memory_space<vmem>>, vector<32x384xf32>,
    %75 = vector.extract_strided_slice %68 {offsets = [0, 127], sizes = [32, 384], strides = [1, 1]} : vector<32x640xf32> to vector<32x384xf32>
    %c96_48 = arith.constant 96 : index
    %c0_49 = arith.constant 0 : index
    %76 = vector.load %arg13[%c96_48, %c0_49] : memref<288x384xf32, #tpu.memory_space<vmem>>, vector<32x384xf32>
    tpu.vector_store %arg13[%c96_48, %c0_49], %75 {strides = array<i32>} : memref<288x384xf32, #tpu.memory_space<vmem>>, vector<32x384xf32>,
    %77 = vector.extract_strided_slice %68 {offsets = [0, 128], sizes = [32, 384], strides = [1, 1]} : vector<32x640xf32> to vector<32x384xf32>
    %c128_50 = arith.constant 128 : index
    %c0_51 = arith.constant 0 : index
    %78 = vector.load %arg13[%c128_50, %c0_51] : memref<288x384xf32, #tpu.memory_space<vmem>>, vector<32x384xf32>
    tpu.vector_store %arg13[%c128_50, %c0_51], %77 {strides = array<i32>} : memref<288x384xf32, #tpu.memory_space<vmem>>, vector<32x384xf32>,
    %79 = vector.extract_strided_slice %68 {offsets = [0, 129], sizes = [32, 384], strides = [1, 1]} : vector<32x640xf32> to vector<32x384xf32>
    %c160_52 = arith.constant 160 : index
    %c0_53 = arith.constant 0 : index
    %80 = vector.load %arg13[%c160_52, %c0_53] : memref<288x384xf32, #tpu.memory_space<vmem>>, vector<32x384xf32>
    tpu.vector_store %arg13[%c160_52, %c0_53], %79 {strides = array<i32>} : memref<288x384xf32, #tpu.memory_space<vmem>>, vector<32x384xf32>,
    %81 = vector.extract_strided_slice %68 {offsets = [0, 145], sizes = [32, 384], strides = [1, 1]} : vector<32x640xf32> to vector<32x384xf32>
    %c192_54 = arith.constant 192 : index
    %c0_55 = arith.constant 0 : index
    %82 = vector.load %arg13[%c192_54, %c0_55] : memref<288x384xf32, #tpu.memory_space<vmem>>, vector<32x384xf32>
    tpu.vector_store %arg13[%c192_54, %c0_55], %81 {strides = array<i32>} : memref<288x384xf32, #tpu.memory_space<vmem>>, vector<32x384xf32>,
    %83 = vector.extract_strided_slice %68 {offsets = [0, 146], sizes = [32, 384], strides = [1, 1]} : vector<32x640xf32> to vector<32x384xf32>
    %c224_56 = arith.constant 224 : index
    %c0_57 = arith.constant 0 : index
    %84 = vector.load %arg13[%c224_56, %c0_57] : memref<288x384xf32, #tpu.memory_space<vmem>>, vector<32x384xf32>
    tpu.vector_store %arg13[%c224_56, %c0_57], %83 {strides = array<i32>} : memref<288x384xf32, #tpu.memory_space<vmem>>, vector<32x384xf32>,
    %85 = vector.extract_strided_slice %68 {offsets = [0, 147], sizes = [32, 384], strides = [1, 1]} : vector<32x640xf32> to vector<32x384xf32>
    %c256_58 = arith.constant 256 : index
    %c0_59 = arith.constant 0 : index
    %86 = vector.load %arg13[%c256_58, %c0_59] : memref<288x384xf32, #tpu.memory_space<vmem>>, vector<32x384xf32>
    tpu.vector_store %arg13[%c256_58, %c0_59], %85 {strides = array<i32>} : memref<288x384xf32, #tpu.memory_space<vmem>>, vector<32x384xf32>,
    %c0_60 = arith.constant 0 : index
    %c0_61 = arith.constant 0 : index
    %87 = vector.load %arg6[%c0_60, %c0_61] : memref<32x288xf32, #tpu.memory_space<vmem>>, vector<32x288xf32>
    %c0_62 = arith.constant 0 : index
    %c0_63 = arith.constant 0 : index
    %88 = vector.load %arg13[%c0_62, %c0_63] : memref<288x384xf32, #tpu.memory_space<vmem>>, vector<288x384xf32>
    %cst_64 = arith.constant dense<0.000000e+00> : vector<32x384xf32>
    %89 = tpu.matmul %87, %88, %cst_64 {dimension_numbers = #tpu.dot_dimension_numbers<[1], [0], [0], [1], [0, 0, 1, 1], [], []>} : vector<32x288xf32>, vector<288x384xf32>, vector<32x384xf32> -> vector<32x384xf32>
    %c0_65 = arith.constant 0 : index
    %c0_66 = arith.constant 0 : index
    %90 = vector.load %arg7[%c0_65, %c0_66] : memref<32x1xf32, #tpu.memory_space<vmem>>, vector<32x1xf32>
    %91 = vector.broadcast %90 : vector<32x1xf32> to vector<32x384xf32>
    %92 = arith.addf %89, %91 : vector<32x384xf32>
    %93 = vector.broadcast %0 : vector<1x384xf32> to vector<32x384xf32>
    %94 = arith.mulf %92, %93 : vector<32x384xf32>
    %cst_67 = arith.constant dense<0.000000e+00> : vector<32xf32>
    %95 = vector.multi_reduction <add>, %94, %cst_67 [1] : vector<32x384xf32> to vector<32xf32>
    %96 = vector.shape_cast %95 : vector<32xf32> to vector<32x1xf32>
    %97 = arith.mulf %94, %94 : vector<32x384xf32>
    %cst_68 = arith.constant dense<0.000000e+00> : vector<32xf32>
    %98 = vector.multi_reduction <add>, %97, %cst_68 [1] : vector<32x384xf32> to vector<32xf32>
    %99 = vector.shape_cast %98 : vector<32xf32> to vector<32x1xf32>
    %cst_69 = arith.constant dense<0.000000e+00> : vector<32x1xf32>
    %100 = tpu.matmul %1, %96, %cst_69 {dimension_numbers = #tpu.dot_dimension_numbers<[1], [0], [0], [1], [0, 0, 1, 1], [], []>} : vector<32x32xf32>, vector<32x1xf32>, vector<32x1xf32> -> vector<32x1xf32>
    %cst_70 = arith.constant 9.765625E-4 : f32
    %101 = vector.broadcast %cst_70 : f32 to vector<32x1xf32>
    %102 = arith.mulf %100, %101 : vector<32x1xf32>
    %cst_71 = arith.constant dense<0.000000e+00> : vector<32x1xf32>
    %103 = tpu.matmul %1, %99, %cst_71 {dimension_numbers = #tpu.dot_dimension_numbers<[1], [0], [0], [1], [0, 0, 1, 1], [], []>} : vector<32x32xf32>, vector<32x1xf32>, vector<32x1xf32> -> vector<32x1xf32>
    %cst_72 = arith.constant 9.765625E-4 : f32
    %104 = vector.broadcast %cst_72 : f32 to vector<32x1xf32>
    %105 = arith.mulf %103, %104 : vector<32x1xf32>
    %106 = arith.mulf %102, %102 : vector<32x1xf32>
    %107 = arith.subf %105, %106 : vector<32x1xf32>
    %cst_73 = arith.constant 0.000000e+00 : f32
    %108 = vector.broadcast %cst_73 : f32 to vector<32x1xf32>
    %109 = arith.maximumf %107, %108 : vector<32x1xf32>
    %cst_74 = arith.constant 9.99999974E-6 : f32
    %110 = vector.broadcast %cst_74 : f32 to vector<32x1xf32>
    %111 = arith.addf %109, %110 : vector<32x1xf32>
    %112 = math.rsqrt %111 : vector<32x1xf32>
    %c0_75 = arith.constant 0 : index
    %c0_76 = arith.constant 0 : index
    %113 = vector.load %arg8[%c0_75, %c0_76] : memref<32x1xf32, #tpu.memory_space<vmem>>, vector<32x1xf32>
    %114 = arith.mulf %112, %113 : vector<32x1xf32>
    %c0_77 = arith.constant 0 : index
    %c0_78 = arith.constant 0 : index
    %115 = vector.load %arg9[%c0_77, %c0_78] : memref<32x1xf32, #tpu.memory_space<vmem>>, vector<32x1xf32>
    %116 = arith.mulf %102, %114 : vector<32x1xf32>
    %117 = arith.subf %115, %116 : vector<32x1xf32>
    %118 = vector.broadcast %114 : vector<32x1xf32> to vector<32x384xf32>
    %119 = arith.mulf %92, %118 : vector<32x384xf32>
    %120 = vector.broadcast %117 : vector<32x1xf32> to vector<32x384xf32>
    %121 = arith.addf %119, %120 : vector<32x384xf32>
    %122 = vector.extract_strided_slice %3 {offsets = [0, 128], sizes = [32, 384], strides = [1, 1]} : vector<32x640xf32> to vector<32x384xf32>
    %123 = arith.addf %121, %122 : vector<32x384xf32>
    %124 = arith.negf %123 : vector<32x384xf32>
    %125 = math.exp %124 : vector<32x384xf32>
    %cst_79 = arith.constant 1.000000e+00 : f32
    %126 = vector.broadcast %cst_79 : f32 to vector<32x384xf32>
    %127 = arith.addf %126, %125 : vector<32x384xf32>
    %128 = arith.divf %126, %127 : vector<32x384xf32>
    %129 = arith.mulf %123, %128 : vector<32x384xf32>
    %130 = vector.broadcast %0 : vector<1x384xf32> to vector<32x384xf32>
    %131 = arith.mulf %129, %130 : vector<32x384xf32>
    %cst_80 = arith.constant 0.000000e+00 : f32
    %132 = vector.broadcast %cst_80 : f32 to vector<32x640xf32>
    %c0_81 = arith.constant 0 : index
    %c0_82 = arith.constant 0 : index
    %c0_83 = arith.constant 0 : index
    %133 = vector.load %arg12[%c0_81, %c0_82, %c0_83] : memref<1x32x640xf32, #tpu.memory_space<vmem>>, vector<1x32x640xf32>
    %134 = vector.shape_cast %133 : vector<1x32x640xf32> to vector<32x640xf32>
    %135 = vector.shape_cast %132 : vector<32x640xf32> to vector<1x32x640xf32>
    tpu.vector_store %arg12[%c0_81, %c0_82, %c0_83], %135 {strides = array<i32>} : memref<1x32x640xf32, #tpu.memory_space<vmem>>, vector<1x32x640xf32>,
    %c0_84 = arith.constant 0 : index
    %c0_85 = arith.constant 0 : index
    %c128_86 = arith.constant 128 : index
    %136 = vector.load %arg12[%c0_84, %c0_85, %c128_86] : memref<1x32x640xf32, #tpu.memory_space<vmem>>, vector<1x32x384xf32>
    %137 = vector.shape_cast %136 : vector<1x32x384xf32> to vector<32x384xf32>
    %138 = vector.shape_cast %131 : vector<32x384xf32> to vector<1x32x384xf32>
    tpu.vector_store %arg12[%c0_84, %c0_85, %c128_86], %138 {strides = array<i32>} : memref<1x32x640xf32, #tpu.memory_space<vmem>>, vector<1x32x384xf32>,
    return
  }
  func.func @transform_0(%arg0: i32) -> (i32, i32, i32) {
    %c0_i32 = arith.constant 0 : i32
    %c0_i32_0 = arith.constant 0 : i32
    %c0_i32_1 = arith.constant 0 : i32
    return %arg0, %c0_i32, %c0_i32_0 : i32, i32, i32
  }
  func.func @transform_1(%arg0: i32) -> (i32, i32) {
    %c0_i32 = arith.constant 0 : i32
    %c0_i32_0 = arith.constant 0 : i32
    %c0_i32_1 = arith.constant 0 : i32
    return %c0_i32, %c0_i32_0 : i32, i32
  }
  func.func @transform_2(%arg0: i32) -> (i32, i32) {
    %c0_i32 = arith.constant 0 : i32
    %c0_i32_0 = arith.constant 0 : i32
    %c0_i32_1 = arith.constant 0 : i32
    return %c0_i32, %c0_i32_0 : i32, i32
  }
  func.func @transform_3(%arg0: i32) -> (i32, i32) {
    %c0_i32 = arith.constant 0 : i32
    %c0_i32_0 = arith.constant 0 : i32
    %c0_i32_1 = arith.constant 0 : i32
    return %c0_i32, %c0_i32_0 : i32, i32
  }
  func.func @transform_4(%arg0: i32) -> (i32, i32) {
    %c0_i32 = arith.constant 0 : i32
    %c0_i32_0 = arith.constant 0 : i32
    %c0_i32_1 = arith.constant 0 : i32
    return %c0_i32, %c0_i32_0 : i32, i32
  }
  func.func @transform_5(%arg0: i32) -> (i32, i32) {
    %c0_i32 = arith.constant 0 : i32
    %c0_i32_0 = arith.constant 0 : i32
    %c0_i32_1 = arith.constant 0 : i32
    return %c0_i32, %c0_i32_0 : i32, i32
  }
  func.func @transform_6(%arg0: i32) -> (i32, i32) {
    %c0_i32 = arith.constant 0 : i32
    %c0_i32_0 = arith.constant 0 : i32
    %c0_i32_1 = arith.constant 0 : i32
    return %c0_i32, %c0_i32_0 : i32, i32
  }
  func.func @transform_7(%arg0: i32) -> (i32, i32) {
    %c0_i32 = arith.constant 0 : i32
    %c0_i32_0 = arith.constant 0 : i32
    %c0_i32_1 = arith.constant 0 : i32
    return %c0_i32, %c0_i32_0 : i32, i32
  }
  func.func @transform_8(%arg0: i32) -> (i32, i32) {
    %c0_i32 = arith.constant 0 : i32
    %c0_i32_0 = arith.constant 0 : i32
    %c0_i32_1 = arith.constant 0 : i32
    return %c0_i32, %c0_i32_0 : i32, i32
  }
  func.func @transform_9(%arg0: i32) -> (i32, i32) {
    %c0_i32 = arith.constant 0 : i32
    %c0_i32_0 = arith.constant 0 : i32
    %c0_i32_1 = arith.constant 0 : i32
    return %c0_i32, %c0_i32_0 : i32, i32
  }
  func.func @transform_10(%arg0: i32) -> (i32, i32) {
    %c0_i32 = arith.constant 0 : i32
    %c0_i32_0 = arith.constant 0 : i32
    %c0_i32_1 = arith.constant 0 : i32
    return %c0_i32, %c0_i32_0 : i32, i32
  }
  func.func @transform_11(%arg0: i32) -> (i32, i32, i32) {
    %c0_i32 = arith.constant 0 : i32
    %c0_i32_0 = arith.constant 0 : i32
    %c0_i32_1 = arith.constant 0 : i32
    return %arg0, %c0_i32, %c0_i32_0 : i32, i32, i32
  }
}

module attributes {stable_mosaic.version = 11 : i64} {
  func.func @kernel(%arg0: i32, %arg1: memref<1x8x640xf32, #tpu.memory_space<vmem>>, %arg2: memref<32x72xf32, #tpu.memory_space<vmem>>, %arg3: memref<32x1xf32, #tpu.memory_space<vmem>>, %arg4: memref<32x1xf32, #tpu.memory_space<vmem>>, %arg5: memref<32x1xf32, #tpu.memory_space<vmem>>, %arg6: memref<32x288xf32, #tpu.memory_space<vmem>>, %arg7: memref<32x1xf32, #tpu.memory_space<vmem>>, %arg8: memref<32x1xf32, #tpu.memory_space<vmem>>, %arg9: memref<32x1xf32, #tpu.memory_space<vmem>>, %arg10: memref<32x32xf32, #tpu.memory_space<vmem>>, %arg11: memref<1x384xf32, #tpu.memory_space<vmem>>, %arg12: memref<32x8xf32, #tpu.memory_space<vmem>>, %arg13: memref<32x1xf32, #tpu.memory_space<vmem>>, %arg14: memref<1x32x640xf32, #tpu.memory_space<vmem>>, %arg15: memref<288x384xf32, #tpu.memory_space<vmem>>, %arg16: memref<32x640xf32, #tpu.memory_space<vmem>>) attributes {dimension_semantics = [#tpu.dimension_semantics<parallel>], iteration_bounds = array<i64: 2>, scalar_prefetch = 0 : i64, scratch_operands = 2 : i64, tpu.core_type = #tpu.core_type<tc>, window_params = [{transform_indices = @transform_0, window_bounds = array<i64: 1, 8, 640>}, {pipeline_mode = #tpu.pipeline_mode<synchronous>, transform_indices = @transform_1, window_bounds = array<i64: 32, 72>}, {pipeline_mode = #tpu.pipeline_mode<synchronous>, transform_indices = @transform_2, window_bounds = array<i64: 32, 1>}, {pipeline_mode = #tpu.pipeline_mode<synchronous>, transform_indices = @transform_3, window_bounds = array<i64: 32, 1>}, {pipeline_mode = #tpu.pipeline_mode<synchronous>, transform_indices = @transform_4, window_bounds = array<i64: 32, 1>}, {pipeline_mode = #tpu.pipeline_mode<synchronous>, transform_indices = @transform_5, window_bounds = array<i64: 32, 288>}, {pipeline_mode = #tpu.pipeline_mode<synchronous>, transform_indices = @transform_6, window_bounds = array<i64: 32, 1>}, {pipeline_mode = #tpu.pipeline_mode<synchronous>, transform_indices = @transform_7, window_bounds = array<i64: 32, 1>}, {pipeline_mode = #tpu.pipeline_mode<synchronous>, transform_indices = @transform_8, window_bounds = array<i64: 32, 1>}, {pipeline_mode = #tpu.pipeline_mode<synchronous>, transform_indices = @transform_9, window_bounds = array<i64: 32, 32>}, {pipeline_mode = #tpu.pipeline_mode<synchronous>, transform_indices = @transform_10, window_bounds = array<i64: 1, 384>}, {pipeline_mode = #tpu.pipeline_mode<synchronous>, transform_indices = @transform_11, window_bounds = array<i64: 32, 8>}, {pipeline_mode = #tpu.pipeline_mode<synchronous>, transform_indices = @transform_12, window_bounds = array<i64: 32, 1>}, {transform_indices = @transform_13, window_bounds = array<i64: 1, 32, 640>}]} {
    %c0 = arith.constant 0 : index
    %c0_0 = arith.constant 0 : index
    %0 = vector.load %arg11[%c0, %c0_0] : memref<1x384xf32, #tpu.memory_space<vmem>>, vector<1x384xf32>
    %c0_1 = arith.constant 0 : index
    %c0_2 = arith.constant 0 : index
    %1 = vector.load %arg10[%c0_1, %c0_2] : memref<32x32xf32, #tpu.memory_space<vmem>>, vector<32x32xf32>
    %c0_3 = arith.constant 0 : index
    %c0_4 = arith.constant 0 : index
    %c0_5 = arith.constant 0 : index
    %2 = vector.load %arg1[%c0_3, %c0_4, %c0_5] : memref<1x8x640xf32, #tpu.memory_space<vmem>>, vector<1x8x640xf32>
    %3 = vector.shape_cast %2 : vector<1x8x640xf32> to vector<8x640xf32>
    %4 = vector.extract_strided_slice %3 {offsets = [0, 109], sizes = [8, 384], strides = [1, 1]} : vector<8x640xf32> to vector<8x384xf32>
    %c0_6 = arith.constant 0 : index
    %c0_7 = arith.constant 0 : index
    %5 = vector.load %arg15[%c0_6, %c0_7] : memref<288x384xf32, #tpu.memory_space<vmem>>, vector<8x384xf32>
    tpu.vector_store %arg15[%c0_6, %c0_7], %4 {strides = array<i32>} : memref<288x384xf32, #tpu.memory_space<vmem>>, vector<8x384xf32>,
    %6 = vector.extract_strided_slice %3 {offsets = [0, 110], sizes = [8, 384], strides = [1, 1]} : vector<8x640xf32> to vector<8x384xf32>
    %c8 = arith.constant 8 : index
    %c0_8 = arith.constant 0 : index
    %7 = vector.load %arg15[%c8, %c0_8] : memref<288x384xf32, #tpu.memory_space<vmem>>, vector<8x384xf32>
    tpu.vector_store %arg15[%c8, %c0_8], %6 {strides = array<i32>} : memref<288x384xf32, #tpu.memory_space<vmem>>, vector<8x384xf32>,
    %8 = vector.extract_strided_slice %3 {offsets = [0, 111], sizes = [8, 384], strides = [1, 1]} : vector<8x640xf32> to vector<8x384xf32>
    %c16 = arith.constant 16 : index
    %c0_9 = arith.constant 0 : index
    %9 = vector.load %arg15[%c16, %c0_9] : memref<288x384xf32, #tpu.memory_space<vmem>>, vector<8x384xf32>
    tpu.vector_store %arg15[%c16, %c0_9], %8 {strides = array<i32>} : memref<288x384xf32, #tpu.memory_space<vmem>>, vector<8x384xf32>,
    %10 = vector.extract_strided_slice %3 {offsets = [0, 127], sizes = [8, 384], strides = [1, 1]} : vector<8x640xf32> to vector<8x384xf32>
    %c24 = arith.constant 24 : index
    %c0_10 = arith.constant 0 : index
    %11 = vector.load %arg15[%c24, %c0_10] : memref<288x384xf32, #tpu.memory_space<vmem>>, vector<8x384xf32>
    tpu.vector_store %arg15[%c24, %c0_10], %10 {strides = array<i32>} : memref<288x384xf32, #tpu.memory_space<vmem>>, vector<8x384xf32>,
    %12 = vector.extract_strided_slice %3 {offsets = [0, 128], sizes = [8, 384], strides = [1, 1]} : vector<8x640xf32> to vector<8x384xf32>
    %c32 = arith.constant 32 : index
    %c0_11 = arith.constant 0 : index
    %13 = vector.load %arg15[%c32, %c0_11] : memref<288x384xf32, #tpu.memory_space<vmem>>, vector<8x384xf32>
    tpu.vector_store %arg15[%c32, %c0_11], %12 {strides = array<i32>} : memref<288x384xf32, #tpu.memory_space<vmem>>, vector<8x384xf32>,
    %14 = vector.extract_strided_slice %3 {offsets = [0, 129], sizes = [8, 384], strides = [1, 1]} : vector<8x640xf32> to vector<8x384xf32>
    %c40 = arith.constant 40 : index
    %c0_12 = arith.constant 0 : index
    %15 = vector.load %arg15[%c40, %c0_12] : memref<288x384xf32, #tpu.memory_space<vmem>>, vector<8x384xf32>
    tpu.vector_store %arg15[%c40, %c0_12], %14 {strides = array<i32>} : memref<288x384xf32, #tpu.memory_space<vmem>>, vector<8x384xf32>,
    %16 = vector.extract_strided_slice %3 {offsets = [0, 145], sizes = [8, 384], strides = [1, 1]} : vector<8x640xf32> to vector<8x384xf32>
    %c48 = arith.constant 48 : index
    %c0_13 = arith.constant 0 : index
    %17 = vector.load %arg15[%c48, %c0_13] : memref<288x384xf32, #tpu.memory_space<vmem>>, vector<8x384xf32>
    tpu.vector_store %arg15[%c48, %c0_13], %16 {strides = array<i32>} : memref<288x384xf32, #tpu.memory_space<vmem>>, vector<8x384xf32>,
    %18 = vector.extract_strided_slice %3 {offsets = [0, 146], sizes = [8, 384], strides = [1, 1]} : vector<8x640xf32> to vector<8x384xf32>
    %c56 = arith.constant 56 : index
    %c0_14 = arith.constant 0 : index
    %19 = vector.load %arg15[%c56, %c0_14] : memref<288x384xf32, #tpu.memory_space<vmem>>, vector<8x384xf32>
    tpu.vector_store %arg15[%c56, %c0_14], %18 {strides = array<i32>} : memref<288x384xf32, #tpu.memory_space<vmem>>, vector<8x384xf32>,
    %20 = vector.extract_strided_slice %3 {offsets = [0, 147], sizes = [8, 384], strides = [1, 1]} : vector<8x640xf32> to vector<8x384xf32>
    %c64 = arith.constant 64 : index
    %c0_15 = arith.constant 0 : index
    %21 = vector.load %arg15[%c64, %c0_15] : memref<288x384xf32, #tpu.memory_space<vmem>>, vector<8x384xf32>
    tpu.vector_store %arg15[%c64, %c0_15], %20 {strides = array<i32>} : memref<288x384xf32, #tpu.memory_space<vmem>>, vector<8x384xf32>,
    %c0_16 = arith.constant 0 : index
    %c0_17 = arith.constant 0 : index
    %22 = vector.load %arg2[%c0_16, %c0_17] : memref<32x72xf32, #tpu.memory_space<vmem>>, vector<32x72xf32>
    %c0_18 = arith.constant 0 : index
    %c0_19 = arith.constant 0 : index
    %23 = vector.load %arg15[%c0_18, %c0_19] : memref<288x384xf32, #tpu.memory_space<vmem>>, vector<72x384xf32>
    %cst = arith.constant dense<0.000000e+00> : vector<32x384xf32>
    %24 = tpu.matmul %22, %23, %cst {dimension_numbers = #tpu.dot_dimension_numbers<[1], [0], [0], [1], [0, 0, 1, 1], [], []>} : vector<32x72xf32>, vector<72x384xf32>, vector<32x384xf32> -> vector<32x384xf32>
    %c0_20 = arith.constant 0 : index
    %c0_21 = arith.constant 0 : index
    %25 = vector.load %arg3[%c0_20, %c0_21] : memref<32x1xf32, #tpu.memory_space<vmem>>, vector<32x1xf32>
    %26 = vector.broadcast %25 : vector<32x1xf32> to vector<32x384xf32>
    %27 = arith.addf %24, %26 : vector<32x384xf32>
    %28 = vector.broadcast %0 : vector<1x384xf32> to vector<32x384xf32>
    %29 = arith.mulf %27, %28 : vector<32x384xf32>
    %cst_22 = arith.constant dense<0.000000e+00> : vector<32xf32>
    %30 = vector.multi_reduction <add>, %29, %cst_22 [1] : vector<32x384xf32> to vector<32xf32>
    %31 = vector.shape_cast %30 : vector<32xf32> to vector<32x1xf32>
    %32 = arith.mulf %29, %29 : vector<32x384xf32>
    %cst_23 = arith.constant dense<0.000000e+00> : vector<32xf32>
    %33 = vector.multi_reduction <add>, %32, %cst_23 [1] : vector<32x384xf32> to vector<32xf32>
    %34 = vector.shape_cast %33 : vector<32xf32> to vector<32x1xf32>
    %cst_24 = arith.constant dense<0.000000e+00> : vector<32x1xf32>
    %35 = tpu.matmul %1, %31, %cst_24 {dimension_numbers = #tpu.dot_dimension_numbers<[1], [0], [0], [1], [0, 0, 1, 1], [], []>} : vector<32x32xf32>, vector<32x1xf32>, vector<32x1xf32> -> vector<32x1xf32>
    %cst_25 = arith.constant 9.765625E-4 : f32
    %36 = vector.broadcast %cst_25 : f32 to vector<32x1xf32>
    %37 = arith.mulf %35, %36 : vector<32x1xf32>
    %cst_26 = arith.constant dense<0.000000e+00> : vector<32x1xf32>
    %38 = tpu.matmul %1, %34, %cst_26 {dimension_numbers = #tpu.dot_dimension_numbers<[1], [0], [0], [1], [0, 0, 1, 1], [], []>} : vector<32x32xf32>, vector<32x1xf32>, vector<32x1xf32> -> vector<32x1xf32>
    %cst_27 = arith.constant 9.765625E-4 : f32
    %39 = vector.broadcast %cst_27 : f32 to vector<32x1xf32>
    %40 = arith.mulf %38, %39 : vector<32x1xf32>
    %41 = arith.mulf %37, %37 : vector<32x1xf32>
    %42 = arith.subf %40, %41 : vector<32x1xf32>
    %cst_28 = arith.constant 0.000000e+00 : f32
    %43 = vector.broadcast %cst_28 : f32 to vector<32x1xf32>
    %44 = arith.maximumf %42, %43 : vector<32x1xf32>
    %cst_29 = arith.constant 9.99999974E-6 : f32
    %45 = vector.broadcast %cst_29 : f32 to vector<32x1xf32>
    %46 = arith.addf %44, %45 : vector<32x1xf32>
    %47 = math.rsqrt %46 : vector<32x1xf32>
    %c0_30 = arith.constant 0 : index
    %c0_31 = arith.constant 0 : index
    %48 = vector.load %arg4[%c0_30, %c0_31] : memref<32x1xf32, #tpu.memory_space<vmem>>, vector<32x1xf32>
    %49 = arith.mulf %47, %48 : vector<32x1xf32>
    %c0_32 = arith.constant 0 : index
    %c0_33 = arith.constant 0 : index
    %50 = vector.load %arg5[%c0_32, %c0_33] : memref<32x1xf32, #tpu.memory_space<vmem>>, vector<32x1xf32>
    %51 = arith.mulf %37, %49 : vector<32x1xf32>
    %52 = arith.subf %50, %51 : vector<32x1xf32>
    %53 = vector.broadcast %49 : vector<32x1xf32> to vector<32x384xf32>
    %54 = arith.mulf %27, %53 : vector<32x384xf32>
    %55 = vector.broadcast %52 : vector<32x1xf32> to vector<32x384xf32>
    %56 = arith.addf %54, %55 : vector<32x384xf32>
    %57 = arith.negf %56 : vector<32x384xf32>
    %58 = math.exp %57 : vector<32x384xf32>
    %cst_34 = arith.constant 1.000000e+00 : f32
    %59 = vector.broadcast %cst_34 : f32 to vector<32x384xf32>
    %60 = arith.addf %59, %58 : vector<32x384xf32>
    %61 = arith.divf %59, %60 : vector<32x384xf32>
    %62 = arith.mulf %56, %61 : vector<32x384xf32>
    %63 = vector.broadcast %0 : vector<1x384xf32> to vector<32x384xf32>
    %64 = arith.mulf %62, %63 : vector<32x384xf32>
    %cst_35 = arith.constant 0.000000e+00 : f32
    %65 = vector.broadcast %cst_35 : f32 to vector<32x640xf32>
    %c0_36 = arith.constant 0 : index
    %c0_37 = arith.constant 0 : index
    %66 = vector.load %arg16[%c0_36, %c0_37] : memref<32x640xf32, #tpu.memory_space<vmem>>, vector<32x640xf32>
    tpu.vector_store %arg16[%c0_36, %c0_37], %65 {strides = array<i32>} : memref<32x640xf32, #tpu.memory_space<vmem>>, vector<32x640xf32>,
    %c0_38 = arith.constant 0 : index
    %c128 = arith.constant 128 : index
    %67 = vector.load %arg16[%c0_38, %c128] : memref<32x640xf32, #tpu.memory_space<vmem>>, vector<32x384xf32>
    tpu.vector_store %arg16[%c0_38, %c128], %64 {strides = array<i32>} : memref<32x640xf32, #tpu.memory_space<vmem>>, vector<32x384xf32>,
    %c0_39 = arith.constant 0 : index
    %c0_40 = arith.constant 0 : index
    %68 = vector.load %arg16[%c0_39, %c0_40] : memref<32x640xf32, #tpu.memory_space<vmem>>, vector<32x640xf32>
    %69 = vector.extract_strided_slice %68 {offsets = [0, 109], sizes = [32, 384], strides = [1, 1]} : vector<32x640xf32> to vector<32x384xf32>
    %c0_41 = arith.constant 0 : index
    %c0_42 = arith.constant 0 : index
    %70 = vector.load %arg15[%c0_41, %c0_42] : memref<288x384xf32, #tpu.memory_space<vmem>>, vector<32x384xf32>
    tpu.vector_store %arg15[%c0_41, %c0_42], %69 {strides = array<i32>} : memref<288x384xf32, #tpu.memory_space<vmem>>, vector<32x384xf32>,
    %71 = vector.extract_strided_slice %68 {offsets = [0, 110], sizes = [32, 384], strides = [1, 1]} : vector<32x640xf32> to vector<32x384xf32>
    %c32_43 = arith.constant 32 : index
    %c0_44 = arith.constant 0 : index
    %72 = vector.load %arg15[%c32_43, %c0_44] : memref<288x384xf32, #tpu.memory_space<vmem>>, vector<32x384xf32>
    tpu.vector_store %arg15[%c32_43, %c0_44], %71 {strides = array<i32>} : memref<288x384xf32, #tpu.memory_space<vmem>>, vector<32x384xf32>,
    %73 = vector.extract_strided_slice %68 {offsets = [0, 111], sizes = [32, 384], strides = [1, 1]} : vector<32x640xf32> to vector<32x384xf32>
    %c64_45 = arith.constant 64 : index
    %c0_46 = arith.constant 0 : index
    %74 = vector.load %arg15[%c64_45, %c0_46] : memref<288x384xf32, #tpu.memory_space<vmem>>, vector<32x384xf32>
    tpu.vector_store %arg15[%c64_45, %c0_46], %73 {strides = array<i32>} : memref<288x384xf32, #tpu.memory_space<vmem>>, vector<32x384xf32>,
    %75 = vector.extract_strided_slice %68 {offsets = [0, 127], sizes = [32, 384], strides = [1, 1]} : vector<32x640xf32> to vector<32x384xf32>
    %c96 = arith.constant 96 : index
    %c0_47 = arith.constant 0 : index
    %76 = vector.load %arg15[%c96, %c0_47] : memref<288x384xf32, #tpu.memory_space<vmem>>, vector<32x384xf32>
    tpu.vector_store %arg15[%c96, %c0_47], %75 {strides = array<i32>} : memref<288x384xf32, #tpu.memory_space<vmem>>, vector<32x384xf32>,
    %77 = vector.extract_strided_slice %68 {offsets = [0, 128], sizes = [32, 384], strides = [1, 1]} : vector<32x640xf32> to vector<32x384xf32>
    %c128_48 = arith.constant 128 : index
    %c0_49 = arith.constant 0 : index
    %78 = vector.load %arg15[%c128_48, %c0_49] : memref<288x384xf32, #tpu.memory_space<vmem>>, vector<32x384xf32>
    tpu.vector_store %arg15[%c128_48, %c0_49], %77 {strides = array<i32>} : memref<288x384xf32, #tpu.memory_space<vmem>>, vector<32x384xf32>,
    %79 = vector.extract_strided_slice %68 {offsets = [0, 129], sizes = [32, 384], strides = [1, 1]} : vector<32x640xf32> to vector<32x384xf32>
    %c160 = arith.constant 160 : index
    %c0_50 = arith.constant 0 : index
    %80 = vector.load %arg15[%c160, %c0_50] : memref<288x384xf32, #tpu.memory_space<vmem>>, vector<32x384xf32>
    tpu.vector_store %arg15[%c160, %c0_50], %79 {strides = array<i32>} : memref<288x384xf32, #tpu.memory_space<vmem>>, vector<32x384xf32>,
    %81 = vector.extract_strided_slice %68 {offsets = [0, 145], sizes = [32, 384], strides = [1, 1]} : vector<32x640xf32> to vector<32x384xf32>
    %c192 = arith.constant 192 : index
    %c0_51 = arith.constant 0 : index
    %82 = vector.load %arg15[%c192, %c0_51] : memref<288x384xf32, #tpu.memory_space<vmem>>, vector<32x384xf32>
    tpu.vector_store %arg15[%c192, %c0_51], %81 {strides = array<i32>} : memref<288x384xf32, #tpu.memory_space<vmem>>, vector<32x384xf32>,
    %83 = vector.extract_strided_slice %68 {offsets = [0, 146], sizes = [32, 384], strides = [1, 1]} : vector<32x640xf32> to vector<32x384xf32>
    %c224 = arith.constant 224 : index
    %c0_52 = arith.constant 0 : index
    %84 = vector.load %arg15[%c224, %c0_52] : memref<288x384xf32, #tpu.memory_space<vmem>>, vector<32x384xf32>
    tpu.vector_store %arg15[%c224, %c0_52], %83 {strides = array<i32>} : memref<288x384xf32, #tpu.memory_space<vmem>>, vector<32x384xf32>,
    %85 = vector.extract_strided_slice %68 {offsets = [0, 147], sizes = [32, 384], strides = [1, 1]} : vector<32x640xf32> to vector<32x384xf32>
    %c256 = arith.constant 256 : index
    %c0_53 = arith.constant 0 : index
    %86 = vector.load %arg15[%c256, %c0_53] : memref<288x384xf32, #tpu.memory_space<vmem>>, vector<32x384xf32>
    tpu.vector_store %arg15[%c256, %c0_53], %85 {strides = array<i32>} : memref<288x384xf32, #tpu.memory_space<vmem>>, vector<32x384xf32>,
    %c0_54 = arith.constant 0 : index
    %c0_55 = arith.constant 0 : index
    %87 = vector.load %arg6[%c0_54, %c0_55] : memref<32x288xf32, #tpu.memory_space<vmem>>, vector<32x288xf32>
    %c0_56 = arith.constant 0 : index
    %c0_57 = arith.constant 0 : index
    %88 = vector.load %arg15[%c0_56, %c0_57] : memref<288x384xf32, #tpu.memory_space<vmem>>, vector<288x384xf32>
    %cst_58 = arith.constant dense<0.000000e+00> : vector<32x384xf32>
    %89 = tpu.matmul %87, %88, %cst_58 {dimension_numbers = #tpu.dot_dimension_numbers<[1], [0], [0], [1], [0, 0, 1, 1], [], []>} : vector<32x288xf32>, vector<288x384xf32>, vector<32x384xf32> -> vector<32x384xf32>
    %c0_59 = arith.constant 0 : index
    %c0_60 = arith.constant 0 : index
    %90 = vector.load %arg7[%c0_59, %c0_60] : memref<32x1xf32, #tpu.memory_space<vmem>>, vector<32x1xf32>
    %91 = vector.broadcast %90 : vector<32x1xf32> to vector<32x384xf32>
    %92 = arith.addf %89, %91 : vector<32x384xf32>
    %93 = vector.broadcast %0 : vector<1x384xf32> to vector<32x384xf32>
    %94 = arith.mulf %92, %93 : vector<32x384xf32>
    %cst_61 = arith.constant dense<0.000000e+00> : vector<32xf32>
    %95 = vector.multi_reduction <add>, %94, %cst_61 [1] : vector<32x384xf32> to vector<32xf32>
    %96 = vector.shape_cast %95 : vector<32xf32> to vector<32x1xf32>
    %97 = arith.mulf %94, %94 : vector<32x384xf32>
    %cst_62 = arith.constant dense<0.000000e+00> : vector<32xf32>
    %98 = vector.multi_reduction <add>, %97, %cst_62 [1] : vector<32x384xf32> to vector<32xf32>
    %99 = vector.shape_cast %98 : vector<32xf32> to vector<32x1xf32>
    %cst_63 = arith.constant dense<0.000000e+00> : vector<32x1xf32>
    %100 = tpu.matmul %1, %96, %cst_63 {dimension_numbers = #tpu.dot_dimension_numbers<[1], [0], [0], [1], [0, 0, 1, 1], [], []>} : vector<32x32xf32>, vector<32x1xf32>, vector<32x1xf32> -> vector<32x1xf32>
    %cst_64 = arith.constant 9.765625E-4 : f32
    %101 = vector.broadcast %cst_64 : f32 to vector<32x1xf32>
    %102 = arith.mulf %100, %101 : vector<32x1xf32>
    %cst_65 = arith.constant dense<0.000000e+00> : vector<32x1xf32>
    %103 = tpu.matmul %1, %99, %cst_65 {dimension_numbers = #tpu.dot_dimension_numbers<[1], [0], [0], [1], [0, 0, 1, 1], [], []>} : vector<32x32xf32>, vector<32x1xf32>, vector<32x1xf32> -> vector<32x1xf32>
    %cst_66 = arith.constant 9.765625E-4 : f32
    %104 = vector.broadcast %cst_66 : f32 to vector<32x1xf32>
    %105 = arith.mulf %103, %104 : vector<32x1xf32>
    %106 = arith.mulf %102, %102 : vector<32x1xf32>
    %107 = arith.subf %105, %106 : vector<32x1xf32>
    %cst_67 = arith.constant 0.000000e+00 : f32
    %108 = vector.broadcast %cst_67 : f32 to vector<32x1xf32>
    %109 = arith.maximumf %107, %108 : vector<32x1xf32>
    %cst_68 = arith.constant 9.99999974E-6 : f32
    %110 = vector.broadcast %cst_68 : f32 to vector<32x1xf32>
    %111 = arith.addf %109, %110 : vector<32x1xf32>
    %112 = math.rsqrt %111 : vector<32x1xf32>
    %c0_69 = arith.constant 0 : index
    %c0_70 = arith.constant 0 : index
    %113 = vector.load %arg8[%c0_69, %c0_70] : memref<32x1xf32, #tpu.memory_space<vmem>>, vector<32x1xf32>
    %114 = arith.mulf %112, %113 : vector<32x1xf32>
    %c0_71 = arith.constant 0 : index
    %c0_72 = arith.constant 0 : index
    %115 = vector.load %arg9[%c0_71, %c0_72] : memref<32x1xf32, #tpu.memory_space<vmem>>, vector<32x1xf32>
    %116 = arith.mulf %102, %114 : vector<32x1xf32>
    %117 = arith.subf %115, %116 : vector<32x1xf32>
    %118 = vector.broadcast %114 : vector<32x1xf32> to vector<32x384xf32>
    %119 = arith.mulf %92, %118 : vector<32x384xf32>
    %120 = vector.broadcast %117 : vector<32x1xf32> to vector<32x384xf32>
    %121 = arith.addf %119, %120 : vector<32x384xf32>
    %122 = vector.extract_strided_slice %3 {offsets = [0, 128], sizes = [8, 384], strides = [1, 1]} : vector<8x640xf32> to vector<8x384xf32>
    %c0_73 = arith.constant 0 : index
    %c0_74 = arith.constant 0 : index
    %123 = vector.load %arg12[%c0_73, %c0_74] : memref<32x8xf32, #tpu.memory_space<vmem>>, vector<32x8xf32>
    %cst_75 = arith.constant dense<0.000000e+00> : vector<32x384xf32>
    %124 = tpu.matmul %123, %122, %cst_75 {dimension_numbers = #tpu.dot_dimension_numbers<[1], [0], [0], [1], [0, 0, 1, 1], [], []>} : vector<32x8xf32>, vector<8x384xf32>, vector<32x384xf32> -> vector<32x384xf32>
    %c0_76 = arith.constant 0 : index
    %c0_77 = arith.constant 0 : index
    %125 = vector.load %arg13[%c0_76, %c0_77] : memref<32x1xf32, #tpu.memory_space<vmem>>, vector<32x1xf32>
    %126 = vector.broadcast %125 : vector<32x1xf32> to vector<32x384xf32>
    %127 = arith.addf %124, %126 : vector<32x384xf32>
    %128 = arith.addf %121, %127 : vector<32x384xf32>
    %129 = arith.negf %128 : vector<32x384xf32>
    %130 = math.exp %129 : vector<32x384xf32>
    %cst_78 = arith.constant 1.000000e+00 : f32
    %131 = vector.broadcast %cst_78 : f32 to vector<32x384xf32>
    %132 = arith.addf %131, %130 : vector<32x384xf32>
    %133 = arith.divf %131, %132 : vector<32x384xf32>
    %134 = arith.mulf %128, %133 : vector<32x384xf32>
    %135 = vector.broadcast %0 : vector<1x384xf32> to vector<32x384xf32>
    %136 = arith.mulf %134, %135 : vector<32x384xf32>
    %cst_79 = arith.constant 0.000000e+00 : f32
    %137 = vector.broadcast %cst_79 : f32 to vector<32x640xf32>
    %c0_80 = arith.constant 0 : index
    %c0_81 = arith.constant 0 : index
    %c0_82 = arith.constant 0 : index
    %138 = vector.load %arg14[%c0_80, %c0_81, %c0_82] : memref<1x32x640xf32, #tpu.memory_space<vmem>>, vector<1x32x640xf32>
    %139 = vector.shape_cast %138 : vector<1x32x640xf32> to vector<32x640xf32>
    %140 = vector.shape_cast %137 : vector<32x640xf32> to vector<1x32x640xf32>
    tpu.vector_store %arg14[%c0_80, %c0_81, %c0_82], %140 {strides = array<i32>} : memref<1x32x640xf32, #tpu.memory_space<vmem>>, vector<1x32x640xf32>,
    %c0_83 = arith.constant 0 : index
    %c0_84 = arith.constant 0 : index
    %c128_85 = arith.constant 128 : index
    %141 = vector.load %arg14[%c0_83, %c0_84, %c128_85] : memref<1x32x640xf32, #tpu.memory_space<vmem>>, vector<1x32x384xf32>
    %142 = vector.shape_cast %141 : vector<1x32x384xf32> to vector<32x384xf32>
    %143 = vector.shape_cast %136 : vector<32x384xf32> to vector<1x32x384xf32>
    tpu.vector_store %arg14[%c0_83, %c0_84, %c128_85], %143 {strides = array<i32>} : memref<1x32x640xf32, #tpu.memory_space<vmem>>, vector<1x32x384xf32>,
    return
  }
  func.func @transform_0(%arg0: i32) -> (i32, i32, i32) {
    %c0_i32 = arith.constant 0 : i32
    %c0_i32_0 = arith.constant 0 : i32
    %c0_i32_1 = arith.constant 0 : i32
    return %arg0, %c0_i32, %c0_i32_0 : i32, i32, i32
  }
  func.func @transform_1(%arg0: i32) -> (i32, i32) {
    %c0_i32 = arith.constant 0 : i32
    %c0_i32_0 = arith.constant 0 : i32
    %c0_i32_1 = arith.constant 0 : i32
    return %c0_i32, %c0_i32_0 : i32, i32
  }
  func.func @transform_2(%arg0: i32) -> (i32, i32) {
    %c0_i32 = arith.constant 0 : i32
    %c0_i32_0 = arith.constant 0 : i32
    %c0_i32_1 = arith.constant 0 : i32
    return %c0_i32, %c0_i32_0 : i32, i32
  }
  func.func @transform_3(%arg0: i32) -> (i32, i32) {
    %c0_i32 = arith.constant 0 : i32
    %c0_i32_0 = arith.constant 0 : i32
    %c0_i32_1 = arith.constant 0 : i32
    return %c0_i32, %c0_i32_0 : i32, i32
  }
  func.func @transform_4(%arg0: i32) -> (i32, i32) {
    %c0_i32 = arith.constant 0 : i32
    %c0_i32_0 = arith.constant 0 : i32
    %c0_i32_1 = arith.constant 0 : i32
    return %c0_i32, %c0_i32_0 : i32, i32
  }
  func.func @transform_5(%arg0: i32) -> (i32, i32) {
    %c0_i32 = arith.constant 0 : i32
    %c0_i32_0 = arith.constant 0 : i32
    %c0_i32_1 = arith.constant 0 : i32
    return %c0_i32, %c0_i32_0 : i32, i32
  }
  func.func @transform_6(%arg0: i32) -> (i32, i32) {
    %c0_i32 = arith.constant 0 : i32
    %c0_i32_0 = arith.constant 0 : i32
    %c0_i32_1 = arith.constant 0 : i32
    return %c0_i32, %c0_i32_0 : i32, i32
  }
  func.func @transform_7(%arg0: i32) -> (i32, i32) {
    %c0_i32 = arith.constant 0 : i32
    %c0_i32_0 = arith.constant 0 : i32
    %c0_i32_1 = arith.constant 0 : i32
    return %c0_i32, %c0_i32_0 : i32, i32
  }
  func.func @transform_8(%arg0: i32) -> (i32, i32) {
    %c0_i32 = arith.constant 0 : i32
    %c0_i32_0 = arith.constant 0 : i32
    %c0_i32_1 = arith.constant 0 : i32
    return %c0_i32, %c0_i32_0 : i32, i32
  }
  func.func @transform_9(%arg0: i32) -> (i32, i32) {
    %c0_i32 = arith.constant 0 : i32
    %c0_i32_0 = arith.constant 0 : i32
    %c0_i32_1 = arith.constant 0 : i32
    return %c0_i32, %c0_i32_0 : i32, i32
  }
  func.func @transform_10(%arg0: i32) -> (i32, i32) {
    %c0_i32 = arith.constant 0 : i32
    %c0_i32_0 = arith.constant 0 : i32
    %c0_i32_1 = arith.constant 0 : i32
    return %c0_i32, %c0_i32_0 : i32, i32
  }
  func.func @transform_11(%arg0: i32) -> (i32, i32) {
    %c0_i32 = arith.constant 0 : i32
    %c0_i32_0 = arith.constant 0 : i32
    %c0_i32_1 = arith.constant 0 : i32
    return %c0_i32, %c0_i32_0 : i32, i32
  }
  func.func @transform_12(%arg0: i32) -> (i32, i32) {
    %c0_i32 = arith.constant 0 : i32
    %c0_i32_0 = arith.constant 0 : i32
    %c0_i32_1 = arith.constant 0 : i32
    return %c0_i32, %c0_i32_0 : i32, i32
  }
  func.func @transform_13(%arg0: i32) -> (i32, i32, i32) {
    %c0_i32 = arith.constant 0 : i32
    %c0_i32_0 = arith.constant 0 : i32
    %c0_i32_1 = arith.constant 0 : i32
    return %arg0, %c0_i32, %c0_i32_0 : i32, i32, i32
  }
}

</mosaic_0001>

<llo_original>
// kernel: forward.2
$region0: #{forward.2}
  #allocation0 [shape = 'u32[]', space=smem, size = 0x4, offset = 0x4, fixed_abs, tag = 'smem constant byte address 0x4 - core index']
  #allocation1 [shape = 'u32[72,128]{1,0:T(1,128)}', space=vmem, size = 0x9000, scoped, tag = 'internal scratch']
  #allocation2 [shape = 'f32[288,384]{1,0:T(8,128)}', space=vmem, size = 0x6c000, scoped, tag = 'scratch operand']
  #allocation3 [shape = 'f32[32,640]{1,0:T(8,128)}', space=vmem, size = 0x14000, scoped, tag = 'scratch operand']
  %s0 = inlined_call_operand.vmem [shape: f32[2,8,640], index: 0, kind: input, shape index: {}]
  %s1 = inlined_call_operand.vmem [shape: f32[32,72], index: 1, kind: input, shape index: {}]
  %s2 = inlined_call_operand.vmem [shape: f32[32,1], index: 2, kind: input, shape index: {}]
  %s3 = inlined_call_operand.vmem [shape: f32[32,1], index: 3, kind: input, shape index: {}]
  %s4 = inlined_call_operand.vmem [shape: f32[32,1], index: 4, kind: input, shape index: {}]
  %s5 = inlined_call_operand.vmem [shape: f32[32,288], index: 5, kind: input, shape index: {}]
  %s6 = inlined_call_operand.vmem [shape: f32[32,1], index: 6, kind: input, shape index: {}]
  %s7 = inlined_call_operand.vmem [shape: f32[32,1], index: 7, kind: input, shape index: {}]
  %s8 = inlined_call_operand.vmem [shape: f32[32,1], index: 8, kind: input, shape index: {}]
  %s9 = inlined_call_operand.vmem [shape: f32[32,32], index: 9, kind: input, shape index: {}]
  %s10 = inlined_call_operand.vmem [shape: f32[1,384], index: 10, kind: input, shape index: {}]
  %s11 = inlined_call_operand.vmem [shape: f32[32,8], index: 11, kind: input, shape index: {}]
  %s12 = inlined_call_operand.vmem [shape: f32[32,1], index: 12, kind: input, shape index: {}]
  %s13 = inlined_call_operand.vmem [shape: f32[2,32,640], index: 13, kind: output, shape index: {}]
  %s14 = sld [smem:[#allocation0]]
  $region85: #{forward.2} parent=0
    _
  %s16 = ssub.s32 1, %s14
  %s17 = scalar_select 0, %s16, %s14
  loop: start=0, step=1, limit=4
  $region2: #{forward.2} parent=0 // loop_pre_header
    _
  $region3: #{forward.2} parent=0 // loop_header
    %s19 = sphi 0, %s23
    %p20 = scmp.ge.s32.totalorder %s19, 4
    %s29 = sphi 0, %s31
    %s32 = sphi 0, %s29
    %s33 = sphi 0, %s32
    %s49 = sphi 0, %s33
    %s53 = sphi 0, %s53
    %s55 = sphi 0, %s53
    %s56 = sphi 0, %s55
    %s70 = sphi 0, %s56
    %s74 = sphi 0, %s74
    %s76 = sphi 0, %s74
    %s77 = sphi 0, %s76
    %s91 = sphi 0, %s77
    %s95 = sphi 0, %s95
    %s97 = sphi 0, %s95
    %s98 = sphi 0, %s97
    %s112 = sphi 0, %s98
    %s116 = sphi 0, %s116
    %s118 = sphi 0, %s116
    %s119 = sphi 0, %s118
    %s133 = sphi 0, %s119
    %s137 = sphi 0, %s137
    %s139 = sphi 0, %s137
    %s140 = sphi 0, %s139
    %s154 = sphi 0, %s140
    %s158 = sphi 0, %s158
    %s160 = sphi 0, %s158
    %s161 = sphi 0, %s160
    %s175 = sphi 0, %s161
    %s179 = sphi 0, %s179
    %s181 = sphi 0, %s179
    %s182 = sphi 0, %s181
    %s196 = sphi 0, %s182
    %s200 = sphi 0, %s200
    %s202 = sphi 0, %s200
    %s203 = sphi 0, %s202
    %s217 = sphi 0, %s203
    %s221 = sphi 0, %s221
    %s223 = sphi 0, %s221
    %s224 = sphi 0, %s223
    %s238 = sphi 0, %s224
    %s242 = sphi 0, %s242
    %s244 = sphi 0, %s242
    %s245 = sphi 0, %s244
    %s259 = sphi 0, %s245
    %s263 = sphi 0, %s263
    %s265 = sphi 0, %s263
    %s266 = sphi 0, %s265
    %s280 = sphi 0, %s266
    %s284 = sphi 0, %s284
    %s286 = sphi 0, %s284
    %s287 = sphi 0, %s286
    %s301 = sphi 0, %s287
    %s307 = sphi 0, %s309
    %s310 = sphi 0, %s307
    %s311 = sphi 0, %s310
    %s327 = sphi 0, %s311
  $region4: #{forward.2} parent=0 // loop_header_branch
    %22 = sbr.rel (%p20) target = $region8
  $region5: #{forward.2} parent=0 // loop_body
    %s24 = ssub.s32 %s19, 1
    %s25 = ssub.s32 %s19, 2
    %s26 = sadd.s32 %s19, 1
    %s27 = ssub.s32 %s19, %s26
    %p28 = scmp.eq.s32.totalorder %s27, 0
    %s30 = sadd.s32 %s29, 1
    %s31 = scalar_select %p28, %s29, %s30
    %p34 = pneg %p28
    %p35 = scmp.eq.s32.totalorder %s19, 1
    %p36 = por %p34, %p35
    %p37 = scmp.ne.s32.totalorder %s29, %s32
    %p38 = scmp.eq.s32.totalorder %s19, 0
    %p39 = por %p37, %p38
    %p40 = scmp.ne.s32.totalorder %s29, %s32
    %p41 = scmp.eq.s32.totalorder %s24, 1
    %p42 = por %p40, %p41
    %p43 = scmp.ne.s32.totalorder %s32, %s33
    %p44 = scmp.eq.s32.totalorder %s24, 0
    %p45 = por %p43, %p44
    %p46 = scmp.ne.s32.totalorder %s32, %s33
    %p47 = scmp.eq.s32.totalorder %s25, 1
    %p48 = por %p46, %p47
    %p50 = scmp.ne.s32.totalorder %s33, %s49
    %p51 = scmp.eq.s32.totalorder %s25, 0
    %p52 = por %p50, %p51
    %s54 = sadd.s32 %s53, 1
    %p57 = scmp.eq.s32.totalorder %s19, 1
    %p58 = scmp.ne.s32.totalorder %s53, %s55
    %p59 = scmp.eq.s32.totalorder %s19, 0
    %p60 = por %p58, %p59
    %p61 = scmp.ne.s32.totalorder %s53, %s55
    %p62 = scmp.eq.s32.totalorder %s24, 1
    %p63 = por %p61, %p62
    %p64 = scmp.ne.s32.totalorder %s55, %s56
    %p65 = scmp.eq.s32.totalorder %s24, 0
    %p66 = por %p64, %p65
    %p67 = scmp.ne.s32.totalorder %s55, %s56
    %p68 = scmp.eq.s32.totalorder %s25, 1
    %p69 = por %p67, %p68
    %p71 = scmp.ne.s32.totalorder %s56, %s70
    %p72 = scmp.eq.s32.totalorder %s25, 0
    %p73 = por %p71, %p72
    %s75 = sadd.s32 %s74, 1
    %p78 = scmp.eq.s32.totalorder %s19, 1
    %p79 = scmp.ne.s32.totalorder %s74, %s76
    %p80 = scmp.eq.s32.totalorder %s19, 0
    %p81 = por %p79, %p80
    %p82 = scmp.ne.s32.totalorder %s74, %s76
    %p83 = scmp.eq.s32.totalorder %s24, 1
    %p84 = por %p82, %p83
    %p85 = scmp.ne.s32.totalorder %s76, %s77
    %p86 = scmp.eq.s32.totalorder %s24, 0
    %p87 = por %p85, %p86
    %p88 = scmp.ne.s32.totalorder %s76, %s77
    %p89 = scmp.eq.s32.totalorder %s25, 1
    %p90 = por %p88, %p89
    %p92 = scmp.ne.s32.totalorder %s77, %s91
    %p93 = scmp.eq.s32.totalorder %s25, 0
    %p94 = por %p92, %p93
    %s96 = sadd.s32 %s95, 1
    %p99 = scmp.eq.s32.totalorder %s19, 1
    %p100 = scmp.ne.s32.totalorder %s95, %s97
    %p101 = scmp.eq.s32.totalorder %s19, 0
    %p102 = por %p100, %p101
    %p103 = scmp.ne.s32.totalorder %s95, %s97
    %p104 = scmp.eq.s32.totalorder %s24, 1
    %p105 = por %p103, %p104
    %p106 = scmp.ne.s32.totalorder %s97, %s98
    %p107 = scmp.eq.s32.totalorder %s24, 0
    %p108 = por %p106, %p107
    %p109 = scmp.ne.s32.totalorder %s97, %s98
    %p110 = scmp.eq.s32.totalorder %s25, 1
    %p111 = por %p109, %p110
    %p113 = scmp.ne.s32.totalorder %s98, %s112
    %p114 = scmp.eq.s32.totalorder %s25, 0
    %p115 = por %p113, %p114
    %s117 = sadd.s32 %s116, 1
    %p120 = scmp.eq.s32.totalorder %s19, 1
    %p121 = scmp.ne.s32.totalorder %s116, %s118
    %p122 = scmp.eq.s32.totalorder %s19, 0
    %p123 = por %p121, %p122
    %p124 = scmp.ne.s32.totalorder %s116, %s118
    %p125 = scmp.eq.s32.totalorder %s24, 1
    %p126 = por %p124, %p125
    %p127 = scmp.ne.s32.totalorder %s118, %s119
    %p128 = scmp.eq.s32.totalorder %s24, 0
    %p129 = por %p127, %p128
    %p130 = scmp.ne.s32.totalorder %s118, %s119
    %p131 = scmp.eq.s32.totalorder %s25, 1
    %p132 = por %p130, %p131
    %p134 = scmp.ne.s32.totalorder %s119, %s133
    %p135 = scmp.eq.s32.totalorder %s25, 0
    %p136 = por %p134, %p135
    %s138 = sadd.s32 %s137, 1
    %p141 = scmp.eq.s32.totalorder %s19, 1
    %p142 = scmp.ne.s32.totalorder %s137, %s139
    %p143 = scmp.eq.s32.totalorder %s19, 0
    %p144 = por %p142, %p143
    %p145 = scmp.ne.s32.totalorder %s137, %s139
    %p146 = scmp.eq.s32.totalorder %s24, 1
    %p147 = por %p145, %p146
    %p148 = scmp.ne.s32.totalorder %s139, %s140
    %p149 = scmp.eq.s32.totalorder %s24, 0
    %p150 = por %p148, %p149
    %p151 = scmp.ne.s32.totalorder %s139, %s140
    %p152 = scmp.eq.s32.totalorder %s25, 1
    %p153 = por %p151, %p152
    %p155 = scmp.ne.s32.totalorder %s140, %s154
    %p156 = scmp.eq.s32.totalorder %s25, 0
    %p157 = por %p155, %p156
    %s159 = sadd.s32 %s158, 1
    %p162 = scmp.eq.s32.totalorder %s19, 1
    %p163 = scmp.ne.s32.totalorder %s158, %s160
    %p164 = scmp.eq.s32.totalorder %s19, 0
    %p165 = por %p163, %p164
    %p166 = scmp.ne.s32.totalorder %s158, %s160
    %p167 = scmp.eq.s32.totalorder %s24, 1
    %p168 = por %p166, %p167
    %p169 = scmp.ne.s32.totalorder %s160, %s161
    %p170 = scmp.eq.s32.totalorder %s24, 0
    %p171 = por %p169, %p170
    %p172 = scmp.ne.s32.totalorder %s160, %s161
    %p173 = scmp.eq.s32.totalorder %s25, 1
    %p174 = por %p172, %p173
    %p176 = scmp.ne.s32.totalorder %s161, %s175
    %p177 = scmp.eq.s32.totalorder %s25, 0
    %p178 = por %p176, %p177
    %s180 = sadd.s32 %s179, 1
    %p183 = scmp.eq.s32.totalorder %s19, 1
    %p184 = scmp.ne.s32.totalorder %s179, %s181
    %p185 = scmp.eq.s32.totalorder %s19, 0
    %p186 = por %p184, %p185
    %p187 = scmp.ne.s32.totalorder %s179, %s181
    %p188 = scmp.eq.s32.totalorder %s24, 1
    %p189 = por %p187, %p188
    %p190 = scmp.ne.s32.totalorder %s181, %s182
    %p191 = scmp.eq.s32.totalorder %s24, 0
    %p192 = por %p190, %p191
    %p193 = scmp.ne.s32.totalorder %s181, %s182
    %p194 = scmp.eq.s32.totalorder %s25, 1
    %p195 = por %p193, %p194
    %p197 = scmp.ne.s32.totalorder %s182, %s196
    %p198 = scmp.eq.s32.totalorder %s25, 0
    %p199 = por %p197, %p198
    %s201 = sadd.s32 %s200, 1
    %p204 = scmp.eq.s32.totalorder %s19, 1
    %p205 = scmp.ne.s32.totalorder %s200, %s202
    %p206 = scmp.eq.s32.totalorder %s19, 0
    %p207 = por %p205, %p206
    %p208 = scmp.ne.s32.totalorder %s200, %s202
    %p209 = scmp.eq.s32.totalorder %s24, 1
    %p210 = por %p208, %p209
    %p211 = scmp.ne.s32.totalorder %s202, %s203
    %p212 = scmp.eq.s32.totalorder %s24, 0
    %p213 = por %p211, %p212
    %p214 = scmp.ne.s32.totalorder %s202, %s203
    %p215 = scmp.eq.s32.totalorder %s25, 1
    %p216 = por %p214, %p215
    %p218 = scmp.ne.s32.totalorder %s203, %s217
    %p219 = scmp.eq.s32.totalorder %s25, 0
    %p220 = por %p218, %p219
    %s222 = sadd.s32 %s221, 1
    %p225 = scmp.eq.s32.totalorder %s19, 1
    %p226 = scmp.ne.s32.totalorder %s221, %s223
    %p227 = scmp.eq.s32.totalorder %s19, 0
    %p228 = por %p226, %p227
    %p229 = scmp.ne.s32.totalorder %s221, %s223
    %p230 = scmp.eq.s32.totalorder %s24, 1
    %p231 = por %p229, %p230
    %p232 = scmp.ne.s32.totalorder %s223, %s224
    %p233 = scmp.eq.s32.totalorder %s24, 0
    %p234 = por %p232, %p233
    %p235 = scmp.ne.s32.totalorder %s223, %s224
    %p236 = scmp.eq.s32.totalorder %s25, 1
    %p237 = por %p235, %p236
    %p239 = scmp.ne.s32.totalorder %s224, %s238
    %p240 = scmp.eq.s32.totalorder %s25, 0
    %p241 = por %p239, %p240
    %s243 = sadd.s32 %s242, 1
    %p246 = scmp.eq.s32.totalorder %s19, 1
    %p247 = scmp.ne.s32.totalorder %s242, %s244
    %p248 = scmp.eq.s32.totalorder %s19, 0
    %p249 = por %p247, %p248
    %p250 = scmp.ne.s32.totalorder %s242, %s244
    %p251 = scmp.eq.s32.totalorder %s24, 1
    %p252 = por %p250, %p251
    %p253 = scmp.ne.s32.totalorder %s244, %s245
    %p254 = scmp.eq.s32.totalorder %s24, 0
    %p255 = por %p253, %p254
    %p256 = scmp.ne.s32.totalorder %s244, %s245
    %p257 = scmp.eq.s32.totalorder %s25, 1
    %p258 = por %p256, %p257
    %p260 = scmp.ne.s32.totalorder %s245, %s259
    %p261 = scmp.eq.s32.totalorder %s25, 0
    %p262 = por %p260, %p261
    %s264 = sadd.s32 %s263, 1
    %p267 = scmp.eq.s32.totalorder %s19, 1
    %p268 = scmp.ne.s32.totalorder %s263, %s265
    %p269 = scmp.eq.s32.totalorder %s19, 0
    %p270 = por %p268, %p269
    %p271 = scmp.ne.s32.totalorder %s263, %s265
    %p272 = scmp.eq.s32.totalorder %s24, 1
    %p273 = por %p271, %p272
    %p274 = scmp.ne.s32.totalorder %s265, %s266
    %p275 = scmp.eq.s32.totalorder %s24, 0
    %p276 = por %p274, %p275
    %p277 = scmp.ne.s32.totalorder %s265, %s266
    %p278 = scmp.eq.s32.totalorder %s25, 1
    %p279 = por %p277, %p278
    %p281 = scmp.ne.s32.totalorder %s266, %s280
    %p282 = scmp.eq.s32.totalorder %s25, 0
    %p283 = por %p281, %p282
    %s285 = sadd.s32 %s284, 1
    %p288 = scmp.eq.s32.totalorder %s19, 1
    %p289 = scmp.ne.s32.totalorder %s284, %s286
    %p290 = scmp.eq.s32.totalorder %s19, 0
    %p291 = por %p289, %p290
    %p292 = scmp.ne.s32.totalorder %s284, %s286
    %p293 = scmp.eq.s32.totalorder %s24, 1
    %p294 = por %p292, %p293
    %p295 = scmp.ne.s32.totalorder %s286, %s287
    %p296 = scmp.eq.s32.totalorder %s24, 0
    %p297 = por %p295, %p296
    %p298 = scmp.ne.s32.totalorder %s286, %s287
    %p299 = scmp.eq.s32.totalorder %s25, 1
    %p300 = por %p298, %p299
    %p302 = scmp.ne.s32.totalorder %s287, %s301
    %p303 = scmp.eq.s32.totalorder %s25, 0
    %p304 = por %p302, %p303
    %s305 = ssub.s32 %s19, %s26
    %p306 = scmp.eq.s32.totalorder %s305, 0
    %s308 = sadd.s32 %s307, 1
    %s309 = scalar_select %p306, %s307, %s308
    %p312 = pneg %p306
    %p313 = scmp.eq.s32.totalorder %s19, 1
    %p314 = por %p312, %p313
    %p315 = scmp.ne.s32.totalorder %s307, %s310
    %p316 = scmp.eq.s32.totalorder %s19, 0
    %p317 = por %p315, %p316
    %p318 = scmp.ne.s32.totalorder %s307, %s310
    %p319 = scmp.eq.s32.totalorder %s24, 1
    %p320 = por %p318, %p319
    %p321 = scmp.ne.s32.totalorder %s310, %s311
    %p322 = scmp.eq.s32.totalorder %s24, 0
    %p323 = por %p321, %p322
    %p324 = scmp.ne.s32.totalorder %s310, %s311
    %p325 = scmp.eq.s32.totalorder %s25, 1
    %p326 = por %p324, %p325
    %p328 = scmp.ne.s32.totalorder %s311, %s327
    %p329 = scmp.eq.s32.totalorder %s25, 0
    %p330 = por %p328, %p329
    %p331 = scmp.le.s32.totalorder 1, %s19
    %p332 = scmp.lt.s32.totalorder %s19, 3
    %p333 = pnand %p331, %p332
    %p334 = pneg %p333
    // Predicated region
    $region9: #{forward.2} parent=5 // pred_check
      _
    $region10: #{forward.2} parent=5 // pred_check_branch
      %336 = sbr.rel (%p333) target = $region12
    $region11: #{forward.2} parent=5 // pred_region
      %s337 = ssub.s32 %s19, 1
      // Predicated region
      $region13: #{forward.2} parent=11 // pred_check
        %p338 = pneg %p66
      $region14: #{forward.2} parent=11 // pred_check_branch
        %340 = sbr.rel (%p338) target = $region16
      $region15: #{forward.2} parent=11 // pred_region
        _
      $region16: #{forward.2} parent=11 // pred_fallthru
        _
      // Predicated region
      $region17: #{forward.2} parent=11 // pred_check
        %p341 = pneg %p87
      $region18: #{forward.2} parent=11 // pred_check_branch
        %343 = sbr.rel (%p341) target = $region20
      $region19: #{forward.2} parent=11 // pred_region
        _
      $region20: #{forward.2} parent=11 // pred_fallthru
        _
      // Predicated region
      $region21: #{forward.2} parent=11 // pred_check
        %p344 = pneg %p108
      $region22: #{forward.2} parent=11 // pred_check_branch
        %346 = sbr.rel (%p344) target = $region24
      $region23: #{forward.2} parent=11 // pred_region
        _
      $region24: #{forward.2} parent=11 // pred_fallthru
        _
      // Predicated region
      $region25: #{forward.2} parent=11 // pred_check
        %p347 = pneg %p129
      $region26: #{forward.2} parent=11 // pred_check_branch
        %349 = sbr.rel (%p347) target = $region28
      $region27: #{forward.2} parent=11 // pred_region
        _
      $region28: #{forward.2} parent=11 // pred_fallthru
        _
      // Predicated region
      $region29: #{forward.2} parent=11 // pred_check
        %p350 = pneg %p150
      $region30: #{forward.2} parent=11 // pred_check_branch
        %352 = sbr.rel (%p350) target = $region32
      $region31: #{forward.2} parent=11 // pred_region
        _
      $region32: #{forward.2} parent=11 // pred_fallthru
        _
      // Predicated region
      $region33: #{forward.2} parent=11 // pred_check
        %p353 = pneg %p171
      $region34: #{forward.2} parent=11 // pred_check_branch
        %355 = sbr.rel (%p353) target = $region36
      $region35: #{forward.2} parent=11 // pred_region
        _
      $region36: #{forward.2} parent=11 // pred_fallthru
        _
      // Predicated region
      $region37: #{forward.2} parent=11 // pred_check
        %p356 = pneg %p192
      $region38: #{forward.2} parent=11 // pred_check_branch
        %358 = sbr.rel (%p356) target = $region40
      $region39: #{forward.2} parent=11 // pred_region
        _
      $region40: #{forward.2} parent=11 // pred_fallthru
        _
      // Predicated region
      $region41: #{forward.2} parent=11 // pred_check
        %p359 = pneg %p213
      $region42: #{forward.2} parent=11 // pred_check_branch
        %361 = sbr.rel (%p359) target = $region44
      $region43: #{forward.2} parent=11 // pred_region
        _
      $region44: #{forward.2} parent=11 // pred_fallthru
        _
      // Predicated region
      $region45: #{forward.2} parent=11 // pred_check
        %p362 = pneg %p234
      $region46: #{forward.2} parent=11 // pred_check_branch
        %364 = sbr.rel (%p362) target = $region48
      $region47: #{forward.2} parent=11 // pred_region
        _
      $region48: #{forward.2} parent=11 // pred_fallthru
        _
      // Predicated region
      $region49: #{forward.2} parent=11 // pred_check
        %p365 = pneg %p255
      $region50: #{forward.2} parent=11 // pred_check_branch
        %367 = sbr.rel (%p365) target = $region52
      $region51: #{forward.2} parent=11 // pred_region
        _
      $region52: #{forward.2} parent=11 // pred_fallthru
        _
      // Predicated region
      $region53: #{forward.2} parent=11 // pred_check
        %p368 = pneg %p276
      $region54: #{forward.2} parent=11 // pred_check_branch
        %370 = sbr.rel (%p368) target = $region56
      $region55: #{forward.2} parent=11 // pred_region
        _
      $region56: #{forward.2} parent=11 // pred_fallthru
        _
      // Predicated region
      $region57: #{forward.2} parent=11 // pred_check
        %p371 = pneg %p297
      $region58: #{forward.2} parent=11 // pred_check_branch
        %373 = sbr.rel (%p371) target = $region60
      $region59: #{forward.2} parent=11 // pred_region
        _
      $region60: #{forward.2} parent=11 // pred_fallthru
        _
    $region12: #{forward.2} parent=5 // pred_fallthru
      _
    %p374 = scmp.lt.s32.totalorder %s19, 2
    // Predicated region
    $region61: #{forward.2} parent=5 // pred_check
      %p375 = pneg %p374
    $region62: #{forward.2} parent=5 // pred_check_branch
      %377 = sbr.rel (%p375) target = $region64
    $region63: #{forward.2} parent=5 // pred_region
      // Predicated region
      $region65: #{forward.2} parent=63 // pred_check
        %p378 = pneg %p39
      $region66: #{forward.2} parent=63 // pred_check_branch
        %380 = sbr.rel (%p378) target = $region68
      $region67: #{forward.2} parent=63 // pred_region
        %p381 = scmp.lt.s32.totalorder %s19, 1
        %s382 = scalar_select %p381, %s19, 1
        %s383 = smul.addr %s382, 5
        %s384 = smul.addr %s383, 8
        %s385 = scalar_lea.vmem %s0, %s384
      $region68: #{forward.2} parent=63 // pred_fallthru
        _
    $region64: #{forward.2} parent=5 // pred_fallthru
      _
    %p386 = scmp.le.s32.totalorder 1, %s19
    %p387 = scmp.lt.s32.totalorder %s19, 3
    %p388 = pnand %p386, %p387
    %p389 = pneg %p388
    // Predicated region
    $region69: #{forward.2} parent=5 // pred_check
      _
    $region70: #{forward.2} parent=5 // pred_check_branch
      %391 = sbr.rel (%p388) target = $region72
    $region71: #{forward.2} parent=5 // pred_region
      %s392 = ssub.s32 %s19, 1
      %p393 = scmp.lt.s32.totalorder %s24, 1
      %s394 = scalar_select %p393, %s24, 1
      %s395 = smul.addr %s394, 5
      %s396 = smul.addr %s395, 8
      %s397 = scalar_lea.vmem %s0, %s396
      %p398 = pneg %p45
      %p399 = pneg %p42
      %p400 = pneg %p66
      %p401 = pneg %p63
      %p402 = pneg %p87
      %p403 = pneg %p84
      %p404 = pneg %p108
      %p405 = pneg %p105
      %p406 = pneg %p129
      %p407 = pneg %p126
      %p408 = pneg %p150
      %p409 = pneg %p147
      %p410 = pneg %p171
      %p411 = pneg %p168
      %p412 = pneg %p192
      %p413 = pneg %p189
      %p414 = pneg %p213
      %p415 = pneg %p210
      %p416 = pneg %p234
      %p417 = pneg %p231
      %p418 = pneg %p255
      %p419 = pneg %p252
      %p420 = pneg %p276
      %p421 = pneg %p273
      %p422 = pneg %p297
      %p423 = pneg %p294
      %p424 = pneg %p323
      %p425 = pneg %p320
      %p426 = scmp.lt.s32.totalorder %s24, 1
      %s427 = scalar_select %p426, %s24, 1
      %s428 = smul.addr %s427, 20
      %s429 = smul.addr %s428, 8
      %s430 = scalar_lea.vmem %s13, %s429
      %p431 = scmp.lt.s32.totalorder %s24, 1
      %s432 = scalar_select %p431, %s24, 1
      %s433 = smul.addr %s432, 5
      %s434 = smul.addr %s433, 8
      %s435 = scalar_lea.vmem %s0, %s434
      %p436 = scmp.lt.s32.totalorder %s24, 1
      %s437 = scalar_select %p436, %s24, 1
      %s438 = smul.addr %s437, 20
      %s439 = smul.addr %s438, 8
      %s440 = scalar_lea.vmem %s13, %s439
      %v441 = vld [vmem:[%s10] sm:$0x7]
      %v442 = vld [vmem:[%s9] sm:$0xff]
      %v443 = vld [vmem:[%s9 + $0x8] sm:$0xff]
      %v444 = vld [vmem:[%s9 + $0x10] sm:$0xff]
      %v445 = vld [vmem:[%s9 + $0x18] sm:$0xff]
      %v446 = vld [vmem:[%s435] sm:$0xff]
      %v447 = vld [vmem:[%s435 + $0x8] sm:$0xff]
      %v448 = vld [vmem:[%s435 + $0x10] sm:$0xff]
      %v449 = vld [vmem:[%s435 + $0x18] sm:$0xff]
      %v450 = vld [vmem:[%s435 + $0x20] sm:$0xff]
      %455 = vrot.lane.b32.xlu0 %v446, 19
      %v456 = vpop.permute.xlu0 %455
      %457 = vrot.lane.b32.xlu0 %v447, 19
      %v458 = vpop.permute.xlu0 %457
      %459 = vrot.lane.b32.xlu0 %v448, 19
      %v460 = vpop.permute.xlu0 %459
      %461 = vrot.lane.b32.xlu0 %v449, 19
      %v462 = vpop.permute.xlu0 %461
      %vm463 = vcmask 154624
      %v464 = vsel %vm463, %v456, %v458
      %v465 = vsel %vm463, %v458, %v460
      %v466 = vsel %vm463, %v460, %v462
      %470 = vst [vmem:[#allocation2] sm:$0xff] %v464
      %471 = vst [vmem:[#allocation2 + $0x8] sm:$0xff] %v465
      %472 = vst [vmem:[#allocation2 + $0x10] sm:$0xff] %v466
      %473 = vrot.lane.b32.xlu0 %v446, 18
      %v474 = vpop.permute.xlu0 %473
      %475 = vrot.lane.b32.xlu0 %v447, 18
      %v476 = vpop.permute.xlu0 %475
      %477 = vrot.lane.b32.xlu0 %v448, 18
      %v478 = vpop.permute.xlu0 %477
      %479 = vrot.lane.b32.xlu0 %v449, 18
      %v480 = vpop.permute.xlu0 %479
      %vm481 = vcmask 146432
      %v482 = vsel %vm481, %v474, %v476
      %v483 = vsel %vm481, %v476, %v478
      %v484 = vsel %vm481, %v478, %v480
      %488 = vst [vmem:[#allocation2 + $0x18] sm:$0xff] %v482
      %489 = vst [vmem:[#allocation2 + $0x20] sm:$0xff] %v483
      %490 = vst [vmem:[#allocation2 + $0x28] sm:$0xff] %v484
      %491 = vrot.lane.b32.xlu0 %v446, 17
      %v492 = vpop.permute.xlu0 %491
      %493 = vrot.lane.b32.xlu0 %v447, 17
      %v494 = vpop.permute.xlu0 %493
      %495 = vrot.lane.b32.xlu0 %v448, 17
      %v496 = vpop.permute.xlu0 %495
      %497 = vrot.lane.b32.xlu0 %v449, 17
      %v498 = vpop.permute.xlu0 %497
      %vm499 = vcmask 138240
      %v500 = vsel %vm499, %v492, %v494
      %v501 = vsel %vm499, %v494, %v496
      %v502 = vsel %vm499, %v496, %v498
      %506 = vst [vmem:[#allocation2 + $0x30] sm:$0xff] %v500
      %507 = vst [vmem:[#allocation2 + $0x38] sm:$0xff] %v501
      %508 = vst [vmem:[#allocation2 + $0x40] sm:$0xff] %v502
      %509 = vrot.lane.b32.xlu0 %v446, 1
      %v510 = vpop.permute.xlu0 %509
      %511 = vrot.lane.b32.xlu0 %v447, 1
      %v512 = vpop.permute.xlu0 %511
      %513 = vrot.lane.b32.xlu0 %v448, 1
      %v514 = vpop.permute.xlu0 %513
      %515 = vrot.lane.b32.xlu0 %v449, 1
      %v516 = vpop.permute.xlu0 %515
      %vm517 = vcmask 7168
      %v518 = vsel %vm517, %v510, %v512
      %v519 = vsel %vm517, %v512, %v514
      %v520 = vsel %vm517, %v514, %v516
      %524 = vst [vmem:[#allocation2 + $0x48] sm:$0xff] %v518
      %525 = vst [vmem:[#allocation2 + $0x50] sm:$0xff] %v519
      %526 = vst [vmem:[#allocation2 + $0x58] sm:$0xff] %v520
      %527 = vst [vmem:[#allocation2 + $0x60] sm:$0xff] %v447
      %528 = vst [vmem:[#allocation2 + $0x68] sm:$0xff] %v448
      %529 = vst [vmem:[#allocation2 + $0x70] sm:$0xff] %v449
      %531 = vrot.lane.b32.xlu0 %v447, 127
      %v532 = vpop.permute.xlu0 %531
      %533 = vrot.lane.b32.xlu0 %v448, 127
      %v534 = vpop.permute.xlu0 %533
      %535 = vrot.lane.b32.xlu0 %v449, 127
      %v536 = vpop.permute.xlu0 %535
      %537 = vrot.lane.b32.xlu0 %v450, 127
      %v538 = vpop.permute.xlu0 %537
      %vm539 = vcmask 1039360
      %v540 = vsel %vm539, %v532, %v534
      %v541 = vsel %vm539, %v534, %v536
      %v542 = vsel %vm539, %v536, %v538
      %546 = vst [vmem:[#allocation2 + $0x78] sm:$0xff] %v540
      %547 = vst [vmem:[#allocation2 + $0x80] sm:$0xff] %v541
      %548 = vst [vmem:[#allocation2 + $0x88] sm:$0xff] %v542
      %549 = vrot.lane.b32.xlu0 %v447, 111
      %v550 = vpop.permute.xlu0 %549
      %551 = vrot.lane.b32.xlu0 %v448, 111
      %v552 = vpop.permute.xlu0 %551
      %553 = vrot.lane.b32.xlu0 %v449, 111
      %v554 = vpop.permute.xlu0 %553
      %555 = vrot.lane.b32.xlu0 %v450, 111
      %v556 = vpop.permute.xlu0 %555
      %vm557 = vcmask 908288
      %v558 = vsel %vm557, %v550, %v552
      %v559 = vsel %vm557, %v552, %v554
      %v560 = vsel %vm557, %v554, %v556
      %564 = vst [vmem:[#allocation2 + $0x90] sm:$0xff] %v558
      %565 = vst [vmem:[#allocation2 + $0x98] sm:$0xff] %v559
      %566 = vst [vmem:[#allocation2 + $0xa0] sm:$0xff] %v560
      %567 = vrot.lane.b32.xlu0 %v447, 110
      %v568 = vpop.permute.xlu0 %567
      %569 = vrot.lane.b32.xlu0 %v448, 110
      %v570 = vpop.permute.xlu0 %569
      %571 = vrot.lane.b32.xlu0 %v449, 110
      %v572 = vpop.permute.xlu0 %571
      %573 = vrot.lane.b32.xlu0 %v450, 110
      %v574 = vpop.permute.xlu0 %573
      %vm575 = vcmask 900096
      %v576 = vsel %vm575, %v568, %v570
      %v577 = vsel %vm575, %v570, %v572
      %v578 = vsel %vm575, %v572, %v574
      %582 = vst [vmem:[#allocation2 + $0xa8] sm:$0xff] %v576
      %583 = vst [vmem:[#allocation2 + $0xb0] sm:$0xff] %v577
      %584 = vst [vmem:[#allocation2 + $0xb8] sm:$0xff] %v578
      %585 = vrot.lane.b32.xlu0 %v447, 109
      %v586 = vpop.permute.xlu0 %585
      %587 = vrot.lane.b32.xlu0 %v448, 109
      %v588 = vpop.permute.xlu0 %587
      %589 = vrot.lane.b32.xlu0 %v449, 109
      %v590 = vpop.permute.xlu0 %589
      %591 = vrot.lane.b32.xlu0 %v450, 109
      %v592 = vpop.permute.xlu0 %591
      %vm593 = vcmask 891904
      %v594 = vsel %vm593, %v586, %v588
      %v595 = vsel %vm593, %v588, %v590
      %v596 = vsel %vm593, %v590, %v592
      %600 = vst [vmem:[#allocation2 + $0xc0] sm:$0xff] %v594
      %601 = vst [vmem:[#allocation2 + $0xc8] sm:$0xff] %v595
      %602 = vst [vmem:[#allocation2 + $0xd0] sm:$0xff] %v596
      %v603 = vld [vmem:[%s1] sm:$0xff]
      %v604 = vld [vmem:[%s1 + $0x8] sm:$0xff]
      %v605 = vld [vmem:[%s1 + $0x10] sm:$0xff]
      %v606 = vld [vmem:[%s1 + $0x18] sm:$0xff]
      %v607 = vld [vmem:[#allocation2] sm:$0xff]
      %v608 = vld [vmem:[#allocation2 + $0x8] sm:$0xff]
      %v609 = vld [vmem:[#allocation2 + $0x10] sm:$0xff]
      %v610 = vld [vmem:[#allocation2 + $0x18] sm:$0xff]
      %v611 = vld [vmem:[#allocation2 + $0x20] sm:$0xff]
      %v612 = vld [vmem:[#allocation2 + $0x28] sm:$0xff]
      %v613 = vld [vmem:[#allocation2 + $0x30] sm:$0xff]
      %v614 = vld [vmem:[#allocation2 + $0x38] sm:$0xff]
      %v615 = vld [vmem:[#allocation2 + $0x40] sm:$0xff]
      %v616 = vld [vmem:[#allocation2 + $0x48] sm:$0xff]
      %v617 = vld [vmem:[#allocation2 + $0x50] sm:$0xff]
      %v618 = vld [vmem:[#allocation2 + $0x58] sm:$0xff]
      %v619 = vld [vmem:[#allocation2 + $0x60] sm:$0xff]
      %v620 = vld [vmem:[#allocation2 + $0x68] sm:$0xff]
      %v621 = vld [vmem:[#allocation2 + $0x70] sm:$0xff]
      %v622 = vld [vmem:[#allocation2 + $0x78] sm:$0xff]
      %v623 = vld [vmem:[#allocation2 + $0x80] sm:$0xff]
      %v624 = vld [vmem:[#allocation2 + $0x88] sm:$0xff]
      %v625 = vld [vmem:[#allocation2 + $0x90] sm:$0xff]
      %v626 = vld [vmem:[#allocation2 + $0x98] sm:$0xff]
      %v627 = vld [vmem:[#allocation2 + $0xa0] sm:$0xff]
      %v628 = vld [vmem:[#allocation2 + $0xa8] sm:$0xff]
      %v629 = vld [vmem:[#allocation2 + $0xb0] sm:$0xff]
      %v630 = vld [vmem:[#allocation2 + $0xb8] sm:$0xff]
      %v631 = vld [vmem:[#allocation2 + $0xc0] sm:$0xff]
      %v632 = vld [vmem:[#allocation2 + $0xc8] sm:$0xff]
      %v633 = vld [vmem:[#allocation2 + $0xd0] sm:$0xff]
      %v634 = vld [vmem:[%s2] sm:$0xff]
      %v635 = vld [vmem:[%s2 + $0x8] sm:$0xff]
      %v636 = vld [vmem:[%s2 + $0x10] sm:$0xff]
      %v637 = vld [vmem:[%s2 + $0x18] sm:$0xff]
      %639 = vset.pattern.permute.xlu0 0
      %640 = vperm.xlu0 %639, %v634
      %v641 = vpop.permute.xlu0 %640
      %644 = vset.pattern.permute.xlu0 0
      %645 = vperm.xlu0 %644, %v635
      %v646 = vpop.permute.xlu0 %645
      %649 = vset.pattern.permute.xlu0 0
      %650 = vperm.xlu0 %649, %v636
      %v651 = vpop.permute.xlu0 %650
      %654 = vset.pattern.permute.xlu0 0
      %655 = vperm.xlu0 %654, %v637
      %v656 = vpop.permute.xlu0 %655
      %vm658 = vcmask 588800
      %v660 = vsel %vm658, %v603, 0
      %v663 = vsel %vm658, %v604, 0
      %v666 = vsel %vm658, %v605, 0
      %v669 = vsel %vm658, %v606, 0
      %671 = vmatpush.msra.mxu0 0.0
      %672 = vmatpush.msra.mxu0 0.0
      %673 = vmatpush.msra.mxu0 0.0
      %674 = vmatpush.msra.mxu0 0.0
      %675 = vmatpush.msra.mxu0 0.0
      %676 = vmatpush.msra.mxu0 0.0
      %677 = vmatpush.msra.mxu0 0.0
      %678 = vmatpush.msra.mxu0 %v631
      %679 = vmatpush.msra.mxu0 %v628
      %680 = vmatpush.msra.mxu0 %v625
      %681 = vmatpush.msra.mxu0 %v622
      %682 = vmatpush.msra.mxu0 %v619
      %683 = vmatpush.msra.mxu0 %v616
      %684 = vmatpush.msra.mxu0 %v613
      %685 = vmatpush.msra.mxu0 %v610
      %686 = vmatpush.msra.mxu0 %v607
      %687 = vmatmul.f32.gmra.mxu0 %v660
      %v688 = vpop.f32.mrf.mxu0
      %v689 = vadd.f32 %v641, %v688
      %690 = vmatmul.f32.gmra.mxu0 %v663
      %v691 = vpop.f32.mrf.mxu0
      %v692 = vadd.f32 %v646, %v691
      %693 = vmatmul.f32.gmra.mxu0 %v666
      %v694 = vpop.f32.mrf.mxu0
      %v695 = vadd.f32 %v651, %v694
      %696 = vmatmul.f32.gmra.mxu0 %v669
      %v697 = vpop.f32.mrf.mxu0
      %v698 = vadd.f32 %v656, %v697
      %699 = vdwg.mxu0
      %700 = vmatpush.msra.mxu0 0.0
      %701 = vmatpush.msra.mxu0 0.0
      %702 = vmatpush.msra.mxu0 0.0
      %703 = vmatpush.msra.mxu0 0.0
      %704 = vmatpush.msra.mxu0 0.0
      %705 = vmatpush.msra.mxu0 0.0
      %706 = vmatpush.msra.mxu0 0.0
      %707 = vmatpush.msra.mxu0 %v632
      %708 = vmatpush.msra.mxu0 %v629
      %709 = vmatpush.msra.mxu0 %v626
      %710 = vmatpush.msra.mxu0 %v623
      %711 = vmatpush.msra.mxu0 %v620
      %712 = vmatpush.msra.mxu0 %v617
      %713 = vmatpush.msra.mxu0 %v614
      %714 = vmatpush.msra.mxu0 %v611
      %715 = vmatpush.msra.mxu0 %v608
      %716 = vmatmul.f32.gmra.mxu0 %v660
      %v717 = vpop.f32.mrf.mxu0
      %v718 = vadd.f32 %v641, %v717
      %719 = vmatmul.f32.gmra.mxu0 %v663
      %v720 = vpop.f32.mrf.mxu0
      %v721 = vadd.f32 %v646, %v720
      %722 = vmatmul.f32.gmra.mxu0 %v666
      %v723 = vpop.f32.mrf.mxu0
      %v724 = vadd.f32 %v651, %v723
      %725 = vmatmul.f32.gmra.mxu0 %v669
      %v726 = vpop.f32.mrf.mxu0
      %v727 = vadd.f32 %v656, %v726
      %728 = vdwg.mxu0
      %729 = vmatpush.msra.mxu0 0.0
      %730 = vmatpush.msra.mxu0 0.0
      %731 = vmatpush.msra.mxu0 0.0
      %732 = vmatpush.msra.mxu0 0.0
      %733 = vmatpush.msra.mxu0 0.0
      %734 = vmatpush.msra.mxu0 0.0
      %735 = vmatpush.msra.mxu0 0.0
      %736 = vmatpush.msra.mxu0 %v633
      %737 = vmatpush.msra.mxu0 %v630
      %738 = vmatpush.msra.mxu0 %v627
      %739 = vmatpush.msra.mxu0 %v624
      %740 = vmatpush.msra.mxu0 %v621
      %741 = vmatpush.msra.mxu0 %v618
      %742 = vmatpush.msra.mxu0 %v615
      %743 = vmatpush.msra.mxu0 %v612
      %744 = vmatpush.msra.mxu0 %v609
      %745 = vmatmul.f32.gmra.mxu0 %v660
      %v746 = vpop.f32.mrf.mxu0
      %v747 = vadd.f32 %v641, %v746
      %748 = vmatmul.f32.gmra.mxu0 %v663
      %v749 = vpop.f32.mrf.mxu0
      %v750 = vadd.f32 %v646, %v749
      %751 = vmatmul.f32.gmra.mxu0 %v666
      %v752 = vpop.f32.mrf.mxu0
      %v753 = vadd.f32 %v651, %v752
      %754 = vmatmul.f32.gmra.mxu0 %v669
      %v755 = vpop.f32.mrf.mxu0
      %v756 = vadd.f32 %v656, %v755
      %757 = vdwg.mxu0
      %v759 = vperm.slane %v441, 0
      %v760 = vperm.slane %v441, 1
      %v761 = vperm.slane %v441, 2
      %v765 = vmul.f32 %v689, %v759
      %v766 = vmul.f32 %v718, %v760
      %v767 = vmul.f32 %v747, %v761
      %v768 = vmul.f32 %v692, %v759
      %v769 = vmul.f32 %v721, %v760
      %v770 = vmul.f32 %v750, %v761
      %v771 = vmul.f32 %v695, %v759
      %v772 = vmul.f32 %v724, %v760
      %v773 = vmul.f32 %v753, %v761
      %v774 = vmul.f32 %v698, %v759
      %v775 = vmul.f32 %v727, %v760
      %v776 = vmul.f32 %v756, %v761
      %v777 = vadd.f32 %v765, %v766
      %v778 = vadd.f32 %v777, %v767
      %779 = vadd.xlane.f32.xlu0 %v778
      %v780 = vpop.xlane.xlu0 %779
      %v781 = vadd.f32 %v768, %v769
      %v782 = vadd.f32 %v781, %v770
      %783 = vadd.xlane.f32.xlu0 %v782
      %v784 = vpop.xlane.xlu0 %783
      %v785 = vadd.f32 %v771, %v772
      %v786 = vadd.f32 %v785, %v773
      %787 = vadd.xlane.f32.xlu0 %v786
      %v788 = vpop.xlane.xlu0 %787
      %v789 = vadd.f32 %v774, %v775
      %v790 = vadd.f32 %v789, %v776
      %791 = vadd.xlane.f32.xlu0 %v790
      %v792 = vpop.xlane.xlu0 %791
      %v793 = vmul.f32 %v765, %v765
      %v794 = vmul.f32 %v766, %v766
      %v795 = vmul.f32 %v767, %v767
      %v796 = vmul.f32 %v768, %v768
      %v797 = vmul.f32 %v769, %v769
      %v798 = vmul.f32 %v770, %v770
      %v799 = vmul.f32 %v771, %v771
      %v800 = vmul.f32 %v772, %v772
      %v801 = vmul.f32 %v773, %v773
      %v802 = vmul.f32 %v774, %v774
      %v803 = vmul.f32 %v775, %v775
      %v804 = vmul.f32 %v776, %v776
      %v805 = vadd.f32 %v793, %v794
      %v806 = vadd.f32 %v805, %v795
      %807 = vadd.xlane.f32.xlu0 %v806
      %v808 = vpop.xlane.xlu0 %807
      %v809 = vadd.f32 %v796, %v797
      %v810 = vadd.f32 %v809, %v798
      %811 = vadd.xlane.f32.xlu0 %v810
      %v812 = vpop.xlane.xlu0 %811
      %v813 = vadd.f32 %v799, %v800
      %v814 = vadd.f32 %v813, %v801
      %815 = vadd.xlane.f32.xlu0 %v814
      %v816 = vpop.xlane.xlu0 %815
      %v817 = vadd.f32 %v802, %v803
      %v818 = vadd.f32 %v817, %v804
      %819 = vadd.xlane.f32.xlu0 %v818
      %v820 = vpop.xlane.xlu0 %819
      %vm821 = vcmask 261120
      %v823 = vsel %vm821, %v442, 0
      %v826 = vsel %vm821, %v443, 0
      %v829 = vsel %vm821, %v444, 0
      %v832 = vsel %vm821, %v445, 0
      %834 = vmatpush.msra.mxu0 0.0
      %835 = vmatpush.msra.mxu0 0.0
      %836 = vmatpush.msra.mxu0 0.0
      %837 = vmatpush.msra.mxu0 0.0
      %838 = vmatpush.msra.mxu0 0.0
      %839 = vmatpush.msra.mxu0 0.0
      %840 = vmatpush.msra.mxu0 0.0
      %841 = vmatpush.msra.mxu0 0.0
      %842 = vmatpush.msra.mxu0 0.0
      %843 = vmatpush.msra.mxu0 0.0
      %844 = vmatpush.msra.mxu0 0.0
      %845 = vmatpush.msra.mxu0 0.0
      %846 = vmatpush.msra.mxu0 %v792
      %847 = vmatpush.msra.mxu0 %v788
      %848 = vmatpush.msra.mxu0 %v784
      %849 = vmatpush.msra.mxu0 %v780
      %850 = vmatmul.f32.gmra.mxu0 %v823
      %v851 = vpop.f32.mrf.mxu0
      %v852 = vadd.f32 0.0, %v851
      %853 = vmatmul.f32.gmra.mxu0 %v826
      %v854 = vpop.f32.mrf.mxu0
      %v855 = vadd.f32 0.0, %v854
      %856 = vmatmul.f32.gmra.mxu0 %v829
      %v857 = vpop.f32.mrf.mxu0
      %v858 = vadd.f32 0.0, %v857
      %859 = vmatmul.f32.gmra.mxu0 %v832
      %v860 = vpop.f32.mrf.mxu0
      %v861 = vadd.f32 0.0, %v860
      %862 = vdwg.mxu0
      %v863 = vmul.f32 %v852, 0.0009765625
      %v864 = vmul.f32 %v855, 0.0009765625
      %v865 = vmul.f32 %v858, 0.0009765625
      %v866 = vmul.f32 %v861, 0.0009765625
      %867 = vmatpush.msra.mxu0 0.0
      %868 = vmatpush.msra.mxu0 0.0
      %869 = vmatpush.msra.mxu0 0.0
      %870 = vmatpush.msra.mxu0 0.0
      %871 = vmatpush.msra.mxu0 0.0
      %872 = vmatpush.msra.mxu0 0.0
      %873 = vmatpush.msra.mxu0 0.0
      %874 = vmatpush.msra.mxu0 0.0
      %875 = vmatpush.msra.mxu0 0.0
      %876 = vmatpush.msra.mxu0 0.0
      %877 = vmatpush.msra.mxu0 0.0
      %878 = vmatpush.msra.mxu0 0.0
      %879 = vmatpush.msra.mxu0 %v820
      %880 = vmatpush.msra.mxu0 %v816
      %881 = vmatpush.msra.mxu0 %v812
      %882 = vmatpush.msra.mxu0 %v808
      %883 = vmatmul.f32.gmra.mxu0 %v823
      %v884 = vpop.f32.mrf.mxu0
      %v885 = vadd.f32 0.0, %v884
      %886 = vmatmul.f32.gmra.mxu0 %v826
      %v887 = vpop.f32.mrf.mxu0
      %v888 = vadd.f32 0.0, %v887
      %889 = vmatmul.f32.gmra.mxu0 %v829
      %v890 = vpop.f32.mrf.mxu0
      %v891 = vadd.f32 0.0, %v890
      %892 = vmatmul.f32.gmra.mxu0 %v832
      %v893 = vpop.f32.mrf.mxu0
      %v894 = vadd.f32 0.0, %v893
      %895 = vdwg.mxu0
      %v896 = vmul.f32 %v885, 0.0009765625
      %v897 = vmul.f32 %v888, 0.0009765625
      %v898 = vmul.f32 %v891, 0.0009765625
      %v899 = vmul.f32 %v894, 0.0009765625
      %v900 = vmul.f32 %v863, %v863
      %v901 = vmul.f32 %v864, %v864
      %v902 = vmul.f32 %v865, %v865
      %v903 = vmul.f32 %v866, %v866
      %v904 = vsub.f32 %v896, %v900
      %v905 = vsub.f32 %v897, %v901
      %v906 = vsub.f32 %v898, %v902
      %v907 = vsub.f32 %v899, %v903
      %v908 = vmax.f32 %v904, 0.0
      %v909 = vmax.f32 %v905, 0.0
      %v910 = vmax.f32 %v906, 0.0
      %v911 = vmax.f32 %v907, 0.0
      %v912 = vadd.f32 %v908, 1e-05
      %v913 = vadd.f32 %v909, 1e-05
      %v914 = vadd.f32 %v910, 1e-05
      %v915 = vadd.f32 %v911, 1e-05
      %v916 = vrsqrt.pop %v912
      %v917 = vmul.f32 %v916, %v912
      %v918 = vmul.f32 %v917, %v916
      %v919 = vmul.f32 0.5, %v918
      %v920 = vsub.f32 1.5, %v919
      %v921 = vmul.f32 %v916, %v920
      %vm922 = vweird.f32 %v912
      %vm923 = vweird.f32 %v916
      %vm924 = vmor %vm922, %vm923
      %v925 = vsel %vm924, %v916, %v921
      %v926 = vrsqrt.pop %v913
      %v927 = vmul.f32 %v926, %v913
      %v928 = vmul.f32 %v927, %v926
      %v929 = vmul.f32 0.5, %v928
      %v930 = vsub.f32 1.5, %v929
      %v931 = vmul.f32 %v926, %v930
      %vm932 = vweird.f32 %v913
      %vm933 = vweird.f32 %v926
      %vm934 = vmor %vm932, %vm933
      %v935 = vsel %vm934, %v926, %v931
      %v936 = vrsqrt.pop %v914
      %v937 = vmul.f32 %v936, %v914
      %v938 = vmul.f32 %v937, %v936
      %v939 = vmul.f32 0.5, %v938
      %v940 = vsub.f32 1.5, %v939
      %v941 = vmul.f32 %v936, %v940
      %vm942 = vweird.f32 %v914
      %vm943 = vweird.f32 %v936
      %vm944 = vmor %vm942, %vm943
      %v945 = vsel %vm944, %v936, %v941
      %v946 = vrsqrt.pop %v915
      %v947 = vmul.f32 %v946, %v915
      %v948 = vmul.f32 %v947, %v946
      %v949 = vmul.f32 0.5, %v948
      %v950 = vsub.f32 1.5, %v949
      %v951 = vmul.f32 %v946, %v950
      %vm952 = vweird.f32 %v915
      %vm953 = vweird.f32 %v946
      %vm954 = vmor %vm952, %vm953
      %v955 = vsel %vm954, %v946, %v951
      %v956 = vld [vmem:[%s3] sm:$0xff]
      %v957 = vld [vmem:[%s3 + $0x8] sm:$0xff]
      %v958 = vld [vmem:[%s3 + $0x10] sm:$0xff]
      %v959 = vld [vmem:[%s3 + $0x18] sm:$0xff]
      %v960 = vmul.f32 %v925, %v956
      %v961 = vmul.f32 %v935, %v957
      %v962 = vmul.f32 %v945, %v958
      %v963 = vmul.f32 %v955, %v959
      %v964 = vld [vmem:[%s4] sm:$0xff]
      %v965 = vld [vmem:[%s4 + $0x8] sm:$0xff]
      %v966 = vld [vmem:[%s4 + $0x10] sm:$0xff]
      %v967 = vld [vmem:[%s4 + $0x18] sm:$0xff]
      %v968 = vmul.f32 %v863, %v960
      %v969 = vmul.f32 %v864, %v961
      %v970 = vmul.f32 %v865, %v962
      %v971 = vmul.f32 %v866, %v963
      %v972 = vsub.f32 %v964, %v968
      %v973 = vsub.f32 %v965, %v969
      %v974 = vsub.f32 %v966, %v970
      %v975 = vsub.f32 %v967, %v971
      %977 = vset.pattern.permute.xlu0 0
      %978 = vperm.xlu0 %977, %v960
      %v979 = vpop.permute.xlu0 %978
      %982 = vset.pattern.permute.xlu0 0
      %983 = vperm.xlu0 %982, %v961
      %v984 = vpop.permute.xlu0 %983
      %987 = vset.pattern.permute.xlu0 0
      %988 = vperm.xlu0 %987, %v962
      %v989 = vpop.permute.xlu0 %988
      %992 = vset.pattern.permute.xlu0 0
      %993 = vperm.xlu0 %992, %v963
      %v994 = vpop.permute.xlu0 %993
      %v996 = vmul.f32 %v689, %v979
      %v997 = vmul.f32 %v718, %v979
      %v998 = vmul.f32 %v747, %v979
      %v999 = vmul.f32 %v692, %v984
      %v1000 = vmul.f32 %v721, %v984
      %v1001 = vmul.f32 %v750, %v984
      %v1002 = vmul.f32 %v695, %v989
      %v1003 = vmul.f32 %v724, %v989
      %v1004 = vmul.f32 %v753, %v989
      %v1005 = vmul.f32 %v698, %v994
      %v1006 = vmul.f32 %v727, %v994
      %v1007 = vmul.f32 %v756, %v994
      %1009 = vset.pattern.permute.xlu0 0
      %1010 = vperm.xlu0 %1009, %v972
      %v1011 = vpop.permute.xlu0 %1010
      %1014 = vset.pattern.permute.xlu0 0
      %1015 = vperm.xlu0 %1014, %v973
      %v1016 = vpop.permute.xlu0 %1015
      %1019 = vset.pattern.permute.xlu0 0
      %1020 = vperm.xlu0 %1019, %v974
      %v1021 = vpop.permute.xlu0 %1020
      %1024 = vset.pattern.permute.xlu0 0
      %1025 = vperm.xlu0 %1024, %v975
      %v1026 = vpop.permute.xlu0 %1025
      %v1028 = vadd.f32 %v996, %v1011
      %v1029 = vadd.f32 %v997, %v1011
      %v1030 = vadd.f32 %v998, %v1011
      %v1031 = vadd.f32 %v999, %v1016
      %v1032 = vadd.f32 %v1000, %v1016
      %v1033 = vadd.f32 %v1001, %v1016
      %v1034 = vadd.f32 %v1002, %v1021
      %v1035 = vadd.f32 %v1003, %v1021
      %v1036 = vadd.f32 %v1004, %v1021
      %v1037 = vadd.f32 %v1005, %v1026
      %v1038 = vadd.f32 %v1006, %v1026
      %v1039 = vadd.f32 %v1007, %v1026
      %v1040 = vxor.u32 %v1028, 2147483648
      %v1041 = vxor.u32 %v1029, 2147483648
      %v1042 = vxor.u32 %v1030, 2147483648
      %v1043 = vxor.u32 %v1031, 2147483648
      %v1044 = vxor.u32 %v1032, 2147483648
      %v1045 = vxor.u32 %v1033, 2147483648
      %v1046 = vxor.u32 %v1034, 2147483648
      %v1047 = vxor.u32 %v1035, 2147483648
      %v1048 = vxor.u32 %v1036, 2147483648
      %v1049 = vxor.u32 %v1037, 2147483648
      %v1050 = vxor.u32 %v1038, 2147483648
      %v1051 = vxor.u32 %v1039, 2147483648
      %v1052 = vmul.f32 %v1040, 1.442695
      %v1053 = vpow.pop %v1052
      %v1054 = vmul.f32 %v1041, 1.442695
      %v1055 = vpow.pop %v1054
      %v1056 = vmul.f32 %v1042, 1.442695
      %v1057 = vpow.pop %v1056
      %v1058 = vmul.f32 %v1043, 1.442695
      %v1059 = vpow.pop %v1058
      %v1060 = vmul.f32 %v1044, 1.442695
      %v1061 = vpow.pop %v1060
      %v1062 = vmul.f32 %v1045, 1.442695
      %v1063 = vpow.pop %v1062
      %v1064 = vmul.f32 %v1046, 1.442695
      %v1065 = vpow.pop %v1064
      %v1066 = vmul.f32 %v1047, 1.442695
      %v1067 = vpow.pop %v1066
      %v1068 = vmul.f32 %v1048, 1.442695
      %v1069 = vpow.pop %v1068
      %v1070 = vmul.f32 %v1049, 1.442695
      %v1071 = vpow.pop %v1070
      %v1072 = vmul.f32 %v1050, 1.442695
      %v1073 = vpow.pop %v1072
      %v1074 = vmul.f32 %v1051, 1.442695
      %v1075 = vpow.pop %v1074
      %v1076 = vadd.f32 %v1053, 1.0
      %v1077 = vadd.f32 %v1055, 1.0
      %v1078 = vadd.f32 %v1057, 1.0
      %v1079 = vadd.f32 %v1059, 1.0
      %v1080 = vadd.f32 %v1061, 1.0
      %v1081 = vadd.f32 %v1063, 1.0
      %v1082 = vadd.f32 %v1065, 1.0
      %v1083 = vadd.f32 %v1067, 1.0
      %v1084 = vadd.f32 %v1069, 1.0
      %v1085 = vadd.f32 %v1071, 1.0
      %v1086 = vadd.f32 %v1073, 1.0
      %v1087 = vadd.f32 %v1075, 1.0
      %v1088 = vrcp.pop %v1076
      %v1089 = vmul.f32 %v1076, %v1088
      %v1090 = vsub.f32 1.0, %v1089
      %v1091 = vmul.f32 %v1088, %v1090
      %v1092 = vadd.f32 %v1088, %v1091
      %vm1093 = vweird.f32 %v1076
      %vm1094 = vweird.f32 %v1088
      %vm1095 = vmor %vm1093, %vm1094
      %v1096 = vsel %vm1095, %v1088, %v1092
      %v1097 = vand.u32 2147483647, %v1076
      %vm1098 = vcmp.eq.f32.partialorder %v1097, 8.507059e+37
      %v1099 = vand.u32 %v1076, 2147483648
      %v1100 = vor.u32 1.1754944e-38, %v1099
      %v1101 = vsel %vm1098, %v1100, %v1096
      %v1102 = vmul.f32 1.0, %v1101
      %v1103 = vrcp.pop %v1077
      %v1104 = vmul.f32 %v1077, %v1103
      %v1105 = vsub.f32 1.0, %v1104
      %v1106 = vmul.f32 %v1103, %v1105
      %v1107 = vadd.f32 %v1103, %v1106
      %vm1108 = vweird.f32 %v1077
      %vm1109 = vweird.f32 %v1103
      %vm1110 = vmor %vm1108, %vm1109
      %v1111 = vsel %vm1110, %v1103, %v1107
      %v1112 = vand.u32 2147483647, %v1077
      %vm1113 = vcmp.eq.f32.partialorder %v1112, 8.507059e+37
      %v1114 = vand.u32 %v1077, 2147483648
      %v1115 = vor.u32 1.1754944e-38, %v1114
      %v1116 = vsel %vm1113, %v1115, %v1111
      %v1117 = vmul.f32 1.0, %v1116
      %v1118 = vrcp.pop %v1078
      %v1119 = vmul.f32 %v1078, %v1118
      %v1120 = vsub.f32 1.0, %v1119
      %v1121 = vmul.f32 %v1118, %v1120
      %v1122 = vadd.f32 %v1118, %v1121
      %vm1123 = vweird.f32 %v1078
      %vm1124 = vweird.f32 %v1118
      %vm1125 = vmor %vm1123, %vm1124
      %v1126 = vsel %vm1125, %v1118, %v1122
      %v1127 = vand.u32 2147483647, %v1078
      %vm1128 = vcmp.eq.f32.partialorder %v1127, 8.507059e+37
      %v1129 = vand.u32 %v1078, 2147483648
      %v1130 = vor.u32 1.1754944e-38, %v1129
      %v1131 = vsel %vm1128, %v1130, %v1126
      %v1132 = vmul.f32 1.0, %v1131
      %v1133 = vrcp.pop %v1079
      %v1134 = vmul.f32 %v1079, %v1133
      %v1135 = vsub.f32 1.0, %v1134
      %v1136 = vmul.f32 %v1133, %v1135
      %v1137 = vadd.f32 %v1133, %v1136
      %vm1138 = vweird.f32 %v1079
      %vm1139 = vweird.f32 %v1133
      %vm1140 = vmor %vm1138, %vm1139
      %v1141 = vsel %vm1140, %v1133, %v1137
      %v1142 = vand.u32 2147483647, %v1079
      %vm1143 = vcmp.eq.f32.partialorder %v1142, 8.507059e+37
      %v1144 = vand.u32 %v1079, 2147483648
      %v1145 = vor.u32 1.1754944e-38, %v1144
      %v1146 = vsel %vm1143, %v1145, %v1141
      %v1147 = vmul.f32 1.0, %v1146
      %v1148 = vrcp.pop %v1080
      %v1149 = vmul.f32 %v1080, %v1148
      %v1150 = vsub.f32 1.0, %v1149
      %v1151 = vmul.f32 %v1148, %v1150
      %v1152 = vadd.f32 %v1148, %v1151
      %vm1153 = vweird.f32 %v1080
      %vm1154 = vweird.f32 %v1148
      %vm1155 = vmor %vm1153, %vm1154
      %v1156 = vsel %vm1155, %v1148, %v1152
      %v1157 = vand.u32 2147483647, %v1080
      %vm1158 = vcmp.eq.f32.partialorder %v1157, 8.507059e+37
      %v1159 = vand.u32 %v1080, 2147483648
      %v1160 = vor.u32 1.1754944e-38, %v1159
      %v1161 = vsel %vm1158, %v1160, %v1156
      %v1162 = vmul.f32 1.0, %v1161
      %v1163 = vrcp.pop %v1081
      %v1164 = vmul.f32 %v1081, %v1163
      %v1165 = vsub.f32 1.0, %v1164
      %v1166 = vmul.f32 %v1163, %v1165
      %v1167 = vadd.f32 %v1163, %v1166
      %vm1168 = vweird.f32 %v1081
      %vm1169 = vweird.f32 %v1163
      %vm1170 = vmor %vm1168, %vm1169
      %v1171 = vsel %vm1170, %v1163, %v1167
      %v1172 = vand.u32 2147483647, %v1081
      %vm1173 = vcmp.eq.f32.partialorder %v1172, 8.507059e+37
      %v1174 = vand.u32 %v1081, 2147483648
      %v1175 = vor.u32 1.1754944e-38, %v1174
      %v1176 = vsel %vm1173, %v1175, %v1171
      %v1177 = vmul.f32 1.0, %v1176
      %v1178 = vrcp.pop %v1082
      %v1179 = vmul.f32 %v1082, %v1178
      %v1180 = vsub.f32 1.0, %v1179
      %v1181 = vmul.f32 %v1178, %v1180
      %v1182 = vadd.f32 %v1178, %v1181
      %vm1183 = vweird.f32 %v1082
      %vm1184 = vweird.f32 %v1178
      %vm1185 = vmor %vm1183, %vm1184
      %v1186 = vsel %vm1185, %v1178, %v1182
      %v1187 = vand.u32 2147483647, %v1082
      %vm1188 = vcmp.eq.f32.partialorder %v1187, 8.507059e+37
      %v1189 = vand.u32 %v1082, 2147483648
      %v1190 = vor.u32 1.1754944e-38, %v1189
      %v1191 = vsel %vm1188, %v1190, %v1186
      %v1192 = vmul.f32 1.0, %v1191
      %v1193 = vrcp.pop %v1083
      %v1194 = vmul.f32 %v1083, %v1193
      %v1195 = vsub.f32 1.0, %v1194
      %v1196 = vmul.f32 %v1193, %v1195
      %v1197 = vadd.f32 %v1193, %v1196
      %vm1198 = vweird.f32 %v1083
      %vm1199 = vweird.f32 %v1193
      %vm1200 = vmor %vm1198, %vm1199
      %v1201 = vsel %vm1200, %v1193, %v1197
      %v1202 = vand.u32 2147483647, %v1083
      %vm1203 = vcmp.eq.f32.partialorder %v1202, 8.507059e+37
      %v1204 = vand.u32 %v1083, 2147483648
      %v1205 = vor.u32 1.1754944e-38, %v1204
      %v1206 = vsel %vm1203, %v1205, %v1201
      %v1207 = vmul.f32 1.0, %v1206
      %v1208 = vrcp.pop %v1084
      %v1209 = vmul.f32 %v1084, %v1208
      %v1210 = vsub.f32 1.0, %v1209
      %v1211 = vmul.f32 %v1208, %v1210
      %v1212 = vadd.f32 %v1208, %v1211
      %vm1213 = vweird.f32 %v1084
      %vm1214 = vweird.f32 %v1208
      %vm1215 = vmor %vm1213, %vm1214
      %v1216 = vsel %vm1215, %v1208, %v1212
      %v1217 = vand.u32 2147483647, %v1084
      %vm1218 = vcmp.eq.f32.partialorder %v1217, 8.507059e+37
      %v1219 = vand.u32 %v1084, 2147483648
      %v1220 = vor.u32 1.1754944e-38, %v1219
      %v1221 = vsel %vm1218, %v1220, %v1216
      %v1222 = vmul.f32 1.0, %v1221
      %v1223 = vrcp.pop %v1085
      %v1224 = vmul.f32 %v1085, %v1223
      %v1225 = vsub.f32 1.0, %v1224
      %v1226 = vmul.f32 %v1223, %v1225
      %v1227 = vadd.f32 %v1223, %v1226
      %vm1228 = vweird.f32 %v1085
      %vm1229 = vweird.f32 %v1223
      %vm1230 = vmor %vm1228, %vm1229
      %v1231 = vsel %vm1230, %v1223, %v1227
      %v1232 = vand.u32 2147483647, %v1085
      %vm1233 = vcmp.eq.f32.partialorder %v1232, 8.507059e+37
      %v1234 = vand.u32 %v1085, 2147483648
      %v1235 = vor.u32 1.1754944e-38, %v1234
      %v1236 = vsel %vm1233, %v1235, %v1231
      %v1237 = vmul.f32 1.0, %v1236
      %v1238 = vrcp.pop %v1086
      %v1239 = vmul.f32 %v1086, %v1238
      %v1240 = vsub.f32 1.0, %v1239
      %v1241 = vmul.f32 %v1238, %v1240
      %v1242 = vadd.f32 %v1238, %v1241
      %vm1243 = vweird.f32 %v1086
      %vm1244 = vweird.f32 %v1238
      %vm1245 = vmor %vm1243, %vm1244
      %v1246 = vsel %vm1245, %v1238, %v1242
      %v1247 = vand.u32 2147483647, %v1086
      %vm1248 = vcmp.eq.f32.partialorder %v1247, 8.507059e+37
      %v1249 = vand.u32 %v1086, 2147483648
      %v1250 = vor.u32 1.1754944e-38, %v1249
      %v1251 = vsel %vm1248, %v1250, %v1246
      %v1252 = vmul.f32 1.0, %v1251
      %v1253 = vrcp.pop %v1087
      %v1254 = vmul.f32 %v1087, %v1253
      %v1255 = vsub.f32 1.0, %v1254
      %v1256 = vmul.f32 %v1253, %v1255
      %v1257 = vadd.f32 %v1253, %v1256
      %vm1258 = vweird.f32 %v1087
      %vm1259 = vweird.f32 %v1253
      %vm1260 = vmor %vm1258, %vm1259
      %v1261 = vsel %vm1260, %v1253, %v1257
      %v1262 = vand.u32 2147483647, %v1087
      %vm1263 = vcmp.eq.f32.partialorder %v1262, 8.507059e+37
      %v1264 = vand.u32 %v1087, 2147483648
      %v1265 = vor.u32 1.1754944e-38, %v1264
      %v1266 = vsel %vm1263, %v1265, %v1261
      %v1267 = vmul.f32 1.0, %v1266
      %v1268 = vmul.f32 %v1028, %v1102
      %v1269 = vmul.f32 %v1029, %v1117
      %v1270 = vmul.f32 %v1030, %v1132
      %v1271 = vmul.f32 %v1031, %v1147
      %v1272 = vmul.f32 %v1032, %v1162
      %v1273 = vmul.f32 %v1033, %v1177
      %v1274 = vmul.f32 %v1034, %v1192
      %v1275 = vmul.f32 %v1035, %v1207
      %v1276 = vmul.f32 %v1036, %v1222
      %v1277 = vmul.f32 %v1037, %v1237
      %v1278 = vmul.f32 %v1038, %v1252
      %v1279 = vmul.f32 %v1039, %v1267
      %v1280 = vmul.f32 %v1268, %v759
      %v1281 = vmul.f32 %v1269, %v760
      %v1282 = vmul.f32 %v1270, %v761
      %v1283 = vmul.f32 %v1271, %v759
      %v1284 = vmul.f32 %v1272, %v760
      %v1285 = vmul.f32 %v1273, %v761
      %v1286 = vmul.f32 %v1274, %v759
      %v1287 = vmul.f32 %v1275, %v760
      %v1288 = vmul.f32 %v1276, %v761
      %v1289 = vmul.f32 %v1277, %v759
      %v1290 = vmul.f32 %v1278, %v760
      %v1291 = vmul.f32 %v1279, %v761
      %1292 = vst [vmem:[#allocation3] sm:$0xff] 0.0
      %1293 = vst [vmem:[#allocation3 + $0x8] sm:$0xff] 0.0
      %1294 = vst [vmem:[#allocation3 + $0x10] sm:$0xff] 0.0
      %1295 = vst [vmem:[#allocation3 + $0x18] sm:$0xff] 0.0
      %1296 = vst [vmem:[#allocation3 + $0x20] sm:$0xff] 0.0
      %1297 = vst [vmem:[#allocation3 + $0x28] sm:$0xff] 0.0
      %1298 = vst [vmem:[#allocation3 + $0x30] sm:$0xff] 0.0
      %1299 = vst [vmem:[#allocation3 + $0x38] sm:$0xff] 0.0
      %1300 = vst [vmem:[#allocation3 + $0x40] sm:$0xff] 0.0
      %1301 = vst [vmem:[#allocation3 + $0x48] sm:$0xff] 0.0
      %1302 = vst [vmem:[#allocation3 + $0x50] sm:$0xff] 0.0
      %1303 = vst [vmem:[#allocation3 + $0x58] sm:$0xff] 0.0
      %1304 = vst [vmem:[#allocation3 + $0x60] sm:$0xff] 0.0
      %1305 = vst [vmem:[#allocation3 + $0x68] sm:$0xff] 0.0
      %1306 = vst [vmem:[#allocation3 + $0x70] sm:$0xff] 0.0
      %1307 = vst [vmem:[#allocation3 + $0x78] sm:$0xff] 0.0
      %1308 = vst [vmem:[#allocation3 + $0x80] sm:$0xff] 0.0
      %1309 = vst [vmem:[#allocation3 + $0x88] sm:$0xff] 0.0
      %1310 = vst [vmem:[#allocation3 + $0x90] sm:$0xff] 0.0
      %1311 = vst [vmem:[#allocation3 + $0x98] sm:$0xff] 0.0
      %1312 = vst [vmem:[#allocation3 + $0x8] sm:$0xff] %v1280
      %1313 = vst [vmem:[#allocation3 + $0x10] sm:$0xff] %v1281
      %1314 = vst [vmem:[#allocation3 + $0x18] sm:$0xff] %v1282
      %1315 = vst [vmem:[#allocation3 + $0x30] sm:$0xff] %v1283
      %1316 = vst [vmem:[#allocation3 + $0x38] sm:$0xff] %v1284
      %1317 = vst [vmem:[#allocation3 + $0x40] sm:$0xff] %v1285
      %1318 = vst [vmem:[#allocation3 + $0x58] sm:$0xff] %v1286
      %1319 = vst [vmem:[#allocation3 + $0x60] sm:$0xff] %v1287
      %1320 = vst [vmem:[#allocation3 + $0x68] sm:$0xff] %v1288
      %1321 = vst [vmem:[#allocation3 + $0x80] sm:$0xff] %v1289
      %1322 = vst [vmem:[#allocation3 + $0x88] sm:$0xff] %v1290
      %1323 = vst [vmem:[#allocation3 + $0x90] sm:$0xff] %v1291
      %v1324 = vld [vmem:[#allocation3] sm:$0xff]
      %v1325 = vld [vmem:[#allocation3 + $0x8] sm:$0xff]
      %v1326 = vld [vmem:[#allocation3 + $0x10] sm:$0xff]
      %v1327 = vld [vmem:[#allocation3 + $0x18] sm:$0xff]
      %v1328 = vld [vmem:[#allocation3 + $0x20] sm:$0xff]
      %v1329 = vld [vmem:[#allocation3 + $0x28] sm:$0xff]
      %v1330 = vld [vmem:[#allocation3 + $0x30] sm:$0xff]
      %v1331 = vld [vmem:[#allocation3 + $0x38] sm:$0xff]
      %v1332 = vld [vmem:[#allocation3 + $0x40] sm:$0xff]
      %v1333 = vld [vmem:[#allocation3 + $0x48] sm:$0xff]
      %v1334 = vld [vmem:[#allocation3 + $0x50] sm:$0xff]
      %v1335 = vld [vmem:[#allocation3 + $0x58] sm:$0xff]
      %v1336 = vld [vmem:[#allocation3 + $0x60] sm:$0xff]
      %v1337 = vld [vmem:[#allocation3 + $0x68] sm:$0xff]
      %v1338 = vld [vmem:[#allocation3 + $0x70] sm:$0xff]
      %v1339 = vld [vmem:[#allocation3 + $0x78] sm:$0xff]
      %v1340 = vld [vmem:[#allocation3 + $0x80] sm:$0xff]
      %v1341 = vld [vmem:[#allocation3 + $0x88] sm:$0xff]
      %v1342 = vld [vmem:[#allocation3 + $0x90] sm:$0xff]
      %v1343 = vld [vmem:[#allocation3 + $0x98] sm:$0xff]
      %1360 = vrot.lane.b32.xlu0 %v1324, 19
      %v1361 = vpop.permute.xlu0 %1360
      %1362 = vrot.lane.b32.xlu0 %v1325, 19
      %v1363 = vpop.permute.xlu0 %1362
      %1364 = vrot.lane.b32.xlu0 %v1326, 19
      %v1365 = vpop.permute.xlu0 %1364
      %1366 = vrot.lane.b32.xlu0 %v1327, 19
      %v1367 = vpop.permute.xlu0 %1366
      %1368 = vrot.lane.b32.xlu0 %v1329, 19
      %v1369 = vpop.permute.xlu0 %1368
      %1370 = vrot.lane.b32.xlu0 %v1330, 19
      %v1371 = vpop.permute.xlu0 %1370
      %1372 = vrot.lane.b32.xlu0 %v1331, 19
      %v1373 = vpop.permute.xlu0 %1372
      %1374 = vrot.lane.b32.xlu0 %v1332, 19
      %v1375 = vpop.permute.xlu0 %1374
      %1376 = vrot.lane.b32.xlu0 %v1334, 19
      %v1377 = vpop.permute.xlu0 %1376
      %1378 = vrot.lane.b32.xlu0 %v1335, 19
      %v1379 = vpop.permute.xlu0 %1378
      %1380 = vrot.lane.b32.xlu0 %v1336, 19
      %v1381 = vpop.permute.xlu0 %1380
      %1382 = vrot.lane.b32.xlu0 %v1337, 19
      %v1383 = vpop.permute.xlu0 %1382
      %1384 = vrot.lane.b32.xlu0 %v1339, 19
      %v1385 = vpop.permute.xlu0 %1384
      %1386 = vrot.lane.b32.xlu0 %v1340, 19
      %v1387 = vpop.permute.xlu0 %1386
      %1388 = vrot.lane.b32.xlu0 %v1341, 19
      %v1389 = vpop.permute.xlu0 %1388
      %1390 = vrot.lane.b32.xlu0 %v1342, 19
      %v1391 = vpop.permute.xlu0 %1390
      %v1392 = vsel %vm463, %v1361, %v1363
      %v1393 = vsel %vm463, %v1363, %v1365
      %v1394 = vsel %vm463, %v1365, %v1367
      %v1395 = vsel %vm463, %v1369, %v1371
      %v1396 = vsel %vm463, %v1371, %v1373
      %v1397 = vsel %vm463, %v1373, %v1375
      %v1398 = vsel %vm463, %v1377, %v1379
      %v1399 = vsel %vm463, %v1379, %v1381
      %v1400 = vsel %vm463, %v1381, %v1383
      %v1401 = vsel %vm463, %v1385, %v1387
      %v1402 = vsel %vm463, %v1387, %v1389
      %v1403 = vsel %vm463, %v1389, %v1391
      %1416 = vst [vmem:[#allocation2] sm:$0xff] %v1392
      %1417 = vst [vmem:[#allocation2 + $0x8] sm:$0xff] %v1393
      %1418 = vst [vmem:[#allocation2 + $0x10] sm:$0xff] %v1394
      %1419 = vst [vmem:[#allocation2 + $0x18] sm:$0xff] %v1395
      %1420 = vst [vmem:[#allocation2 + $0x20] sm:$0xff] %v1396
      %1421 = vst [vmem:[#allocation2 + $0x28] sm:$0xff] %v1397
      %1422 = vst [vmem:[#allocation2 + $0x30] sm:$0xff] %v1398
      %1423 = vst [vmem:[#allocation2 + $0x38] sm:$0xff] %v1399
      %1424 = vst [vmem:[#allocation2 + $0x40] sm:$0xff] %v1400
      %1425 = vst [vmem:[#allocation2 + $0x48] sm:$0xff] %v1401
      %1426 = vst [vmem:[#allocation2 + $0x50] sm:$0xff] %v1402
      %1427 = vst [vmem:[#allocation2 + $0x58] sm:$0xff] %v1403
      %1428 = vrot.lane.b32.xlu0 %v1324, 18
      %v1429 = vpop.permute.xlu0 %1428
      %1430 = vrot.lane.b32.xlu0 %v1325, 18
      %v1431 = vpop.permute.xlu0 %1430
      %1432 = vrot.lane.b32.xlu0 %v1326, 18
      %v1433 = vpop.permute.xlu0 %1432
      %1434 = vrot.lane.b32.xlu0 %v1327, 18
      %v1435 = vpop.permute.xlu0 %1434
      %1436 = vrot.lane.b32.xlu0 %v1329, 18
      %v1437 = vpop.permute.xlu0 %1436
      %1438 = vrot.lane.b32.xlu0 %v1330, 18
      %v1439 = vpop.permute.xlu0 %1438
      %1440 = vrot.lane.b32.xlu0 %v1331, 18
      %v1441 = vpop.permute.xlu0 %1440
      %1442 = vrot.lane.b32.xlu0 %v1332, 18
      %v1443 = vpop.permute.xlu0 %1442
      %1444 = vrot.lane.b32.xlu0 %v1334, 18
      %v1445 = vpop.permute.xlu0 %1444
      %1446 = vrot.lane.b32.xlu0 %v1335, 18
      %v1447 = vpop.permute.xlu0 %1446
      %1448 = vrot.lane.b32.xlu0 %v1336, 18
      %v1449 = vpop.permute.xlu0 %1448
      %1450 = vrot.lane.b32.xlu0 %v1337, 18
      %v1451 = vpop.permute.xlu0 %1450
      %1452 = vrot.lane.b32.xlu0 %v1339, 18
      %v1453 = vpop.permute.xlu0 %1452
      %1454 = vrot.lane.b32.xlu0 %v1340, 18
      %v1455 = vpop.permute.xlu0 %1454
      %1456 = vrot.lane.b32.xlu0 %v1341, 18
      %v1457 = vpop.permute.xlu0 %1456
      %1458 = vrot.lane.b32.xlu0 %v1342, 18
      %v1459 = vpop.permute.xlu0 %1458
      %v1460 = vsel %vm481, %v1429, %v1431
      %v1461 = vsel %vm481, %v1431, %v1433
      %v1462 = vsel %vm481, %v1433, %v1435
      %v1463 = vsel %vm481, %v1437, %v1439
      %v1464 = vsel %vm481, %v1439, %v1441
      %v1465 = vsel %vm481, %v1441, %v1443
      %v1466 = vsel %vm481, %v1445, %v1447
      %v1467 = vsel %vm481, %v1447, %v1449
      %v1468 = vsel %vm481, %v1449, %v1451
      %v1469 = vsel %vm481, %v1453, %v1455
      %v1470 = vsel %vm481, %v1455, %v1457
      %v1471 = vsel %vm481, %v1457, %v1459
      %1484 = vst [vmem:[#allocation2 + $0x60] sm:$0xff] %v1460
      %1485 = vst [vmem:[#allocation2 + $0x68] sm:$0xff] %v1461
      %1486 = vst [vmem:[#allocation2 + $0x70] sm:$0xff] %v1462
      %1487 = vst [vmem:[#allocation2 + $0x78] sm:$0xff] %v1463
      %1488 = vst [vmem:[#allocation2 + $0x80] sm:$0xff] %v1464
      %1489 = vst [vmem:[#allocation2 + $0x88] sm:$0xff] %v1465
      %1490 = vst [vmem:[#allocation2 + $0x90] sm:$0xff] %v1466
      %1491 = vst [vmem:[#allocation2 + $0x98] sm:$0xff] %v1467
      %1492 = vst [vmem:[#allocation2 + $0xa0] sm:$0xff] %v1468
      %1493 = vst [vmem:[#allocation2 + $0xa8] sm:$0xff] %v1469
      %1494 = vst [vmem:[#allocation2 + $0xb0] sm:$0xff] %v1470
      %1495 = vst [vmem:[#allocation2 + $0xb8] sm:$0xff] %v1471
      %1496 = vrot.lane.b32.xlu0 %v1324, 17
      %v1497 = vpop.permute.xlu0 %1496
      %1498 = vrot.lane.b32.xlu0 %v1325, 17
      %v1499 = vpop.permute.xlu0 %1498
      %1500 = vrot.lane.b32.xlu0 %v1326, 17
      %v1501 = vpop.permute.xlu0 %1500
      %1502 = vrot.lane.b32.xlu0 %v1327, 17
      %v1503 = vpop.permute.xlu0 %1502
      %1504 = vrot.lane.b32.xlu0 %v1329, 17
      %v1505 = vpop.permute.xlu0 %1504
      %1506 = vrot.lane.b32.xlu0 %v1330, 17
      %v1507 = vpop.permute.xlu0 %1506
      %1508 = vrot.lane.b32.xlu0 %v1331, 17
      %v1509 = vpop.permute.xlu0 %1508
      %1510 = vrot.lane.b32.xlu0 %v1332, 17
      %v1511 = vpop.permute.xlu0 %1510
      %1512 = vrot.lane.b32.xlu0 %v1334, 17
      %v1513 = vpop.permute.xlu0 %1512
      %1514 = vrot.lane.b32.xlu0 %v1335, 17
      %v1515 = vpop.permute.xlu0 %1514
      %1516 = vrot.lane.b32.xlu0 %v1336, 17
      %v1517 = vpop.permute.xlu0 %1516
      %1518 = vrot.lane.b32.xlu0 %v1337, 17
      %v1519 = vpop.permute.xlu0 %1518
      %1520 = vrot.lane.b32.xlu0 %v1339, 17
      %v1521 = vpop.permute.xlu0 %1520
      %1522 = vrot.lane.b32.xlu0 %v1340, 17
      %v1523 = vpop.permute.xlu0 %1522
      %1524 = vrot.lane.b32.xlu0 %v1341, 17
      %v1525 = vpop.permute.xlu0 %1524
      %1526 = vrot.lane.b32.xlu0 %v1342, 17
      %v1527 = vpop.permute.xlu0 %1526
      %v1528 = vsel %vm499, %v1497, %v1499
      %v1529 = vsel %vm499, %v1499, %v1501
      %v1530 = vsel %vm499, %v1501, %v1503
      %v1531 = vsel %vm499, %v1505, %v1507
      %v1532 = vsel %vm499, %v1507, %v1509
      %v1533 = vsel %vm499, %v1509, %v1511
      %v1534 = vsel %vm499, %v1513, %v1515
      %v1535 = vsel %vm499, %v1515, %v1517
      %v1536 = vsel %vm499, %v1517, %v1519
      %v1537 = vsel %vm499, %v1521, %v1523
      %v1538 = vsel %vm499, %v1523, %v1525
      %v1539 = vsel %vm499, %v1525, %v1527
      %1552 = vst [vmem:[#allocation2 + $0xc0] sm:$0xff] %v1528
      %1553 = vst [vmem:[#allocation2 + $0xc8] sm:$0xff] %v1529
      %1554 = vst [vmem:[#allocation2 + $0xd0] sm:$0xff] %v1530
      %1555 = vst [vmem:[#allocation2 + $0xd8] sm:$0xff] %v1531
      %1556 = vst [vmem:[#allocation2 + $0xe0] sm:$0xff] %v1532
      %1557 = vst [vmem:[#allocation2 + $0xe8] sm:$0xff] %v1533
      %1558 = vst [vmem:[#allocation2 + $0xf0] sm:$0xff] %v1534
      %1559 = vst [vmem:[#allocation2 + $0xf8] sm:$0xff] %v1535
      %1560 = vst [vmem:[#allocation2 + $0x100] sm:$0xff] %v1536
      %1561 = vst [vmem:[#allocation2 + $0x108] sm:$0xff] %v1537
      %1562 = vst [vmem:[#allocation2 + $0x110] sm:$0xff] %v1538
      %1563 = vst [vmem:[#allocation2 + $0x118] sm:$0xff] %v1539
      %1564 = vrot.lane.b32.xlu0 %v1324, 1
      %v1565 = vpop.permute.xlu0 %1564
      %1566 = vrot.lane.b32.xlu0 %v1325, 1
      %v1567 = vpop.permute.xlu0 %1566
      %1568 = vrot.lane.b32.xlu0 %v1326, 1
      %v1569 = vpop.permute.xlu0 %1568
      %1570 = vrot.lane.b32.xlu0 %v1327, 1
      %v1571 = vpop.permute.xlu0 %1570
      %1572 = vrot.lane.b32.xlu0 %v1329, 1
      %v1573 = vpop.permute.xlu0 %1572
      %1574 = vrot.lane.b32.xlu0 %v1330, 1
      %v1575 = vpop.permute.xlu0 %1574
      %1576 = vrot.lane.b32.xlu0 %v1331, 1
      %v1577 = vpop.permute.xlu0 %1576
      %1578 = vrot.lane.b32.xlu0 %v1332, 1
      %v1579 = vpop.permute.xlu0 %1578
      %1580 = vrot.lane.b32.xlu0 %v1334, 1
      %v1581 = vpop.permute.xlu0 %1580
      %1582 = vrot.lane.b32.xlu0 %v1335, 1
      %v1583 = vpop.permute.xlu0 %1582
      %1584 = vrot.lane.b32.xlu0 %v1336, 1
      %v1585 = vpop.permute.xlu0 %1584
      %1586 = vrot.lane.b32.xlu0 %v1337, 1
      %v1587 = vpop.permute.xlu0 %1586
      %1588 = vrot.lane.b32.xlu0 %v1339, 1
      %v1589 = vpop.permute.xlu0 %1588
      %1590 = vrot.lane.b32.xlu0 %v1340, 1
      %v1591 = vpop.permute.xlu0 %1590
      %1592 = vrot.lane.b32.xlu0 %v1341, 1
      %v1593 = vpop.permute.xlu0 %1592
      %1594 = vrot.lane.b32.xlu0 %v1342, 1
      %v1595 = vpop.permute.xlu0 %1594
      %v1596 = vsel %vm517, %v1565, %v1567
      %v1597 = vsel %vm517, %v1567, %v1569
      %v1598 = vsel %vm517, %v1569, %v1571
      %v1599 = vsel %vm517, %v1573, %v1575
      %v1600 = vsel %vm517, %v1575, %v1577
      %v1601 = vsel %vm517, %v1577, %v1579
      %v1602 = vsel %vm517, %v1581, %v1583
      %v1603 = vsel %vm517, %v1583, %v1585
      %v1604 = vsel %vm517, %v1585, %v1587
      %v1605 = vsel %vm517, %v1589, %v1591
      %v1606 = vsel %vm517, %v1591, %v1593
      %v1607 = vsel %vm517, %v1593, %v1595
      %1620 = vst [vmem:[#allocation2 + $0x120] sm:$0xff] %v1596
      %1621 = vst [vmem:[#allocation2 + $0x128] sm:$0xff] %v1597
      %1622 = vst [vmem:[#allocation2 + $0x130] sm:$0xff] %v1598
      %1623 = vst [vmem:[#allocation2 + $0x138] sm:$0xff] %v1599
      %1624 = vst [vmem:[#allocation2 + $0x140] sm:$0xff] %v1600
      %1625 = vst [vmem:[#allocation2 + $0x148] sm:$0xff] %v1601
      %1626 = vst [vmem:[#allocation2 + $0x150] sm:$0xff] %v1602
      %1627 = vst [vmem:[#allocation2 + $0x158] sm:$0xff] %v1603
      %1628 = vst [vmem:[#allocation2 + $0x160] sm:$0xff] %v1604
      %1629 = vst [vmem:[#allocation2 + $0x168] sm:$0xff] %v1605
      %1630 = vst [vmem:[#allocation2 + $0x170] sm:$0xff] %v1606
      %1631 = vst [vmem:[#allocation2 + $0x178] sm:$0xff] %v1607
      %1632 = vst [vmem:[#allocation2 + $0x180] sm:$0xff] %v1325
      %1633 = vst [vmem:[#allocation2 + $0x188] sm:$0xff] %v1326
      %1634 = vst [vmem:[#allocation2 + $0x190] sm:$0xff] %v1327
      %1635 = vst [vmem:[#allocation2 + $0x198] sm:$0xff] %v1330
      %1636 = vst [vmem:[#allocation2 + $0x1a0] sm:$0xff] %v1331
      %1637 = vst [vmem:[#allocation2 + $0x1a8] sm:$0xff] %v1332
      %1638 = vst [vmem:[#allocation2 + $0x1b0] sm:$0xff] %v1335
      %1639 = vst [vmem:[#allocation2 + $0x1b8] sm:$0xff] %v1336
      %1640 = vst [vmem:[#allocation2 + $0x1c0] sm:$0xff] %v1337
      %1641 = vst [vmem:[#allocation2 + $0x1c8] sm:$0xff] %v1340
      %1642 = vst [vmem:[#allocation2 + $0x1d0] sm:$0xff] %v1341
      %1643 = vst [vmem:[#allocation2 + $0x1d8] sm:$0xff] %v1342
      %1648 = vrot.lane.b32.xlu0 %v1325, 127
      %v1649 = vpop.permute.xlu0 %1648
      %1650 = vrot.lane.b32.xlu0 %v1326, 127
      %v1651 = vpop.permute.xlu0 %1650
      %1652 = vrot.lane.b32.xlu0 %v1327, 127
      %v1653 = vpop.permute.xlu0 %1652
      %1654 = vrot.lane.b32.xlu0 %v1328, 127
      %v1655 = vpop.permute.xlu0 %1654
      %1656 = vrot.lane.b32.xlu0 %v1330, 127
      %v1657 = vpop.permute.xlu0 %1656
      %1658 = vrot.lane.b32.xlu0 %v1331, 127
      %v1659 = vpop.permute.xlu0 %1658
      %1660 = vrot.lane.b32.xlu0 %v1332, 127
      %v1661 = vpop.permute.xlu0 %1660
      %1662 = vrot.lane.b32.xlu0 %v1333, 127
      %v1663 = vpop.permute.xlu0 %1662
      %1664 = vrot.lane.b32.xlu0 %v1335, 127
      %v1665 = vpop.permute.xlu0 %1664
      %1666 = vrot.lane.b32.xlu0 %v1336, 127
      %v1667 = vpop.permute.xlu0 %1666
      %1668 = vrot.lane.b32.xlu0 %v1337, 127
      %v1669 = vpop.permute.xlu0 %1668
      %1670 = vrot.lane.b32.xlu0 %v1338, 127
      %v1671 = vpop.permute.xlu0 %1670
      %1672 = vrot.lane.b32.xlu0 %v1340, 127
      %v1673 = vpop.permute.xlu0 %1672
      %1674 = vrot.lane.b32.xlu0 %v1341, 127
      %v1675 = vpop.permute.xlu0 %1674
      %1676 = vrot.lane.b32.xlu0 %v1342, 127
      %v1677 = vpop.permute.xlu0 %1676
      %1678 = vrot.lane.b32.xlu0 %v1343, 127
      %v1679 = vpop.permute.xlu0 %1678
      %v1680 = vsel %vm539, %v1649, %v1651
      %v1681 = vsel %vm539, %v1651, %v1653
      %v1682 = vsel %vm539, %v1653, %v1655
      %v1683 = vsel %vm539, %v1657, %v1659
      %v1684 = vsel %vm539, %v1659, %v1661
      %v1685 = vsel %vm539, %v1661, %v1663
      %v1686 = vsel %vm539, %v1665, %v1667
      %v1687 = vsel %vm539, %v1667, %v1669
      %v1688 = vsel %vm539, %v1669, %v1671
      %v1689 = vsel %vm539, %v1673, %v1675
      %v1690 = vsel %vm539, %v1675, %v1677
      %v1691 = vsel %vm539, %v1677, %v1679
      %1704 = vst [vmem:[#allocation2 + $0x1e0] sm:$0xff] %v1680
      %1705 = vst [vmem:[#allocation2 + $0x1e8] sm:$0xff] %v1681
      %1706 = vst [vmem:[#allocation2 + $0x1f0] sm:$0xff] %v1682
      %1707 = vst [vmem:[#allocation2 + $0x1f8] sm:$0xff] %v1683
      %1708 = vst [vmem:[#allocation2 + $0x200] sm:$0xff] %v1684
      %1709 = vst [vmem:[#allocation2 + $0x208] sm:$0xff] %v1685
      %1710 = vst [vmem:[#allocation2 + $0x210] sm:$0xff] %v1686
      %1711 = vst [vmem:[#allocation2 + $0x218] sm:$0xff] %v1687
      %1712 = vst [vmem:[#allocation2 + $0x220] sm:$0xff] %v1688
      %1713 = vst [vmem:[#allocation2 + $0x228] sm:$0xff] %v1689
      %1714 = vst [vmem:[#allocation2 + $0x230] sm:$0xff] %v1690
      %1715 = vst [vmem:[#allocation2 + $0x238] sm:$0xff] %v1691
      %1716 = vrot.lane.b32.xlu0 %v1325, 111
      %v1717 = vpop.permute.xlu0 %1716
      %1718 = vrot.lane.b32.xlu0 %v1326, 111
      %v1719 = vpop.permute.xlu0 %1718
      %1720 = vrot.lane.b32.xlu0 %v1327, 111
      %v1721 = vpop.permute.xlu0 %1720
      %1722 = vrot.lane.b32.xlu0 %v1328, 111
      %v1723 = vpop.permute.xlu0 %1722
      %1724 = vrot.lane.b32.xlu0 %v1330, 111
      %v1725 = vpop.permute.xlu0 %1724
      %1726 = vrot.lane.b32.xlu0 %v1331, 111
      %v1727 = vpop.permute.xlu0 %1726
      %1728 = vrot.lane.b32.xlu0 %v1332, 111
      %v1729 = vpop.permute.xlu0 %1728
      %1730 = vrot.lane.b32.xlu0 %v1333, 111
      %v1731 = vpop.permute.xlu0 %1730
      %1732 = vrot.lane.b32.xlu0 %v1335, 111
      %v1733 = vpop.permute.xlu0 %1732
      %1734 = vrot.lane.b32.xlu0 %v1336, 111
      %v1735 = vpop.permute.xlu0 %1734
      %1736 = vrot.lane.b32.xlu0 %v1337, 111
      %v1737 = vpop.permute.xlu0 %1736
      %1738 = vrot.lane.b32.xlu0 %v1338, 111
      %v1739 = vpop.permute.xlu0 %1738
      %1740 = vrot.lane.b32.xlu0 %v1340, 111
      %v1741 = vpop.permute.xlu0 %1740
      %1742 = vrot.lane.b32.xlu0 %v1341, 111
      %v1743 = vpop.permute.xlu0 %1742
      %1744 = vrot.lane.b32.xlu0 %v1342, 111
      %v1745 = vpop.permute.xlu0 %1744
      %1746 = vrot.lane.b32.xlu0 %v1343, 111
      %v1747 = vpop.permute.xlu0 %1746
      %v1748 = vsel %vm557, %v1717, %v1719
      %v1749 = vsel %vm557, %v1719, %v1721
      %v1750 = vsel %vm557, %v1721, %v1723
      %v1751 = vsel %vm557, %v1725, %v1727
      %v1752 = vsel %vm557, %v1727, %v1729
      %v1753 = vsel %vm557, %v1729, %v1731
      %v1754 = vsel %vm557, %v1733, %v1735
      %v1755 = vsel %vm557, %v1735, %v1737
      %v1756 = vsel %vm557, %v1737, %v1739
      %v1757 = vsel %vm557, %v1741, %v1743
      %v1758 = vsel %vm557, %v1743, %v1745
      %v1759 = vsel %vm557, %v1745, %v1747
      %1772 = vst [vmem:[#allocation2 + $0x240] sm:$0xff] %v1748
      %1773 = vst [vmem:[#allocation2 + $0x248] sm:$0xff] %v1749
      %1774 = vst [vmem:[#allocation2 + $0x250] sm:$0xff] %v1750
      %1775 = vst [vmem:[#allocation2 + $0x258] sm:$0xff] %v1751
      %1776 = vst [vmem:[#allocation2 + $0x260] sm:$0xff] %v1752
      %1777 = vst [vmem:[#allocation2 + $0x268] sm:$0xff] %v1753
      %1778 = vst [vmem:[#allocation2 + $0x270] sm:$0xff] %v1754
      %1779 = vst [vmem:[#allocation2 + $0x278] sm:$0xff] %v1755
      %1780 = vst [vmem:[#allocation2 + $0x280] sm:$0xff] %v1756
      %1781 = vst [vmem:[#allocation2 + $0x288] sm:$0xff] %v1757
      %1782 = vst [vmem:[#allocation2 + $0x290] sm:$0xff] %v1758
      %1783 = vst [vmem:[#allocation2 + $0x298] sm:$0xff] %v1759
      %1784 = vrot.lane.b32.xlu0 %v1325, 110
      %v1785 = vpop.permute.xlu0 %1784
      %1786 = vrot.lane.b32.xlu0 %v1326, 110
      %v1787 = vpop.permute.xlu0 %1786
      %1788 = vrot.lane.b32.xlu0 %v1327, 110
      %v1789 = vpop.permute.xlu0 %1788
      %1790 = vrot.lane.b32.xlu0 %v1328, 110
      %v1791 = vpop.permute.xlu0 %1790
      %1792 = vrot.lane.b32.xlu0 %v1330, 110
      %v1793 = vpop.permute.xlu0 %1792
      %1794 = vrot.lane.b32.xlu0 %v1331, 110
      %v1795 = vpop.permute.xlu0 %1794
      %1796 = vrot.lane.b32.xlu0 %v1332, 110
      %v1797 = vpop.permute.xlu0 %1796
      %1798 = vrot.lane.b32.xlu0 %v1333, 110
      %v1799 = vpop.permute.xlu0 %1798
      %1800 = vrot.lane.b32.xlu0 %v1335, 110
      %v1801 = vpop.permute.xlu0 %1800
      %1802 = vrot.lane.b32.xlu0 %v1336, 110
      %v1803 = vpop.permute.xlu0 %1802
      %1804 = vrot.lane.b32.xlu0 %v1337, 110
      %v1805 = vpop.permute.xlu0 %1804
      %1806 = vrot.lane.b32.xlu0 %v1338, 110
      %v1807 = vpop.permute.xlu0 %1806
      %1808 = vrot.lane.b32.xlu0 %v1340, 110
      %v1809 = vpop.permute.xlu0 %1808
      %1810 = vrot.lane.b32.xlu0 %v1341, 110
      %v1811 = vpop.permute.xlu0 %1810
      %1812 = vrot.lane.b32.xlu0 %v1342, 110
      %v1813 = vpop.permute.xlu0 %1812
      %1814 = vrot.lane.b32.xlu0 %v1343, 110
      %v1815 = vpop.permute.xlu0 %1814
      %v1816 = vsel %vm575, %v1785, %v1787
      %v1817 = vsel %vm575, %v1787, %v1789
      %v1818 = vsel %vm575, %v1789, %v1791
      %v1819 = vsel %vm575, %v1793, %v1795
      %v1820 = vsel %vm575, %v1795, %v1797
      %v1821 = vsel %vm575, %v1797, %v1799
      %v1822 = vsel %vm575, %v1801, %v1803
      %v1823 = vsel %vm575, %v1803, %v1805
      %v1824 = vsel %vm575, %v1805, %v1807
      %v1825 = vsel %vm575, %v1809, %v1811
      %v1826 = vsel %vm575, %v1811, %v1813
      %v1827 = vsel %vm575, %v1813, %v1815
      %1840 = vst [vmem:[#allocation2 + $0x2a0] sm:$0xff] %v1816
      %1841 = vst [vmem:[#allocation2 + $0x2a8] sm:$0xff] %v1817
      %1842 = vst [vmem:[#allocation2 + $0x2b0] sm:$0xff] %v1818
      %1843 = vst [vmem:[#allocation2 + $0x2b8] sm:$0xff] %v1819
      %1844 = vst [vmem:[#allocation2 + $0x2c0] sm:$0xff] %v1820
      %1845 = vst [vmem:[#allocation2 + $0x2c8] sm:$0xff] %v1821
      %1846 = vst [vmem:[#allocation2 + $0x2d0] sm:$0xff] %v1822
      %1847 = vst [vmem:[#allocation2 + $0x2d8] sm:$0xff] %v1823
      %1848 = vst [vmem:[#allocation2 + $0x2e0] sm:$0xff] %v1824
      %1849 = vst [vmem:[#allocation2 + $0x2e8] sm:$0xff] %v1825
      %1850 = vst [vmem:[#allocation2 + $0x2f0] sm:$0xff] %v1826
      %1851 = vst [vmem:[#allocation2 + $0x2f8] sm:$0xff] %v1827
      %1852 = vrot.lane.b32.xlu0 %v1325, 109
      %v1853 = vpop.permute.xlu0 %1852
      %1854 = vrot.lane.b32.xlu0 %v1326, 109
      %v1855 = vpop.permute.xlu0 %1854
      %1856 = vrot.lane.b32.xlu0 %v1327, 109
      %v1857 = vpop.permute.xlu0 %1856
      %1858 = vrot.lane.b32.xlu0 %v1328, 109
      %v1859 = vpop.permute.xlu0 %1858
      %1860 = vrot.lane.b32.xlu0 %v1330, 109
      %v1861 = vpop.permute.xlu0 %1860
      %1862 = vrot.lane.b32.xlu0 %v1331, 109
      %v1863 = vpop.permute.xlu0 %1862
      %1864 = vrot.lane.b32.xlu0 %v1332, 109
      %v1865 = vpop.permute.xlu0 %1864
      %1866 = vrot.lane.b32.xlu0 %v1333, 109
      %v1867 = vpop.permute.xlu0 %1866
      %1868 = vrot.lane.b32.xlu0 %v1335, 109
      %v1869 = vpop.permute.xlu0 %1868
      %1870 = vrot.lane.b32.xlu0 %v1336, 109
      %v1871 = vpop.permute.xlu0 %1870
      %1872 = vrot.lane.b32.xlu0 %v1337, 109
      %v1873 = vpop.permute.xlu0 %1872
      %1874 = vrot.lane.b32.xlu0 %v1338, 109
      %v1875 = vpop.permute.xlu0 %1874
      %1876 = vrot.lane.b32.xlu0 %v1340, 109
      %v1877 = vpop.permute.xlu0 %1876
      %1878 = vrot.lane.b32.xlu0 %v1341, 109
      %v1879 = vpop.permute.xlu0 %1878
      %1880 = vrot.lane.b32.xlu0 %v1342, 109
      %v1881 = vpop.permute.xlu0 %1880
      %1882 = vrot.lane.b32.xlu0 %v1343, 109
      %v1883 = vpop.permute.xlu0 %1882
      %v1884 = vsel %vm593, %v1853, %v1855
      %v1885 = vsel %vm593, %v1855, %v1857
      %v1886 = vsel %vm593, %v1857, %v1859
      %v1887 = vsel %vm593, %v1861, %v1863
      %v1888 = vsel %vm593, %v1863, %v1865
      %v1889 = vsel %vm593, %v1865, %v1867
      %v1890 = vsel %vm593, %v1869, %v1871
      %v1891 = vsel %vm593, %v1871, %v1873
      %v1892 = vsel %vm593, %v1873, %v1875
      %v1893 = vsel %vm593, %v1877, %v1879
      %v1894 = vsel %vm593, %v1879, %v1881
      %v1895 = vsel %vm593, %v1881, %v1883
      %1908 = vst [vmem:[#allocation2 + $0x300] sm:$0xff] %v1884
      %1909 = vst [vmem:[#allocation2 + $0x308] sm:$0xff] %v1885
      %1910 = vst [vmem:[#allocation2 + $0x310] sm:$0xff] %v1886
      %1911 = vst [vmem:[#allocation2 + $0x318] sm:$0xff] %v1887
      %1912 = vst [vmem:[#allocation2 + $0x320] sm:$0xff] %v1888
      %1913 = vst [vmem:[#allocation2 + $0x328] sm:$0xff] %v1889
      %1914 = vst [vmem:[#allocation2 + $0x330] sm:$0xff] %v1890
      %1915 = vst [vmem:[#allocation2 + $0x338] sm:$0xff] %v1891
      %1916 = vst [vmem:[#allocation2 + $0x340] sm:$0xff] %v1892
      %1917 = vst [vmem:[#allocation2 + $0x348] sm:$0xff] %v1893
      %1918 = vst [vmem:[#allocation2 + $0x350] sm:$0xff] %v1894
      %1919 = vst [vmem:[#allocation2 + $0x358] sm:$0xff] %v1895
      %v1920 = vld [vmem:[%s5] sm:$0xff]
      %v1921 = vld [vmem:[%s5 + $0x8] sm:$0xff]
      %v1922 = vld [vmem:[%s5 + $0x10] sm:$0xff]
      %v1923 = vld [vmem:[%s5 + $0x18] sm:$0xff]
      %v1924 = vld [vmem:[%s5 + $0x20] sm:$0xff]
      %v1925 = vld [vmem:[%s5 + $0x28] sm:$0xff]
      %v1926 = vld [vmem:[%s5 + $0x30] sm:$0xff]
      %v1927 = vld [vmem:[%s5 + $0x38] sm:$0xff]
      %v1928 = vld [vmem:[%s5 + $0x40] sm:$0xff]
      %v1929 = vld [vmem:[%s5 + $0x48] sm:$0xff]
      %v1930 = vld [vmem:[%s5 + $0x50] sm:$0xff]
      %v1931 = vld [vmem:[%s5 + $0x58] sm:$0xff]
      %v1932 = vld [vmem:[#allocation2] sm:$0xff]
      %v1933 = vld [vmem:[#allocation2 + $0x8] sm:$0xff]
      %v1934 = vld [vmem:[#allocation2 + $0x10] sm:$0xff]
      %v1935 = vld [vmem:[#allocation2 + $0x18] sm:$0xff]
      %v1936 = vld [vmem:[#allocation2 + $0x20] sm:$0xff]
      %v1937 = vld [vmem:[#allocation2 + $0x28] sm:$0xff]
      %v1938 = vld [vmem:[#allocation2 + $0x30] sm:$0xff]
      %v1939 = vld [vmem:[#allocation2 + $0x38] sm:$0xff]
      %v1940 = vld [vmem:[#allocation2 + $0x40] sm:$0xff]
      %v1941 = vld [vmem:[#allocation2 + $0x48] sm:$0xff]
      %v1942 = vld [vmem:[#allocation2 + $0x50] sm:$0xff]
      %v1943 = vld [vmem:[#allocation2 + $0x58] sm:$0xff]
      %v1944 = vld [vmem:[#allocation2 + $0x60] sm:$0xff]
      %v1945 = vld [vmem:[#allocation2 + $0x68] sm:$0xff]
      %v1946 = vld [vmem:[#allocation2 + $0x70] sm:$0xff]
      %v1947 = vld [vmem:[#allocation2 + $0x78] sm:$0xff]
      %v1948 = vld [vmem:[#allocation2 + $0x80] sm:$0xff]
      %v1949 = vld [vmem:[#allocation2 + $0x88] sm:$0xff]
      %v1950 = vld [vmem:[#allocation2 + $0x90] sm:$0xff]
      %v1951 = vld [vmem:[#allocation2 + $0x98] sm:$0xff]
      %v1952 = vld [vmem:[#allocation2 + $0xa0] sm:$0xff]
      %v1953 = vld [vmem:[#allocation2 + $0xa8] sm:$0xff]
      %v1954 = vld [vmem:[#allocation2 + $0xb0] sm:$0xff]
      %v1955 = vld [vmem:[#allocation2 + $0xb8] sm:$0xff]
      %v1956 = vld [vmem:[#allocation2 + $0xc0] sm:$0xff]
      %v1957 = vld [vmem:[#allocation2 + $0xc8] sm:$0xff]
      %v1958 = vld [vmem:[#allocation2 + $0xd0] sm:$0xff]
      %v1959 = vld [vmem:[#allocation2 + $0xd8] sm:$0xff]
      %v1960 = vld [vmem:[#allocation2 + $0xe0] sm:$0xff]
      %v1961 = vld [vmem:[#allocation2 + $0xe8] sm:$0xff]
      %v1962 = vld [vmem:[#allocation2 + $0xf0] sm:$0xff]
      %v1963 = vld [vmem:[#allocation2 + $0xf8] sm:$0xff]
      %v1964 = vld [vmem:[#allocation2 + $0x100] sm:$0xff]
      %v1965 = vld [vmem:[#allocation2 + $0x108] sm:$0xff]
      %v1966 = vld [vmem:[#allocation2 + $0x110] sm:$0xff]
      %v1967 = vld [vmem:[#allocation2 + $0x118] sm:$0xff]
      %v1968 = vld [vmem:[#allocation2 + $0x120] sm:$0xff]
      %v1969 = vld [vmem:[#allocation2 + $0x128] sm:$0xff]
      %v1970 = vld [vmem:[#allocation2 + $0x130] sm:$0xff]
      %v1971 = vld [vmem:[#allocation2 + $0x138] sm:$0xff]
      %v1972 = vld [vmem:[#allocation2 + $0x140] sm:$0xff]
      %v1973 = vld [vmem:[#allocation2 + $0x148] sm:$0xff]
      %v1974 = vld [vmem:[#allocation2 + $0x150] sm:$0xff]
      %v1975 = vld [vmem:[#allocation2 + $0x158] sm:$0xff]
      %v1976 = vld [vmem:[#allocation2 + $0x160] sm:$0xff]
      %v1977 = vld [vmem:[#allocation2 + $0x168] sm:$0xff]
      %v1978 = vld [vmem:[#allocation2 + $0x170] sm:$0xff]
      %v1979 = vld [vmem:[#allocation2 + $0x178] sm:$0xff]
      %v1980 = vld [vmem:[#allocation2 + $0x180] sm:$0xff]
      %v1981 = vld [vmem:[#allocation2 + $0x188] sm:$0xff]
      %v1982 = vld [vmem:[#allocation2 + $0x190] sm:$0xff]
      %v1983 = vld [vmem:[#allocation2 + $0x198] sm:$0xff]
      %v1984 = vld [vmem:[#allocation2 + $0x1a0] sm:$0xff]
      %v1985 = vld [vmem:[#allocation2 + $0x1a8] sm:$0xff]
      %v1986 = vld [vmem:[#allocation2 + $0x1b0] sm:$0xff]
      %v1987 = vld [vmem:[#allocation2 + $0x1b8] sm:$0xff]
      %v1988 = vld [vmem:[#allocation2 + $0x1c0] sm:$0xff]
      %v1989 = vld [vmem:[#allocation2 + $0x1c8] sm:$0xff]
      %v1990 = vld [vmem:[#allocation2 + $0x1d0] sm:$0xff]
      %v1991 = vld [vmem:[#allocation2 + $0x1d8] sm:$0xff]
      %v1992 = vld [vmem:[#allocation2 + $0x1e0] sm:$0xff]
      %v1993 = vld [vmem:[#allocation2 + $0x1e8] sm:$0xff]
      %v1994 = vld [vmem:[#allocation2 + $0x1f0] sm:$0xff]
      %v1995 = vld [vmem:[#allocation2 + $0x1f8] sm:$0xff]
      %v1996 = vld [vmem:[#allocation2 + $0x200] sm:$0xff]
      %v1997 = vld [vmem:[#allocation2 + $0x208] sm:$0xff]
      %v1998 = vld [vmem:[#allocation2 + $0x210] sm:$0xff]
      %v1999 = vld [vmem:[#allocation2 + $0x218] sm:$0xff]
      %v2000 = vld [vmem:[#allocation2 + $0x220] sm:$0xff]
      %v2001 = vld [vmem:[#allocation2 + $0x228] sm:$0xff]
      %v2002 = vld [vmem:[#allocation2 + $0x230] sm:$0xff]
      %v2003 = vld [vmem:[#allocation2 + $0x238] sm:$0xff]
      %v2004 = vld [vmem:[#allocation2 + $0x240] sm:$0xff]
      %v2005 = vld [vmem:[#allocation2 + $0x248] sm:$0xff]
      %v2006 = vld [vmem:[#allocation2 + $0x250] sm:$0xff]
      %v2007 = vld [vmem:[#allocation2 + $0x258] sm:$0xff]
      %v2008 = vld [vmem:[#allocation2 + $0x260] sm:$0xff]
      %v2009 = vld [vmem:[#allocation2 + $0x268] sm:$0xff]
      %v2010 = vld [vmem:[#allocation2 + $0x270] sm:$0xff]
      %v2011 = vld [vmem:[#allocation2 + $0x278] sm:$0xff]
      %v2012 = vld [vmem:[#allocation2 + $0x280] sm:$0xff]
      %v2013 = vld [vmem:[#allocation2 + $0x288] sm:$0xff]
      %v2014 = vld [vmem:[#allocation2 + $0x290] sm:$0xff]
      %v2015 = vld [vmem:[#allocation2 + $0x298] sm:$0xff]
      %v2016 = vld [vmem:[#allocation2 + $0x2a0] sm:$0xff]
      %v2017 = vld [vmem:[#allocation2 + $0x2a8] sm:$0xff]
      %v2018 = vld [vmem:[#allocation2 + $0x2b0] sm:$0xff]
      %v2019 = vld [vmem:[#allocation2 + $0x2b8] sm:$0xff]
      %v2020 = vld [vmem:[#allocation2 + $0x2c0] sm:$0xff]
      %v2021 = vld [vmem:[#allocation2 + $0x2c8] sm:$0xff]
      %v2022 = vld [vmem:[#allocation2 + $0x2d0] sm:$0xff]
      %v2023 = vld [vmem:[#allocation2 + $0x2d8] sm:$0xff]
      %v2024 = vld [vmem:[#allocation2 + $0x2e0] sm:$0xff]
      %v2025 = vld [vmem:[#allocation2 + $0x2e8] sm:$0xff]
      %v2026 = vld [vmem:[#allocation2 + $0x2f0] sm:$0xff]
      %v2027 = vld [vmem:[#allocation2 + $0x2f8] sm:$0xff]
      %v2028 = vld [vmem:[#allocation2 + $0x300] sm:$0xff]
      %v2029 = vld [vmem:[#allocation2 + $0x308] sm:$0xff]
      %v2030 = vld [vmem:[#allocation2 + $0x310] sm:$0xff]
      %v2031 = vld [vmem:[#allocation2 + $0x318] sm:$0xff]
      %v2032 = vld [vmem:[#allocation2 + $0x320] sm:$0xff]
      %v2033 = vld [vmem:[#allocation2 + $0x328] sm:$0xff]
      %v2034 = vld [vmem:[#allocation2 + $0x330] sm:$0xff]
      %v2035 = vld [vmem:[#allocation2 + $0x338] sm:$0xff]
      %v2036 = vld [vmem:[#allocation2 + $0x340] sm:$0xff]
      %v2037 = vld [vmem:[#allocation2 + $0x348] sm:$0xff]
      %v2038 = vld [vmem:[#allocation2 + $0x350] sm:$0xff]
      %v2039 = vld [vmem:[#allocation2 + $0x358] sm:$0xff]
      %v2040 = vld [vmem:[%s6] sm:$0xff]
      %v2041 = vld [vmem:[%s6 + $0x8] sm:$0xff]
      %v2042 = vld [vmem:[%s6 + $0x10] sm:$0xff]
      %v2043 = vld [vmem:[%s6 + $0x18] sm:$0xff]
      %2045 = vset.pattern.permute.xlu0 0
      %2046 = vperm.xlu0 %2045, %v2040
      %v2047 = vpop.permute.xlu0 %2046
      %2050 = vset.pattern.permute.xlu0 0
      %2051 = vperm.xlu0 %2050, %v2041
      %v2052 = vpop.permute.xlu0 %2051
      %2055 = vset.pattern.permute.xlu0 0
      %2056 = vperm.xlu0 %2055, %v2042
      %v2057 = vpop.permute.xlu0 %2056
      %2060 = vset.pattern.permute.xlu0 0
      %2061 = vperm.xlu0 %2060, %v2043
      %v2062 = vpop.permute.xlu0 %2061
      %v2065 = vsel %vm821, %v1922, 0
      %v2068 = vsel %vm821, %v1925, 0
      %v2071 = vsel %vm821, %v1928, 0
      %v2074 = vsel %vm821, %v1931, 0
      %2076 = vmatpush.msra.mxu0 %v1977
      %2077 = vmatpush.msra.mxu0 %v1974
      %2078 = vmatpush.msra.mxu0 %v1971
      %2079 = vmatpush.msra.mxu0 %v1968
      %2080 = vmatpush.msra.mxu0 %v1965
      %2081 = vmatpush.msra.mxu0 %v1962
      %2082 = vmatpush.msra.mxu0 %v1959
      %2083 = vmatpush.msra.mxu0 %v1956
      %2084 = vmatpush.msra.mxu0 %v1953
      %2085 = vmatpush.msra.mxu0 %v1950
      %2086 = vmatpush.msra.mxu0 %v1947
      %2087 = vmatpush.msra.mxu0 %v1944
      %2088 = vmatpush.msra.mxu0 %v1941
      %2089 = vmatpush.msra.mxu0 %v1938
      %2090 = vmatpush.msra.mxu0 %v1935
      %2091 = vmatpush.msra.mxu0 %v1932
      %2092 = vmatmul.f32.gmra.mxu0 %v1920
      %v2093 = vpop.f32.mrf.mxu0
      %v2094 = vadd.f32 %v2047, %v2093
      %2095 = vmatmul.f32.gmra.mxu0 %v1923
      %v2096 = vpop.f32.mrf.mxu0
      %v2097 = vadd.f32 %v2052, %v2096
      %2098 = vmatmul.f32.gmra.mxu0 %v1926
      %v2099 = vpop.f32.mrf.mxu0
      %v2100 = vadd.f32 %v2057, %v2099
      %2101 = vmatmul.f32.gmra.mxu0 %v1929
      %v2102 = vpop.f32.mrf.mxu0
      %v2103 = vadd.f32 %v2062, %v2102
      %2104 = vdwg.mxu0
      %2105 = vmatpush.msra.mxu0 %v2025
      %2106 = vmatpush.msra.mxu0 %v2022
      %2107 = vmatpush.msra.mxu0 %v2019
      %2108 = vmatpush.msra.mxu0 %v2016
      %2109 = vmatpush.msra.mxu0 %v2013
      %2110 = vmatpush.msra.mxu0 %v2010
      %2111 = vmatpush.msra.mxu0 %v2007
      %2112 = vmatpush.msra.mxu0 %v2004
      %2113 = vmatpush.msra.mxu0 %v2001
      %2114 = vmatpush.msra.mxu0 %v1998
      %2115 = vmatpush.msra.mxu0 %v1995
      %2116 = vmatpush.msra.mxu0 %v1992
      %2117 = vmatpush.msra.mxu0 %v1989
      %2118 = vmatpush.msra.mxu0 %v1986
      %2119 = vmatpush.msra.mxu0 %v1983
      %2120 = vmatpush.msra.mxu0 %v1980
      %2121 = vmatmul.f32.gmra.mxu0 %v1921
      %v2122 = vpop.f32.mrf.mxu0
      %v2123 = vadd.f32 %v2094, %v2122
      %2124 = vmatmul.f32.gmra.mxu0 %v1924
      %v2125 = vpop.f32.mrf.mxu0
      %v2126 = vadd.f32 %v2097, %v2125
      %2127 = vmatmul.f32.gmra.mxu0 %v1927
      %v2128 = vpop.f32.mrf.mxu0
      %v2129 = vadd.f32 %v2100, %v2128
      %2130 = vmatmul.f32.gmra.mxu0 %v1930
      %v2131 = vpop.f32.mrf.mxu0
      %v2132 = vadd.f32 %v2103, %v2131
      %2133 = vdwg.mxu0
      %2134 = vmatpush.msra.mxu0 0.0
      %2135 = vmatpush.msra.mxu0 0.0
      %2136 = vmatpush.msra.mxu0 0.0
      %2137 = vmatpush.msra.mxu0 0.0
      %2138 = vmatpush.msra.mxu0 0.0
      %2139 = vmatpush.msra.mxu0 0.0
      %2140 = vmatpush.msra.mxu0 0.0
      %2141 = vmatpush.msra.mxu0 0.0
      %2142 = vmatpush.msra.mxu0 0.0
      %2143 = vmatpush.msra.mxu0 0.0
      %2144 = vmatpush.msra.mxu0 0.0
      %2145 = vmatpush.msra.mxu0 0.0
      %2146 = vmatpush.msra.mxu0 %v2037
      %2147 = vmatpush.msra.mxu0 %v2034
      %2148 = vmatpush.msra.mxu0 %v2031
      %2149 = vmatpush.msra.mxu0 %v2028
      %2150 = vmatmul.f32.gmra.mxu0 %v2065
      %v2151 = vpop.f32.mrf.mxu0
      %v2152 = vadd.f32 %v2123, %v2151
      %2153 = vmatmul.f32.gmra.mxu0 %v2068
      %v2154 = vpop.f32.mrf.mxu0
      %v2155 = vadd.f32 %v2126, %v2154
      %2156 = vmatmul.f32.gmra.mxu0 %v2071
      %v2157 = vpop.f32.mrf.mxu0
      %v2158 = vadd.f32 %v2129, %v2157
      %2159 = vmatmul.f32.gmra.mxu0 %v2074
      %v2160 = vpop.f32.mrf.mxu0
      %v2161 = vadd.f32 %v2132, %v2160
      %2162 = vdwg.mxu0
      %2163 = vmatpush.msra.mxu0 %v1978
      %2164 = vmatpush.msra.mxu0 %v1975
      %2165 = vmatpush.msra.mxu0 %v1972
      %2166 = vmatpush.msra.mxu0 %v1969
      %2167 = vmatpush.msra.mxu0 %v1966
      %2168 = vmatpush.msra.mxu0 %v1963
      %2169 = vmatpush.msra.mxu0 %v1960
      %2170 = vmatpush.msra.mxu0 %v1957
      %2171 = vmatpush.msra.mxu0 %v1954
      %2172 = vmatpush.msra.mxu0 %v1951
      %2173 = vmatpush.msra.mxu0 %v1948
      %2174 = vmatpush.msra.mxu0 %v1945
      %2175 = vmatpush.msra.mxu0 %v1942
      %2176 = vmatpush.msra.mxu0 %v1939
      %2177 = vmatpush.msra.mxu0 %v1936
      %2178 = vmatpush.msra.mxu0 %v1933
      %2179 = vmatmul.f32.gmra.mxu0 %v1920
      %v2180 = vpop.f32.mrf.mxu0
      %v2181 = vadd.f32 %v2047, %v2180
      %2182 = vmatmul.f32.gmra.mxu0 %v1923
      %v2183 = vpop.f32.mrf.mxu0
      %v2184 = vadd.f32 %v2052, %v2183
      %2185 = vmatmul.f32.gmra.mxu0 %v1926
      %v2186 = vpop.f32.mrf.mxu0
      %v2187 = vadd.f32 %v2057, %v2186
      %2188 = vmatmul.f32.gmra.mxu0 %v1929
      %v2189 = vpop.f32.mrf.mxu0
      %v2190 = vadd.f32 %v2062, %v2189
      %2191 = vdwg.mxu0
      %2192 = vmatpush.msra.mxu0 %v2026
      %2193 = vmatpush.msra.mxu0 %v2023
      %2194 = vmatpush.msra.mxu0 %v2020
      %2195 = vmatpush.msra.mxu0 %v2017
      %2196 = vmatpush.msra.mxu0 %v2014
      %2197 = vmatpush.msra.mxu0 %v2011
      %2198 = vmatpush.msra.mxu0 %v2008
      %2199 = vmatpush.msra.mxu0 %v2005
      %2200 = vmatpush.msra.mxu0 %v2002
      %2201 = vmatpush.msra.mxu0 %v1999
      %2202 = vmatpush.msra.mxu0 %v1996
      %2203 = vmatpush.msra.mxu0 %v1993
      %2204 = vmatpush.msra.mxu0 %v1990
      %2205 = vmatpush.msra.mxu0 %v1987
      %2206 = vmatpush.msra.mxu0 %v1984
      %2207 = vmatpush.msra.mxu0 %v1981
      %2208 = vmatmul.f32.gmra.mxu0 %v1921
      %v2209 = vpop.f32.mrf.mxu0
      %v2210 = vadd.f32 %v2181, %v2209
      %2211 = vmatmul.f32.gmra.mxu0 %v1924
      %v2212 = vpop.f32.mrf.mxu0
      %v2213 = vadd.f32 %v2184, %v2212
      %2214 = vmatmul.f32.gmra.mxu0 %v1927
      %v2215 = vpop.f32.mrf.mxu0
      %v2216 = vadd.f32 %v2187, %v2215
      %2217 = vmatmul.f32.gmra.mxu0 %v1930
      %v2218 = vpop.f32.mrf.mxu0
      %v2219 = vadd.f32 %v2190, %v2218
      %2220 = vdwg.mxu0
      %2221 = vmatpush.msra.mxu0 0.0
      %2222 = vmatpush.msra.mxu0 0.0
      %2223 = vmatpush.msra.mxu0 0.0
      %2224 = vmatpush.msra.mxu0 0.0
      %2225 = vmatpush.msra.mxu0 0.0
      %2226 = vmatpush.msra.mxu0 0.0
      %2227 = vmatpush.msra.mxu0 0.0
      %2228 = vmatpush.msra.mxu0 0.0
      %2229 = vmatpush.msra.mxu0 0.0
      %2230 = vmatpush.msra.mxu0 0.0
      %2231 = vmatpush.msra.mxu0 0.0
      %2232 = vmatpush.msra.mxu0 0.0
      %2233 = vmatpush.msra.mxu0 %v2038
      %2234 = vmatpush.msra.mxu0 %v2035
      %2235 = vmatpush.msra.mxu0 %v2032
      %2236 = vmatpush.msra.mxu0 %v2029
      %2237 = vmatmul.f32.gmra.mxu0 %v2065
      %v2238 = vpop.f32.mrf.mxu0
      %v2239 = vadd.f32 %v2210, %v2238
      %2240 = vmatmul.f32.gmra.mxu0 %v2068
      %v2241 = vpop.f32.mrf.mxu0
      %v2242 = vadd.f32 %v2213, %v2241
      %2243 = vmatmul.f32.gmra.mxu0 %v2071
      %v2244 = vpop.f32.mrf.mxu0
      %v2245 = vadd.f32 %v2216, %v2244
      %2246 = vmatmul.f32.gmra.mxu0 %v2074
      %v2247 = vpop.f32.mrf.mxu0
      %v2248 = vadd.f32 %v2219, %v2247
      %2249 = vdwg.mxu0
      %2250 = vmatpush.msra.mxu0 %v1979
      %2251 = vmatpush.msra.mxu0 %v1976
      %2252 = vmatpush.msra.mxu0 %v1973
      %2253 = vmatpush.msra.mxu0 %v1970
      %2254 = vmatpush.msra.mxu0 %v1967
      %2255 = vmatpush.msra.mxu0 %v1964
      %2256 = vmatpush.msra.mxu0 %v1961
      %2257 = vmatpush.msra.mxu0 %v1958
      %2258 = vmatpush.msra.mxu0 %v1955
      %2259 = vmatpush.msra.mxu0 %v1952
      %2260 = vmatpush.msra.mxu0 %v1949
      %2261 = vmatpush.msra.mxu0 %v1946
      %2262 = vmatpush.msra.mxu0 %v1943
      %2263 = vmatpush.msra.mxu0 %v1940
      %2264 = vmatpush.msra.mxu0 %v1937
      %2265 = vmatpush.msra.mxu0 %v1934
      %2266 = vmatmul.f32.gmra.mxu0 %v1920
      %v2267 = vpop.f32.mrf.mxu0
      %v2268 = vadd.f32 %v2047, %v2267
      %2269 = vmatmul.f32.gmra.mxu0 %v1923
      %v2270 = vpop.f32.mrf.mxu0
      %v2271 = vadd.f32 %v2052, %v2270
      %2272 = vmatmul.f32.gmra.mxu0 %v1926
      %v2273 = vpop.f32.mrf.mxu0
      %v2274 = vadd.f32 %v2057, %v2273
      %2275 = vmatmul.f32.gmra.mxu0 %v1929
      %v2276 = vpop.f32.mrf.mxu0
      %v2277 = vadd.f32 %v2062, %v2276
      %2278 = vdwg.mxu0
      %2279 = vmatpush.msra.mxu0 %v2027
      %2280 = vmatpush.msra.mxu0 %v2024
      %2281 = vmatpush.msra.mxu0 %v2021
      %2282 = vmatpush.msra.mxu0 %v2018
      %2283 = vmatpush.msra.mxu0 %v2015
      %2284 = vmatpush.msra.mxu0 %v2012
      %2285 = vmatpush.msra.mxu0 %v2009
      %2286 = vmatpush.msra.mxu0 %v2006
      %2287 = vmatpush.msra.mxu0 %v2003
      %2288 = vmatpush.msra.mxu0 %v2000
      %2289 = vmatpush.msra.mxu0 %v1997
      %2290 = vmatpush.msra.mxu0 %v1994
      %2291 = vmatpush.msra.mxu0 %v1991
      %2292 = vmatpush.msra.mxu0 %v1988
      %2293 = vmatpush.msra.mxu0 %v1985
      %2294 = vmatpush.msra.mxu0 %v1982
      %2295 = vmatmul.f32.gmra.mxu0 %v1921
      %v2296 = vpop.f32.mrf.mxu0
      %v2297 = vadd.f32 %v2268, %v2296
      %2298 = vmatmul.f32.gmra.mxu0 %v1924
      %v2299 = vpop.f32.mrf.mxu0
      %v2300 = vadd.f32 %v2271, %v2299
      %2301 = vmatmul.f32.gmra.mxu0 %v1927
      %v2302 = vpop.f32.mrf.mxu0
      %v2303 = vadd.f32 %v2274, %v2302
      %2304 = vmatmul.f32.gmra.mxu0 %v1930
      %v2305 = vpop.f32.mrf.mxu0
      %v2306 = vadd.f32 %v2277, %v2305
      %2307 = vdwg.mxu0
      %2308 = vmatpush.msra.mxu0 0.0
      %2309 = vmatpush.msra.mxu0 0.0
      %2310 = vmatpush.msra.mxu0 0.0
      %2311 = vmatpush.msra.mxu0 0.0
      %2312 = vmatpush.msra.mxu0 0.0
      %2313 = vmatpush.msra.mxu0 0.0
      %2314 = vmatpush.msra.mxu0 0.0
      %2315 = vmatpush.msra.mxu0 0.0
      %2316 = vmatpush.msra.mxu0 0.0
      %2317 = vmatpush.msra.mxu0 0.0
      %2318 = vmatpush.msra.mxu0 0.0
      %2319 = vmatpush.msra.mxu0 0.0
      %2320 = vmatpush.msra.mxu0 %v2039
      %2321 = vmatpush.msra.mxu0 %v2036
      %2322 = vmatpush.msra.mxu0 %v2033
      %2323 = vmatpush.msra.mxu0 %v2030
      %2324 = vmatmul.f32.gmra.mxu0 %v2065
      %v2325 = vpop.f32.mrf.mxu0
      %v2326 = vadd.f32 %v2297, %v2325
      %2327 = vmatmul.f32.gmra.mxu0 %v2068
      %v2328 = vpop.f32.mrf.mxu0
      %v2329 = vadd.f32 %v2300, %v2328
      %2330 = vmatmul.f32.gmra.mxu0 %v2071
      %v2331 = vpop.f32.mrf.mxu0
      %v2332 = vadd.f32 %v2303, %v2331
      %2333 = vmatmul.f32.gmra.mxu0 %v2074
      %v2334 = vpop.f32.mrf.mxu0
      %v2335 = vadd.f32 %v2306, %v2334
      %2336 = vdwg.mxu0
      %v2337 = vmul.f32 %v2152, %v759
      %v2338 = vmul.f32 %v2239, %v760
      %v2339 = vmul.f32 %v2326, %v761
      %v2340 = vmul.f32 %v2155, %v759
      %v2341 = vmul.f32 %v2242, %v760
      %v2342 = vmul.f32 %v2329, %v761
      %v2343 = vmul.f32 %v2158, %v759
      %v2344 = vmul.f32 %v2245, %v760
      %v2345 = vmul.f32 %v2332, %v761
      %v2346 = vmul.f32 %v2161, %v759
      %v2347 = vmul.f32 %v2248, %v760
      %v2348 = vmul.f32 %v2335, %v761
      %v2349 = vadd.f32 %v2337, %v2338
      %v2350 = vadd.f32 %v2349, %v2339
      %2351 = vadd.xlane.f32.xlu0 %v2350
      %v2352 = vpop.xlane.xlu0 %2351
      %v2353 = vadd.f32 %v2340, %v2341
      %v2354 = vadd.f32 %v2353, %v2342
      %2355 = vadd.xlane.f32.xlu0 %v2354
      %v2356 = vpop.xlane.xlu0 %2355
      %v2357 = vadd.f32 %v2343, %v2344
      %v2358 = vadd.f32 %v2357, %v2345
      %2359 = vadd.xlane.f32.xlu0 %v2358
      %v2360 = vpop.xlane.xlu0 %2359
      %v2361 = vadd.f32 %v2346, %v2347
      %v2362 = vadd.f32 %v2361, %v2348
      %2363 = vadd.xlane.f32.xlu0 %v2362
      %v2364 = vpop.xlane.xlu0 %2363
      %v2365 = vmul.f32 %v2337, %v2337
      %v2366 = vmul.f32 %v2338, %v2338
      %v2367 = vmul.f32 %v2339, %v2339
      %v2368 = vmul.f32 %v2340, %v2340
      %v2369 = vmul.f32 %v2341, %v2341
      %v2370 = vmul.f32 %v2342, %v2342
      %v2371 = vmul.f32 %v2343, %v2343
      %v2372 = vmul.f32 %v2344, %v2344
      %v2373 = vmul.f32 %v2345, %v2345
      %v2374 = vmul.f32 %v2346, %v2346
      %v2375 = vmul.f32 %v2347, %v2347
      %v2376 = vmul.f32 %v2348, %v2348
      %v2377 = vadd.f32 %v2365, %v2366
      %v2378 = vadd.f32 %v2377, %v2367
      %2379 = vadd.xlane.f32.xlu0 %v2378
      %v2380 = vpop.xlane.xlu0 %2379
      %v2381 = vadd.f32 %v2368, %v2369
      %v2382 = vadd.f32 %v2381, %v2370
      %2383 = vadd.xlane.f32.xlu0 %v2382
      %v2384 = vpop.xlane.xlu0 %2383
      %v2385 = vadd.f32 %v2371, %v2372
      %v2386 = vadd.f32 %v2385, %v2373
      %2387 = vadd.xlane.f32.xlu0 %v2386
      %v2388 = vpop.xlane.xlu0 %2387
      %v2389 = vadd.f32 %v2374, %v2375
      %v2390 = vadd.f32 %v2389, %v2376
      %2391 = vadd.xlane.f32.xlu0 %v2390
      %v2392 = vpop.xlane.xlu0 %2391
      %2393 = vmatpush.msra.mxu0 0.0
      %2394 = vmatpush.msra.mxu0 0.0
      %2395 = vmatpush.msra.mxu0 0.0
      %2396 = vmatpush.msra.mxu0 0.0
      %2397 = vmatpush.msra.mxu0 0.0
      %2398 = vmatpush.msra.mxu0 0.0
      %2399 = vmatpush.msra.mxu0 0.0
      %2400 = vmatpush.msra.mxu0 0.0
      %2401 = vmatpush.msra.mxu0 0.0
      %2402 = vmatpush.msra.mxu0 0.0
      %2403 = vmatpush.msra.mxu0 0.0
      %2404 = vmatpush.msra.mxu0 0.0
      %2405 = vmatpush.msra.mxu0 %v2364
      %2406 = vmatpush.msra.mxu0 %v2360
      %2407 = vmatpush.msra.mxu0 %v2356
      %2408 = vmatpush.msra.mxu0 %v2352
      %2409 = vmatmul.f32.gmra.mxu0 %v823
      %v2410 = vpop.f32.mrf.mxu0
      %v2411 = vadd.f32 0.0, %v2410
      %2412 = vmatmul.f32.gmra.mxu0 %v826
      %v2413 = vpop.f32.mrf.mxu0
      %v2414 = vadd.f32 0.0, %v2413
      %2415 = vmatmul.f32.gmra.mxu0 %v829
      %v2416 = vpop.f32.mrf.mxu0
      %v2417 = vadd.f32 0.0, %v2416
      %2418 = vmatmul.f32.gmra.mxu0 %v832
      %v2419 = vpop.f32.mrf.mxu0
      %v2420 = vadd.f32 0.0, %v2419
      %2421 = vdwg.mxu0
      %v2422 = vmul.f32 %v2411, 0.0009765625
      %v2423 = vmul.f32 %v2414, 0.0009765625
      %v2424 = vmul.f32 %v2417, 0.0009765625
      %v2425 = vmul.f32 %v2420, 0.0009765625
      %2426 = vmatpush.msra.mxu0 0.0
      %2427 = vmatpush.msra.mxu0 0.0
      %2428 = vmatpush.msra.mxu0 0.0
      %2429 = vmatpush.msra.mxu0 0.0
      %2430 = vmatpush.msra.mxu0 0.0
      %2431 = vmatpush.msra.mxu0 0.0
      %2432 = vmatpush.msra.mxu0 0.0
      %2433 = vmatpush.msra.mxu0 0.0
      %2434 = vmatpush.msra.mxu0 0.0
      %2435 = vmatpush.msra.mxu0 0.0
      %2436 = vmatpush.msra.mxu0 0.0
      %2437 = vmatpush.msra.mxu0 0.0
      %2438 = vmatpush.msra.mxu0 %v2392
      %2439 = vmatpush.msra.mxu0 %v2388
      %2440 = vmatpush.msra.mxu0 %v2384
      %2441 = vmatpush.msra.mxu0 %v2380
      %2442 = vmatmul.f32.gmra.mxu0 %v823
      %v2443 = vpop.f32.mrf.mxu0
      %v2444 = vadd.f32 0.0, %v2443
      %2445 = vmatmul.f32.gmra.mxu0 %v826
      %v2446 = vpop.f32.mrf.mxu0
      %v2447 = vadd.f32 0.0, %v2446
      %2448 = vmatmul.f32.gmra.mxu0 %v829
      %v2449 = vpop.f32.mrf.mxu0
      %v2450 = vadd.f32 0.0, %v2449
      %2451 = vmatmul.f32.gmra.mxu0 %v832
      %v2452 = vpop.f32.mrf.mxu0
      %v2453 = vadd.f32 0.0, %v2452
      %2454 = vdwg.mxu0
      %v2455 = vmul.f32 %v2444, 0.0009765625
      %v2456 = vmul.f32 %v2447, 0.0009765625
      %v2457 = vmul.f32 %v2450, 0.0009765625
      %v2458 = vmul.f32 %v2453, 0.0009765625
      %v2459 = vmul.f32 %v2422, %v2422
      %v2460 = vmul.f32 %v2423, %v2423
      %v2461 = vmul.f32 %v2424, %v2424
      %v2462 = vmul.f32 %v2425, %v2425
      %v2463 = vsub.f32 %v2455, %v2459
      %v2464 = vsub.f32 %v2456, %v2460
      %v2465 = vsub.f32 %v2457, %v2461
      %v2466 = vsub.f32 %v2458, %v2462
      %v2467 = vmax.f32 %v2463, 0.0
      %v2468 = vmax.f32 %v2464, 0.0
      %v2469 = vmax.f32 %v2465, 0.0
      %v2470 = vmax.f32 %v2466, 0.0
      %v2471 = vadd.f32 %v2467, 1e-05
      %v2472 = vadd.f32 %v2468, 1e-05
      %v2473 = vadd.f32 %v2469, 1e-05
      %v2474 = vadd.f32 %v2470, 1e-05
      %v2475 = vrsqrt.pop %v2471
      %v2476 = vmul.f32 %v2475, %v2471
      %v2477 = vmul.f32 %v2476, %v2475
      %v2478 = vmul.f32 0.5, %v2477
      %v2479 = vsub.f32 1.5, %v2478
      %v2480 = vmul.f32 %v2475, %v2479
      %vm2481 = vweird.f32 %v2471
      %vm2482 = vweird.f32 %v2475
      %vm2483 = vmor %vm2481, %vm2482
      %v2484 = vsel %vm2483, %v2475, %v2480
      %v2485 = vrsqrt.pop %v2472
      %v2486 = vmul.f32 %v2485, %v2472
      %v2487 = vmul.f32 %v2486, %v2485
      %v2488 = vmul.f32 0.5, %v2487
      %v2489 = vsub.f32 1.5, %v2488
      %v2490 = vmul.f32 %v2485, %v2489
      %vm2491 = vweird.f32 %v2472
      %vm2492 = vweird.f32 %v2485
      %vm2493 = vmor %vm2491, %vm2492
      %v2494 = vsel %vm2493, %v2485, %v2490
      %v2495 = vrsqrt.pop %v2473
      %v2496 = vmul.f32 %v2495, %v2473
      %v2497 = vmul.f32 %v2496, %v2495
      %v2498 = vmul.f32 0.5, %v2497
      %v2499 = vsub.f32 1.5, %v2498
      %v2500 = vmul.f32 %v2495, %v2499
      %vm2501 = vweird.f32 %v2473
      %vm2502 = vweird.f32 %v2495
      %vm2503 = vmor %vm2501, %vm2502
      %v2504 = vsel %vm2503, %v2495, %v2500
      %v2505 = vrsqrt.pop %v2474
      %v2506 = vmul.f32 %v2505, %v2474
      %v2507 = vmul.f32 %v2506, %v2505
      %v2508 = vmul.f32 0.5, %v2507
      %v2509 = vsub.f32 1.5, %v2508
      %v2510 = vmul.f32 %v2505, %v2509
      %vm2511 = vweird.f32 %v2474
      %vm2512 = vweird.f32 %v2505
      %vm2513 = vmor %vm2511, %vm2512
      %v2514 = vsel %vm2513, %v2505, %v2510
      %v2515 = vld [vmem:[%s7] sm:$0xff]
      %v2516 = vld [vmem:[%s7 + $0x8] sm:$0xff]
      %v2517 = vld [vmem:[%s7 + $0x10] sm:$0xff]
      %v2518 = vld [vmem:[%s7 + $0x18] sm:$0xff]
      %v2519 = vmul.f32 %v2484, %v2515
      %v2520 = vmul.f32 %v2494, %v2516
      %v2521 = vmul.f32 %v2504, %v2517
      %v2522 = vmul.f32 %v2514, %v2518
      %v2523 = vld [vmem:[%s8] sm:$0xff]
      %v2524 = vld [vmem:[%s8 + $0x8] sm:$0xff]
      %v2525 = vld [vmem:[%s8 + $0x10] sm:$0xff]
      %v2526 = vld [vmem:[%s8 + $0x18] sm:$0xff]
      %v2527 = vmul.f32 %v2422, %v2519
      %v2528 = vmul.f32 %v2423, %v2520
      %v2529 = vmul.f32 %v2424, %v2521
      %v2530 = vmul.f32 %v2425, %v2522
      %v2531 = vsub.f32 %v2523, %v2527
      %v2532 = vsub.f32 %v2524, %v2528
      %v2533 = vsub.f32 %v2525, %v2529
      %v2534 = vsub.f32 %v2526, %v2530
      %2536 = vset.pattern.permute.xlu0 0
      %2537 = vperm.xlu0 %2536, %v2519
      %v2538 = vpop.permute.xlu0 %2537
      %2541 = vset.pattern.permute.xlu0 0
      %2542 = vperm.xlu0 %2541, %v2520
      %v2543 = vpop.permute.xlu0 %2542
      %2546 = vset.pattern.permute.xlu0 0
      %2547 = vperm.xlu0 %2546, %v2521
      %v2548 = vpop.permute.xlu0 %2547
      %2551 = vset.pattern.permute.xlu0 0
      %2552 = vperm.xlu0 %2551, %v2522
      %v2553 = vpop.permute.xlu0 %2552
      %v2555 = vmul.f32 %v2152, %v2538
      %v2556 = vmul.f32 %v2239, %v2538
      %v2557 = vmul.f32 %v2326, %v2538
      %v2558 = vmul.f32 %v2155, %v2543
      %v2559 = vmul.f32 %v2242, %v2543
      %v2560 = vmul.f32 %v2329, %v2543
      %v2561 = vmul.f32 %v2158, %v2548
      %v2562 = vmul.f32 %v2245, %v2548
      %v2563 = vmul.f32 %v2332, %v2548
      %v2564 = vmul.f32 %v2161, %v2553
      %v2565 = vmul.f32 %v2248, %v2553
      %v2566 = vmul.f32 %v2335, %v2553
      %2568 = vset.pattern.permute.xlu0 0
      %2569 = vperm.xlu0 %2568, %v2531
      %v2570 = vpop.permute.xlu0 %2569
      %2573 = vset.pattern.permute.xlu0 0
      %2574 = vperm.xlu0 %2573, %v2532
      %v2575 = vpop.permute.xlu0 %2574
      %2578 = vset.pattern.permute.xlu0 0
      %2579 = vperm.xlu0 %2578, %v2533
      %v2580 = vpop.permute.xlu0 %2579
      %2583 = vset.pattern.permute.xlu0 0
      %2584 = vperm.xlu0 %2583, %v2534
      %v2585 = vpop.permute.xlu0 %2584
      %v2587 = vadd.f32 %v2555, %v2570
      %v2588 = vadd.f32 %v2556, %v2570
      %v2589 = vadd.f32 %v2557, %v2570
      %v2590 = vadd.f32 %v2558, %v2575
      %v2591 = vadd.f32 %v2559, %v2575
      %v2592 = vadd.f32 %v2560, %v2575
      %v2593 = vadd.f32 %v2561, %v2580
      %v2594 = vadd.f32 %v2562, %v2580
      %v2595 = vadd.f32 %v2563, %v2580
      %v2596 = vadd.f32 %v2564, %v2585
      %v2597 = vadd.f32 %v2565, %v2585
      %v2598 = vadd.f32 %v2566, %v2585
      %v2599 = vld [vmem:[%s11] sm:$0xff]
      %v2600 = vld [vmem:[%s11 + $0x8] sm:$0xff]
      %v2601 = vld [vmem:[%s11 + $0x10] sm:$0xff]
      %v2602 = vld [vmem:[%s11 + $0x18] sm:$0xff]
      %v2603 = vld [vmem:[%s12] sm:$0xff]
      %v2604 = vld [vmem:[%s12 + $0x8] sm:$0xff]
      %v2605 = vld [vmem:[%s12 + $0x10] sm:$0xff]
      %v2606 = vld [vmem:[%s12 + $0x18] sm:$0xff]
      %2608 = vset.pattern.permute.xlu0 0
      %2609 = vperm.xlu0 %2608, %v2603
      %v2610 = vpop.permute.xlu0 %2609
      %2613 = vset.pattern.permute.xlu0 0
      %2614 = vperm.xlu0 %2613, %v2604
      %v2615 = vpop.permute.xlu0 %2614
      %2618 = vset.pattern.permute.xlu0 0
      %2619 = vperm.xlu0 %2618, %v2605
      %v2620 = vpop.permute.xlu0 %2619
      %2623 = vset.pattern.permute.xlu0 0
      %2624 = vperm.xlu0 %2623, %v2606
      %v2625 = vpop.permute.xlu0 %2624
      %vm2627 = vcmask 64512
      %v2629 = vsel %vm2627, %v2599, 0
      %v2632 = vsel %vm2627, %v2600, 0
      %v2635 = vsel %vm2627, %v2601, 0
      %v2638 = vsel %vm2627, %v2602, 0
      %2640 = vmatpush.msra.mxu0 0.0
      %2641 = vmatpush.msra.mxu0 0.0
      %2642 = vmatpush.msra.mxu0 0.0
      %2643 = vmatpush.msra.mxu0 0.0
      %2644 = vmatpush.msra.mxu0 0.0
      %2645 = vmatpush.msra.mxu0 0.0
      %2646 = vmatpush.msra.mxu0 0.0
      %2647 = vmatpush.msra.mxu0 0.0
      %2648 = vmatpush.msra.mxu0 0.0
      %2649 = vmatpush.msra.mxu0 0.0
      %2650 = vmatpush.msra.mxu0 0.0
      %2651 = vmatpush.msra.mxu0 0.0
      %2652 = vmatpush.msra.mxu0 0.0
      %2653 = vmatpush.msra.mxu0 0.0
      %2654 = vmatpush.msra.mxu0 0.0
      %2655 = vmatpush.msra.mxu0 %v447
      %2656 = vmatmul.f32.gmra.mxu0 %v2629
      %v2657 = vpop.f32.mrf.mxu0
      %v2658 = vadd.f32 %v2610, %v2657
      %2659 = vmatmul.f32.gmra.mxu0 %v2632
      %v2660 = vpop.f32.mrf.mxu0
      %v2661 = vadd.f32 %v2615, %v2660
      %2662 = vmatmul.f32.gmra.mxu0 %v2635
      %v2663 = vpop.f32.mrf.mxu0
      %v2664 = vadd.f32 %v2620, %v2663
      %2665 = vmatmul.f32.gmra.mxu0 %v2638
      %v2666 = vpop.f32.mrf.mxu0
      %v2667 = vadd.f32 %v2625, %v2666
      %2668 = vdwg.mxu0
      %2669 = vmatpush.msra.mxu0 0.0
      %2670 = vmatpush.msra.mxu0 0.0
      %2671 = vmatpush.msra.mxu0 0.0
      %2672 = vmatpush.msra.mxu0 0.0
      %2673 = vmatpush.msra.mxu0 0.0
      %2674 = vmatpush.msra.mxu0 0.0
      %2675 = vmatpush.msra.mxu0 0.0
      %2676 = vmatpush.msra.mxu0 0.0
      %2677 = vmatpush.msra.mxu0 0.0
      %2678 = vmatpush.msra.mxu0 0.0
      %2679 = vmatpush.msra.mxu0 0.0
      %2680 = vmatpush.msra.mxu0 0.0
      %2681 = vmatpush.msra.mxu0 0.0
      %2682 = vmatpush.msra.mxu0 0.0
      %2683 = vmatpush.msra.mxu0 0.0
      %2684 = vmatpush.msra.mxu0 %v448
      %2685 = vmatmul.f32.gmra.mxu0 %v2629
      %v2686 = vpop.f32.mrf.mxu0
      %v2687 = vadd.f32 %v2610, %v2686
      %2688 = vmatmul.f32.gmra.mxu0 %v2632
      %v2689 = vpop.f32.mrf.mxu0
      %v2690 = vadd.f32 %v2615, %v2689
      %2691 = vmatmul.f32.gmra.mxu0 %v2635
      %v2692 = vpop.f32.mrf.mxu0
      %v2693 = vadd.f32 %v2620, %v2692
      %2694 = vmatmul.f32.gmra.mxu0 %v2638
      %v2695 = vpop.f32.mrf.mxu0
      %v2696 = vadd.f32 %v2625, %v2695
      %2697 = vdwg.mxu0
      %2698 = vmatpush.msra.mxu0 0.0
      %2699 = vmatpush.msra.mxu0 0.0
      %2700 = vmatpush.msra.mxu0 0.0
      %2701 = vmatpush.msra.mxu0 0.0
      %2702 = vmatpush.msra.mxu0 0.0
      %2703 = vmatpush.msra.mxu0 0.0
      %2704 = vmatpush.msra.mxu0 0.0
      %2705 = vmatpush.msra.mxu0 0.0
      %2706 = vmatpush.msra.mxu0 0.0
      %2707 = vmatpush.msra.mxu0 0.0
      %2708 = vmatpush.msra.mxu0 0.0
      %2709 = vmatpush.msra.mxu0 0.0
      %2710 = vmatpush.msra.mxu0 0.0
      %2711 = vmatpush.msra.mxu0 0.0
      %2712 = vmatpush.msra.mxu0 0.0
      %2713 = vmatpush.msra.mxu0 %v449
      %2714 = vmatmul.f32.gmra.mxu0 %v2629
      %v2715 = vpop.f32.mrf.mxu0
      %v2716 = vadd.f32 %v2610, %v2715
      %2717 = vmatmul.f32.gmra.mxu0 %v2632
      %v2718 = vpop.f32.mrf.mxu0
      %v2719 = vadd.f32 %v2615, %v2718
      %2720 = vmatmul.f32.gmra.mxu0 %v2635
      %v2721 = vpop.f32.mrf.mxu0
      %v2722 = vadd.f32 %v2620, %v2721
      %2723 = vmatmul.f32.gmra.mxu0 %v2638
      %v2724 = vpop.f32.mrf.mxu0
      %v2725 = vadd.f32 %v2625, %v2724
      %2726 = vdwg.mxu0
      %v2727 = vadd.f32 %v2587, %v2658
      %v2728 = vadd.f32 %v2588, %v2687
      %v2729 = vadd.f32 %v2589, %v2716
      %v2730 = vadd.f32 %v2590, %v2661
      %v2731 = vadd.f32 %v2591, %v2690
      %v2732 = vadd.f32 %v2592, %v2719
      %v2733 = vadd.f32 %v2593, %v2664
      %v2734 = vadd.f32 %v2594, %v2693
      %v2735 = vadd.f32 %v2595, %v2722
      %v2736 = vadd.f32 %v2596, %v2667
      %v2737 = vadd.f32 %v2597, %v2696
      %v2738 = vadd.f32 %v2598, %v2725
      %v2739 = vxor.u32 %v2727, 2147483648
      %v2740 = vxor.u32 %v2728, 2147483648
      %v2741 = vxor.u32 %v2729, 2147483648
      %v2742 = vxor.u32 %v2730, 2147483648
      %v2743 = vxor.u32 %v2731, 2147483648
      %v2744 = vxor.u32 %v2732, 2147483648
      %v2745 = vxor.u32 %v2733, 2147483648
      %v2746 = vxor.u32 %v2734, 2147483648
      %v2747 = vxor.u32 %v2735, 2147483648
      %v2748 = vxor.u32 %v2736, 2147483648
      %v2749 = vxor.u32 %v2737, 2147483648
      %v2750 = vxor.u32 %v2738, 2147483648
      %v2751 = vmul.f32 %v2739, 1.442695
      %v2752 = vpow.pop %v2751
      %v2753 = vmul.f32 %v2740, 1.442695
      %v2754 = vpow.pop %v2753
      %v2755 = vmul.f32 %v2741, 1.442695
      %v2756 = vpow.pop %v2755
      %v2757 = vmul.f32 %v2742, 1.442695
      %v2758 = vpow.pop %v2757
      %v2759 = vmul.f32 %v2743, 1.442695
      %v2760 = vpow.pop %v2759
      %v2761 = vmul.f32 %v2744, 1.442695
      %v2762 = vpow.pop %v2761
      %v2763 = vmul.f32 %v2745, 1.442695
      %v2764 = vpow.pop %v2763
      %v2765 = vmul.f32 %v2746, 1.442695
      %v2766 = vpow.pop %v2765
      %v2767 = vmul.f32 %v2747, 1.442695
      %v2768 = vpow.pop %v2767
      %v2769 = vmul.f32 %v2748, 1.442695
      %v2770 = vpow.pop %v2769
      %v2771 = vmul.f32 %v2749, 1.442695
      %v2772 = vpow.pop %v2771
      %v2773 = vmul.f32 %v2750, 1.442695
      %v2774 = vpow.pop %v2773
      %v2775 = vadd.f32 %v2752, 1.0
      %v2776 = vadd.f32 %v2754, 1.0
      %v2777 = vadd.f32 %v2756, 1.0
      %v2778 = vadd.f32 %v2758, 1.0
      %v2779 = vadd.f32 %v2760, 1.0
      %v2780 = vadd.f32 %v2762, 1.0
      %v2781 = vadd.f32 %v2764, 1.0
      %v2782 = vadd.f32 %v2766, 1.0
      %v2783 = vadd.f32 %v2768, 1.0
      %v2784 = vadd.f32 %v2770, 1.0
      %v2785 = vadd.f32 %v2772, 1.0
      %v2786 = vadd.f32 %v2774, 1.0
      %v2787 = vrcp.pop %v2775
      %v2788 = vmul.f32 %v2775, %v2787
      %v2789 = vsub.f32 1.0, %v2788
      %v2790 = vmul.f32 %v2787, %v2789
      %v2791 = vadd.f32 %v2787, %v2790
      %vm2792 = vweird.f32 %v2775
      %vm2793 = vweird.f32 %v2787
      %vm2794 = vmor %vm2792, %vm2793
      %v2795 = vsel %vm2794, %v2787, %v2791
      %v2796 = vand.u32 2147483647, %v2775
      %vm2797 = vcmp.eq.f32.partialorder %v2796, 8.507059e+37
      %v2798 = vand.u32 %v2775, 2147483648
      %v2799 = vor.u32 1.1754944e-38, %v2798
      %v2800 = vsel %vm2797, %v2799, %v2795
      %v2801 = vmul.f32 1.0, %v2800
      %v2802 = vrcp.pop %v2776
      %v2803 = vmul.f32 %v2776, %v2802
      %v2804 = vsub.f32 1.0, %v2803
      %v2805 = vmul.f32 %v2802, %v2804
      %v2806 = vadd.f32 %v2802, %v2805
      %vm2807 = vweird.f32 %v2776
      %vm2808 = vweird.f32 %v2802
      %vm2809 = vmor %vm2807, %vm2808
      %v2810 = vsel %vm2809, %v2802, %v2806
      %v2811 = vand.u32 2147483647, %v2776
      %vm2812 = vcmp.eq.f32.partialorder %v2811, 8.507059e+37
      %v2813 = vand.u32 %v2776, 2147483648
      %v2814 = vor.u32 1.1754944e-38, %v2813
      %v2815 = vsel %vm2812, %v2814, %v2810
      %v2816 = vmul.f32 1.0, %v2815
      %v2817 = vrcp.pop %v2777
      %v2818 = vmul.f32 %v2777, %v2817
      %v2819 = vsub.f32 1.0, %v2818
      %v2820 = vmul.f32 %v2817, %v2819
      %v2821 = vadd.f32 %v2817, %v2820
      %vm2822 = vweird.f32 %v2777
      %vm2823 = vweird.f32 %v2817
      %vm2824 = vmor %vm2822, %vm2823
      %v2825 = vsel %vm2824, %v2817, %v2821
      %v2826 = vand.u32 2147483647, %v2777
      %vm2827 = vcmp.eq.f32.partialorder %v2826, 8.507059e+37
      %v2828 = vand.u32 %v2777, 2147483648
      %v2829 = vor.u32 1.1754944e-38, %v2828
      %v2830 = vsel %vm2827, %v2829, %v2825
      %v2831 = vmul.f32 1.0, %v2830
      %v2832 = vrcp.pop %v2778
      %v2833 = vmul.f32 %v2778, %v2832
      %v2834 = vsub.f32 1.0, %v2833
      %v2835 = vmul.f32 %v2832, %v2834
      %v2836 = vadd.f32 %v2832, %v2835
      %vm2837 = vweird.f32 %v2778
      %vm2838 = vweird.f32 %v2832
      %vm2839 = vmor %vm2837, %vm2838
      %v2840 = vsel %vm2839, %v2832, %v2836
      %v2841 = vand.u32 2147483647, %v2778
      %vm2842 = vcmp.eq.f32.partialorder %v2841, 8.507059e+37
      %v2843 = vand.u32 %v2778, 2147483648
      %v2844 = vor.u32 1.1754944e-38, %v2843
      %v2845 = vsel %vm2842, %v2844, %v2840
      %v2846 = vmul.f32 1.0, %v2845
      %v2847 = vrcp.pop %v2779
      %v2848 = vmul.f32 %v2779, %v2847
      %v2849 = vsub.f32 1.0, %v2848
      %v2850 = vmul.f32 %v2847, %v2849
      %v2851 = vadd.f32 %v2847, %v2850
      %vm2852 = vweird.f32 %v2779
      %vm2853 = vweird.f32 %v2847
      %vm2854 = vmor %vm2852, %vm2853
      %v2855 = vsel %vm2854, %v2847, %v2851
      %v2856 = vand.u32 2147483647, %v2779
      %vm2857 = vcmp.eq.f32.partialorder %v2856, 8.507059e+37
      %v2858 = vand.u32 %v2779, 2147483648
      %v2859 = vor.u32 1.1754944e-38, %v2858
      %v2860 = vsel %vm2857, %v2859, %v2855
      %v2861 = vmul.f32 1.0, %v2860
      %v2862 = vrcp.pop %v2780
      %v2863 = vmul.f32 %v2780, %v2862
      %v2864 = vsub.f32 1.0, %v2863
      %v2865 = vmul.f32 %v2862, %v2864
      %v2866 = vadd.f32 %v2862, %v2865
      %vm2867 = vweird.f32 %v2780
      %vm2868 = vweird.f32 %v2862
      %vm2869 = vmor %vm2867, %vm2868
      %v2870 = vsel %vm2869, %v2862, %v2866
      %v2871 = vand.u32 2147483647, %v2780
      %vm2872 = vcmp.eq.f32.partialorder %v2871, 8.507059e+37
      %v2873 = vand.u32 %v2780, 2147483648
      %v2874 = vor.u32 1.1754944e-38, %v2873
      %v2875 = vsel %vm2872, %v2874, %v2870
      %v2876 = vmul.f32 1.0, %v2875
      %v2877 = vrcp.pop %v2781
      %v2878 = vmul.f32 %v2781, %v2877
      %v2879 = vsub.f32 1.0, %v2878
      %v2880 = vmul.f32 %v2877, %v2879
      %v2881 = vadd.f32 %v2877, %v2880
      %vm2882 = vweird.f32 %v2781
      %vm2883 = vweird.f32 %v2877
      %vm2884 = vmor %vm2882, %vm2883
      %v2885 = vsel %vm2884, %v2877, %v2881
      %v2886 = vand.u32 2147483647, %v2781
      %vm2887 = vcmp.eq.f32.partialorder %v2886, 8.507059e+37
      %v2888 = vand.u32 %v2781, 2147483648
      %v2889 = vor.u32 1.1754944e-38, %v2888
      %v2890 = vsel %vm2887, %v2889, %v2885
      %v2891 = vmul.f32 1.0, %v2890
      %v2892 = vrcp.pop %v2782
      %v2893 = vmul.f32 %v2782, %v2892
      %v2894 = vsub.f32 1.0, %v2893
      %v2895 = vmul.f32 %v2892, %v2894
      %v2896 = vadd.f32 %v2892, %v2895
      %vm2897 = vweird.f32 %v2782
      %vm2898 = vweird.f32 %v2892
      %vm2899 = vmor %vm2897, %vm2898
      %v2900 = vsel %vm2899, %v2892, %v2896
      %v2901 = vand.u32 2147483647, %v2782
      %vm2902 = vcmp.eq.f32.partialorder %v2901, 8.507059e+37
      %v2903 = vand.u32 %v2782, 2147483648
      %v2904 = vor.u32 1.1754944e-38, %v2903
      %v2905 = vsel %vm2902, %v2904, %v2900
      %v2906 = vmul.f32 1.0, %v2905
      %v2907 = vrcp.pop %v2783
      %v2908 = vmul.f32 %v2783, %v2907
      %v2909 = vsub.f32 1.0, %v2908
      %v2910 = vmul.f32 %v2907, %v2909
      %v2911 = vadd.f32 %v2907, %v2910
      %vm2912 = vweird.f32 %v2783
      %vm2913 = vweird.f32 %v2907
      %vm2914 = vmor %vm2912, %vm2913
      %v2915 = vsel %vm2914, %v2907, %v2911
      %v2916 = vand.u32 2147483647, %v2783
      %vm2917 = vcmp.eq.f32.partialorder %v2916, 8.507059e+37
      %v2918 = vand.u32 %v2783, 2147483648
      %v2919 = vor.u32 1.1754944e-38, %v2918
      %v2920 = vsel %vm2917, %v2919, %v2915
      %v2921 = vmul.f32 1.0, %v2920
      %v2922 = vrcp.pop %v2784
      %v2923 = vmul.f32 %v2784, %v2922
      %v2924 = vsub.f32 1.0, %v2923
      %v2925 = vmul.f32 %v2922, %v2924
      %v2926 = vadd.f32 %v2922, %v2925
      %vm2927 = vweird.f32 %v2784
      %vm2928 = vweird.f32 %v2922
      %vm2929 = vmor %vm2927, %vm2928
      %v2930 = vsel %vm2929, %v2922, %v2926
      %v2931 = vand.u32 2147483647, %v2784
      %vm2932 = vcmp.eq.f32.partialorder %v2931, 8.507059e+37
      %v2933 = vand.u32 %v2784, 2147483648
      %v2934 = vor.u32 1.1754944e-38, %v2933
      %v2935 = vsel %vm2932, %v2934, %v2930
      %v2936 = vmul.f32 1.0, %v2935
      %v2937 = vrcp.pop %v2785
      %v2938 = vmul.f32 %v2785, %v2937
      %v2939 = vsub.f32 1.0, %v2938
      %v2940 = vmul.f32 %v2937, %v2939
      %v2941 = vadd.f32 %v2937, %v2940
      %vm2942 = vweird.f32 %v2785
      %vm2943 = vweird.f32 %v2937
      %vm2944 = vmor %vm2942, %vm2943
      %v2945 = vsel %vm2944, %v2937, %v2941
      %v2946 = vand.u32 2147483647, %v2785
      %vm2947 = vcmp.eq.f32.partialorder %v2946, 8.507059e+37
      %v2948 = vand.u32 %v2785, 2147483648
      %v2949 = vor.u32 1.1754944e-38, %v2948
      %v2950 = vsel %vm2947, %v2949, %v2945
      %v2951 = vmul.f32 1.0, %v2950
      %v2952 = vrcp.pop %v2786
      %v2953 = vmul.f32 %v2786, %v2952
      %v2954 = vsub.f32 1.0, %v2953
      %v2955 = vmul.f32 %v2952, %v2954
      %v2956 = vadd.f32 %v2952, %v2955
      %vm2957 = vweird.f32 %v2786
      %vm2958 = vweird.f32 %v2952
      %vm2959 = vmor %vm2957, %vm2958
      %v2960 = vsel %vm2959, %v2952, %v2956
      %v2961 = vand.u32 2147483647, %v2786
      %vm2962 = vcmp.eq.f32.partialorder %v2961, 8.507059e+37
      %v2963 = vand.u32 %v2786, 2147483648
      %v2964 = vor.u32 1.1754944e-38, %v2963
      %v2965 = vsel %vm2962, %v2964, %v2960
      %v2966 = vmul.f32 1.0, %v2965
      %v2967 = vmul.f32 %v2727, %v2801
      %v2968 = vmul.f32 %v2728, %v2816
      %v2969 = vmul.f32 %v2729, %v2831
      %v2970 = vmul.f32 %v2730, %v2846
      %v2971 = vmul.f32 %v2731, %v2861
      %v2972 = vmul.f32 %v2732, %v2876
      %v2973 = vmul.f32 %v2733, %v2891
      %v2974 = vmul.f32 %v2734, %v2906
      %v2975 = vmul.f32 %v2735, %v2921
      %v2976 = vmul.f32 %v2736, %v2936
      %v2977 = vmul.f32 %v2737, %v2951
      %v2978 = vmul.f32 %v2738, %v2966
      %v2979 = vmul.f32 %v2967, %v759
      %v2980 = vmul.f32 %v2968, %v760
      %v2981 = vmul.f32 %v2969, %v761
      %v2982 = vmul.f32 %v2970, %v759
      %v2983 = vmul.f32 %v2971, %v760
      %v2984 = vmul.f32 %v2972, %v761
      %v2985 = vmul.f32 %v2973, %v759
      %v2986 = vmul.f32 %v2974, %v760
      %v2987 = vmul.f32 %v2975, %v761
      %v2988 = vmul.f32 %v2976, %v759
      %v2989 = vmul.f32 %v2977, %v760
      %v2990 = vmul.f32 %v2978, %v761
      %2991 = vst [vmem:[%s440] sm:$0xff] 0.0
      %2992 = vst [vmem:[%s440 + $0x8] sm:$0xff] 0.0
      %2993 = vst [vmem:[%s440 + $0x10] sm:$0xff] 0.0
      %2994 = vst [vmem:[%s440 + $0x18] sm:$0xff] 0.0
      %2995 = vst [vmem:[%s440 + $0x20] sm:$0xff] 0.0
      %2996 = vst [vmem:[%s440 + $0x28] sm:$0xff] 0.0
      %2997 = vst [vmem:[%s440 + $0x30] sm:$0xff] 0.0
      %2998 = vst [vmem:[%s440 + $0x38] sm:$0xff] 0.0
      %2999 = vst [vmem:[%s440 + $0x40] sm:$0xff] 0.0
      %3000 = vst [vmem:[%s440 + $0x48] sm:$0xff] 0.0
      %3001 = vst [vmem:[%s440 + $0x50] sm:$0xff] 0.0
      %3002 = vst [vmem:[%s440 + $0x58] sm:$0xff] 0.0
      %3003 = vst [vmem:[%s440 + $0x60] sm:$0xff] 0.0
      %3004 = vst [vmem:[%s440 + $0x68] sm:$0xff] 0.0
      %3005 = vst [vmem:[%s440 + $0x70] sm:$0xff] 0.0
      %3006 = vst [vmem:[%s440 + $0x78] sm:$0xff] 0.0
      %3007 = vst [vmem:[%s440 + $0x80] sm:$0xff] 0.0
      %3008 = vst [vmem:[%s440 + $0x88] sm:$0xff] 0.0
      %3009 = vst [vmem:[%s440 + $0x90] sm:$0xff] 0.0
      %3010 = vst [vmem:[%s440 + $0x98] sm:$0xff] 0.0
      %3011 = vst [vmem:[%s440 + $0x8] sm:$0xff] %v2979
      %3012 = vst [vmem:[%s440 + $0x10] sm:$0xff] %v2980
      %3013 = vst [vmem:[%s440 + $0x18] sm:$0xff] %v2981
      %3014 = vst [vmem:[%s440 + $0x30] sm:$0xff] %v2982
      %3015 = vst [vmem:[%s440 + $0x38] sm:$0xff] %v2983
      %3016 = vst [vmem:[%s440 + $0x40] sm:$0xff] %v2984
      %3017 = vst [vmem:[%s440 + $0x58] sm:$0xff] %v2985
      %3018 = vst [vmem:[%s440 + $0x60] sm:$0xff] %v2986
      %3019 = vst [vmem:[%s440 + $0x68] sm:$0xff] %v2987
      %3020 = vst [vmem:[%s440 + $0x80] sm:$0xff] %v2988
      %3021 = vst [vmem:[%s440 + $0x88] sm:$0xff] %v2989
      %3022 = vst [vmem:[%s440 + $0x90] sm:$0xff] %v2990
      %p3023 = scmp.lt.s32.totalorder %s24, 1
      %s3024 = scalar_select %p3023, %s24, 1
      %s3025 = smul.addr %s3024, 20
      %s3026 = smul.addr %s3025, 8
      %s3027 = scalar_lea.vmem %s13, %s3026
      // Predicated region
      $region73: #{forward.2} parent=71 // pred_check
        %p3028 = pneg %p320
      $region74: #{forward.2} parent=71 // pred_check_branch
        %3030 = sbr.rel (%p3028) target = $region76
      $region75: #{forward.2} parent=71 // pred_region
        _
      $region76: #{forward.2} parent=71 // pred_fallthru
        _
    $region72: #{forward.2} parent=5 // pred_fallthru
      _
    %p3031 = scmp.le.s32.totalorder 2, %s19
    // Predicated region
    $region77: #{forward.2} parent=5 // pred_check
      %p3032 = pneg %p3031
    $region78: #{forward.2} parent=5 // pred_check_branch
      %3034 = sbr.rel (%p3032) target = $region80
    $region79: #{forward.2} parent=5 // pred_region
      %s3035 = ssub.s32 %s19, 2
      // Predicated region
      $region81: #{forward.2} parent=79 // pred_check
        %p3036 = pneg %p326
      $region82: #{forward.2} parent=79 // pred_check_branch
        %3038 = sbr.rel (%p3036) target = $region84
      $region83: #{forward.2} parent=79 // pred_region
        %p3039 = scmp.lt.s32.totalorder %s25, 1
        %s3040 = scalar_select %p3039, %s25, 1
        %s3041 = smul.addr %s3040, 20
        %s3042 = smul.addr %s3041, 8
        %s3043 = scalar_lea.vmem %s13, %s3042
      $region84: #{forward.2} parent=79 // pred_fallthru
        _
    $region80: #{forward.2} parent=5 // pred_fallthru
      _
  $region6: #{forward.2} parent=0 // loop_footer
    %s23 = sadd.s32 1, %s19
  $region7: #{forward.2} parent=0 // loop_footer_branch
    %18 = sbr.rel target = $region3
  $region8: #{forward.2} parent=0 // loop_exit
    _

// kernel: forward.3
$region0: #{forward.3}
  #allocation0 [shape = 'u32[]', space=smem, size = 0x4, offset = 0x4, fixed_abs, tag = 'smem constant byte address 0x4 - core index']
  #allocation1 [shape = 'u32[72,128]{1,0:T(1,128)}', space=vmem, size = 0x9000, scoped, tag = 'internal scratch']
  #allocation2 [shape = 'f32[288,384]{1,0:T(8,128)}', space=vmem, size = 0x6c000, scoped, tag = 'scratch operand']
  #allocation3 [shape = 'f32[32,640]{1,0:T(8,128)}', space=vmem, size = 0x14000, scoped, tag = 'scratch operand']
  %s0 = inlined_call_operand.vmem [shape: f32[2,32,640], index: 0, kind: input, shape index: {}]
  %s1 = inlined_call_operand.vmem [shape: f32[32,288], index: 1, kind: input, shape index: {}]
  %s2 = inlined_call_operand.vmem [shape: f32[32,1], index: 2, kind: input, shape index: {}]
  %s3 = inlined_call_operand.vmem [shape: f32[32,1], index: 3, kind: input, shape index: {}]
  %s4 = inlined_call_operand.vmem [shape: f32[32,1], index: 4, kind: input, shape index: {}]
  %s5 = inlined_call_operand.vmem [shape: f32[32,288], index: 5, kind: input, shape index: {}]
  %s6 = inlined_call_operand.vmem [shape: f32[32,1], index: 6, kind: input, shape index: {}]
  %s7 = inlined_call_operand.vmem [shape: f32[32,1], index: 7, kind: input, shape index: {}]
  %s8 = inlined_call_operand.vmem [shape: f32[32,1], index: 8, kind: input, shape index: {}]
  %s9 = inlined_call_operand.vmem [shape: f32[32,32], index: 9, kind: input, shape index: {}]
  %s10 = inlined_call_operand.vmem [shape: f32[1,384], index: 10, kind: input, shape index: {}]
  %s11 = inlined_call_operand.vmem [shape: f32[2,32,640], index: 11, kind: output, shape index: {}]
  %s12 = sld [smem:[#allocation0]]
  $region77: #{forward.3} parent=0
    _
  %s14 = ssub.s32 1, %s12
  %s15 = scalar_select 0, %s14, %s12
  loop: start=0, step=1, limit=4
  $region2: #{forward.3} parent=0 // loop_pre_header
    _
  $region3: #{forward.3} parent=0 // loop_header
    %s17 = sphi 0, %s21
    %p18 = scmp.ge.s32.totalorder %s17, 4
    %s27 = sphi 0, %s29
    %s30 = sphi 0, %s27
    %s31 = sphi 0, %s30
    %s47 = sphi 0, %s31
    %s51 = sphi 0, %s51
    %s53 = sphi 0, %s51
    %s54 = sphi 0, %s53
    %s68 = sphi 0, %s54
    %s72 = sphi 0, %s72
    %s74 = sphi 0, %s72
    %s75 = sphi 0, %s74
    %s89 = sphi 0, %s75
    %s93 = sphi 0, %s93
    %s95 = sphi 0, %s93
    %s96 = sphi 0, %s95
    %s110 = sphi 0, %s96
    %s114 = sphi 0, %s114
    %s116 = sphi 0, %s114
    %s117 = sphi 0, %s116
    %s131 = sphi 0, %s117
    %s135 = sphi 0, %s135
    %s137 = sphi 0, %s135
    %s138 = sphi 0, %s137
    %s152 = sphi 0, %s138
    %s156 = sphi 0, %s156
    %s158 = sphi 0, %s156
    %s159 = sphi 0, %s158
    %s173 = sphi 0, %s159
    %s177 = sphi 0, %s177
    %s179 = sphi 0, %s177
    %s180 = sphi 0, %s179
    %s194 = sphi 0, %s180
    %s198 = sphi 0, %s198
    %s200 = sphi 0, %s198
    %s201 = sphi 0, %s200
    %s215 = sphi 0, %s201
    %s219 = sphi 0, %s219
    %s221 = sphi 0, %s219
    %s222 = sphi 0, %s221
    %s236 = sphi 0, %s222
    %s240 = sphi 0, %s240
    %s242 = sphi 0, %s240
    %s243 = sphi 0, %s242
    %s257 = sphi 0, %s243
    %s263 = sphi 0, %s265
    %s266 = sphi 0, %s263
    %s267 = sphi 0, %s266
    %s283 = sphi 0, %s267
  $region4: #{forward.3} parent=0 // loop_header_branch
    %20 = sbr.rel (%p18) target = $region8
  $region5: #{forward.3} parent=0 // loop_body
    %s22 = ssub.s32 %s17, 1
    %s23 = ssub.s32 %s17, 2
    %s24 = sadd.s32 %s17, 1
    %s25 = ssub.s32 %s17, %s24
    %p26 = scmp.eq.s32.totalorder %s25, 0
    %s28 = sadd.s32 %s27, 1
    %s29 = scalar_select %p26, %s27, %s28
    %p32 = pneg %p26
    %p33 = scmp.eq.s32.totalorder %s17, 1
    %p34 = por %p32, %p33
    %p35 = scmp.ne.s32.totalorder %s27, %s30
    %p36 = scmp.eq.s32.totalorder %s17, 0
    %p37 = por %p35, %p36
    %p38 = scmp.ne.s32.totalorder %s27, %s30
    %p39 = scmp.eq.s32.totalorder %s22, 1
    %p40 = por %p38, %p39
    %p41 = scmp.ne.s32.totalorder %s30, %s31
    %p42 = scmp.eq.s32.totalorder %s22, 0
    %p43 = por %p41, %p42
    %p44 = scmp.ne.s32.totalorder %s30, %s31
    %p45 = scmp.eq.s32.totalorder %s23, 1
    %p46 = por %p44, %p45
    %p48 = scmp.ne.s32.totalorder %s31, %s47
    %p49 = scmp.eq.s32.totalorder %s23, 0
    %p50 = por %p48, %p49
    %s52 = sadd.s32 %s51, 1
    %p55 = scmp.eq.s32.totalorder %s17, 1
    %p56 = scmp.ne.s32.totalorder %s51, %s53
    %p57 = scmp.eq.s32.totalorder %s17, 0
    %p58 = por %p56, %p57
    %p59 = scmp.ne.s32.totalorder %s51, %s53
    %p60 = scmp.eq.s32.totalorder %s22, 1
    %p61 = por %p59, %p60
    %p62 = scmp.ne.s32.totalorder %s53, %s54
    %p63 = scmp.eq.s32.totalorder %s22, 0
    %p64 = por %p62, %p63
    %p65 = scmp.ne.s32.totalorder %s53, %s54
    %p66 = scmp.eq.s32.totalorder %s23, 1
    %p67 = por %p65, %p66
    %p69 = scmp.ne.s32.totalorder %s54, %s68
    %p70 = scmp.eq.s32.totalorder %s23, 0
    %p71 = por %p69, %p70
    %s73 = sadd.s32 %s72, 1
    %p76 = scmp.eq.s32.totalorder %s17, 1
    %p77 = scmp.ne.s32.totalorder %s72, %s74
    %p78 = scmp.eq.s32.totalorder %s17, 0
    %p79 = por %p77, %p78
    %p80 = scmp.ne.s32.totalorder %s72, %s74
    %p81 = scmp.eq.s32.totalorder %s22, 1
    %p82 = por %p80, %p81
    %p83 = scmp.ne.s32.totalorder %s74, %s75
    %p84 = scmp.eq.s32.totalorder %s22, 0
    %p85 = por %p83, %p84
    %p86 = scmp.ne.s32.totalorder %s74, %s75
    %p87 = scmp.eq.s32.totalorder %s23, 1
    %p88 = por %p86, %p87
    %p90 = scmp.ne.s32.totalorder %s75, %s89
    %p91 = scmp.eq.s32.totalorder %s23, 0
    %p92 = por %p90, %p91
    %s94 = sadd.s32 %s93, 1
    %p97 = scmp.eq.s32.totalorder %s17, 1
    %p98 = scmp.ne.s32.totalorder %s93, %s95
    %p99 = scmp.eq.s32.totalorder %s17, 0
    %p100 = por %p98, %p99
    %p101 = scmp.ne.s32.totalorder %s93, %s95
    %p102 = scmp.eq.s32.totalorder %s22, 1
    %p103 = por %p101, %p102
    %p104 = scmp.ne.s32.totalorder %s95, %s96
    %p105 = scmp.eq.s32.totalorder %s22, 0
    %p106 = por %p104, %p105
    %p107 = scmp.ne.s32.totalorder %s95, %s96
    %p108 = scmp.eq.s32.totalorder %s23, 1
    %p109 = por %p107, %p108
    %p111 = scmp.ne.s32.totalorder %s96, %s110
    %p112 = scmp.eq.s32.totalorder %s23, 0
    %p113 = por %p111, %p112
    %s115 = sadd.s32 %s114, 1
    %p118 = scmp.eq.s32.totalorder %s17, 1
    %p119 = scmp.ne.s32.totalorder %s114, %s116
    %p120 = scmp.eq.s32.totalorder %s17, 0
    %p121 = por %p119, %p120
    %p122 = scmp.ne.s32.totalorder %s114, %s116
    %p123 = scmp.eq.s32.totalorder %s22, 1
    %p124 = por %p122, %p123
    %p125 = scmp.ne.s32.totalorder %s116, %s117
    %p126 = scmp.eq.s32.totalorder %s22, 0
    %p127 = por %p125, %p126
    %p128 = scmp.ne.s32.totalorder %s116, %s117
    %p129 = scmp.eq.s32.totalorder %s23, 1
    %p130 = por %p128, %p129
    %p132 = scmp.ne.s32.totalorder %s117, %s131
    %p133 = scmp.eq.s32.totalorder %s23, 0
    %p134 = por %p132, %p133
    %s136 = sadd.s32 %s135, 1
    %p139 = scmp.eq.s32.totalorder %s17, 1
    %p140 = scmp.ne.s32.totalorder %s135, %s137
    %p141 = scmp.eq.s32.totalorder %s17, 0
    %p142 = por %p140, %p141
    %p143 = scmp.ne.s32.totalorder %s135, %s137
    %p144 = scmp.eq.s32.totalorder %s22, 1
    %p145 = por %p143, %p144
    %p146 = scmp.ne.s32.totalorder %s137, %s138
    %p147 = scmp.eq.s32.totalorder %s22, 0
    %p148 = por %p146, %p147
    %p149 = scmp.ne.s32.totalorder %s137, %s138
    %p150 = scmp.eq.s32.totalorder %s23, 1
    %p151 = por %p149, %p150
    %p153 = scmp.ne.s32.totalorder %s138, %s152
    %p154 = scmp.eq.s32.totalorder %s23, 0
    %p155 = por %p153, %p154
    %s157 = sadd.s32 %s156, 1
    %p160 = scmp.eq.s32.totalorder %s17, 1
    %p161 = scmp.ne.s32.totalorder %s156, %s158
    %p162 = scmp.eq.s32.totalorder %s17, 0
    %p163 = por %p161, %p162
    %p164 = scmp.ne.s32.totalorder %s156, %s158
    %p165 = scmp.eq.s32.totalorder %s22, 1
    %p166 = por %p164, %p165
    %p167 = scmp.ne.s32.totalorder %s158, %s159
    %p168 = scmp.eq.s32.totalorder %s22, 0
    %p169 = por %p167, %p168
    %p170 = scmp.ne.s32.totalorder %s158, %s159
    %p171 = scmp.eq.s32.totalorder %s23, 1
    %p172 = por %p170, %p171
    %p174 = scmp.ne.s32.totalorder %s159, %s173
    %p175 = scmp.eq.s32.totalorder %s23, 0
    %p176 = por %p174, %p175
    %s178 = sadd.s32 %s177, 1
    %p181 = scmp.eq.s32.totalorder %s17, 1
    %p182 = scmp.ne.s32.totalorder %s177, %s179
    %p183 = scmp.eq.s32.totalorder %s17, 0
    %p184 = por %p182, %p183
    %p185 = scmp.ne.s32.totalorder %s177, %s179
    %p186 = scmp.eq.s32.totalorder %s22, 1
    %p187 = por %p185, %p186
    %p188 = scmp.ne.s32.totalorder %s179, %s180
    %p189 = scmp.eq.s32.totalorder %s22, 0
    %p190 = por %p188, %p189
    %p191 = scmp.ne.s32.totalorder %s179, %s180
    %p192 = scmp.eq.s32.totalorder %s23, 1
    %p193 = por %p191, %p192
    %p195 = scmp.ne.s32.totalorder %s180, %s194
    %p196 = scmp.eq.s32.totalorder %s23, 0
    %p197 = por %p195, %p196
    %s199 = sadd.s32 %s198, 1
    %p202 = scmp.eq.s32.totalorder %s17, 1
    %p203 = scmp.ne.s32.totalorder %s198, %s200
    %p204 = scmp.eq.s32.totalorder %s17, 0
    %p205 = por %p203, %p204
    %p206 = scmp.ne.s32.totalorder %s198, %s200
    %p207 = scmp.eq.s32.totalorder %s22, 1
    %p208 = por %p206, %p207
    %p209 = scmp.ne.s32.totalorder %s200, %s201
    %p210 = scmp.eq.s32.totalorder %s22, 0
    %p211 = por %p209, %p210
    %p212 = scmp.ne.s32.totalorder %s200, %s201
    %p213 = scmp.eq.s32.totalorder %s23, 1
    %p214 = por %p212, %p213
    %p216 = scmp.ne.s32.totalorder %s201, %s215
    %p217 = scmp.eq.s32.totalorder %s23, 0
    %p218 = por %p216, %p217
    %s220 = sadd.s32 %s219, 1
    %p223 = scmp.eq.s32.totalorder %s17, 1
    %p224 = scmp.ne.s32.totalorder %s219, %s221
    %p225 = scmp.eq.s32.totalorder %s17, 0
    %p226 = por %p224, %p225
    %p227 = scmp.ne.s32.totalorder %s219, %s221
    %p228 = scmp.eq.s32.totalorder %s22, 1
    %p229 = por %p227, %p228
    %p230 = scmp.ne.s32.totalorder %s221, %s222
    %p231 = scmp.eq.s32.totalorder %s22, 0
    %p232 = por %p230, %p231
    %p233 = scmp.ne.s32.totalorder %s221, %s222
    %p234 = scmp.eq.s32.totalorder %s23, 1
    %p235 = por %p233, %p234
    %p237 = scmp.ne.s32.totalorder %s222, %s236
    %p238 = scmp.eq.s32.totalorder %s23, 0
    %p239 = por %p237, %p238
    %s241 = sadd.s32 %s240, 1
    %p244 = scmp.eq.s32.totalorder %s17, 1
    %p245 = scmp.ne.s32.totalorder %s240, %s242
    %p246 = scmp.eq.s32.totalorder %s17, 0
    %p247 = por %p245, %p246
    %p248 = scmp.ne.s32.totalorder %s240, %s242
    %p249 = scmp.eq.s32.totalorder %s22, 1
    %p250 = por %p248, %p249
    %p251 = scmp.ne.s32.totalorder %s242, %s243
    %p252 = scmp.eq.s32.totalorder %s22, 0
    %p253 = por %p251, %p252
    %p254 = scmp.ne.s32.totalorder %s242, %s243
    %p255 = scmp.eq.s32.totalorder %s23, 1
    %p256 = por %p254, %p255
    %p258 = scmp.ne.s32.totalorder %s243, %s257
    %p259 = scmp.eq.s32.totalorder %s23, 0
    %p260 = por %p258, %p259
    %s261 = ssub.s32 %s17, %s24
    %p262 = scmp.eq.s32.totalorder %s261, 0
    %s264 = sadd.s32 %s263, 1
    %s265 = scalar_select %p262, %s263, %s264
    %p268 = pneg %p262
    %p269 = scmp.eq.s32.totalorder %s17, 1
    %p270 = por %p268, %p269
    %p271 = scmp.ne.s32.totalorder %s263, %s266
    %p272 = scmp.eq.s32.totalorder %s17, 0
    %p273 = por %p271, %p272
    %p274 = scmp.ne.s32.totalorder %s263, %s266
    %p275 = scmp.eq.s32.totalorder %s22, 1
    %p276 = por %p274, %p275
    %p277 = scmp.ne.s32.totalorder %s266, %s267
    %p278 = scmp.eq.s32.totalorder %s22, 0
    %p279 = por %p277, %p278
    %p280 = scmp.ne.s32.totalorder %s266, %s267
    %p281 = scmp.eq.s32.totalorder %s23, 1
    %p282 = por %p280, %p281
    %p284 = scmp.ne.s32.totalorder %s267, %s283
    %p285 = scmp.eq.s32.totalorder %s23, 0
    %p286 = por %p284, %p285
    %p287 = scmp.le.s32.totalorder 1, %s17
    %p288 = scmp.lt.s32.totalorder %s17, 3
    %p289 = pnand %p287, %p288
    %p290 = pneg %p289
    // Predicated region
    $region9: #{forward.3} parent=5 // pred_check
      _
    $region10: #{forward.3} parent=5 // pred_check_branch
      %292 = sbr.rel (%p289) target = $region12
    $region11: #{forward.3} parent=5 // pred_region
      %s293 = ssub.s32 %s17, 1
      // Predicated region
      $region13: #{forward.3} parent=11 // pred_check
        %p294 = pneg %p64
      $region14: #{forward.3} parent=11 // pred_check_branch
        %296 = sbr.rel (%p294) target = $region16
      $region15: #{forward.3} parent=11 // pred_region
        _
      $region16: #{forward.3} parent=11 // pred_fallthru
        _
      // Predicated region
      $region17: #{forward.3} parent=11 // pred_check
        %p297 = pneg %p85
      $region18: #{forward.3} parent=11 // pred_check_branch
        %299 = sbr.rel (%p297) target = $region20
      $region19: #{forward.3} parent=11 // pred_region
        _
      $region20: #{forward.3} parent=11 // pred_fallthru
        _
      // Predicated region
      $region21: #{forward.3} parent=11 // pred_check
        %p300 = pneg %p106
      $region22: #{forward.3} parent=11 // pred_check_branch
        %302 = sbr.rel (%p300) target = $region24
      $region23: #{forward.3} parent=11 // pred_region
        _
      $region24: #{forward.3} parent=11 // pred_fallthru
        _
      // Predicated region
      $region25: #{forward.3} parent=11 // pred_check
        %p303 = pneg %p127
      $region26: #{forward.3} parent=11 // pred_check_branch
        %305 = sbr.rel (%p303) target = $region28
      $region27: #{forward.3} parent=11 // pred_region
        _
      $region28: #{forward.3} parent=11 // pred_fallthru
        _
      // Predicated region
      $region29: #{forward.3} parent=11 // pred_check
        %p306 = pneg %p148
      $region30: #{forward.3} parent=11 // pred_check_branch
        %308 = sbr.rel (%p306) target = $region32
      $region31: #{forward.3} parent=11 // pred_region
        _
      $region32: #{forward.3} parent=11 // pred_fallthru
        _
      // Predicated region
      $region33: #{forward.3} parent=11 // pred_check
        %p309 = pneg %p169
      $region34: #{forward.3} parent=11 // pred_check_branch
        %311 = sbr.rel (%p309) target = $region36
      $region35: #{forward.3} parent=11 // pred_region
        _
      $region36: #{forward.3} parent=11 // pred_fallthru
        _
      // Predicated region
      $region37: #{forward.3} parent=11 // pred_check
        %p312 = pneg %p190
      $region38: #{forward.3} parent=11 // pred_check_branch
        %314 = sbr.rel (%p312) target = $region40
      $region39: #{forward.3} parent=11 // pred_region
        _
      $region40: #{forward.3} parent=11 // pred_fallthru
        _
      // Predicated region
      $region41: #{forward.3} parent=11 // pred_check
        %p315 = pneg %p211
      $region42: #{forward.3} parent=11 // pred_check_branch
        %317 = sbr.rel (%p315) target = $region44
      $region43: #{forward.3} parent=11 // pred_region
        _
      $region44: #{forward.3} parent=11 // pred_fallthru
        _
      // Predicated region
      $region45: #{forward.3} parent=11 // pred_check
        %p318 = pneg %p232
      $region46: #{forward.3} parent=11 // pred_check_branch
        %320 = sbr.rel (%p318) target = $region48
      $region47: #{forward.3} parent=11 // pred_region
        _
      $region48: #{forward.3} parent=11 // pred_fallthru
        _
      // Predicated region
      $region49: #{forward.3} parent=11 // pred_check
        %p321 = pneg %p253
      $region50: #{forward.3} parent=11 // pred_check_branch
        %323 = sbr.rel (%p321) target = $region52
      $region51: #{forward.3} parent=11 // pred_region
        _
      $region52: #{forward.3} parent=11 // pred_fallthru
        _
    $region12: #{forward.3} parent=5 // pred_fallthru
      _
    %p324 = scmp.lt.s32.totalorder %s17, 2
    // Predicated region
    $region53: #{forward.3} parent=5 // pred_check
      %p325 = pneg %p324
    $region54: #{forward.3} parent=5 // pred_check_branch
      %327 = sbr.rel (%p325) target = $region56
    $region55: #{forward.3} parent=5 // pred_region
      // Predicated region
      $region57: #{forward.3} parent=55 // pred_check
        %p328 = pneg %p37
      $region58: #{forward.3} parent=55 // pred_check_branch
        %330 = sbr.rel (%p328) target = $region60
      $region59: #{forward.3} parent=55 // pred_region
        %p331 = scmp.lt.s32.totalorder %s17, 1
        %s332 = scalar_select %p331, %s17, 1
        %s333 = smul.addr %s332, 20
        %s334 = smul.addr %s333, 8
        %s335 = scalar_lea.vmem %s0, %s334
      $region60: #{forward.3} parent=55 // pred_fallthru
        _
    $region56: #{forward.3} parent=5 // pred_fallthru
      _
    %p336 = scmp.le.s32.totalorder 1, %s17
    %p337 = scmp.lt.s32.totalorder %s17, 3
    %p338 = pnand %p336, %p337
    %p339 = pneg %p338
    // Predicated region
    $region61: #{forward.3} parent=5 // pred_check
      _
    $region62: #{forward.3} parent=5 // pred_check_branch
      %341 = sbr.rel (%p338) target = $region64
    $region63: #{forward.3} parent=5 // pred_region
      %s342 = ssub.s32 %s17, 1
      %p343 = scmp.lt.s32.totalorder %s22, 1
      %s344 = scalar_select %p343, %s22, 1
      %s345 = smul.addr %s344, 20
      %s346 = smul.addr %s345, 8
      %s347 = scalar_lea.vmem %s0, %s346
      %p348 = pneg %p43
      %p349 = pneg %p40
      %p350 = pneg %p64
      %p351 = pneg %p61
      %p352 = pneg %p85
      %p353 = pneg %p82
      %p354 = pneg %p106
      %p355 = pneg %p103
      %p356 = pneg %p127
      %p357 = pneg %p124
      %p358 = pneg %p148
      %p359 = pneg %p145
      %p360 = pneg %p169
      %p361 = pneg %p166
      %p362 = pneg %p190
      %p363 = pneg %p187
      %p364 = pneg %p211
      %p365 = pneg %p208
      %p366 = pneg %p232
      %p367 = pneg %p229
      %p368 = pneg %p253
      %p369 = pneg %p250
      %p370 = pneg %p279
      %p371 = pneg %p276
      %p372 = scmp.lt.s32.totalorder %s22, 1
      %s373 = scalar_select %p372, %s22, 1
      %s374 = smul.addr %s373, 20
      %s375 = smul.addr %s374, 8
      %s376 = scalar_lea.vmem %s11, %s375
      %p377 = scmp.lt.s32.totalorder %s22, 1
      %s378 = scalar_select %p377, %s22, 1
      %s379 = smul.addr %s378, 20
      %s380 = smul.addr %s379, 8
      %s381 = scalar_lea.vmem %s0, %s380
      %p382 = scmp.lt.s32.totalorder %s22, 1
      %s383 = scalar_select %p382, %s22, 1
      %s384 = smul.addr %s383, 20
      %s385 = smul.addr %s384, 8
      %s386 = scalar_lea.vmem %s11, %s385
      %v387 = vld [vmem:[%s10] sm:$0x7]
      %v388 = vld [vmem:[%s9] sm:$0xff]
      %v389 = vld [vmem:[%s9 + $0x8] sm:$0xff]
      %v390 = vld [vmem:[%s9 + $0x10] sm:$0xff]
      %v391 = vld [vmem:[%s9 + $0x18] sm:$0xff]
      %v392 = vld [vmem:[%s381] sm:$0xff]
      %v393 = vld [vmem:[%s381 + $0x8] sm:$0xff]
      %v394 = vld [vmem:[%s381 + $0x10] sm:$0xff]
      %v395 = vld [vmem:[%s381 + $0x18] sm:$0xff]
      %v396 = vld [vmem:[%s381 + $0x20] sm:$0xff]
      %v397 = vld [vmem:[%s381 + $0x28] sm:$0xff]
      %v398 = vld [vmem:[%s381 + $0x30] sm:$0xff]
      %v399 = vld [vmem:[%s381 + $0x38] sm:$0xff]
      %v400 = vld [vmem:[%s381 + $0x40] sm:$0xff]
      %v401 = vld [vmem:[%s381 + $0x48] sm:$0xff]
      %v402 = vld [vmem:[%s381 + $0x50] sm:$0xff]
      %v403 = vld [vmem:[%s381 + $0x58] sm:$0xff]
      %v404 = vld [vmem:[%s381 + $0x60] sm:$0xff]
      %v405 = vld [vmem:[%s381 + $0x68] sm:$0xff]
      %v406 = vld [vmem:[%s381 + $0x70] sm:$0xff]
      %v407 = vld [vmem:[%s381 + $0x78] sm:$0xff]
      %v408 = vld [vmem:[%s381 + $0x80] sm:$0xff]
      %v409 = vld [vmem:[%s381 + $0x88] sm:$0xff]
      %v410 = vld [vmem:[%s381 + $0x90] sm:$0xff]
      %v411 = vld [vmem:[%s381 + $0x98] sm:$0xff]
      %428 = vrot.lane.b32.xlu0 %v392, 19
      %v429 = vpop.permute.xlu0 %428
      %430 = vrot.lane.b32.xlu0 %v393, 19
      %v431 = vpop.permute.xlu0 %430
      %432 = vrot.lane.b32.xlu0 %v394, 19
      %v433 = vpop.permute.xlu0 %432
      %434 = vrot.lane.b32.xlu0 %v395, 19
      %v435 = vpop.permute.xlu0 %434
      %436 = vrot.lane.b32.xlu0 %v397, 19
      %v437 = vpop.permute.xlu0 %436
      %438 = vrot.lane.b32.xlu0 %v398, 19
      %v439 = vpop.permute.xlu0 %438
      %440 = vrot.lane.b32.xlu0 %v399, 19
      %v441 = vpop.permute.xlu0 %440
      %442 = vrot.lane.b32.xlu0 %v400, 19
      %v443 = vpop.permute.xlu0 %442
      %444 = vrot.lane.b32.xlu0 %v402, 19
      %v445 = vpop.permute.xlu0 %444
      %446 = vrot.lane.b32.xlu0 %v403, 19
      %v447 = vpop.permute.xlu0 %446
      %448 = vrot.lane.b32.xlu0 %v404, 19
      %v449 = vpop.permute.xlu0 %448
      %450 = vrot.lane.b32.xlu0 %v405, 19
      %v451 = vpop.permute.xlu0 %450
      %452 = vrot.lane.b32.xlu0 %v407, 19
      %v453 = vpop.permute.xlu0 %452
      %454 = vrot.lane.b32.xlu0 %v408, 19
      %v455 = vpop.permute.xlu0 %454
      %456 = vrot.lane.b32.xlu0 %v409, 19
      %v457 = vpop.permute.xlu0 %456
      %458 = vrot.lane.b32.xlu0 %v410, 19
      %v459 = vpop.permute.xlu0 %458
      %vm460 = vcmask 154624
      %v461 = vsel %vm460, %v429, %v431
      %v462 = vsel %vm460, %v431, %v433
      %v463 = vsel %vm460, %v433, %v435
      %v464 = vsel %vm460, %v437, %v439
      %v465 = vsel %vm460, %v439, %v441
      %v466 = vsel %vm460, %v441, %v443
      %v467 = vsel %vm460, %v445, %v447
      %v468 = vsel %vm460, %v447, %v449
      %v469 = vsel %vm460, %v449, %v451
      %v470 = vsel %vm460, %v453, %v455
      %v471 = vsel %vm460, %v455, %v457
      %v472 = vsel %vm460, %v457, %v459
      %485 = vst [vmem:[#allocation2] sm:$0xff] %v461
      %486 = vst [vmem:[#allocation2 + $0x8] sm:$0xff] %v462
      %487 = vst [vmem:[#allocation2 + $0x10] sm:$0xff] %v463
      %488 = vst [vmem:[#allocation2 + $0x18] sm:$0xff] %v464
      %489 = vst [vmem:[#allocation2 + $0x20] sm:$0xff] %v465
      %490 = vst [vmem:[#allocation2 + $0x28] sm:$0xff] %v466
      %491 = vst [vmem:[#allocation2 + $0x30] sm:$0xff] %v467
      %492 = vst [vmem:[#allocation2 + $0x38] sm:$0xff] %v468
      %493 = vst [vmem:[#allocation2 + $0x40] sm:$0xff] %v469
      %494 = vst [vmem:[#allocation2 + $0x48] sm:$0xff] %v470
      %495 = vst [vmem:[#allocation2 + $0x50] sm:$0xff] %v471
      %496 = vst [vmem:[#allocation2 + $0x58] sm:$0xff] %v472
      %497 = vrot.lane.b32.xlu0 %v392, 18
      %v498 = vpop.permute.xlu0 %497
      %499 = vrot.lane.b32.xlu0 %v393, 18
      %v500 = vpop.permute.xlu0 %499
      %501 = vrot.lane.b32.xlu0 %v394, 18
      %v502 = vpop.permute.xlu0 %501
      %503 = vrot.lane.b32.xlu0 %v395, 18
      %v504 = vpop.permute.xlu0 %503
      %505 = vrot.lane.b32.xlu0 %v397, 18
      %v506 = vpop.permute.xlu0 %505
      %507 = vrot.lane.b32.xlu0 %v398, 18
      %v508 = vpop.permute.xlu0 %507
      %509 = vrot.lane.b32.xlu0 %v399, 18
      %v510 = vpop.permute.xlu0 %509
      %511 = vrot.lane.b32.xlu0 %v400, 18
      %v512 = vpop.permute.xlu0 %511
      %513 = vrot.lane.b32.xlu0 %v402, 18
      %v514 = vpop.permute.xlu0 %513
      %515 = vrot.lane.b32.xlu0 %v403, 18
      %v516 = vpop.permute.xlu0 %515
      %517 = vrot.lane.b32.xlu0 %v404, 18
      %v518 = vpop.permute.xlu0 %517
      %519 = vrot.lane.b32.xlu0 %v405, 18
      %v520 = vpop.permute.xlu0 %519
      %521 = vrot.lane.b32.xlu0 %v407, 18
      %v522 = vpop.permute.xlu0 %521
      %523 = vrot.lane.b32.xlu0 %v408, 18
      %v524 = vpop.permute.xlu0 %523
      %525 = vrot.lane.b32.xlu0 %v409, 18
      %v526 = vpop.permute.xlu0 %525
      %527 = vrot.lane.b32.xlu0 %v410, 18
      %v528 = vpop.permute.xlu0 %527
      %vm529 = vcmask 146432
      %v530 = vsel %vm529, %v498, %v500
      %v531 = vsel %vm529, %v500, %v502
      %v532 = vsel %vm529, %v502, %v504
      %v533 = vsel %vm529, %v506, %v508
      %v534 = vsel %vm529, %v508, %v510
      %v535 = vsel %vm529, %v510, %v512
      %v536 = vsel %vm529, %v514, %v516
      %v537 = vsel %vm529, %v516, %v518
      %v538 = vsel %vm529, %v518, %v520
      %v539 = vsel %vm529, %v522, %v524
      %v540 = vsel %vm529, %v524, %v526
      %v541 = vsel %vm529, %v526, %v528
      %554 = vst [vmem:[#allocation2 + $0x60] sm:$0xff] %v530
      %555 = vst [vmem:[#allocation2 + $0x68] sm:$0xff] %v531
      %556 = vst [vmem:[#allocation2 + $0x70] sm:$0xff] %v532
      %557 = vst [vmem:[#allocation2 + $0x78] sm:$0xff] %v533
      %558 = vst [vmem:[#allocation2 + $0x80] sm:$0xff] %v534
      %559 = vst [vmem:[#allocation2 + $0x88] sm:$0xff] %v535
      %560 = vst [vmem:[#allocation2 + $0x90] sm:$0xff] %v536
      %561 = vst [vmem:[#allocation2 + $0x98] sm:$0xff] %v537
      %562 = vst [vmem:[#allocation2 + $0xa0] sm:$0xff] %v538
      %563 = vst [vmem:[#allocation2 + $0xa8] sm:$0xff] %v539
      %564 = vst [vmem:[#allocation2 + $0xb0] sm:$0xff] %v540
      %565 = vst [vmem:[#allocation2 + $0xb8] sm:$0xff] %v541
      %566 = vrot.lane.b32.xlu0 %v392, 17
      %v567 = vpop.permute.xlu0 %566
      %568 = vrot.lane.b32.xlu0 %v393, 17
      %v569 = vpop.permute.xlu0 %568
      %570 = vrot.lane.b32.xlu0 %v394, 17
      %v571 = vpop.permute.xlu0 %570
      %572 = vrot.lane.b32.xlu0 %v395, 17
      %v573 = vpop.permute.xlu0 %572
      %574 = vrot.lane.b32.xlu0 %v397, 17
      %v575 = vpop.permute.xlu0 %574
      %576 = vrot.lane.b32.xlu0 %v398, 17
      %v577 = vpop.permute.xlu0 %576
      %578 = vrot.lane.b32.xlu0 %v399, 17
      %v579 = vpop.permute.xlu0 %578
      %580 = vrot.lane.b32.xlu0 %v400, 17
      %v581 = vpop.permute.xlu0 %580
      %582 = vrot.lane.b32.xlu0 %v402, 17
      %v583 = vpop.permute.xlu0 %582
      %584 = vrot.lane.b32.xlu0 %v403, 17
      %v585 = vpop.permute.xlu0 %584
      %586 = vrot.lane.b32.xlu0 %v404, 17
      %v587 = vpop.permute.xlu0 %586
      %588 = vrot.lane.b32.xlu0 %v405, 17
      %v589 = vpop.permute.xlu0 %588
      %590 = vrot.lane.b32.xlu0 %v407, 17
      %v591 = vpop.permute.xlu0 %590
      %592 = vrot.lane.b32.xlu0 %v408, 17
      %v593 = vpop.permute.xlu0 %592
      %594 = vrot.lane.b32.xlu0 %v409, 17
      %v595 = vpop.permute.xlu0 %594
      %596 = vrot.lane.b32.xlu0 %v410, 17
      %v597 = vpop.permute.xlu0 %596
      %vm598 = vcmask 138240
      %v599 = vsel %vm598, %v567, %v569
      %v600 = vsel %vm598, %v569, %v571
      %v601 = vsel %vm598, %v571, %v573
      %v602 = vsel %vm598, %v575, %v577
      %v603 = vsel %vm598, %v577, %v579
      %v604 = vsel %vm598, %v579, %v581
      %v605 = vsel %vm598, %v583, %v585
      %v606 = vsel %vm598, %v585, %v587
      %v607 = vsel %vm598, %v587, %v589
      %v608 = vsel %vm598, %v591, %v593
      %v609 = vsel %vm598, %v593, %v595
      %v610 = vsel %vm598, %v595, %v597
      %623 = vst [vmem:[#allocation2 + $0xc0] sm:$0xff] %v599
      %624 = vst [vmem:[#allocation2 + $0xc8] sm:$0xff] %v600
      %625 = vst [vmem:[#allocation2 + $0xd0] sm:$0xff] %v601
      %626 = vst [vmem:[#allocation2 + $0xd8] sm:$0xff] %v602
      %627 = vst [vmem:[#allocation2 + $0xe0] sm:$0xff] %v603
      %628 = vst [vmem:[#allocation2 + $0xe8] sm:$0xff] %v604
      %629 = vst [vmem:[#allocation2 + $0xf0] sm:$0xff] %v605
      %630 = vst [vmem:[#allocation2 + $0xf8] sm:$0xff] %v606
      %631 = vst [vmem:[#allocation2 + $0x100] sm:$0xff] %v607
      %632 = vst [vmem:[#allocation2 + $0x108] sm:$0xff] %v608
      %633 = vst [vmem:[#allocation2 + $0x110] sm:$0xff] %v609
      %634 = vst [vmem:[#allocation2 + $0x118] sm:$0xff] %v610
      %635 = vrot.lane.b32.xlu0 %v392, 1
      %v636 = vpop.permute.xlu0 %635
      %637 = vrot.lane.b32.xlu0 %v393, 1
      %v638 = vpop.permute.xlu0 %637
      %639 = vrot.lane.b32.xlu0 %v394, 1
      %v640 = vpop.permute.xlu0 %639
      %641 = vrot.lane.b32.xlu0 %v395, 1
      %v642 = vpop.permute.xlu0 %641
      %643 = vrot.lane.b32.xlu0 %v397, 1
      %v644 = vpop.permute.xlu0 %643
      %645 = vrot.lane.b32.xlu0 %v398, 1
      %v646 = vpop.permute.xlu0 %645
      %647 = vrot.lane.b32.xlu0 %v399, 1
      %v648 = vpop.permute.xlu0 %647
      %649 = vrot.lane.b32.xlu0 %v400, 1
      %v650 = vpop.permute.xlu0 %649
      %651 = vrot.lane.b32.xlu0 %v402, 1
      %v652 = vpop.permute.xlu0 %651
      %653 = vrot.lane.b32.xlu0 %v403, 1
      %v654 = vpop.permute.xlu0 %653
      %655 = vrot.lane.b32.xlu0 %v404, 1
      %v656 = vpop.permute.xlu0 %655
      %657 = vrot.lane.b32.xlu0 %v405, 1
      %v658 = vpop.permute.xlu0 %657
      %659 = vrot.lane.b32.xlu0 %v407, 1
      %v660 = vpop.permute.xlu0 %659
      %661 = vrot.lane.b32.xlu0 %v408, 1
      %v662 = vpop.permute.xlu0 %661
      %663 = vrot.lane.b32.xlu0 %v409, 1
      %v664 = vpop.permute.xlu0 %663
      %665 = vrot.lane.b32.xlu0 %v410, 1
      %v666 = vpop.permute.xlu0 %665
      %vm667 = vcmask 7168
      %v668 = vsel %vm667, %v636, %v638
      %v669 = vsel %vm667, %v638, %v640
      %v670 = vsel %vm667, %v640, %v642
      %v671 = vsel %vm667, %v644, %v646
      %v672 = vsel %vm667, %v646, %v648
      %v673 = vsel %vm667, %v648, %v650
      %v674 = vsel %vm667, %v652, %v654
      %v675 = vsel %vm667, %v654, %v656
      %v676 = vsel %vm667, %v656, %v658
      %v677 = vsel %vm667, %v660, %v662
      %v678 = vsel %vm667, %v662, %v664
      %v679 = vsel %vm667, %v664, %v666
      %692 = vst [vmem:[#allocation2 + $0x120] sm:$0xff] %v668
      %693 = vst [vmem:[#allocation2 + $0x128] sm:$0xff] %v669
      %694 = vst [vmem:[#allocation2 + $0x130] sm:$0xff] %v670
      %695 = vst [vmem:[#allocation2 + $0x138] sm:$0xff] %v671
      %696 = vst [vmem:[#allocation2 + $0x140] sm:$0xff] %v672
      %697 = vst [vmem:[#allocation2 + $0x148] sm:$0xff] %v673
      %698 = vst [vmem:[#allocation2 + $0x150] sm:$0xff] %v674
      %699 = vst [vmem:[#allocation2 + $0x158] sm:$0xff] %v675
      %700 = vst [vmem:[#allocation2 + $0x160] sm:$0xff] %v676
      %701 = vst [vmem:[#allocation2 + $0x168] sm:$0xff] %v677
      %702 = vst [vmem:[#allocation2 + $0x170] sm:$0xff] %v678
      %703 = vst [vmem:[#allocation2 + $0x178] sm:$0xff] %v679
      %704 = vst [vmem:[#allocation2 + $0x180] sm:$0xff] %v393
      %705 = vst [vmem:[#allocation2 + $0x188] sm:$0xff] %v394
      %706 = vst [vmem:[#allocation2 + $0x190] sm:$0xff] %v395
      %707 = vst [vmem:[#allocation2 + $0x198] sm:$0xff] %v398
      %708 = vst [vmem:[#allocation2 + $0x1a0] sm:$0xff] %v399
      %709 = vst [vmem:[#allocation2 + $0x1a8] sm:$0xff] %v400
      %710 = vst [vmem:[#allocation2 + $0x1b0] sm:$0xff] %v403
      %711 = vst [vmem:[#allocation2 + $0x1b8] sm:$0xff] %v404
      %712 = vst [vmem:[#allocation2 + $0x1c0] sm:$0xff] %v405
      %713 = vst [vmem:[#allocation2 + $0x1c8] sm:$0xff] %v408
      %714 = vst [vmem:[#allocation2 + $0x1d0] sm:$0xff] %v409
      %715 = vst [vmem:[#allocation2 + $0x1d8] sm:$0xff] %v410
      %720 = vrot.lane.b32.xlu0 %v393, 127
      %v721 = vpop.permute.xlu0 %720
      %722 = vrot.lane.b32.xlu0 %v394, 127
      %v723 = vpop.permute.xlu0 %722
      %724 = vrot.lane.b32.xlu0 %v395, 127
      %v725 = vpop.permute.xlu0 %724
      %726 = vrot.lane.b32.xlu0 %v396, 127
      %v727 = vpop.permute.xlu0 %726
      %728 = vrot.lane.b32.xlu0 %v398, 127
      %v729 = vpop.permute.xlu0 %728
      %730 = vrot.lane.b32.xlu0 %v399, 127
      %v731 = vpop.permute.xlu0 %730
      %732 = vrot.lane.b32.xlu0 %v400, 127
      %v733 = vpop.permute.xlu0 %732
      %734 = vrot.lane.b32.xlu0 %v401, 127
      %v735 = vpop.permute.xlu0 %734
      %736 = vrot.lane.b32.xlu0 %v403, 127
      %v737 = vpop.permute.xlu0 %736
      %738 = vrot.lane.b32.xlu0 %v404, 127
      %v739 = vpop.permute.xlu0 %738
      %740 = vrot.lane.b32.xlu0 %v405, 127
      %v741 = vpop.permute.xlu0 %740
      %742 = vrot.lane.b32.xlu0 %v406, 127
      %v743 = vpop.permute.xlu0 %742
      %744 = vrot.lane.b32.xlu0 %v408, 127
      %v745 = vpop.permute.xlu0 %744
      %746 = vrot.lane.b32.xlu0 %v409, 127
      %v747 = vpop.permute.xlu0 %746
      %748 = vrot.lane.b32.xlu0 %v410, 127
      %v749 = vpop.permute.xlu0 %748
      %750 = vrot.lane.b32.xlu0 %v411, 127
      %v751 = vpop.permute.xlu0 %750
      %vm752 = vcmask 1039360
      %v753 = vsel %vm752, %v721, %v723
      %v754 = vsel %vm752, %v723, %v725
      %v755 = vsel %vm752, %v725, %v727
      %v756 = vsel %vm752, %v729, %v731
      %v757 = vsel %vm752, %v731, %v733
      %v758 = vsel %vm752, %v733, %v735
      %v759 = vsel %vm752, %v737, %v739
      %v760 = vsel %vm752, %v739, %v741
      %v761 = vsel %vm752, %v741, %v743
      %v762 = vsel %vm752, %v745, %v747
      %v763 = vsel %vm752, %v747, %v749
      %v764 = vsel %vm752, %v749, %v751
      %777 = vst [vmem:[#allocation2 + $0x1e0] sm:$0xff] %v753
      %778 = vst [vmem:[#allocation2 + $0x1e8] sm:$0xff] %v754
      %779 = vst [vmem:[#allocation2 + $0x1f0] sm:$0xff] %v755
      %780 = vst [vmem:[#allocation2 + $0x1f8] sm:$0xff] %v756
      %781 = vst [vmem:[#allocation2 + $0x200] sm:$0xff] %v757
      %782 = vst [vmem:[#allocation2 + $0x208] sm:$0xff] %v758
      %783 = vst [vmem:[#allocation2 + $0x210] sm:$0xff] %v759
      %784 = vst [vmem:[#allocation2 + $0x218] sm:$0xff] %v760
      %785 = vst [vmem:[#allocation2 + $0x220] sm:$0xff] %v761
      %786 = vst [vmem:[#allocation2 + $0x228] sm:$0xff] %v762
      %787 = vst [vmem:[#allocation2 + $0x230] sm:$0xff] %v763
      %788 = vst [vmem:[#allocation2 + $0x238] sm:$0xff] %v764
      %789 = vrot.lane.b32.xlu0 %v393, 111
      %v790 = vpop.permute.xlu0 %789
      %791 = vrot.lane.b32.xlu0 %v394, 111
      %v792 = vpop.permute.xlu0 %791
      %793 = vrot.lane.b32.xlu0 %v395, 111
      %v794 = vpop.permute.xlu0 %793
      %795 = vrot.lane.b32.xlu0 %v396, 111
      %v796 = vpop.permute.xlu0 %795
      %797 = vrot.lane.b32.xlu0 %v398, 111
      %v798 = vpop.permute.xlu0 %797
      %799 = vrot.lane.b32.xlu0 %v399, 111
      %v800 = vpop.permute.xlu0 %799
      %801 = vrot.lane.b32.xlu0 %v400, 111
      %v802 = vpop.permute.xlu0 %801
      %803 = vrot.lane.b32.xlu0 %v401, 111
      %v804 = vpop.permute.xlu0 %803
      %805 = vrot.lane.b32.xlu0 %v403, 111
      %v806 = vpop.permute.xlu0 %805
      %807 = vrot.lane.b32.xlu0 %v404, 111
      %v808 = vpop.permute.xlu0 %807
      %809 = vrot.lane.b32.xlu0 %v405, 111
      %v810 = vpop.permute.xlu0 %809
      %811 = vrot.lane.b32.xlu0 %v406, 111
      %v812 = vpop.permute.xlu0 %811
      %813 = vrot.lane.b32.xlu0 %v408, 111
      %v814 = vpop.permute.xlu0 %813
      %815 = vrot.lane.b32.xlu0 %v409, 111
      %v816 = vpop.permute.xlu0 %815
      %817 = vrot.lane.b32.xlu0 %v410, 111
      %v818 = vpop.permute.xlu0 %817
      %819 = vrot.lane.b32.xlu0 %v411, 111
      %v820 = vpop.permute.xlu0 %819
      %vm821 = vcmask 908288
      %v822 = vsel %vm821, %v790, %v792
      %v823 = vsel %vm821, %v792, %v794
      %v824 = vsel %vm821, %v794, %v796
      %v825 = vsel %vm821, %v798, %v800
      %v826 = vsel %vm821, %v800, %v802
      %v827 = vsel %vm821, %v802, %v804
      %v828 = vsel %vm821, %v806, %v808
      %v829 = vsel %vm821, %v808, %v810
      %v830 = vsel %vm821, %v810, %v812
      %v831 = vsel %vm821, %v814, %v816
      %v832 = vsel %vm821, %v816, %v818
      %v833 = vsel %vm821, %v818, %v820
      %846 = vst [vmem:[#allocation2 + $0x240] sm:$0xff] %v822
      %847 = vst [vmem:[#allocation2 + $0x248] sm:$0xff] %v823
      %848 = vst [vmem:[#allocation2 + $0x250] sm:$0xff] %v824
      %849 = vst [vmem:[#allocation2 + $0x258] sm:$0xff] %v825
      %850 = vst [vmem:[#allocation2 + $0x260] sm:$0xff] %v826
      %851 = vst [vmem:[#allocation2 + $0x268] sm:$0xff] %v827
      %852 = vst [vmem:[#allocation2 + $0x270] sm:$0xff] %v828
      %853 = vst [vmem:[#allocation2 + $0x278] sm:$0xff] %v829
      %854 = vst [vmem:[#allocation2 + $0x280] sm:$0xff] %v830
      %855 = vst [vmem:[#allocation2 + $0x288] sm:$0xff] %v831
      %856 = vst [vmem:[#allocation2 + $0x290] sm:$0xff] %v832
      %857 = vst [vmem:[#allocation2 + $0x298] sm:$0xff] %v833
      %858 = vrot.lane.b32.xlu0 %v393, 110
      %v859 = vpop.permute.xlu0 %858
      %860 = vrot.lane.b32.xlu0 %v394, 110
      %v861 = vpop.permute.xlu0 %860
      %862 = vrot.lane.b32.xlu0 %v395, 110
      %v863 = vpop.permute.xlu0 %862
      %864 = vrot.lane.b32.xlu0 %v396, 110
      %v865 = vpop.permute.xlu0 %864
      %866 = vrot.lane.b32.xlu0 %v398, 110
      %v867 = vpop.permute.xlu0 %866
      %868 = vrot.lane.b32.xlu0 %v399, 110
      %v869 = vpop.permute.xlu0 %868
      %870 = vrot.lane.b32.xlu0 %v400, 110
      %v871 = vpop.permute.xlu0 %870
      %872 = vrot.lane.b32.xlu0 %v401, 110
      %v873 = vpop.permute.xlu0 %872
      %874 = vrot.lane.b32.xlu0 %v403, 110
      %v875 = vpop.permute.xlu0 %874
      %876 = vrot.lane.b32.xlu0 %v404, 110
      %v877 = vpop.permute.xlu0 %876
      %878 = vrot.lane.b32.xlu0 %v405, 110
      %v879 = vpop.permute.xlu0 %878
      %880 = vrot.lane.b32.xlu0 %v406, 110
      %v881 = vpop.permute.xlu0 %880
      %882 = vrot.lane.b32.xlu0 %v408, 110
      %v883 = vpop.permute.xlu0 %882
      %884 = vrot.lane.b32.xlu0 %v409, 110
      %v885 = vpop.permute.xlu0 %884
      %886 = vrot.lane.b32.xlu0 %v410, 110
      %v887 = vpop.permute.xlu0 %886
      %888 = vrot.lane.b32.xlu0 %v411, 110
      %v889 = vpop.permute.xlu0 %888
      %vm890 = vcmask 900096
      %v891 = vsel %vm890, %v859, %v861
      %v892 = vsel %vm890, %v861, %v863
      %v893 = vsel %vm890, %v863, %v865
      %v894 = vsel %vm890, %v867, %v869
      %v895 = vsel %vm890, %v869, %v871
      %v896 = vsel %vm890, %v871, %v873
      %v897 = vsel %vm890, %v875, %v877
      %v898 = vsel %vm890, %v877, %v879
      %v899 = vsel %vm890, %v879, %v881
      %v900 = vsel %vm890, %v883, %v885
      %v901 = vsel %vm890, %v885, %v887
      %v902 = vsel %vm890, %v887, %v889
      %915 = vst [vmem:[#allocation2 + $0x2a0] sm:$0xff] %v891
      %916 = vst [vmem:[#allocation2 + $0x2a8] sm:$0xff] %v892
      %917 = vst [vmem:[#allocation2 + $0x2b0] sm:$0xff] %v893
      %918 = vst [vmem:[#allocation2 + $0x2b8] sm:$0xff] %v894
      %919 = vst [vmem:[#allocation2 + $0x2c0] sm:$0xff] %v895
      %920 = vst [vmem:[#allocation2 + $0x2c8] sm:$0xff] %v896
      %921 = vst [vmem:[#allocation2 + $0x2d0] sm:$0xff] %v897
      %922 = vst [vmem:[#allocation2 + $0x2d8] sm:$0xff] %v898
      %923 = vst [vmem:[#allocation2 + $0x2e0] sm:$0xff] %v899
      %924 = vst [vmem:[#allocation2 + $0x2e8] sm:$0xff] %v900
      %925 = vst [vmem:[#allocation2 + $0x2f0] sm:$0xff] %v901
      %926 = vst [vmem:[#allocation2 + $0x2f8] sm:$0xff] %v902
      %927 = vrot.lane.b32.xlu0 %v393, 109
      %v928 = vpop.permute.xlu0 %927
      %929 = vrot.lane.b32.xlu0 %v394, 109
      %v930 = vpop.permute.xlu0 %929
      %931 = vrot.lane.b32.xlu0 %v395, 109
      %v932 = vpop.permute.xlu0 %931
      %933 = vrot.lane.b32.xlu0 %v396, 109
      %v934 = vpop.permute.xlu0 %933
      %935 = vrot.lane.b32.xlu0 %v398, 109
      %v936 = vpop.permute.xlu0 %935
      %937 = vrot.lane.b32.xlu0 %v399, 109
      %v938 = vpop.permute.xlu0 %937
      %939 = vrot.lane.b32.xlu0 %v400, 109
      %v940 = vpop.permute.xlu0 %939
      %941 = vrot.lane.b32.xlu0 %v401, 109
      %v942 = vpop.permute.xlu0 %941
      %943 = vrot.lane.b32.xlu0 %v403, 109
      %v944 = vpop.permute.xlu0 %943
      %945 = vrot.lane.b32.xlu0 %v404, 109
      %v946 = vpop.permute.xlu0 %945
      %947 = vrot.lane.b32.xlu0 %v405, 109
      %v948 = vpop.permute.xlu0 %947
      %949 = vrot.lane.b32.xlu0 %v406, 109
      %v950 = vpop.permute.xlu0 %949
      %951 = vrot.lane.b32.xlu0 %v408, 109
      %v952 = vpop.permute.xlu0 %951
      %953 = vrot.lane.b32.xlu0 %v409, 109
      %v954 = vpop.permute.xlu0 %953
      %955 = vrot.lane.b32.xlu0 %v410, 109
      %v956 = vpop.permute.xlu0 %955
      %957 = vrot.lane.b32.xlu0 %v411, 109
      %v958 = vpop.permute.xlu0 %957
      %vm959 = vcmask 891904
      %v960 = vsel %vm959, %v928, %v930
      %v961 = vsel %vm959, %v930, %v932
      %v962 = vsel %vm959, %v932, %v934
      %v963 = vsel %vm959, %v936, %v938
      %v964 = vsel %vm959, %v938, %v940
      %v965 = vsel %vm959, %v940, %v942
      %v966 = vsel %vm959, %v944, %v946
      %v967 = vsel %vm959, %v946, %v948
      %v968 = vsel %vm959, %v948, %v950
      %v969 = vsel %vm959, %v952, %v954
      %v970 = vsel %vm959, %v954, %v956
      %v971 = vsel %vm959, %v956, %v958
      %984 = vst [vmem:[#allocation2 + $0x300] sm:$0xff] %v960
      %985 = vst [vmem:[#allocation2 + $0x308] sm:$0xff] %v961
      %986 = vst [vmem:[#allocation2 + $0x310] sm:$0xff] %v962
      %987 = vst [vmem:[#allocation2 + $0x318] sm:$0xff] %v963
      %988 = vst [vmem:[#allocation2 + $0x320] sm:$0xff] %v964
      %989 = vst [vmem:[#allocation2 + $0x328] sm:$0xff] %v965
      %990 = vst [vmem:[#allocation2 + $0x330] sm:$0xff] %v966
      %991 = vst [vmem:[#allocation2 + $0x338] sm:$0xff] %v967
      %992 = vst [vmem:[#allocation2 + $0x340] sm:$0xff] %v968
      %993 = vst [vmem:[#allocation2 + $0x348] sm:$0xff] %v969
      %994 = vst [vmem:[#allocation2 + $0x350] sm:$0xff] %v970
      %995 = vst [vmem:[#allocation2 + $0x358] sm:$0xff] %v971
      %v996 = vld [vmem:[%s1] sm:$0xff]
      %v997 = vld [vmem:[%s1 + $0x8] sm:$0xff]
      %v998 = vld [vmem:[%s1 + $0x10] sm:$0xff]
      %v999 = vld [vmem:[%s1 + $0x18] sm:$0xff]
      %v1000 = vld [vmem:[%s1 + $0x20] sm:$0xff]
      %v1001 = vld [vmem:[%s1 + $0x28] sm:$0xff]
      %v1002 = vld [vmem:[%s1 + $0x30] sm:$0xff]
      %v1003 = vld [vmem:[%s1 + $0x38] sm:$0xff]
      %v1004 = vld [vmem:[%s1 + $0x40] sm:$0xff]
      %v1005 = vld [vmem:[%s1 + $0x48] sm:$0xff]
      %v1006 = vld [vmem:[%s1 + $0x50] sm:$0xff]
      %v1007 = vld [vmem:[%s1 + $0x58] sm:$0xff]
      %v1008 = vld [vmem:[#allocation2] sm:$0xff]
      %v1009 = vld [vmem:[#allocation2 + $0x8] sm:$0xff]
      %v1010 = vld [vmem:[#allocation2 + $0x10] sm:$0xff]
      %v1011 = vld [vmem:[#allocation2 + $0x18] sm:$0xff]
      %v1012 = vld [vmem:[#allocation2 + $0x20] sm:$0xff]
      %v1013 = vld [vmem:[#allocation2 + $0x28] sm:$0xff]
      %v1014 = vld [vmem:[#allocation2 + $0x30] sm:$0xff]
      %v1015 = vld [vmem:[#allocation2 + $0x38] sm:$0xff]
      %v1016 = vld [vmem:[#allocation2 + $0x40] sm:$0xff]
      %v1017 = vld [vmem:[#allocation2 + $0x48] sm:$0xff]
      %v1018 = vld [vmem:[#allocation2 + $0x50] sm:$0xff]
      %v1019 = vld [vmem:[#allocation2 + $0x58] sm:$0xff]
      %v1020 = vld [vmem:[#allocation2 + $0x60] sm:$0xff]
      %v1021 = vld [vmem:[#allocation2 + $0x68] sm:$0xff]
      %v1022 = vld [vmem:[#allocation2 + $0x70] sm:$0xff]
      %v1023 = vld [vmem:[#allocation2 + $0x78] sm:$0xff]
      %v1024 = vld [vmem:[#allocation2 + $0x80] sm:$0xff]
      %v1025 = vld [vmem:[#allocation2 + $0x88] sm:$0xff]
      %v1026 = vld [vmem:[#allocation2 + $0x90] sm:$0xff]
      %v1027 = vld [vmem:[#allocation2 + $0x98] sm:$0xff]
      %v1028 = vld [vmem:[#allocation2 + $0xa0] sm:$0xff]
      %v1029 = vld [vmem:[#allocation2 + $0xa8] sm:$0xff]
      %v1030 = vld [vmem:[#allocation2 + $0xb0] sm:$0xff]
      %v1031 = vld [vmem:[#allocation2 + $0xb8] sm:$0xff]
      %v1032 = vld [vmem:[#allocation2 + $0xc0] sm:$0xff]
      %v1033 = vld [vmem:[#allocation2 + $0xc8] sm:$0xff]
      %v1034 = vld [vmem:[#allocation2 + $0xd0] sm:$0xff]
      %v1035 = vld [vmem:[#allocation2 + $0xd8] sm:$0xff]
      %v1036 = vld [vmem:[#allocation2 + $0xe0] sm:$0xff]
      %v1037 = vld [vmem:[#allocation2 + $0xe8] sm:$0xff]
      %v1038 = vld [vmem:[#allocation2 + $0xf0] sm:$0xff]
      %v1039 = vld [vmem:[#allocation2 + $0xf8] sm:$0xff]
      %v1040 = vld [vmem:[#allocation2 + $0x100] sm:$0xff]
      %v1041 = vld [vmem:[#allocation2 + $0x108] sm:$0xff]
      %v1042 = vld [vmem:[#allocation2 + $0x110] sm:$0xff]
      %v1043 = vld [vmem:[#allocation2 + $0x118] sm:$0xff]
      %v1044 = vld [vmem:[#allocation2 + $0x120] sm:$0xff]
      %v1045 = vld [vmem:[#allocation2 + $0x128] sm:$0xff]
      %v1046 = vld [vmem:[#allocation2 + $0x130] sm:$0xff]
      %v1047 = vld [vmem:[#allocation2 + $0x138] sm:$0xff]
      %v1048 = vld [vmem:[#allocation2 + $0x140] sm:$0xff]
      %v1049 = vld [vmem:[#allocation2 + $0x148] sm:$0xff]
      %v1050 = vld [vmem:[#allocation2 + $0x150] sm:$0xff]
      %v1051 = vld [vmem:[#allocation2 + $0x158] sm:$0xff]
      %v1052 = vld [vmem:[#allocation2 + $0x160] sm:$0xff]
      %v1053 = vld [vmem:[#allocation2 + $0x168] sm:$0xff]
      %v1054 = vld [vmem:[#allocation2 + $0x170] sm:$0xff]
      %v1055 = vld [vmem:[#allocation2 + $0x178] sm:$0xff]
      %v1056 = vld [vmem:[#allocation2 + $0x180] sm:$0xff]
      %v1057 = vld [vmem:[#allocation2 + $0x188] sm:$0xff]
      %v1058 = vld [vmem:[#allocation2 + $0x190] sm:$0xff]
      %v1059 = vld [vmem:[#allocation2 + $0x198] sm:$0xff]
      %v1060 = vld [vmem:[#allocation2 + $0x1a0] sm:$0xff]
      %v1061 = vld [vmem:[#allocation2 + $0x1a8] sm:$0xff]
      %v1062 = vld [vmem:[#allocation2 + $0x1b0] sm:$0xff]
      %v1063 = vld [vmem:[#allocation2 + $0x1b8] sm:$0xff]
      %v1064 = vld [vmem:[#allocation2 + $0x1c0] sm:$0xff]
      %v1065 = vld [vmem:[#allocation2 + $0x1c8] sm:$0xff]
      %v1066 = vld [vmem:[#allocation2 + $0x1d0] sm:$0xff]
      %v1067 = vld [vmem:[#allocation2 + $0x1d8] sm:$0xff]
      %v1068 = vld [vmem:[#allocation2 + $0x1e0] sm:$0xff]
      %v1069 = vld [vmem:[#allocation2 + $0x1e8] sm:$0xff]
      %v1070 = vld [vmem:[#allocation2 + $0x1f0] sm:$0xff]
      %v1071 = vld [vmem:[#allocation2 + $0x1f8] sm:$0xff]
      %v1072 = vld [vmem:[#allocation2 + $0x200] sm:$0xff]
      %v1073 = vld [vmem:[#allocation2 + $0x208] sm:$0xff]
      %v1074 = vld [vmem:[#allocation2 + $0x210] sm:$0xff]
      %v1075 = vld [vmem:[#allocation2 + $0x218] sm:$0xff]
      %v1076 = vld [vmem:[#allocation2 + $0x220] sm:$0xff]
      %v1077 = vld [vmem:[#allocation2 + $0x228] sm:$0xff]
      %v1078 = vld [vmem:[#allocation2 + $0x230] sm:$0xff]
      %v1079 = vld [vmem:[#allocation2 + $0x238] sm:$0xff]
      %v1080 = vld [vmem:[#allocation2 + $0x240] sm:$0xff]
      %v1081 = vld [vmem:[#allocation2 + $0x248] sm:$0xff]
      %v1082 = vld [vmem:[#allocation2 + $0x250] sm:$0xff]
      %v1083 = vld [vmem:[#allocation2 + $0x258] sm:$0xff]
      %v1084 = vld [vmem:[#allocation2 + $0x260] sm:$0xff]
      %v1085 = vld [vmem:[#allocation2 + $0x268] sm:$0xff]
      %v1086 = vld [vmem:[#allocation2 + $0x270] sm:$0xff]
      %v1087 = vld [vmem:[#allocation2 + $0x278] sm:$0xff]
      %v1088 = vld [vmem:[#allocation2 + $0x280] sm:$0xff]
      %v1089 = vld [vmem:[#allocation2 + $0x288] sm:$0xff]
      %v1090 = vld [vmem:[#allocation2 + $0x290] sm:$0xff]
      %v1091 = vld [vmem:[#allocation2 + $0x298] sm:$0xff]
      %v1092 = vld [vmem:[#allocation2 + $0x2a0] sm:$0xff]
      %v1093 = vld [vmem:[#allocation2 + $0x2a8] sm:$0xff]
      %v1094 = vld [vmem:[#allocation2 + $0x2b0] sm:$0xff]
      %v1095 = vld [vmem:[#allocation2 + $0x2b8] sm:$0xff]
      %v1096 = vld [vmem:[#allocation2 + $0x2c0] sm:$0xff]
      %v1097 = vld [vmem:[#allocation2 + $0x2c8] sm:$0xff]
      %v1098 = vld [vmem:[#allocation2 + $0x2d0] sm:$0xff]
      %v1099 = vld [vmem:[#allocation2 + $0x2d8] sm:$0xff]
      %v1100 = vld [vmem:[#allocation2 + $0x2e0] sm:$0xff]
      %v1101 = vld [vmem:[#allocation2 + $0x2e8] sm:$0xff]
      %v1102 = vld [vmem:[#allocation2 + $0x2f0] sm:$0xff]
      %v1103 = vld [vmem:[#allocation2 + $0x2f8] sm:$0xff]
      %v1104 = vld [vmem:[#allocation2 + $0x300] sm:$0xff]
      %v1105 = vld [vmem:[#allocation2 + $0x308] sm:$0xff]
      %v1106 = vld [vmem:[#allocation2 + $0x310] sm:$0xff]
      %v1107 = vld [vmem:[#allocation2 + $0x318] sm:$0xff]
      %v1108 = vld [vmem:[#allocation2 + $0x320] sm:$0xff]
      %v1109 = vld [vmem:[#allocation2 + $0x328] sm:$0xff]
      %v1110 = vld [vmem:[#allocation2 + $0x330] sm:$0xff]
      %v1111 = vld [vmem:[#allocation2 + $0x338] sm:$0xff]
      %v1112 = vld [vmem:[#allocation2 + $0x340] sm:$0xff]
      %v1113 = vld [vmem:[#allocation2 + $0x348] sm:$0xff]
      %v1114 = vld [vmem:[#allocation2 + $0x350] sm:$0xff]
      %v1115 = vld [vmem:[#allocation2 + $0x358] sm:$0xff]
      %v1116 = vld [vmem:[%s2] sm:$0xff]
      %v1117 = vld [vmem:[%s2 + $0x8] sm:$0xff]
      %v1118 = vld [vmem:[%s2 + $0x10] sm:$0xff]
      %v1119 = vld [vmem:[%s2 + $0x18] sm:$0xff]
      %1121 = vset.pattern.permute.xlu0 0
      %1122 = vperm.xlu0 %1121, %v1116
      %v1123 = vpop.permute.xlu0 %1122
      %1126 = vset.pattern.permute.xlu0 0
      %1127 = vperm.xlu0 %1126, %v1117
      %v1128 = vpop.permute.xlu0 %1127
      %1131 = vset.pattern.permute.xlu0 0
      %1132 = vperm.xlu0 %1131, %v1118
      %v1133 = vpop.permute.xlu0 %1132
      %1136 = vset.pattern.permute.xlu0 0
      %1137 = vperm.xlu0 %1136, %v1119
      %v1138 = vpop.permute.xlu0 %1137
      %vm1140 = vcmask 261120
      %v1142 = vsel %vm1140, %v998, 0
      %v1145 = vsel %vm1140, %v1001, 0
      %v1148 = vsel %vm1140, %v1004, 0
      %v1151 = vsel %vm1140, %v1007, 0
      %1153 = vmatpush.msra.mxu0 %v1053
      %1154 = vmatpush.msra.mxu0 %v1050
      %1155 = vmatpush.msra.mxu0 %v1047
      %1156 = vmatpush.msra.mxu0 %v1044
      %1157 = vmatpush.msra.mxu0 %v1041
      %1158 = vmatpush.msra.mxu0 %v1038
      %1159 = vmatpush.msra.mxu0 %v1035
      %1160 = vmatpush.msra.mxu0 %v1032
      %1161 = vmatpush.msra.mxu0 %v1029
      %1162 = vmatpush.msra.mxu0 %v1026
      %1163 = vmatpush.msra.mxu0 %v1023
      %1164 = vmatpush.msra.mxu0 %v1020
      %1165 = vmatpush.msra.mxu0 %v1017
      %1166 = vmatpush.msra.mxu0 %v1014
      %1167 = vmatpush.msra.mxu0 %v1011
      %1168 = vmatpush.msra.mxu0 %v1008
      %1169 = vmatmul.f32.gmra.mxu0 %v996
      %v1170 = vpop.f32.mrf.mxu0
      %v1171 = vadd.f32 %v1123, %v1170
      %1172 = vmatmul.f32.gmra.mxu0 %v999
      %v1173 = vpop.f32.mrf.mxu0
      %v1174 = vadd.f32 %v1128, %v1173
      %1175 = vmatmul.f32.gmra.mxu0 %v1002
      %v1176 = vpop.f32.mrf.mxu0
      %v1177 = vadd.f32 %v1133, %v1176
      %1178 = vmatmul.f32.gmra.mxu0 %v1005
      %v1179 = vpop.f32.mrf.mxu0
      %v1180 = vadd.f32 %v1138, %v1179
      %1181 = vdwg.mxu0
      %1182 = vmatpush.msra.mxu0 %v1101
      %1183 = vmatpush.msra.mxu0 %v1098
      %1184 = vmatpush.msra.mxu0 %v1095
      %1185 = vmatpush.msra.mxu0 %v1092
      %1186 = vmatpush.msra.mxu0 %v1089
      %1187 = vmatpush.msra.mxu0 %v1086
      %1188 = vmatpush.msra.mxu0 %v1083
      %1189 = vmatpush.msra.mxu0 %v1080
      %1190 = vmatpush.msra.mxu0 %v1077
      %1191 = vmatpush.msra.mxu0 %v1074
      %1192 = vmatpush.msra.mxu0 %v1071
      %1193 = vmatpush.msra.mxu0 %v1068
      %1194 = vmatpush.msra.mxu0 %v1065
      %1195 = vmatpush.msra.mxu0 %v1062
      %1196 = vmatpush.msra.mxu0 %v1059
      %1197 = vmatpush.msra.mxu0 %v1056
      %1198 = vmatmul.f32.gmra.mxu0 %v997
      %v1199 = vpop.f32.mrf.mxu0
      %v1200 = vadd.f32 %v1171, %v1199
      %1201 = vmatmul.f32.gmra.mxu0 %v1000
      %v1202 = vpop.f32.mrf.mxu0
      %v1203 = vadd.f32 %v1174, %v1202
      %1204 = vmatmul.f32.gmra.mxu0 %v1003
      %v1205 = vpop.f32.mrf.mxu0
      %v1206 = vadd.f32 %v1177, %v1205
      %1207 = vmatmul.f32.gmra.mxu0 %v1006
      %v1208 = vpop.f32.mrf.mxu0
      %v1209 = vadd.f32 %v1180, %v1208
      %1210 = vdwg.mxu0
      %1211 = vmatpush.msra.mxu0 0.0
      %1212 = vmatpush.msra.mxu0 0.0
      %1213 = vmatpush.msra.mxu0 0.0
      %1214 = vmatpush.msra.mxu0 0.0
      %1215 = vmatpush.msra.mxu0 0.0
      %1216 = vmatpush.msra.mxu0 0.0
      %1217 = vmatpush.msra.mxu0 0.0
      %1218 = vmatpush.msra.mxu0 0.0
      %1219 = vmatpush.msra.mxu0 0.0
      %1220 = vmatpush.msra.mxu0 0.0
      %1221 = vmatpush.msra.mxu0 0.0
      %1222 = vmatpush.msra.mxu0 0.0
      %1223 = vmatpush.msra.mxu0 %v1113
      %1224 = vmatpush.msra.mxu0 %v1110
      %1225 = vmatpush.msra.mxu0 %v1107
      %1226 = vmatpush.msra.mxu0 %v1104
      %1227 = vmatmul.f32.gmra.mxu0 %v1142
      %v1228 = vpop.f32.mrf.mxu0
      %v1229 = vadd.f32 %v1200, %v1228
      %1230 = vmatmul.f32.gmra.mxu0 %v1145
      %v1231 = vpop.f32.mrf.mxu0
      %v1232 = vadd.f32 %v1203, %v1231
      %1233 = vmatmul.f32.gmra.mxu0 %v1148
      %v1234 = vpop.f32.mrf.mxu0
      %v1235 = vadd.f32 %v1206, %v1234
      %1236 = vmatmul.f32.gmra.mxu0 %v1151
      %v1237 = vpop.f32.mrf.mxu0
      %v1238 = vadd.f32 %v1209, %v1237
      %1239 = vdwg.mxu0
      %1240 = vmatpush.msra.mxu0 %v1054
      %1241 = vmatpush.msra.mxu0 %v1051
      %1242 = vmatpush.msra.mxu0 %v1048
      %1243 = vmatpush.msra.mxu0 %v1045
      %1244 = vmatpush.msra.mxu0 %v1042
      %1245 = vmatpush.msra.mxu0 %v1039
      %1246 = vmatpush.msra.mxu0 %v1036
      %1247 = vmatpush.msra.mxu0 %v1033
      %1248 = vmatpush.msra.mxu0 %v1030
      %1249 = vmatpush.msra.mxu0 %v1027
      %1250 = vmatpush.msra.mxu0 %v1024
      %1251 = vmatpush.msra.mxu0 %v1021
      %1252 = vmatpush.msra.mxu0 %v1018
      %1253 = vmatpush.msra.mxu0 %v1015
      %1254 = vmatpush.msra.mxu0 %v1012
      %1255 = vmatpush.msra.mxu0 %v1009
      %1256 = vmatmul.f32.gmra.mxu0 %v996
      %v1257 = vpop.f32.mrf.mxu0
      %v1258 = vadd.f32 %v1123, %v1257
      %1259 = vmatmul.f32.gmra.mxu0 %v999
      %v1260 = vpop.f32.mrf.mxu0
      %v1261 = vadd.f32 %v1128, %v1260
      %1262 = vmatmul.f32.gmra.mxu0 %v1002
      %v1263 = vpop.f32.mrf.mxu0
      %v1264 = vadd.f32 %v1133, %v1263
      %1265 = vmatmul.f32.gmra.mxu0 %v1005
      %v1266 = vpop.f32.mrf.mxu0
      %v1267 = vadd.f32 %v1138, %v1266
      %1268 = vdwg.mxu0
      %1269 = vmatpush.msra.mxu0 %v1102
      %1270 = vmatpush.msra.mxu0 %v1099
      %1271 = vmatpush.msra.mxu0 %v1096
      %1272 = vmatpush.msra.mxu0 %v1093
      %1273 = vmatpush.msra.mxu0 %v1090
      %1274 = vmatpush.msra.mxu0 %v1087
      %1275 = vmatpush.msra.mxu0 %v1084
      %1276 = vmatpush.msra.mxu0 %v1081
      %1277 = vmatpush.msra.mxu0 %v1078
      %1278 = vmatpush.msra.mxu0 %v1075
      %1279 = vmatpush.msra.mxu0 %v1072
      %1280 = vmatpush.msra.mxu0 %v1069
      %1281 = vmatpush.msra.mxu0 %v1066
      %1282 = vmatpush.msra.mxu0 %v1063
      %1283 = vmatpush.msra.mxu0 %v1060
      %1284 = vmatpush.msra.mxu0 %v1057
      %1285 = vmatmul.f32.gmra.mxu0 %v997
      %v1286 = vpop.f32.mrf.mxu0
      %v1287 = vadd.f32 %v1258, %v1286
      %1288 = vmatmul.f32.gmra.mxu0 %v1000
      %v1289 = vpop.f32.mrf.mxu0
      %v1290 = vadd.f32 %v1261, %v1289
      %1291 = vmatmul.f32.gmra.mxu0 %v1003
      %v1292 = vpop.f32.mrf.mxu0
      %v1293 = vadd.f32 %v1264, %v1292
      %1294 = vmatmul.f32.gmra.mxu0 %v1006
      %v1295 = vpop.f32.mrf.mxu0
      %v1296 = vadd.f32 %v1267, %v1295
      %1297 = vdwg.mxu0
      %1298 = vmatpush.msra.mxu0 0.0
      %1299 = vmatpush.msra.mxu0 0.0
      %1300 = vmatpush.msra.mxu0 0.0
      %1301 = vmatpush.msra.mxu0 0.0
      %1302 = vmatpush.msra.mxu0 0.0
      %1303 = vmatpush.msra.mxu0 0.0
      %1304 = vmatpush.msra.mxu0 0.0
      %1305 = vmatpush.msra.mxu0 0.0
      %1306 = vmatpush.msra.mxu0 0.0
      %1307 = vmatpush.msra.mxu0 0.0
      %1308 = vmatpush.msra.mxu0 0.0
      %1309 = vmatpush.msra.mxu0 0.0
      %1310 = vmatpush.msra.mxu0 %v1114
      %1311 = vmatpush.msra.mxu0 %v1111
      %1312 = vmatpush.msra.mxu0 %v1108
      %1313 = vmatpush.msra.mxu0 %v1105
      %1314 = vmatmul.f32.gmra.mxu0 %v1142
      %v1315 = vpop.f32.mrf.mxu0
      %v1316 = vadd.f32 %v1287, %v1315
      %1317 = vmatmul.f32.gmra.mxu0 %v1145
      %v1318 = vpop.f32.mrf.mxu0
      %v1319 = vadd.f32 %v1290, %v1318
      %1320 = vmatmul.f32.gmra.mxu0 %v1148
      %v1321 = vpop.f32.mrf.mxu0
      %v1322 = vadd.f32 %v1293, %v1321
      %1323 = vmatmul.f32.gmra.mxu0 %v1151
      %v1324 = vpop.f32.mrf.mxu0
      %v1325 = vadd.f32 %v1296, %v1324
      %1326 = vdwg.mxu0
      %1327 = vmatpush.msra.mxu0 %v1055
      %1328 = vmatpush.msra.mxu0 %v1052
      %1329 = vmatpush.msra.mxu0 %v1049
      %1330 = vmatpush.msra.mxu0 %v1046
      %1331 = vmatpush.msra.mxu0 %v1043
      %1332 = vmatpush.msra.mxu0 %v1040
      %1333 = vmatpush.msra.mxu0 %v1037
      %1334 = vmatpush.msra.mxu0 %v1034
      %1335 = vmatpush.msra.mxu0 %v1031
      %1336 = vmatpush.msra.mxu0 %v1028
      %1337 = vmatpush.msra.mxu0 %v1025
      %1338 = vmatpush.msra.mxu0 %v1022
      %1339 = vmatpush.msra.mxu0 %v1019
      %1340 = vmatpush.msra.mxu0 %v1016
      %1341 = vmatpush.msra.mxu0 %v1013
      %1342 = vmatpush.msra.mxu0 %v1010
      %1343 = vmatmul.f32.gmra.mxu0 %v996
      %v1344 = vpop.f32.mrf.mxu0
      %v1345 = vadd.f32 %v1123, %v1344
      %1346 = vmatmul.f32.gmra.mxu0 %v999
      %v1347 = vpop.f32.mrf.mxu0
      %v1348 = vadd.f32 %v1128, %v1347
      %1349 = vmatmul.f32.gmra.mxu0 %v1002
      %v1350 = vpop.f32.mrf.mxu0
      %v1351 = vadd.f32 %v1133, %v1350
      %1352 = vmatmul.f32.gmra.mxu0 %v1005
      %v1353 = vpop.f32.mrf.mxu0
      %v1354 = vadd.f32 %v1138, %v1353
      %1355 = vdwg.mxu0
      %1356 = vmatpush.msra.mxu0 %v1103
      %1357 = vmatpush.msra.mxu0 %v1100
      %1358 = vmatpush.msra.mxu0 %v1097
      %1359 = vmatpush.msra.mxu0 %v1094
      %1360 = vmatpush.msra.mxu0 %v1091
      %1361 = vmatpush.msra.mxu0 %v1088
      %1362 = vmatpush.msra.mxu0 %v1085
      %1363 = vmatpush.msra.mxu0 %v1082
      %1364 = vmatpush.msra.mxu0 %v1079
      %1365 = vmatpush.msra.mxu0 %v1076
      %1366 = vmatpush.msra.mxu0 %v1073
      %1367 = vmatpush.msra.mxu0 %v1070
      %1368 = vmatpush.msra.mxu0 %v1067
      %1369 = vmatpush.msra.mxu0 %v1064
      %1370 = vmatpush.msra.mxu0 %v1061
      %1371 = vmatpush.msra.mxu0 %v1058
      %1372 = vmatmul.f32.gmra.mxu0 %v997
      %v1373 = vpop.f32.mrf.mxu0
      %v1374 = vadd.f32 %v1345, %v1373
      %1375 = vmatmul.f32.gmra.mxu0 %v1000
      %v1376 = vpop.f32.mrf.mxu0
      %v1377 = vadd.f32 %v1348, %v1376
      %1378 = vmatmul.f32.gmra.mxu0 %v1003
      %v1379 = vpop.f32.mrf.mxu0
      %v1380 = vadd.f32 %v1351, %v1379
      %1381 = vmatmul.f32.gmra.mxu0 %v1006
      %v1382 = vpop.f32.mrf.mxu0
      %v1383 = vadd.f32 %v1354, %v1382
      %1384 = vdwg.mxu0
      %1385 = vmatpush.msra.mxu0 0.0
      %1386 = vmatpush.msra.mxu0 0.0
      %1387 = vmatpush.msra.mxu0 0.0
      %1388 = vmatpush.msra.mxu0 0.0
      %1389 = vmatpush.msra.mxu0 0.0
      %1390 = vmatpush.msra.mxu0 0.0
      %1391 = vmatpush.msra.mxu0 0.0
      %1392 = vmatpush.msra.mxu0 0.0
      %1393 = vmatpush.msra.mxu0 0.0
      %1394 = vmatpush.msra.mxu0 0.0
      %1395 = vmatpush.msra.mxu0 0.0
      %1396 = vmatpush.msra.mxu0 0.0
      %1397 = vmatpush.msra.mxu0 %v1115
      %1398 = vmatpush.msra.mxu0 %v1112
      %1399 = vmatpush.msra.mxu0 %v1109
      %1400 = vmatpush.msra.mxu0 %v1106
      %1401 = vmatmul.f32.gmra.mxu0 %v1142
      %v1402 = vpop.f32.mrf.mxu0
      %v1403 = vadd.f32 %v1374, %v1402
      %1404 = vmatmul.f32.gmra.mxu0 %v1145
      %v1405 = vpop.f32.mrf.mxu0
      %v1406 = vadd.f32 %v1377, %v1405
      %1407 = vmatmul.f32.gmra.mxu0 %v1148
      %v1408 = vpop.f32.mrf.mxu0
      %v1409 = vadd.f32 %v1380, %v1408
      %1410 = vmatmul.f32.gmra.mxu0 %v1151
      %v1411 = vpop.f32.mrf.mxu0
      %v1412 = vadd.f32 %v1383, %v1411
      %1413 = vdwg.mxu0
      %v1415 = vperm.slane %v387, 0
      %v1416 = vperm.slane %v387, 1
      %v1417 = vperm.slane %v387, 2
      %v1421 = vmul.f32 %v1229, %v1415
      %v1422 = vmul.f32 %v1316, %v1416
      %v1423 = vmul.f32 %v1403, %v1417
      %v1424 = vmul.f32 %v1232, %v1415
      %v1425 = vmul.f32 %v1319, %v1416
      %v1426 = vmul.f32 %v1406, %v1417
      %v1427 = vmul.f32 %v1235, %v1415
      %v1428 = vmul.f32 %v1322, %v1416
      %v1429 = vmul.f32 %v1409, %v1417
      %v1430 = vmul.f32 %v1238, %v1415
      %v1431 = vmul.f32 %v1325, %v1416
      %v1432 = vmul.f32 %v1412, %v1417
      %v1433 = vadd.f32 %v1421, %v1422
      %v1434 = vadd.f32 %v1433, %v1423
      %1435 = vadd.xlane.f32.xlu0 %v1434
      %v1436 = vpop.xlane.xlu0 %1435
      %v1437 = vadd.f32 %v1424, %v1425
      %v1438 = vadd.f32 %v1437, %v1426
      %1439 = vadd.xlane.f32.xlu0 %v1438
      %v1440 = vpop.xlane.xlu0 %1439
      %v1441 = vadd.f32 %v1427, %v1428
      %v1442 = vadd.f32 %v1441, %v1429
      %1443 = vadd.xlane.f32.xlu0 %v1442
      %v1444 = vpop.xlane.xlu0 %1443
      %v1445 = vadd.f32 %v1430, %v1431
      %v1446 = vadd.f32 %v1445, %v1432
      %1447 = vadd.xlane.f32.xlu0 %v1446
      %v1448 = vpop.xlane.xlu0 %1447
      %v1449 = vmul.f32 %v1421, %v1421
      %v1450 = vmul.f32 %v1422, %v1422
      %v1451 = vmul.f32 %v1423, %v1423
      %v1452 = vmul.f32 %v1424, %v1424
      %v1453 = vmul.f32 %v1425, %v1425
      %v1454 = vmul.f32 %v1426, %v1426
      %v1455 = vmul.f32 %v1427, %v1427
      %v1456 = vmul.f32 %v1428, %v1428
      %v1457 = vmul.f32 %v1429, %v1429
      %v1458 = vmul.f32 %v1430, %v1430
      %v1459 = vmul.f32 %v1431, %v1431
      %v1460 = vmul.f32 %v1432, %v1432
      %v1461 = vadd.f32 %v1449, %v1450
      %v1462 = vadd.f32 %v1461, %v1451
      %1463 = vadd.xlane.f32.xlu0 %v1462
      %v1464 = vpop.xlane.xlu0 %1463
      %v1465 = vadd.f32 %v1452, %v1453
      %v1466 = vadd.f32 %v1465, %v1454
      %1467 = vadd.xlane.f32.xlu0 %v1466
      %v1468 = vpop.xlane.xlu0 %1467
      %v1469 = vadd.f32 %v1455, %v1456
      %v1470 = vadd.f32 %v1469, %v1457
      %1471 = vadd.xlane.f32.xlu0 %v1470
      %v1472 = vpop.xlane.xlu0 %1471
      %v1473 = vadd.f32 %v1458, %v1459
      %v1474 = vadd.f32 %v1473, %v1460
      %1475 = vadd.xlane.f32.xlu0 %v1474
      %v1476 = vpop.xlane.xlu0 %1475
      %v1478 = vsel %vm1140, %v388, 0
      %v1481 = vsel %vm1140, %v389, 0
      %v1484 = vsel %vm1140, %v390, 0
      %v1487 = vsel %vm1140, %v391, 0
      %1489 = vmatpush.msra.mxu0 0.0
      %1490 = vmatpush.msra.mxu0 0.0
      %1491 = vmatpush.msra.mxu0 0.0
      %1492 = vmatpush.msra.mxu0 0.0
      %1493 = vmatpush.msra.mxu0 0.0
      %1494 = vmatpush.msra.mxu0 0.0
      %1495 = vmatpush.msra.mxu0 0.0
      %1496 = vmatpush.msra.mxu0 0.0
      %1497 = vmatpush.msra.mxu0 0.0
      %1498 = vmatpush.msra.mxu0 0.0
      %1499 = vmatpush.msra.mxu0 0.0
      %1500 = vmatpush.msra.mxu0 0.0
      %1501 = vmatpush.msra.mxu0 %v1448
      %1502 = vmatpush.msra.mxu0 %v1444
      %1503 = vmatpush.msra.mxu0 %v1440
      %1504 = vmatpush.msra.mxu0 %v1436
      %1505 = vmatmul.f32.gmra.mxu0 %v1478
      %v1506 = vpop.f32.mrf.mxu0
      %v1507 = vadd.f32 0.0, %v1506
      %1508 = vmatmul.f32.gmra.mxu0 %v1481
      %v1509 = vpop.f32.mrf.mxu0
      %v1510 = vadd.f32 0.0, %v1509
      %1511 = vmatmul.f32.gmra.mxu0 %v1484
      %v1512 = vpop.f32.mrf.mxu0
      %v1513 = vadd.f32 0.0, %v1512
      %1514 = vmatmul.f32.gmra.mxu0 %v1487
      %v1515 = vpop.f32.mrf.mxu0
      %v1516 = vadd.f32 0.0, %v1515
      %1517 = vdwg.mxu0
      %v1518 = vmul.f32 %v1507, 0.0009765625
      %v1519 = vmul.f32 %v1510, 0.0009765625
      %v1520 = vmul.f32 %v1513, 0.0009765625
      %v1521 = vmul.f32 %v1516, 0.0009765625
      %1522 = vmatpush.msra.mxu0 0.0
      %1523 = vmatpush.msra.mxu0 0.0
      %1524 = vmatpush.msra.mxu0 0.0
      %1525 = vmatpush.msra.mxu0 0.0
      %1526 = vmatpush.msra.mxu0 0.0
      %1527 = vmatpush.msra.mxu0 0.0
      %1528 = vmatpush.msra.mxu0 0.0
      %1529 = vmatpush.msra.mxu0 0.0
      %1530 = vmatpush.msra.mxu0 0.0
      %1531 = vmatpush.msra.mxu0 0.0
      %1532 = vmatpush.msra.mxu0 0.0
      %1533 = vmatpush.msra.mxu0 0.0
      %1534 = vmatpush.msra.mxu0 %v1476
      %1535 = vmatpush.msra.mxu0 %v1472
      %1536 = vmatpush.msra.mxu0 %v1468
      %1537 = vmatpush.msra.mxu0 %v1464
      %1538 = vmatmul.f32.gmra.mxu0 %v1478
      %v1539 = vpop.f32.mrf.mxu0
      %v1540 = vadd.f32 0.0, %v1539
      %1541 = vmatmul.f32.gmra.mxu0 %v1481
      %v1542 = vpop.f32.mrf.mxu0
      %v1543 = vadd.f32 0.0, %v1542
      %1544 = vmatmul.f32.gmra.mxu0 %v1484
      %v1545 = vpop.f32.mrf.mxu0
      %v1546 = vadd.f32 0.0, %v1545
      %1547 = vmatmul.f32.gmra.mxu0 %v1487
      %v1548 = vpop.f32.mrf.mxu0
      %v1549 = vadd.f32 0.0, %v1548
      %1550 = vdwg.mxu0
      %v1551 = vmul.f32 %v1540, 0.0009765625
      %v1552 = vmul.f32 %v1543, 0.0009765625
      %v1553 = vmul.f32 %v1546, 0.0009765625
      %v1554 = vmul.f32 %v1549, 0.0009765625
      %v1555 = vmul.f32 %v1518, %v1518
      %v1556 = vmul.f32 %v1519, %v1519
      %v1557 = vmul.f32 %v1520, %v1520
      %v1558 = vmul.f32 %v1521, %v1521
      %v1559 = vsub.f32 %v1551, %v1555
      %v1560 = vsub.f32 %v1552, %v1556
      %v1561 = vsub.f32 %v1553, %v1557
      %v1562 = vsub.f32 %v1554, %v1558
      %v1563 = vmax.f32 %v1559, 0.0
      %v1564 = vmax.f32 %v1560, 0.0
      %v1565 = vmax.f32 %v1561, 0.0
      %v1566 = vmax.f32 %v1562, 0.0
      %v1567 = vadd.f32 %v1563, 1e-05
      %v1568 = vadd.f32 %v1564, 1e-05
      %v1569 = vadd.f32 %v1565, 1e-05
      %v1570 = vadd.f32 %v1566, 1e-05
      %v1571 = vrsqrt.pop %v1567
      %v1572 = vmul.f32 %v1571, %v1567
      %v1573 = vmul.f32 %v1572, %v1571
      %v1574 = vmul.f32 0.5, %v1573
      %v1575 = vsub.f32 1.5, %v1574
      %v1576 = vmul.f32 %v1571, %v1575
      %vm1577 = vweird.f32 %v1567
      %vm1578 = vweird.f32 %v1571
      %vm1579 = vmor %vm1577, %vm1578
      %v1580 = vsel %vm1579, %v1571, %v1576
      %v1581 = vrsqrt.pop %v1568
      %v1582 = vmul.f32 %v1581, %v1568
      %v1583 = vmul.f32 %v1582, %v1581
      %v1584 = vmul.f32 0.5, %v1583
      %v1585 = vsub.f32 1.5, %v1584
      %v1586 = vmul.f32 %v1581, %v1585
      %vm1587 = vweird.f32 %v1568
      %vm1588 = vweird.f32 %v1581
      %vm1589 = vmor %vm1587, %vm1588
      %v1590 = vsel %vm1589, %v1581, %v1586
      %v1591 = vrsqrt.pop %v1569
      %v1592 = vmul.f32 %v1591, %v1569
      %v1593 = vmul.f32 %v1592, %v1591
      %v1594 = vmul.f32 0.5, %v1593
      %v1595 = vsub.f32 1.5, %v1594
      %v1596 = vmul.f32 %v1591, %v1595
      %vm1597 = vweird.f32 %v1569
      %vm1598 = vweird.f32 %v1591
      %vm1599 = vmor %vm1597, %vm1598
      %v1600 = vsel %vm1599, %v1591, %v1596
      %v1601 = vrsqrt.pop %v1570
      %v1602 = vmul.f32 %v1601, %v1570
      %v1603 = vmul.f32 %v1602, %v1601
      %v1604 = vmul.f32 0.5, %v1603
      %v1605 = vsub.f32 1.5, %v1604
      %v1606 = vmul.f32 %v1601, %v1605
      %vm1607 = vweird.f32 %v1570
      %vm1608 = vweird.f32 %v1601
      %vm1609 = vmor %vm1607, %vm1608
      %v1610 = vsel %vm1609, %v1601, %v1606
      %v1611 = vld [vmem:[%s3] sm:$0xff]
      %v1612 = vld [vmem:[%s3 + $0x8] sm:$0xff]
      %v1613 = vld [vmem:[%s3 + $0x10] sm:$0xff]
      %v1614 = vld [vmem:[%s3 + $0x18] sm:$0xff]
      %v1615 = vmul.f32 %v1580, %v1611
      %v1616 = vmul.f32 %v1590, %v1612
      %v1617 = vmul.f32 %v1600, %v1613
      %v1618 = vmul.f32 %v1610, %v1614
      %v1619 = vld [vmem:[%s4] sm:$0xff]
      %v1620 = vld [vmem:[%s4 + $0x8] sm:$0xff]
      %v1621 = vld [vmem:[%s4 + $0x10] sm:$0xff]
      %v1622 = vld [vmem:[%s4 + $0x18] sm:$0xff]
      %v1623 = vmul.f32 %v1518, %v1615
      %v1624 = vmul.f32 %v1519, %v1616
      %v1625 = vmul.f32 %v1520, %v1617
      %v1626 = vmul.f32 %v1521, %v1618
      %v1627 = vsub.f32 %v1619, %v1623
      %v1628 = vsub.f32 %v1620, %v1624
      %v1629 = vsub.f32 %v1621, %v1625
      %v1630 = vsub.f32 %v1622, %v1626
      %1632 = vset.pattern.permute.xlu0 0
      %1633 = vperm.xlu0 %1632, %v1615
      %v1634 = vpop.permute.xlu0 %1633
      %1637 = vset.pattern.permute.xlu0 0
      %1638 = vperm.xlu0 %1637, %v1616
      %v1639 = vpop.permute.xlu0 %1638
      %1642 = vset.pattern.permute.xlu0 0
      %1643 = vperm.xlu0 %1642, %v1617
      %v1644 = vpop.permute.xlu0 %1643
      %1647 = vset.pattern.permute.xlu0 0
      %1648 = vperm.xlu0 %1647, %v1618
      %v1649 = vpop.permute.xlu0 %1648
      %v1651 = vmul.f32 %v1229, %v1634
      %v1652 = vmul.f32 %v1316, %v1634
      %v1653 = vmul.f32 %v1403, %v1634
      %v1654 = vmul.f32 %v1232, %v1639
      %v1655 = vmul.f32 %v1319, %v1639
      %v1656 = vmul.f32 %v1406, %v1639
      %v1657 = vmul.f32 %v1235, %v1644
      %v1658 = vmul.f32 %v1322, %v1644
      %v1659 = vmul.f32 %v1409, %v1644
      %v1660 = vmul.f32 %v1238, %v1649
      %v1661 = vmul.f32 %v1325, %v1649
      %v1662 = vmul.f32 %v1412, %v1649
      %1664 = vset.pattern.permute.xlu0 0
      %1665 = vperm.xlu0 %1664, %v1627
      %v1666 = vpop.permute.xlu0 %1665
      %1669 = vset.pattern.permute.xlu0 0
      %1670 = vperm.xlu0 %1669, %v1628
      %v1671 = vpop.permute.xlu0 %1670
      %1674 = vset.pattern.permute.xlu0 0
      %1675 = vperm.xlu0 %1674, %v1629
      %v1676 = vpop.permute.xlu0 %1675
      %1679 = vset.pattern.permute.xlu0 0
      %1680 = vperm.xlu0 %1679, %v1630
      %v1681 = vpop.permute.xlu0 %1680
      %v1683 = vadd.f32 %v1651, %v1666
      %v1684 = vadd.f32 %v1652, %v1666
      %v1685 = vadd.f32 %v1653, %v1666
      %v1686 = vadd.f32 %v1654, %v1671
      %v1687 = vadd.f32 %v1655, %v1671
      %v1688 = vadd.f32 %v1656, %v1671
      %v1689 = vadd.f32 %v1657, %v1676
      %v1690 = vadd.f32 %v1658, %v1676
      %v1691 = vadd.f32 %v1659, %v1676
      %v1692 = vadd.f32 %v1660, %v1681
      %v1693 = vadd.f32 %v1661, %v1681
      %v1694 = vadd.f32 %v1662, %v1681
      %v1695 = vxor.u32 %v1683, 2147483648
      %v1696 = vxor.u32 %v1684, 2147483648
      %v1697 = vxor.u32 %v1685, 2147483648
      %v1698 = vxor.u32 %v1686, 2147483648
      %v1699 = vxor.u32 %v1687, 2147483648
      %v1700 = vxor.u32 %v1688, 2147483648
      %v1701 = vxor.u32 %v1689, 2147483648
      %v1702 = vxor.u32 %v1690, 2147483648
      %v1703 = vxor.u32 %v1691, 2147483648
      %v1704 = vxor.u32 %v1692, 2147483648
      %v1705 = vxor.u32 %v1693, 2147483648
      %v1706 = vxor.u32 %v1694, 2147483648
      %v1707 = vmul.f32 %v1695, 1.442695
      %v1708 = vpow.pop %v1707
      %v1709 = vmul.f32 %v1696, 1.442695
      %v1710 = vpow.pop %v1709
      %v1711 = vmul.f32 %v1697, 1.442695
      %v1712 = vpow.pop %v1711
      %v1713 = vmul.f32 %v1698, 1.442695
      %v1714 = vpow.pop %v1713
      %v1715 = vmul.f32 %v1699, 1.442695
      %v1716 = vpow.pop %v1715
      %v1717 = vmul.f32 %v1700, 1.442695
      %v1718 = vpow.pop %v1717
      %v1719 = vmul.f32 %v1701, 1.442695
      %v1720 = vpow.pop %v1719
      %v1721 = vmul.f32 %v1702, 1.442695
      %v1722 = vpow.pop %v1721
      %v1723 = vmul.f32 %v1703, 1.442695
      %v1724 = vpow.pop %v1723
      %v1725 = vmul.f32 %v1704, 1.442695
      %v1726 = vpow.pop %v1725
      %v1727 = vmul.f32 %v1705, 1.442695
      %v1728 = vpow.pop %v1727
      %v1729 = vmul.f32 %v1706, 1.442695
      %v1730 = vpow.pop %v1729
      %v1731 = vadd.f32 %v1708, 1.0
      %v1732 = vadd.f32 %v1710, 1.0
      %v1733 = vadd.f32 %v1712, 1.0
      %v1734 = vadd.f32 %v1714, 1.0
      %v1735 = vadd.f32 %v1716, 1.0
      %v1736 = vadd.f32 %v1718, 1.0
      %v1737 = vadd.f32 %v1720, 1.0
      %v1738 = vadd.f32 %v1722, 1.0
      %v1739 = vadd.f32 %v1724, 1.0
      %v1740 = vadd.f32 %v1726, 1.0
      %v1741 = vadd.f32 %v1728, 1.0
      %v1742 = vadd.f32 %v1730, 1.0
      %v1743 = vrcp.pop %v1731
      %v1744 = vmul.f32 %v1731, %v1743
      %v1745 = vsub.f32 1.0, %v1744
      %v1746 = vmul.f32 %v1743, %v1745
      %v1747 = vadd.f32 %v1743, %v1746
      %vm1748 = vweird.f32 %v1731
      %vm1749 = vweird.f32 %v1743
      %vm1750 = vmor %vm1748, %vm1749
      %v1751 = vsel %vm1750, %v1743, %v1747
      %v1752 = vand.u32 2147483647, %v1731
      %vm1753 = vcmp.eq.f32.partialorder %v1752, 8.507059e+37
      %v1754 = vand.u32 %v1731, 2147483648
      %v1755 = vor.u32 1.1754944e-38, %v1754
      %v1756 = vsel %vm1753, %v1755, %v1751
      %v1757 = vmul.f32 1.0, %v1756
      %v1758 = vrcp.pop %v1732
      %v1759 = vmul.f32 %v1732, %v1758
      %v1760 = vsub.f32 1.0, %v1759
      %v1761 = vmul.f32 %v1758, %v1760
      %v1762 = vadd.f32 %v1758, %v1761
      %vm1763 = vweird.f32 %v1732
      %vm1764 = vweird.f32 %v1758
      %vm1765 = vmor %vm1763, %vm1764
      %v1766 = vsel %vm1765, %v1758, %v1762
      %v1767 = vand.u32 2147483647, %v1732
      %vm1768 = vcmp.eq.f32.partialorder %v1767, 8.507059e+37
      %v1769 = vand.u32 %v1732, 2147483648
      %v1770 = vor.u32 1.1754944e-38, %v1769
      %v1771 = vsel %vm1768, %v1770, %v1766
      %v1772 = vmul.f32 1.0, %v1771
      %v1773 = vrcp.pop %v1733
      %v1774 = vmul.f32 %v1733, %v1773
      %v1775 = vsub.f32 1.0, %v1774
      %v1776 = vmul.f32 %v1773, %v1775
      %v1777 = vadd.f32 %v1773, %v1776
      %vm1778 = vweird.f32 %v1733
      %vm1779 = vweird.f32 %v1773
      %vm1780 = vmor %vm1778, %vm1779
      %v1781 = vsel %vm1780, %v1773, %v1777
      %v1782 = vand.u32 2147483647, %v1733
      %vm1783 = vcmp.eq.f32.partialorder %v1782, 8.507059e+37
      %v1784 = vand.u32 %v1733, 2147483648
      %v1785 = vor.u32 1.1754944e-38, %v1784
      %v1786 = vsel %vm1783, %v1785, %v1781
      %v1787 = vmul.f32 1.0, %v1786
      %v1788 = vrcp.pop %v1734
      %v1789 = vmul.f32 %v1734, %v1788
      %v1790 = vsub.f32 1.0, %v1789
      %v1791 = vmul.f32 %v1788, %v1790
      %v1792 = vadd.f32 %v1788, %v1791
      %vm1793 = vweird.f32 %v1734
      %vm1794 = vweird.f32 %v1788
      %vm1795 = vmor %vm1793, %vm1794
      %v1796 = vsel %vm1795, %v1788, %v1792
      %v1797 = vand.u32 2147483647, %v1734
      %vm1798 = vcmp.eq.f32.partialorder %v1797, 8.507059e+37
      %v1799 = vand.u32 %v1734, 2147483648
      %v1800 = vor.u32 1.1754944e-38, %v1799
      %v1801 = vsel %vm1798, %v1800, %v1796
      %v1802 = vmul.f32 1.0, %v1801
      %v1803 = vrcp.pop %v1735
      %v1804 = vmul.f32 %v1735, %v1803
      %v1805 = vsub.f32 1.0, %v1804
      %v1806 = vmul.f32 %v1803, %v1805
      %v1807 = vadd.f32 %v1803, %v1806
      %vm1808 = vweird.f32 %v1735
      %vm1809 = vweird.f32 %v1803
      %vm1810 = vmor %vm1808, %vm1809
      %v1811 = vsel %vm1810, %v1803, %v1807
      %v1812 = vand.u32 2147483647, %v1735
      %vm1813 = vcmp.eq.f32.partialorder %v1812, 8.507059e+37
      %v1814 = vand.u32 %v1735, 2147483648
      %v1815 = vor.u32 1.1754944e-38, %v1814
      %v1816 = vsel %vm1813, %v1815, %v1811
      %v1817 = vmul.f32 1.0, %v1816
      %v1818 = vrcp.pop %v1736
      %v1819 = vmul.f32 %v1736, %v1818
      %v1820 = vsub.f32 1.0, %v1819
      %v1821 = vmul.f32 %v1818, %v1820
      %v1822 = vadd.f32 %v1818, %v1821
      %vm1823 = vweird.f32 %v1736
      %vm1824 = vweird.f32 %v1818
      %vm1825 = vmor %vm1823, %vm1824
      %v1826 = vsel %vm1825, %v1818, %v1822
      %v1827 = vand.u32 2147483647, %v1736
      %vm1828 = vcmp.eq.f32.partialorder %v1827, 8.507059e+37
      %v1829 = vand.u32 %v1736, 2147483648
      %v1830 = vor.u32 1.1754944e-38, %v1829
      %v1831 = vsel %vm1828, %v1830, %v1826
      %v1832 = vmul.f32 1.0, %v1831
      %v1833 = vrcp.pop %v1737
      %v1834 = vmul.f32 %v1737, %v1833
      %v1835 = vsub.f32 1.0, %v1834
      %v1836 = vmul.f32 %v1833, %v1835
      %v1837 = vadd.f32 %v1833, %v1836
      %vm1838 = vweird.f32 %v1737
      %vm1839 = vweird.f32 %v1833
      %vm1840 = vmor %vm1838, %vm1839
      %v1841 = vsel %vm1840, %v1833, %v1837
      %v1842 = vand.u32 2147483647, %v1737
      %vm1843 = vcmp.eq.f32.partialorder %v1842, 8.507059e+37
      %v1844 = vand.u32 %v1737, 2147483648
      %v1845 = vor.u32 1.1754944e-38, %v1844
      %v1846 = vsel %vm1843, %v1845, %v1841
      %v1847 = vmul.f32 1.0, %v1846
      %v1848 = vrcp.pop %v1738
      %v1849 = vmul.f32 %v1738, %v1848
      %v1850 = vsub.f32 1.0, %v1849
      %v1851 = vmul.f32 %v1848, %v1850
      %v1852 = vadd.f32 %v1848, %v1851
      %vm1853 = vweird.f32 %v1738
      %vm1854 = vweird.f32 %v1848
      %vm1855 = vmor %vm1853, %vm1854
      %v1856 = vsel %vm1855, %v1848, %v1852
      %v1857 = vand.u32 2147483647, %v1738
      %vm1858 = vcmp.eq.f32.partialorder %v1857, 8.507059e+37
      %v1859 = vand.u32 %v1738, 2147483648
      %v1860 = vor.u32 1.1754944e-38, %v1859
      %v1861 = vsel %vm1858, %v1860, %v1856
      %v1862 = vmul.f32 1.0, %v1861
      %v1863 = vrcp.pop %v1739
      %v1864 = vmul.f32 %v1739, %v1863
      %v1865 = vsub.f32 1.0, %v1864
      %v1866 = vmul.f32 %v1863, %v1865
      %v1867 = vadd.f32 %v1863, %v1866
      %vm1868 = vweird.f32 %v1739
      %vm1869 = vweird.f32 %v1863
      %vm1870 = vmor %vm1868, %vm1869
      %v1871 = vsel %vm1870, %v1863, %v1867
      %v1872 = vand.u32 2147483647, %v1739
      %vm1873 = vcmp.eq.f32.partialorder %v1872, 8.507059e+37
      %v1874 = vand.u32 %v1739, 2147483648
      %v1875 = vor.u32 1.1754944e-38, %v1874
      %v1876 = vsel %vm1873, %v1875, %v1871
      %v1877 = vmul.f32 1.0, %v1876
      %v1878 = vrcp.pop %v1740
      %v1879 = vmul.f32 %v1740, %v1878
      %v1880 = vsub.f32 1.0, %v1879
      %v1881 = vmul.f32 %v1878, %v1880
      %v1882 = vadd.f32 %v1878, %v1881
      %vm1883 = vweird.f32 %v1740
      %vm1884 = vweird.f32 %v1878
      %vm1885 = vmor %vm1883, %vm1884
      %v1886 = vsel %vm1885, %v1878, %v1882
      %v1887 = vand.u32 2147483647, %v1740
      %vm1888 = vcmp.eq.f32.partialorder %v1887, 8.507059e+37
      %v1889 = vand.u32 %v1740, 2147483648
      %v1890 = vor.u32 1.1754944e-38, %v1889
      %v1891 = vsel %vm1888, %v1890, %v1886
      %v1892 = vmul.f32 1.0, %v1891
      %v1893 = vrcp.pop %v1741
      %v1894 = vmul.f32 %v1741, %v1893
      %v1895 = vsub.f32 1.0, %v1894
      %v1896 = vmul.f32 %v1893, %v1895
      %v1897 = vadd.f32 %v1893, %v1896
      %vm1898 = vweird.f32 %v1741
      %vm1899 = vweird.f32 %v1893
      %vm1900 = vmor %vm1898, %vm1899
      %v1901 = vsel %vm1900, %v1893, %v1897
      %v1902 = vand.u32 2147483647, %v1741
      %vm1903 = vcmp.eq.f32.partialorder %v1902, 8.507059e+37
      %v1904 = vand.u32 %v1741, 2147483648
      %v1905 = vor.u32 1.1754944e-38, %v1904
      %v1906 = vsel %vm1903, %v1905, %v1901
      %v1907 = vmul.f32 1.0, %v1906
      %v1908 = vrcp.pop %v1742
      %v1909 = vmul.f32 %v1742, %v1908
      %v1910 = vsub.f32 1.0, %v1909
      %v1911 = vmul.f32 %v1908, %v1910
      %v1912 = vadd.f32 %v1908, %v1911
      %vm1913 = vweird.f32 %v1742
      %vm1914 = vweird.f32 %v1908
      %vm1915 = vmor %vm1913, %vm1914
      %v1916 = vsel %vm1915, %v1908, %v1912
      %v1917 = vand.u32 2147483647, %v1742
      %vm1918 = vcmp.eq.f32.partialorder %v1917, 8.507059e+37
      %v1919 = vand.u32 %v1742, 2147483648
      %v1920 = vor.u32 1.1754944e-38, %v1919
      %v1921 = vsel %vm1918, %v1920, %v1916
      %v1922 = vmul.f32 1.0, %v1921
      %v1923 = vmul.f32 %v1683, %v1757
      %v1924 = vmul.f32 %v1684, %v1772
      %v1925 = vmul.f32 %v1685, %v1787
      %v1926 = vmul.f32 %v1686, %v1802
      %v1927 = vmul.f32 %v1687, %v1817
      %v1928 = vmul.f32 %v1688, %v1832
      %v1929 = vmul.f32 %v1689, %v1847
      %v1930 = vmul.f32 %v1690, %v1862
      %v1931 = vmul.f32 %v1691, %v1877
      %v1932 = vmul.f32 %v1692, %v1892
      %v1933 = vmul.f32 %v1693, %v1907
      %v1934 = vmul.f32 %v1694, %v1922
      %v1935 = vmul.f32 %v1923, %v1415
      %v1936 = vmul.f32 %v1924, %v1416
      %v1937 = vmul.f32 %v1925, %v1417
      %v1938 = vmul.f32 %v1926, %v1415
      %v1939 = vmul.f32 %v1927, %v1416
      %v1940 = vmul.f32 %v1928, %v1417
      %v1941 = vmul.f32 %v1929, %v1415
      %v1942 = vmul.f32 %v1930, %v1416
      %v1943 = vmul.f32 %v1931, %v1417
      %v1944 = vmul.f32 %v1932, %v1415
      %v1945 = vmul.f32 %v1933, %v1416
      %v1946 = vmul.f32 %v1934, %v1417
      %1947 = vst [vmem:[#allocation3] sm:$0xff] 0.0
      %1948 = vst [vmem:[#allocation3 + $0x8] sm:$0xff] 0.0
      %1949 = vst [vmem:[#allocation3 + $0x10] sm:$0xff] 0.0
      %1950 = vst [vmem:[#allocation3 + $0x18] sm:$0xff] 0.0
      %1951 = vst [vmem:[#allocation3 + $0x20] sm:$0xff] 0.0
      %1952 = vst [vmem:[#allocation3 + $0x28] sm:$0xff] 0.0
      %1953 = vst [vmem:[#allocation3 + $0x30] sm:$0xff] 0.0
      %1954 = vst [vmem:[#allocation3 + $0x38] sm:$0xff] 0.0
      %1955 = vst [vmem:[#allocation3 + $0x40] sm:$0xff] 0.0
      %1956 = vst [vmem:[#allocation3 + $0x48] sm:$0xff] 0.0
      %1957 = vst [vmem:[#allocation3 + $0x50] sm:$0xff] 0.0
      %1958 = vst [vmem:[#allocation3 + $0x58] sm:$0xff] 0.0
      %1959 = vst [vmem:[#allocation3 + $0x60] sm:$0xff] 0.0
      %1960 = vst [vmem:[#allocation3 + $0x68] sm:$0xff] 0.0
      %1961 = vst [vmem:[#allocation3 + $0x70] sm:$0xff] 0.0
      %1962 = vst [vmem:[#allocation3 + $0x78] sm:$0xff] 0.0
      %1963 = vst [vmem:[#allocation3 + $0x80] sm:$0xff] 0.0
      %1964 = vst [vmem:[#allocation3 + $0x88] sm:$0xff] 0.0
      %1965 = vst [vmem:[#allocation3 + $0x90] sm:$0xff] 0.0
      %1966 = vst [vmem:[#allocation3 + $0x98] sm:$0xff] 0.0
      %1967 = vst [vmem:[#allocation3 + $0x8] sm:$0xff] %v1935
      %1968 = vst [vmem:[#allocation3 + $0x10] sm:$0xff] %v1936
      %1969 = vst [vmem:[#allocation3 + $0x18] sm:$0xff] %v1937
      %1970 = vst [vmem:[#allocation3 + $0x30] sm:$0xff] %v1938
      %1971 = vst [vmem:[#allocation3 + $0x38] sm:$0xff] %v1939
      %1972 = vst [vmem:[#allocation3 + $0x40] sm:$0xff] %v1940
      %1973 = vst [vmem:[#allocation3 + $0x58] sm:$0xff] %v1941
      %1974 = vst [vmem:[#allocation3 + $0x60] sm:$0xff] %v1942
      %1975 = vst [vmem:[#allocation3 + $0x68] sm:$0xff] %v1943
      %1976 = vst [vmem:[#allocation3 + $0x80] sm:$0xff] %v1944
      %1977 = vst [vmem:[#allocation3 + $0x88] sm:$0xff] %v1945
      %1978 = vst [vmem:[#allocation3 + $0x90] sm:$0xff] %v1946
      %v1979 = vld [vmem:[#allocation3] sm:$0xff]
      %v1980 = vld [vmem:[#allocation3 + $0x8] sm:$0xff]
      %v1981 = vld [vmem:[#allocation3 + $0x10] sm:$0xff]
      %v1982 = vld [vmem:[#allocation3 + $0x18] sm:$0xff]
      %v1983 = vld [vmem:[#allocation3 + $0x20] sm:$0xff]
      %v1984 = vld [vmem:[#allocation3 + $0x28] sm:$0xff]
      %v1985 = vld [vmem:[#allocation3 + $0x30] sm:$0xff]
      %v1986 = vld [vmem:[#allocation3 + $0x38] sm:$0xff]
      %v1987 = vld [vmem:[#allocation3 + $0x40] sm:$0xff]
      %v1988 = vld [vmem:[#allocation3 + $0x48] sm:$0xff]
      %v1989 = vld [vmem:[#allocation3 + $0x50] sm:$0xff]
      %v1990 = vld [vmem:[#allocation3 + $0x58] sm:$0xff]
      %v1991 = vld [vmem:[#allocation3 + $0x60] sm:$0xff]
      %v1992 = vld [vmem:[#allocation3 + $0x68] sm:$0xff]
      %v1993 = vld [vmem:[#allocation3 + $0x70] sm:$0xff]
      %v1994 = vld [vmem:[#allocation3 + $0x78] sm:$0xff]
      %v1995 = vld [vmem:[#allocation3 + $0x80] sm:$0xff]
      %v1996 = vld [vmem:[#allocation3 + $0x88] sm:$0xff]
      %v1997 = vld [vmem:[#allocation3 + $0x90] sm:$0xff]
      %v1998 = vld [vmem:[#allocation3 + $0x98] sm:$0xff]
      %2015 = vrot.lane.b32.xlu0 %v1979, 19
      %v2016 = vpop.permute.xlu0 %2015
      %2017 = vrot.lane.b32.xlu0 %v1980, 19
      %v2018 = vpop.permute.xlu0 %2017
      %2019 = vrot.lane.b32.xlu0 %v1981, 19
      %v2020 = vpop.permute.xlu0 %2019
      %2021 = vrot.lane.b32.xlu0 %v1982, 19
      %v2022 = vpop.permute.xlu0 %2021
      %2023 = vrot.lane.b32.xlu0 %v1984, 19
      %v2024 = vpop.permute.xlu0 %2023
      %2025 = vrot.lane.b32.xlu0 %v1985, 19
      %v2026 = vpop.permute.xlu0 %2025
      %2027 = vrot.lane.b32.xlu0 %v1986, 19
      %v2028 = vpop.permute.xlu0 %2027
      %2029 = vrot.lane.b32.xlu0 %v1987, 19
      %v2030 = vpop.permute.xlu0 %2029
      %2031 = vrot.lane.b32.xlu0 %v1989, 19
      %v2032 = vpop.permute.xlu0 %2031
      %2033 = vrot.lane.b32.xlu0 %v1990, 19
      %v2034 = vpop.permute.xlu0 %2033
      %2035 = vrot.lane.b32.xlu0 %v1991, 19
      %v2036 = vpop.permute.xlu0 %2035
      %2037 = vrot.lane.b32.xlu0 %v1992, 19
      %v2038 = vpop.permute.xlu0 %2037
      %2039 = vrot.lane.b32.xlu0 %v1994, 19
      %v2040 = vpop.permute.xlu0 %2039
      %2041 = vrot.lane.b32.xlu0 %v1995, 19
      %v2042 = vpop.permute.xlu0 %2041
      %2043 = vrot.lane.b32.xlu0 %v1996, 19
      %v2044 = vpop.permute.xlu0 %2043
      %2045 = vrot.lane.b32.xlu0 %v1997, 19
      %v2046 = vpop.permute.xlu0 %2045
      %v2047 = vsel %vm460, %v2016, %v2018
      %v2048 = vsel %vm460, %v2018, %v2020
      %v2049 = vsel %vm460, %v2020, %v2022
      %v2050 = vsel %vm460, %v2024, %v2026
      %v2051 = vsel %vm460, %v2026, %v2028
      %v2052 = vsel %vm460, %v2028, %v2030
      %v2053 = vsel %vm460, %v2032, %v2034
      %v2054 = vsel %vm460, %v2034, %v2036
      %v2055 = vsel %vm460, %v2036, %v2038
      %v2056 = vsel %vm460, %v2040, %v2042
      %v2057 = vsel %vm460, %v2042, %v2044
      %v2058 = vsel %vm460, %v2044, %v2046
      %2071 = vst [vmem:[#allocation2] sm:$0xff] %v2047
      %2072 = vst [vmem:[#allocation2 + $0x8] sm:$0xff] %v2048
      %2073 = vst [vmem:[#allocation2 + $0x10] sm:$0xff] %v2049
      %2074 = vst [vmem:[#allocation2 + $0x18] sm:$0xff] %v2050
      %2075 = vst [vmem:[#allocation2 + $0x20] sm:$0xff] %v2051
      %2076 = vst [vmem:[#allocation2 + $0x28] sm:$0xff] %v2052
      %2077 = vst [vmem:[#allocation2 + $0x30] sm:$0xff] %v2053
      %2078 = vst [vmem:[#allocation2 + $0x38] sm:$0xff] %v2054
      %2079 = vst [vmem:[#allocation2 + $0x40] sm:$0xff] %v2055
      %2080 = vst [vmem:[#allocation2 + $0x48] sm:$0xff] %v2056
      %2081 = vst [vmem:[#allocation2 + $0x50] sm:$0xff] %v2057
      %2082 = vst [vmem:[#allocation2 + $0x58] sm:$0xff] %v2058
      %2083 = vrot.lane.b32.xlu0 %v1979, 18
      %v2084 = vpop.permute.xlu0 %2083
      %2085 = vrot.lane.b32.xlu0 %v1980, 18
      %v2086 = vpop.permute.xlu0 %2085
      %2087 = vrot.lane.b32.xlu0 %v1981, 18
      %v2088 = vpop.permute.xlu0 %2087
      %2089 = vrot.lane.b32.xlu0 %v1982, 18
      %v2090 = vpop.permute.xlu0 %2089
      %2091 = vrot.lane.b32.xlu0 %v1984, 18
      %v2092 = vpop.permute.xlu0 %2091
      %2093 = vrot.lane.b32.xlu0 %v1985, 18
      %v2094 = vpop.permute.xlu0 %2093
      %2095 = vrot.lane.b32.xlu0 %v1986, 18
      %v2096 = vpop.permute.xlu0 %2095
      %2097 = vrot.lane.b32.xlu0 %v1987, 18
      %v2098 = vpop.permute.xlu0 %2097
      %2099 = vrot.lane.b32.xlu0 %v1989, 18
      %v2100 = vpop.permute.xlu0 %2099
      %2101 = vrot.lane.b32.xlu0 %v1990, 18
      %v2102 = vpop.permute.xlu0 %2101
      %2103 = vrot.lane.b32.xlu0 %v1991, 18
      %v2104 = vpop.permute.xlu0 %2103
      %2105 = vrot.lane.b32.xlu0 %v1992, 18
      %v2106 = vpop.permute.xlu0 %2105
      %2107 = vrot.lane.b32.xlu0 %v1994, 18
      %v2108 = vpop.permute.xlu0 %2107
      %2109 = vrot.lane.b32.xlu0 %v1995, 18
      %v2110 = vpop.permute.xlu0 %2109
      %2111 = vrot.lane.b32.xlu0 %v1996, 18
      %v2112 = vpop.permute.xlu0 %2111
      %2113 = vrot.lane.b32.xlu0 %v1997, 18
      %v2114 = vpop.permute.xlu0 %2113
      %v2115 = vsel %vm529, %v2084, %v2086
      %v2116 = vsel %vm529, %v2086, %v2088
      %v2117 = vsel %vm529, %v2088, %v2090
      %v2118 = vsel %vm529, %v2092, %v2094
      %v2119 = vsel %vm529, %v2094, %v2096
      %v2120 = vsel %vm529, %v2096, %v2098
      %v2121 = vsel %vm529, %v2100, %v2102
      %v2122 = vsel %vm529, %v2102, %v2104
      %v2123 = vsel %vm529, %v2104, %v2106
      %v2124 = vsel %vm529, %v2108, %v2110
      %v2125 = vsel %vm529, %v2110, %v2112
      %v2126 = vsel %vm529, %v2112, %v2114
      %2139 = vst [vmem:[#allocation2 + $0x60] sm:$0xff] %v2115
      %2140 = vst [vmem:[#allocation2 + $0x68] sm:$0xff] %v2116
      %2141 = vst [vmem:[#allocation2 + $0x70] sm:$0xff] %v2117
      %2142 = vst [vmem:[#allocation2 + $0x78] sm:$0xff] %v2118
      %2143 = vst [vmem:[#allocation2 + $0x80] sm:$0xff] %v2119
      %2144 = vst [vmem:[#allocation2 + $0x88] sm:$0xff] %v2120
      %2145 = vst [vmem:[#allocation2 + $0x90] sm:$0xff] %v2121
      %2146 = vst [vmem:[#allocation2 + $0x98] sm:$0xff] %v2122
      %2147 = vst [vmem:[#allocation2 + $0xa0] sm:$0xff] %v2123
      %2148 = vst [vmem:[#allocation2 + $0xa8] sm:$0xff] %v2124
      %2149 = vst [vmem:[#allocation2 + $0xb0] sm:$0xff] %v2125
      %2150 = vst [vmem:[#allocation2 + $0xb8] sm:$0xff] %v2126
      %2151 = vrot.lane.b32.xlu0 %v1979, 17
      %v2152 = vpop.permute.xlu0 %2151
      %2153 = vrot.lane.b32.xlu0 %v1980, 17
      %v2154 = vpop.permute.xlu0 %2153
      %2155 = vrot.lane.b32.xlu0 %v1981, 17
      %v2156 = vpop.permute.xlu0 %2155
      %2157 = vrot.lane.b32.xlu0 %v1982, 17
      %v2158 = vpop.permute.xlu0 %2157
      %2159 = vrot.lane.b32.xlu0 %v1984, 17
      %v2160 = vpop.permute.xlu0 %2159
      %2161 = vrot.lane.b32.xlu0 %v1985, 17
      %v2162 = vpop.permute.xlu0 %2161
      %2163 = vrot.lane.b32.xlu0 %v1986, 17
      %v2164 = vpop.permute.xlu0 %2163
      %2165 = vrot.lane.b32.xlu0 %v1987, 17
      %v2166 = vpop.permute.xlu0 %2165
      %2167 = vrot.lane.b32.xlu0 %v1989, 17
      %v2168 = vpop.permute.xlu0 %2167
      %2169 = vrot.lane.b32.xlu0 %v1990, 17
      %v2170 = vpop.permute.xlu0 %2169
      %2171 = vrot.lane.b32.xlu0 %v1991, 17
      %v2172 = vpop.permute.xlu0 %2171
      %2173 = vrot.lane.b32.xlu0 %v1992, 17
      %v2174 = vpop.permute.xlu0 %2173
      %2175 = vrot.lane.b32.xlu0 %v1994, 17
      %v2176 = vpop.permute.xlu0 %2175
      %2177 = vrot.lane.b32.xlu0 %v1995, 17
      %v2178 = vpop.permute.xlu0 %2177
      %2179 = vrot.lane.b32.xlu0 %v1996, 17
      %v2180 = vpop.permute.xlu0 %2179
      %2181 = vrot.lane.b32.xlu0 %v1997, 17
      %v2182 = vpop.permute.xlu0 %2181
      %v2183 = vsel %vm598, %v2152, %v2154
      %v2184 = vsel %vm598, %v2154, %v2156
      %v2185 = vsel %vm598, %v2156, %v2158
      %v2186 = vsel %vm598, %v2160, %v2162
      %v2187 = vsel %vm598, %v2162, %v2164
      %v2188 = vsel %vm598, %v2164, %v2166
      %v2189 = vsel %vm598, %v2168, %v2170
      %v2190 = vsel %vm598, %v2170, %v2172
      %v2191 = vsel %vm598, %v2172, %v2174
      %v2192 = vsel %vm598, %v2176, %v2178
      %v2193 = vsel %vm598, %v2178, %v2180
      %v2194 = vsel %vm598, %v2180, %v2182
      %2207 = vst [vmem:[#allocation2 + $0xc0] sm:$0xff] %v2183
      %2208 = vst [vmem:[#allocation2 + $0xc8] sm:$0xff] %v2184
      %2209 = vst [vmem:[#allocation2 + $0xd0] sm:$0xff] %v2185
      %2210 = vst [vmem:[#allocation2 + $0xd8] sm:$0xff] %v2186
      %2211 = vst [vmem:[#allocation2 + $0xe0] sm:$0xff] %v2187
      %2212 = vst [vmem:[#allocation2 + $0xe8] sm:$0xff] %v2188
      %2213 = vst [vmem:[#allocation2 + $0xf0] sm:$0xff] %v2189
      %2214 = vst [vmem:[#allocation2 + $0xf8] sm:$0xff] %v2190
      %2215 = vst [vmem:[#allocation2 + $0x100] sm:$0xff] %v2191
      %2216 = vst [vmem:[#allocation2 + $0x108] sm:$0xff] %v2192
      %2217 = vst [vmem:[#allocation2 + $0x110] sm:$0xff] %v2193
      %2218 = vst [vmem:[#allocation2 + $0x118] sm:$0xff] %v2194
      %2219 = vrot.lane.b32.xlu0 %v1979, 1
      %v2220 = vpop.permute.xlu0 %2219
      %2221 = vrot.lane.b32.xlu0 %v1980, 1
      %v2222 = vpop.permute.xlu0 %2221
      %2223 = vrot.lane.b32.xlu0 %v1981, 1
      %v2224 = vpop.permute.xlu0 %2223
      %2225 = vrot.lane.b32.xlu0 %v1982, 1
      %v2226 = vpop.permute.xlu0 %2225
      %2227 = vrot.lane.b32.xlu0 %v1984, 1
      %v2228 = vpop.permute.xlu0 %2227
      %2229 = vrot.lane.b32.xlu0 %v1985, 1
      %v2230 = vpop.permute.xlu0 %2229
      %2231 = vrot.lane.b32.xlu0 %v1986, 1
      %v2232 = vpop.permute.xlu0 %2231
      %2233 = vrot.lane.b32.xlu0 %v1987, 1
      %v2234 = vpop.permute.xlu0 %2233
      %2235 = vrot.lane.b32.xlu0 %v1989, 1
      %v2236 = vpop.permute.xlu0 %2235
      %2237 = vrot.lane.b32.xlu0 %v1990, 1
      %v2238 = vpop.permute.xlu0 %2237
      %2239 = vrot.lane.b32.xlu0 %v1991, 1
      %v2240 = vpop.permute.xlu0 %2239
      %2241 = vrot.lane.b32.xlu0 %v1992, 1
      %v2242 = vpop.permute.xlu0 %2241
      %2243 = vrot.lane.b32.xlu0 %v1994, 1
      %v2244 = vpop.permute.xlu0 %2243
      %2245 = vrot.lane.b32.xlu0 %v1995, 1
      %v2246 = vpop.permute.xlu0 %2245
      %2247 = vrot.lane.b32.xlu0 %v1996, 1
      %v2248 = vpop.permute.xlu0 %2247
      %2249 = vrot.lane.b32.xlu0 %v1997, 1
      %v2250 = vpop.permute.xlu0 %2249
      %v2251 = vsel %vm667, %v2220, %v2222
      %v2252 = vsel %vm667, %v2222, %v2224
      %v2253 = vsel %vm667, %v2224, %v2226
      %v2254 = vsel %vm667, %v2228, %v2230
      %v2255 = vsel %vm667, %v2230, %v2232
      %v2256 = vsel %vm667, %v2232, %v2234
      %v2257 = vsel %vm667, %v2236, %v2238
      %v2258 = vsel %vm667, %v2238, %v2240
      %v2259 = vsel %vm667, %v2240, %v2242
      %v2260 = vsel %vm667, %v2244, %v2246
      %v2261 = vsel %vm667, %v2246, %v2248
      %v2262 = vsel %vm667, %v2248, %v2250
      %2275 = vst [vmem:[#allocation2 + $0x120] sm:$0xff] %v2251
      %2276 = vst [vmem:[#allocation2 + $0x128] sm:$0xff] %v2252
      %2277 = vst [vmem:[#allocation2 + $0x130] sm:$0xff] %v2253
      %2278 = vst [vmem:[#allocation2 + $0x138] sm:$0xff] %v2254
      %2279 = vst [vmem:[#allocation2 + $0x140] sm:$0xff] %v2255
      %2280 = vst [vmem:[#allocation2 + $0x148] sm:$0xff] %v2256
      %2281 = vst [vmem:[#allocation2 + $0x150] sm:$0xff] %v2257
      %2282 = vst [vmem:[#allocation2 + $0x158] sm:$0xff] %v2258
      %2283 = vst [vmem:[#allocation2 + $0x160] sm:$0xff] %v2259
      %2284 = vst [vmem:[#allocation2 + $0x168] sm:$0xff] %v2260
      %2285 = vst [vmem:[#allocation2 + $0x170] sm:$0xff] %v2261
      %2286 = vst [vmem:[#allocation2 + $0x178] sm:$0xff] %v2262
      %2287 = vst [vmem:[#allocation2 + $0x180] sm:$0xff] %v1980
      %2288 = vst [vmem:[#allocation2 + $0x188] sm:$0xff] %v1981
      %2289 = vst [vmem:[#allocation2 + $0x190] sm:$0xff] %v1982
      %2290 = vst [vmem:[#allocation2 + $0x198] sm:$0xff] %v1985
      %2291 = vst [vmem:[#allocation2 + $0x1a0] sm:$0xff] %v1986
      %2292 = vst [vmem:[#allocation2 + $0x1a8] sm:$0xff] %v1987
      %2293 = vst [vmem:[#allocation2 + $0x1b0] sm:$0xff] %v1990
      %2294 = vst [vmem:[#allocation2 + $0x1b8] sm:$0xff] %v1991
      %2295 = vst [vmem:[#allocation2 + $0x1c0] sm:$0xff] %v1992
      %2296 = vst [vmem:[#allocation2 + $0x1c8] sm:$0xff] %v1995
      %2297 = vst [vmem:[#allocation2 + $0x1d0] sm:$0xff] %v1996
      %2298 = vst [vmem:[#allocation2 + $0x1d8] sm:$0xff] %v1997
      %2303 = vrot.lane.b32.xlu0 %v1980, 127
      %v2304 = vpop.permute.xlu0 %2303
      %2305 = vrot.lane.b32.xlu0 %v1981, 127
      %v2306 = vpop.permute.xlu0 %2305
      %2307 = vrot.lane.b32.xlu0 %v1982, 127
      %v2308 = vpop.permute.xlu0 %2307
      %2309 = vrot.lane.b32.xlu0 %v1983, 127
      %v2310 = vpop.permute.xlu0 %2309
      %2311 = vrot.lane.b32.xlu0 %v1985, 127
      %v2312 = vpop.permute.xlu0 %2311
      %2313 = vrot.lane.b32.xlu0 %v1986, 127
      %v2314 = vpop.permute.xlu0 %2313
      %2315 = vrot.lane.b32.xlu0 %v1987, 127
      %v2316 = vpop.permute.xlu0 %2315
      %2317 = vrot.lane.b32.xlu0 %v1988, 127
      %v2318 = vpop.permute.xlu0 %2317
      %2319 = vrot.lane.b32.xlu0 %v1990, 127
      %v2320 = vpop.permute.xlu0 %2319
      %2321 = vrot.lane.b32.xlu0 %v1991, 127
      %v2322 = vpop.permute.xlu0 %2321
      %2323 = vrot.lane.b32.xlu0 %v1992, 127
      %v2324 = vpop.permute.xlu0 %2323
      %2325 = vrot.lane.b32.xlu0 %v1993, 127
      %v2326 = vpop.permute.xlu0 %2325
      %2327 = vrot.lane.b32.xlu0 %v1995, 127
      %v2328 = vpop.permute.xlu0 %2327
      %2329 = vrot.lane.b32.xlu0 %v1996, 127
      %v2330 = vpop.permute.xlu0 %2329
      %2331 = vrot.lane.b32.xlu0 %v1997, 127
      %v2332 = vpop.permute.xlu0 %2331
      %2333 = vrot.lane.b32.xlu0 %v1998, 127
      %v2334 = vpop.permute.xlu0 %2333
      %v2335 = vsel %vm752, %v2304, %v2306
      %v2336 = vsel %vm752, %v2306, %v2308
      %v2337 = vsel %vm752, %v2308, %v2310
      %v2338 = vsel %vm752, %v2312, %v2314
      %v2339 = vsel %vm752, %v2314, %v2316
      %v2340 = vsel %vm752, %v2316, %v2318
      %v2341 = vsel %vm752, %v2320, %v2322
      %v2342 = vsel %vm752, %v2322, %v2324
      %v2343 = vsel %vm752, %v2324, %v2326
      %v2344 = vsel %vm752, %v2328, %v2330
      %v2345 = vsel %vm752, %v2330, %v2332
      %v2346 = vsel %vm752, %v2332, %v2334
      %2359 = vst [vmem:[#allocation2 + $0x1e0] sm:$0xff] %v2335
      %2360 = vst [vmem:[#allocation2 + $0x1e8] sm:$0xff] %v2336
      %2361 = vst [vmem:[#allocation2 + $0x1f0] sm:$0xff] %v2337
      %2362 = vst [vmem:[#allocation2 + $0x1f8] sm:$0xff] %v2338
      %2363 = vst [vmem:[#allocation2 + $0x200] sm:$0xff] %v2339
      %2364 = vst [vmem:[#allocation2 + $0x208] sm:$0xff] %v2340
      %2365 = vst [vmem:[#allocation2 + $0x210] sm:$0xff] %v2341
      %2366 = vst [vmem:[#allocation2 + $0x218] sm:$0xff] %v2342
      %2367 = vst [vmem:[#allocation2 + $0x220] sm:$0xff] %v2343
      %2368 = vst [vmem:[#allocation2 + $0x228] sm:$0xff] %v2344
      %2369 = vst [vmem:[#allocation2 + $0x230] sm:$0xff] %v2345
      %2370 = vst [vmem:[#allocation2 + $0x238] sm:$0xff] %v2346
      %2371 = vrot.lane.b32.xlu0 %v1980, 111
      %v2372 = vpop.permute.xlu0 %2371
      %2373 = vrot.lane.b32.xlu0 %v1981, 111
      %v2374 = vpop.permute.xlu0 %2373
      %2375 = vrot.lane.b32.xlu0 %v1982, 111
      %v2376 = vpop.permute.xlu0 %2375
      %2377 = vrot.lane.b32.xlu0 %v1983, 111
      %v2378 = vpop.permute.xlu0 %2377
      %2379 = vrot.lane.b32.xlu0 %v1985, 111
      %v2380 = vpop.permute.xlu0 %2379
      %2381 = vrot.lane.b32.xlu0 %v1986, 111
      %v2382 = vpop.permute.xlu0 %2381
      %2383 = vrot.lane.b32.xlu0 %v1987, 111
      %v2384 = vpop.permute.xlu0 %2383
      %2385 = vrot.lane.b32.xlu0 %v1988, 111
      %v2386 = vpop.permute.xlu0 %2385
      %2387 = vrot.lane.b32.xlu0 %v1990, 111
      %v2388 = vpop.permute.xlu0 %2387
      %2389 = vrot.lane.b32.xlu0 %v1991, 111
      %v2390 = vpop.permute.xlu0 %2389
      %2391 = vrot.lane.b32.xlu0 %v1992, 111
      %v2392 = vpop.permute.xlu0 %2391
      %2393 = vrot.lane.b32.xlu0 %v1993, 111
      %v2394 = vpop.permute.xlu0 %2393
      %2395 = vrot.lane.b32.xlu0 %v1995, 111
      %v2396 = vpop.permute.xlu0 %2395
      %2397 = vrot.lane.b32.xlu0 %v1996, 111
      %v2398 = vpop.permute.xlu0 %2397
      %2399 = vrot.lane.b32.xlu0 %v1997, 111
      %v2400 = vpop.permute.xlu0 %2399
      %2401 = vrot.lane.b32.xlu0 %v1998, 111
      %v2402 = vpop.permute.xlu0 %2401
      %v2403 = vsel %vm821, %v2372, %v2374
      %v2404 = vsel %vm821, %v2374, %v2376
      %v2405 = vsel %vm821, %v2376, %v2378
      %v2406 = vsel %vm821, %v2380, %v2382
      %v2407 = vsel %vm821, %v2382, %v2384
      %v2408 = vsel %vm821, %v2384, %v2386
      %v2409 = vsel %vm821, %v2388, %v2390
      %v2410 = vsel %vm821, %v2390, %v2392
      %v2411 = vsel %vm821, %v2392, %v2394
      %v2412 = vsel %vm821, %v2396, %v2398
      %v2413 = vsel %vm821, %v2398, %v2400
      %v2414 = vsel %vm821, %v2400, %v2402
      %2427 = vst [vmem:[#allocation2 + $0x240] sm:$0xff] %v2403
      %2428 = vst [vmem:[#allocation2 + $0x248] sm:$0xff] %v2404
      %2429 = vst [vmem:[#allocation2 + $0x250] sm:$0xff] %v2405
      %2430 = vst [vmem:[#allocation2 + $0x258] sm:$0xff] %v2406
      %2431 = vst [vmem:[#allocation2 + $0x260] sm:$0xff] %v2407
      %2432 = vst [vmem:[#allocation2 + $0x268] sm:$0xff] %v2408
      %2433 = vst [vmem:[#allocation2 + $0x270] sm:$0xff] %v2409
      %2434 = vst [vmem:[#allocation2 + $0x278] sm:$0xff] %v2410
      %2435 = vst [vmem:[#allocation2 + $0x280] sm:$0xff] %v2411
      %2436 = vst [vmem:[#allocation2 + $0x288] sm:$0xff] %v2412
      %2437 = vst [vmem:[#allocation2 + $0x290] sm:$0xff] %v2413
      %2438 = vst [vmem:[#allocation2 + $0x298] sm:$0xff] %v2414
      %2439 = vrot.lane.b32.xlu0 %v1980, 110
      %v2440 = vpop.permute.xlu0 %2439
      %2441 = vrot.lane.b32.xlu0 %v1981, 110
      %v2442 = vpop.permute.xlu0 %2441
      %2443 = vrot.lane.b32.xlu0 %v1982, 110
      %v2444 = vpop.permute.xlu0 %2443
      %2445 = vrot.lane.b32.xlu0 %v1983, 110
      %v2446 = vpop.permute.xlu0 %2445
      %2447 = vrot.lane.b32.xlu0 %v1985, 110
      %v2448 = vpop.permute.xlu0 %2447
      %2449 = vrot.lane.b32.xlu0 %v1986, 110
      %v2450 = vpop.permute.xlu0 %2449
      %2451 = vrot.lane.b32.xlu0 %v1987, 110
      %v2452 = vpop.permute.xlu0 %2451
      %2453 = vrot.lane.b32.xlu0 %v1988, 110
      %v2454 = vpop.permute.xlu0 %2453
      %2455 = vrot.lane.b32.xlu0 %v1990, 110
      %v2456 = vpop.permute.xlu0 %2455
      %2457 = vrot.lane.b32.xlu0 %v1991, 110
      %v2458 = vpop.permute.xlu0 %2457
      %2459 = vrot.lane.b32.xlu0 %v1992, 110
      %v2460 = vpop.permute.xlu0 %2459
      %2461 = vrot.lane.b32.xlu0 %v1993, 110
      %v2462 = vpop.permute.xlu0 %2461
      %2463 = vrot.lane.b32.xlu0 %v1995, 110
      %v2464 = vpop.permute.xlu0 %2463
      %2465 = vrot.lane.b32.xlu0 %v1996, 110
      %v2466 = vpop.permute.xlu0 %2465
      %2467 = vrot.lane.b32.xlu0 %v1997, 110
      %v2468 = vpop.permute.xlu0 %2467
      %2469 = vrot.lane.b32.xlu0 %v1998, 110
      %v2470 = vpop.permute.xlu0 %2469
      %v2471 = vsel %vm890, %v2440, %v2442
      %v2472 = vsel %vm890, %v2442, %v2444
      %v2473 = vsel %vm890, %v2444, %v2446
      %v2474 = vsel %vm890, %v2448, %v2450
      %v2475 = vsel %vm890, %v2450, %v2452
      %v2476 = vsel %vm890, %v2452, %v2454
      %v2477 = vsel %vm890, %v2456, %v2458
      %v2478 = vsel %vm890, %v2458, %v2460
      %v2479 = vsel %vm890, %v2460, %v2462
      %v2480 = vsel %vm890, %v2464, %v2466
      %v2481 = vsel %vm890, %v2466, %v2468
      %v2482 = vsel %vm890, %v2468, %v2470
      %2495 = vst [vmem:[#allocation2 + $0x2a0] sm:$0xff] %v2471
      %2496 = vst [vmem:[#allocation2 + $0x2a8] sm:$0xff] %v2472
      %2497 = vst [vmem:[#allocation2 + $0x2b0] sm:$0xff] %v2473
      %2498 = vst [vmem:[#allocation2 + $0x2b8] sm:$0xff] %v2474
      %2499 = vst [vmem:[#allocation2 + $0x2c0] sm:$0xff] %v2475
      %2500 = vst [vmem:[#allocation2 + $0x2c8] sm:$0xff] %v2476
      %2501 = vst [vmem:[#allocation2 + $0x2d0] sm:$0xff] %v2477
      %2502 = vst [vmem:[#allocation2 + $0x2d8] sm:$0xff] %v2478
      %2503 = vst [vmem:[#allocation2 + $0x2e0] sm:$0xff] %v2479
      %2504 = vst [vmem:[#allocation2 + $0x2e8] sm:$0xff] %v2480
      %2505 = vst [vmem:[#allocation2 + $0x2f0] sm:$0xff] %v2481
      %2506 = vst [vmem:[#allocation2 + $0x2f8] sm:$0xff] %v2482
      %2507 = vrot.lane.b32.xlu0 %v1980, 109
      %v2508 = vpop.permute.xlu0 %2507
      %2509 = vrot.lane.b32.xlu0 %v1981, 109
      %v2510 = vpop.permute.xlu0 %2509
      %2511 = vrot.lane.b32.xlu0 %v1982, 109
      %v2512 = vpop.permute.xlu0 %2511
      %2513 = vrot.lane.b32.xlu0 %v1983, 109
      %v2514 = vpop.permute.xlu0 %2513
      %2515 = vrot.lane.b32.xlu0 %v1985, 109
      %v2516 = vpop.permute.xlu0 %2515
      %2517 = vrot.lane.b32.xlu0 %v1986, 109
      %v2518 = vpop.permute.xlu0 %2517
      %2519 = vrot.lane.b32.xlu0 %v1987, 109
      %v2520 = vpop.permute.xlu0 %2519
      %2521 = vrot.lane.b32.xlu0 %v1988, 109
      %v2522 = vpop.permute.xlu0 %2521
      %2523 = vrot.lane.b32.xlu0 %v1990, 109
      %v2524 = vpop.permute.xlu0 %2523
      %2525 = vrot.lane.b32.xlu0 %v1991, 109
      %v2526 = vpop.permute.xlu0 %2525
      %2527 = vrot.lane.b32.xlu0 %v1992, 109
      %v2528 = vpop.permute.xlu0 %2527
      %2529 = vrot.lane.b32.xlu0 %v1993, 109
      %v2530 = vpop.permute.xlu0 %2529
      %2531 = vrot.lane.b32.xlu0 %v1995, 109
      %v2532 = vpop.permute.xlu0 %2531
      %2533 = vrot.lane.b32.xlu0 %v1996, 109
      %v2534 = vpop.permute.xlu0 %2533
      %2535 = vrot.lane.b32.xlu0 %v1997, 109
      %v2536 = vpop.permute.xlu0 %2535
      %2537 = vrot.lane.b32.xlu0 %v1998, 109
      %v2538 = vpop.permute.xlu0 %2537
      %v2539 = vsel %vm959, %v2508, %v2510
      %v2540 = vsel %vm959, %v2510, %v2512
      %v2541 = vsel %vm959, %v2512, %v2514
      %v2542 = vsel %vm959, %v2516, %v2518
      %v2543 = vsel %vm959, %v2518, %v2520
      %v2544 = vsel %vm959, %v2520, %v2522
      %v2545 = vsel %vm959, %v2524, %v2526
      %v2546 = vsel %vm959, %v2526, %v2528
      %v2547 = vsel %vm959, %v2528, %v2530
      %v2548 = vsel %vm959, %v2532, %v2534
      %v2549 = vsel %vm959, %v2534, %v2536
      %v2550 = vsel %vm959, %v2536, %v2538
      %2563 = vst [vmem:[#allocation2 + $0x300] sm:$0xff] %v2539
      %2564 = vst [vmem:[#allocation2 + $0x308] sm:$0xff] %v2540
      %2565 = vst [vmem:[#allocation2 + $0x310] sm:$0xff] %v2541
      %2566 = vst [vmem:[#allocation2 + $0x318] sm:$0xff] %v2542
      %2567 = vst [vmem:[#allocation2 + $0x320] sm:$0xff] %v2543
      %2568 = vst [vmem:[#allocation2 + $0x328] sm:$0xff] %v2544
      %2569 = vst [vmem:[#allocation2 + $0x330] sm:$0xff] %v2545
      %2570 = vst [vmem:[#allocation2 + $0x338] sm:$0xff] %v2546
      %2571 = vst [vmem:[#allocation2 + $0x340] sm:$0xff] %v2547
      %2572 = vst [vmem:[#allocation2 + $0x348] sm:$0xff] %v2548
      %2573 = vst [vmem:[#allocation2 + $0x350] sm:$0xff] %v2549
      %2574 = vst [vmem:[#allocation2 + $0x358] sm:$0xff] %v2550
      %v2575 = vld [vmem:[%s5] sm:$0xff]
      %v2576 = vld [vmem:[%s5 + $0x8] sm:$0xff]
      %v2577 = vld [vmem:[%s5 + $0x10] sm:$0xff]
      %v2578 = vld [vmem:[%s5 + $0x18] sm:$0xff]
      %v2579 = vld [vmem:[%s5 + $0x20] sm:$0xff]
      %v2580 = vld [vmem:[%s5 + $0x28] sm:$0xff]
      %v2581 = vld [vmem:[%s5 + $0x30] sm:$0xff]
      %v2582 = vld [vmem:[%s5 + $0x38] sm:$0xff]
      %v2583 = vld [vmem:[%s5 + $0x40] sm:$0xff]
      %v2584 = vld [vmem:[%s5 + $0x48] sm:$0xff]
      %v2585 = vld [vmem:[%s5 + $0x50] sm:$0xff]
      %v2586 = vld [vmem:[%s5 + $0x58] sm:$0xff]
      %v2587 = vld [vmem:[#allocation2] sm:$0xff]
      %v2588 = vld [vmem:[#allocation2 + $0x8] sm:$0xff]
      %v2589 = vld [vmem:[#allocation2 + $0x10] sm:$0xff]
      %v2590 = vld [vmem:[#allocation2 + $0x18] sm:$0xff]
      %v2591 = vld [vmem:[#allocation2 + $0x20] sm:$0xff]
      %v2592 = vld [vmem:[#allocation2 + $0x28] sm:$0xff]
      %v2593 = vld [vmem:[#allocation2 + $0x30] sm:$0xff]
      %v2594 = vld [vmem:[#allocation2 + $0x38] sm:$0xff]
      %v2595 = vld [vmem:[#allocation2 + $0x40] sm:$0xff]
      %v2596 = vld [vmem:[#allocation2 + $0x48] sm:$0xff]
      %v2597 = vld [vmem:[#allocation2 + $0x50] sm:$0xff]
      %v2598 = vld [vmem:[#allocation2 + $0x58] sm:$0xff]
      %v2599 = vld [vmem:[#allocation2 + $0x60] sm:$0xff]
      %v2600 = vld [vmem:[#allocation2 + $0x68] sm:$0xff]
      %v2601 = vld [vmem:[#allocation2 + $0x70] sm:$0xff]
      %v2602 = vld [vmem:[#allocation2 + $0x78] sm:$0xff]
      %v2603 = vld [vmem:[#allocation2 + $0x80] sm:$0xff]
      %v2604 = vld [vmem:[#allocation2 + $0x88] sm:$0xff]
      %v2605 = vld [vmem:[#allocation2 + $0x90] sm:$0xff]
      %v2606 = vld [vmem:[#allocation2 + $0x98] sm:$0xff]
      %v2607 = vld [vmem:[#allocation2 + $0xa0] sm:$0xff]
      %v2608 = vld [vmem:[#allocation2 + $0xa8] sm:$0xff]
      %v2609 = vld [vmem:[#allocation2 + $0xb0] sm:$0xff]
      %v2610 = vld [vmem:[#allocation2 + $0xb8] sm:$0xff]
      %v2611 = vld [vmem:[#allocation2 + $0xc0] sm:$0xff]
      %v2612 = vld [vmem:[#allocation2 + $0xc8] sm:$0xff]
      %v2613 = vld [vmem:[#allocation2 + $0xd0] sm:$0xff]
      %v2614 = vld [vmem:[#allocation2 + $0xd8] sm:$0xff]
      %v2615 = vld [vmem:[#allocation2 + $0xe0] sm:$0xff]
      %v2616 = vld [vmem:[#allocation2 + $0xe8] sm:$0xff]
      %v2617 = vld [vmem:[#allocation2 + $0xf0] sm:$0xff]
      %v2618 = vld [vmem:[#allocation2 + $0xf8] sm:$0xff]
      %v2619 = vld [vmem:[#allocation2 + $0x100] sm:$0xff]
      %v2620 = vld [vmem:[#allocation2 + $0x108] sm:$0xff]
      %v2621 = vld [vmem:[#allocation2 + $0x110] sm:$0xff]
      %v2622 = vld [vmem:[#allocation2 + $0x118] sm:$0xff]
      %v2623 = vld [vmem:[#allocation2 + $0x120] sm:$0xff]
      %v2624 = vld [vmem:[#allocation2 + $0x128] sm:$0xff]
      %v2625 = vld [vmem:[#allocation2 + $0x130] sm:$0xff]
      %v2626 = vld [vmem:[#allocation2 + $0x138] sm:$0xff]
      %v2627 = vld [vmem:[#allocation2 + $0x140] sm:$0xff]
      %v2628 = vld [vmem:[#allocation2 + $0x148] sm:$0xff]
      %v2629 = vld [vmem:[#allocation2 + $0x150] sm:$0xff]
      %v2630 = vld [vmem:[#allocation2 + $0x158] sm:$0xff]
      %v2631 = vld [vmem:[#allocation2 + $0x160] sm:$0xff]
      %v2632 = vld [vmem:[#allocation2 + $0x168] sm:$0xff]
      %v2633 = vld [vmem:[#allocation2 + $0x170] sm:$0xff]
      %v2634 = vld [vmem:[#allocation2 + $0x178] sm:$0xff]
      %v2635 = vld [vmem:[#allocation2 + $0x180] sm:$0xff]
      %v2636 = vld [vmem:[#allocation2 + $0x188] sm:$0xff]
      %v2637 = vld [vmem:[#allocation2 + $0x190] sm:$0xff]
      %v2638 = vld [vmem:[#allocation2 + $0x198] sm:$0xff]
      %v2639 = vld [vmem:[#allocation2 + $0x1a0] sm:$0xff]
      %v2640 = vld [vmem:[#allocation2 + $0x1a8] sm:$0xff]
      %v2641 = vld [vmem:[#allocation2 + $0x1b0] sm:$0xff]
      %v2642 = vld [vmem:[#allocation2 + $0x1b8] sm:$0xff]
      %v2643 = vld [vmem:[#allocation2 + $0x1c0] sm:$0xff]
      %v2644 = vld [vmem:[#allocation2 + $0x1c8] sm:$0xff]
      %v2645 = vld [vmem:[#allocation2 + $0x1d0] sm:$0xff]
      %v2646 = vld [vmem:[#allocation2 + $0x1d8] sm:$0xff]
      %v2647 = vld [vmem:[#allocation2 + $0x1e0] sm:$0xff]
      %v2648 = vld [vmem:[#allocation2 + $0x1e8] sm:$0xff]
      %v2649 = vld [vmem:[#allocation2 + $0x1f0] sm:$0xff]
      %v2650 = vld [vmem:[#allocation2 + $0x1f8] sm:$0xff]
      %v2651 = vld [vmem:[#allocation2 + $0x200] sm:$0xff]
      %v2652 = vld [vmem:[#allocation2 + $0x208] sm:$0xff]
      %v2653 = vld [vmem:[#allocation2 + $0x210] sm:$0xff]
      %v2654 = vld [vmem:[#allocation2 + $0x218] sm:$0xff]
      %v2655 = vld [vmem:[#allocation2 + $0x220] sm:$0xff]
      %v2656 = vld [vmem:[#allocation2 + $0x228] sm:$0xff]
      %v2657 = vld [vmem:[#allocation2 + $0x230] sm:$0xff]
      %v2658 = vld [vmem:[#allocation2 + $0x238] sm:$0xff]
      %v2659 = vld [vmem:[#allocation2 + $0x240] sm:$0xff]
      %v2660 = vld [vmem:[#allocation2 + $0x248] sm:$0xff]
      %v2661 = vld [vmem:[#allocation2 + $0x250] sm:$0xff]
      %v2662 = vld [vmem:[#allocation2 + $0x258] sm:$0xff]
      %v2663 = vld [vmem:[#allocation2 + $0x260] sm:$0xff]
      %v2664 = vld [vmem:[#allocation2 + $0x268] sm:$0xff]
      %v2665 = vld [vmem:[#allocation2 + $0x270] sm:$0xff]
      %v2666 = vld [vmem:[#allocation2 + $0x278] sm:$0xff]
      %v2667 = vld [vmem:[#allocation2 + $0x280] sm:$0xff]
      %v2668 = vld [vmem:[#allocation2 + $0x288] sm:$0xff]
      %v2669 = vld [vmem:[#allocation2 + $0x290] sm:$0xff]
      %v2670 = vld [vmem:[#allocation2 + $0x298] sm:$0xff]
      %v2671 = vld [vmem:[#allocation2 + $0x2a0] sm:$0xff]
      %v2672 = vld [vmem:[#allocation2 + $0x2a8] sm:$0xff]
      %v2673 = vld [vmem:[#allocation2 + $0x2b0] sm:$0xff]
      %v2674 = vld [vmem:[#allocation2 + $0x2b8] sm:$0xff]
      %v2675 = vld [vmem:[#allocation2 + $0x2c0] sm:$0xff]
      %v2676 = vld [vmem:[#allocation2 + $0x2c8] sm:$0xff]
      %v2677 = vld [vmem:[#allocation2 + $0x2d0] sm:$0xff]
      %v2678 = vld [vmem:[#allocation2 + $0x2d8] sm:$0xff]
      %v2679 = vld [vmem:[#allocation2 + $0x2e0] sm:$0xff]
      %v2680 = vld [vmem:[#allocation2 + $0x2e8] sm:$0xff]
      %v2681 = vld [vmem:[#allocation2 + $0x2f0] sm:$0xff]
      %v2682 = vld [vmem:[#allocation2 + $0x2f8] sm:$0xff]
      %v2683 = vld [vmem:[#allocation2 + $0x300] sm:$0xff]
      %v2684 = vld [vmem:[#allocation2 + $0x308] sm:$0xff]
      %v2685 = vld [vmem:[#allocation2 + $0x310] sm:$0xff]
      %v2686 = vld [vmem:[#allocation2 + $0x318] sm:$0xff]
      %v2687 = vld [vmem:[#allocation2 + $0x320] sm:$0xff]
      %v2688 = vld [vmem:[#allocation2 + $0x328] sm:$0xff]
      %v2689 = vld [vmem:[#allocation2 + $0x330] sm:$0xff]
      %v2690 = vld [vmem:[#allocation2 + $0x338] sm:$0xff]
      %v2691 = vld [vmem:[#allocation2 + $0x340] sm:$0xff]
      %v2692 = vld [vmem:[#allocation2 + $0x348] sm:$0xff]
      %v2693 = vld [vmem:[#allocation2 + $0x350] sm:$0xff]
      %v2694 = vld [vmem:[#allocation2 + $0x358] sm:$0xff]
      %v2695 = vld [vmem:[%s6] sm:$0xff]
      %v2696 = vld [vmem:[%s6 + $0x8] sm:$0xff]
      %v2697 = vld [vmem:[%s6 + $0x10] sm:$0xff]
      %v2698 = vld [vmem:[%s6 + $0x18] sm:$0xff]
      %2700 = vset.pattern.permute.xlu0 0
      %2701 = vperm.xlu0 %2700, %v2695
      %v2702 = vpop.permute.xlu0 %2701
      %2705 = vset.pattern.permute.xlu0 0
      %2706 = vperm.xlu0 %2705, %v2696
      %v2707 = vpop.permute.xlu0 %2706
      %2710 = vset.pattern.permute.xlu0 0
      %2711 = vperm.xlu0 %2710, %v2697
      %v2712 = vpop.permute.xlu0 %2711
      %2715 = vset.pattern.permute.xlu0 0
      %2716 = vperm.xlu0 %2715, %v2698
      %v2717 = vpop.permute.xlu0 %2716
      %v2720 = vsel %vm1140, %v2577, 0
      %v2723 = vsel %vm1140, %v2580, 0
      %v2726 = vsel %vm1140, %v2583, 0
      %v2729 = vsel %vm1140, %v2586, 0
      %2731 = vmatpush.msra.mxu0 %v2632
      %2732 = vmatpush.msra.mxu0 %v2629
      %2733 = vmatpush.msra.mxu0 %v2626
      %2734 = vmatpush.msra.mxu0 %v2623
      %2735 = vmatpush.msra.mxu0 %v2620
      %2736 = vmatpush.msra.mxu0 %v2617
      %2737 = vmatpush.msra.mxu0 %v2614
      %2738 = vmatpush.msra.mxu0 %v2611
      %2739 = vmatpush.msra.mxu0 %v2608
      %2740 = vmatpush.msra.mxu0 %v2605
      %2741 = vmatpush.msra.mxu0 %v2602
      %2742 = vmatpush.msra.mxu0 %v2599
      %2743 = vmatpush.msra.mxu0 %v2596
      %2744 = vmatpush.msra.mxu0 %v2593
      %2745 = vmatpush.msra.mxu0 %v2590
      %2746 = vmatpush.msra.mxu0 %v2587
      %2747 = vmatmul.f32.gmra.mxu0 %v2575
      %v2748 = vpop.f32.mrf.mxu0
      %v2749 = vadd.f32 %v2702, %v2748
      %2750 = vmatmul.f32.gmra.mxu0 %v2578
      %v2751 = vpop.f32.mrf.mxu0
      %v2752 = vadd.f32 %v2707, %v2751
      %2753 = vmatmul.f32.gmra.mxu0 %v2581
      %v2754 = vpop.f32.mrf.mxu0
      %v2755 = vadd.f32 %v2712, %v2754
      %2756 = vmatmul.f32.gmra.mxu0 %v2584
      %v2757 = vpop.f32.mrf.mxu0
      %v2758 = vadd.f32 %v2717, %v2757
      %2759 = vdwg.mxu0
      %2760 = vmatpush.msra.mxu0 %v2680
      %2761 = vmatpush.msra.mxu0 %v2677
      %2762 = vmatpush.msra.mxu0 %v2674
      %2763 = vmatpush.msra.mxu0 %v2671
      %2764 = vmatpush.msra.mxu0 %v2668
      %2765 = vmatpush.msra.mxu0 %v2665
      %2766 = vmatpush.msra.mxu0 %v2662
      %2767 = vmatpush.msra.mxu0 %v2659
      %2768 = vmatpush.msra.mxu0 %v2656
      %2769 = vmatpush.msra.mxu0 %v2653
      %2770 = vmatpush.msra.mxu0 %v2650
      %2771 = vmatpush.msra.mxu0 %v2647
      %2772 = vmatpush.msra.mxu0 %v2644
      %2773 = vmatpush.msra.mxu0 %v2641
      %2774 = vmatpush.msra.mxu0 %v2638
      %2775 = vmatpush.msra.mxu0 %v2635
      %2776 = vmatmul.f32.gmra.mxu0 %v2576
      %v2777 = vpop.f32.mrf.mxu0
      %v2778 = vadd.f32 %v2749, %v2777
      %2779 = vmatmul.f32.gmra.mxu0 %v2579
      %v2780 = vpop.f32.mrf.mxu0
      %v2781 = vadd.f32 %v2752, %v2780
      %2782 = vmatmul.f32.gmra.mxu0 %v2582
      %v2783 = vpop.f32.mrf.mxu0
      %v2784 = vadd.f32 %v2755, %v2783
      %2785 = vmatmul.f32.gmra.mxu0 %v2585
      %v2786 = vpop.f32.mrf.mxu0
      %v2787 = vadd.f32 %v2758, %v2786
      %2788 = vdwg.mxu0
      %2789 = vmatpush.msra.mxu0 0.0
      %2790 = vmatpush.msra.mxu0 0.0
      %2791 = vmatpush.msra.mxu0 0.0
      %2792 = vmatpush.msra.mxu0 0.0
      %2793 = vmatpush.msra.mxu0 0.0
      %2794 = vmatpush.msra.mxu0 0.0
      %2795 = vmatpush.msra.mxu0 0.0
      %2796 = vmatpush.msra.mxu0 0.0
      %2797 = vmatpush.msra.mxu0 0.0
      %2798 = vmatpush.msra.mxu0 0.0
      %2799 = vmatpush.msra.mxu0 0.0
      %2800 = vmatpush.msra.mxu0 0.0
      %2801 = vmatpush.msra.mxu0 %v2692
      %2802 = vmatpush.msra.mxu0 %v2689
      %2803 = vmatpush.msra.mxu0 %v2686
      %2804 = vmatpush.msra.mxu0 %v2683
      %2805 = vmatmul.f32.gmra.mxu0 %v2720
      %v2806 = vpop.f32.mrf.mxu0
      %v2807 = vadd.f32 %v2778, %v2806
      %2808 = vmatmul.f32.gmra.mxu0 %v2723
      %v2809 = vpop.f32.mrf.mxu0
      %v2810 = vadd.f32 %v2781, %v2809
      %2811 = vmatmul.f32.gmra.mxu0 %v2726
      %v2812 = vpop.f32.mrf.mxu0
      %v2813 = vadd.f32 %v2784, %v2812
      %2814 = vmatmul.f32.gmra.mxu0 %v2729
      %v2815 = vpop.f32.mrf.mxu0
      %v2816 = vadd.f32 %v2787, %v2815
      %2817 = vdwg.mxu0
      %2818 = vmatpush.msra.mxu0 %v2633
      %2819 = vmatpush.msra.mxu0 %v2630
      %2820 = vmatpush.msra.mxu0 %v2627
      %2821 = vmatpush.msra.mxu0 %v2624
      %2822 = vmatpush.msra.mxu0 %v2621
      %2823 = vmatpush.msra.mxu0 %v2618
      %2824 = vmatpush.msra.mxu0 %v2615
      %2825 = vmatpush.msra.mxu0 %v2612
      %2826 = vmatpush.msra.mxu0 %v2609
      %2827 = vmatpush.msra.mxu0 %v2606
      %2828 = vmatpush.msra.mxu0 %v2603
      %2829 = vmatpush.msra.mxu0 %v2600
      %2830 = vmatpush.msra.mxu0 %v2597
      %2831 = vmatpush.msra.mxu0 %v2594
      %2832 = vmatpush.msra.mxu0 %v2591
      %2833 = vmatpush.msra.mxu0 %v2588
      %2834 = vmatmul.f32.gmra.mxu0 %v2575
      %v2835 = vpop.f32.mrf.mxu0
      %v2836 = vadd.f32 %v2702, %v2835
      %2837 = vmatmul.f32.gmra.mxu0 %v2578
      %v2838 = vpop.f32.mrf.mxu0
      %v2839 = vadd.f32 %v2707, %v2838
      %2840 = vmatmul.f32.gmra.mxu0 %v2581
      %v2841 = vpop.f32.mrf.mxu0
      %v2842 = vadd.f32 %v2712, %v2841
      %2843 = vmatmul.f32.gmra.mxu0 %v2584
      %v2844 = vpop.f32.mrf.mxu0
      %v2845 = vadd.f32 %v2717, %v2844
      %2846 = vdwg.mxu0
      %2847 = vmatpush.msra.mxu0 %v2681
      %2848 = vmatpush.msra.mxu0 %v2678
      %2849 = vmatpush.msra.mxu0 %v2675
      %2850 = vmatpush.msra.mxu0 %v2672
      %2851 = vmatpush.msra.mxu0 %v2669
      %2852 = vmatpush.msra.mxu0 %v2666
      %2853 = vmatpush.msra.mxu0 %v2663
      %2854 = vmatpush.msra.mxu0 %v2660
      %2855 = vmatpush.msra.mxu0 %v2657
      %2856 = vmatpush.msra.mxu0 %v2654
      %2857 = vmatpush.msra.mxu0 %v2651
      %2858 = vmatpush.msra.mxu0 %v2648
      %2859 = vmatpush.msra.mxu0 %v2645
      %2860 = vmatpush.msra.mxu0 %v2642
      %2861 = vmatpush.msra.mxu0 %v2639
      %2862 = vmatpush.msra.mxu0 %v2636
      %2863 = vmatmul.f32.gmra.mxu0 %v2576
      %v2864 = vpop.f32.mrf.mxu0
      %v2865 = vadd.f32 %v2836, %v2864
      %2866 = vmatmul.f32.gmra.mxu0 %v2579
      %v2867 = vpop.f32.mrf.mxu0
      %v2868 = vadd.f32 %v2839, %v2867
      %2869 = vmatmul.f32.gmra.mxu0 %v2582
      %v2870 = vpop.f32.mrf.mxu0
      %v2871 = vadd.f32 %v2842, %v2870
      %2872 = vmatmul.f32.gmra.mxu0 %v2585
      %v2873 = vpop.f32.mrf.mxu0
      %v2874 = vadd.f32 %v2845, %v2873
      %2875 = vdwg.mxu0
      %2876 = vmatpush.msra.mxu0 0.0
      %2877 = vmatpush.msra.mxu0 0.0
      %2878 = vmatpush.msra.mxu0 0.0
      %2879 = vmatpush.msra.mxu0 0.0
      %2880 = vmatpush.msra.mxu0 0.0
      %2881 = vmatpush.msra.mxu0 0.0
      %2882 = vmatpush.msra.mxu0 0.0
      %2883 = vmatpush.msra.mxu0 0.0
      %2884 = vmatpush.msra.mxu0 0.0
      %2885 = vmatpush.msra.mxu0 0.0
      %2886 = vmatpush.msra.mxu0 0.0
      %2887 = vmatpush.msra.mxu0 0.0
      %2888 = vmatpush.msra.mxu0 %v2693
      %2889 = vmatpush.msra.mxu0 %v2690
      %2890 = vmatpush.msra.mxu0 %v2687
      %2891 = vmatpush.msra.mxu0 %v2684
      %2892 = vmatmul.f32.gmra.mxu0 %v2720
      %v2893 = vpop.f32.mrf.mxu0
      %v2894 = vadd.f32 %v2865, %v2893
      %2895 = vmatmul.f32.gmra.mxu0 %v2723
      %v2896 = vpop.f32.mrf.mxu0
      %v2897 = vadd.f32 %v2868, %v2896
      %2898 = vmatmul.f32.gmra.mxu0 %v2726
      %v2899 = vpop.f32.mrf.mxu0
      %v2900 = vadd.f32 %v2871, %v2899
      %2901 = vmatmul.f32.gmra.mxu0 %v2729
      %v2902 = vpop.f32.mrf.mxu0
      %v2903 = vadd.f32 %v2874, %v2902
      %2904 = vdwg.mxu0
      %2905 = vmatpush.msra.mxu0 %v2634
      %2906 = vmatpush.msra.mxu0 %v2631
      %2907 = vmatpush.msra.mxu0 %v2628
      %2908 = vmatpush.msra.mxu0 %v2625
      %2909 = vmatpush.msra.mxu0 %v2622
      %2910 = vmatpush.msra.mxu0 %v2619
      %2911 = vmatpush.msra.mxu0 %v2616
      %2912 = vmatpush.msra.mxu0 %v2613
      %2913 = vmatpush.msra.mxu0 %v2610
      %2914 = vmatpush.msra.mxu0 %v2607
      %2915 = vmatpush.msra.mxu0 %v2604
      %2916 = vmatpush.msra.mxu0 %v2601
      %2917 = vmatpush.msra.mxu0 %v2598
      %2918 = vmatpush.msra.mxu0 %v2595
      %2919 = vmatpush.msra.mxu0 %v2592
      %2920 = vmatpush.msra.mxu0 %v2589
      %2921 = vmatmul.f32.gmra.mxu0 %v2575
      %v2922 = vpop.f32.mrf.mxu0
      %v2923 = vadd.f32 %v2702, %v2922
      %2924 = vmatmul.f32.gmra.mxu0 %v2578
      %v2925 = vpop.f32.mrf.mxu0
      %v2926 = vadd.f32 %v2707, %v2925
      %2927 = vmatmul.f32.gmra.mxu0 %v2581
      %v2928 = vpop.f32.mrf.mxu0
      %v2929 = vadd.f32 %v2712, %v2928
      %2930 = vmatmul.f32.gmra.mxu0 %v2584
      %v2931 = vpop.f32.mrf.mxu0
      %v2932 = vadd.f32 %v2717, %v2931
      %2933 = vdwg.mxu0
      %2934 = vmatpush.msra.mxu0 %v2682
      %2935 = vmatpush.msra.mxu0 %v2679
      %2936 = vmatpush.msra.mxu0 %v2676
      %2937 = vmatpush.msra.mxu0 %v2673
      %2938 = vmatpush.msra.mxu0 %v2670
      %2939 = vmatpush.msra.mxu0 %v2667
      %2940 = vmatpush.msra.mxu0 %v2664
      %2941 = vmatpush.msra.mxu0 %v2661
      %2942 = vmatpush.msra.mxu0 %v2658
      %2943 = vmatpush.msra.mxu0 %v2655
      %2944 = vmatpush.msra.mxu0 %v2652
      %2945 = vmatpush.msra.mxu0 %v2649
      %2946 = vmatpush.msra.mxu0 %v2646
      %2947 = vmatpush.msra.mxu0 %v2643
      %2948 = vmatpush.msra.mxu0 %v2640
      %2949 = vmatpush.msra.mxu0 %v2637
      %2950 = vmatmul.f32.gmra.mxu0 %v2576
      %v2951 = vpop.f32.mrf.mxu0
      %v2952 = vadd.f32 %v2923, %v2951
      %2953 = vmatmul.f32.gmra.mxu0 %v2579
      %v2954 = vpop.f32.mrf.mxu0
      %v2955 = vadd.f32 %v2926, %v2954
      %2956 = vmatmul.f32.gmra.mxu0 %v2582
      %v2957 = vpop.f32.mrf.mxu0
      %v2958 = vadd.f32 %v2929, %v2957
      %2959 = vmatmul.f32.gmra.mxu0 %v2585
      %v2960 = vpop.f32.mrf.mxu0
      %v2961 = vadd.f32 %v2932, %v2960
      %2962 = vdwg.mxu0
      %2963 = vmatpush.msra.mxu0 0.0
      %2964 = vmatpush.msra.mxu0 0.0
      %2965 = vmatpush.msra.mxu0 0.0
      %2966 = vmatpush.msra.mxu0 0.0
      %2967 = vmatpush.msra.mxu0 0.0
      %2968 = vmatpush.msra.mxu0 0.0
      %2969 = vmatpush.msra.mxu0 0.0
      %2970 = vmatpush.msra.mxu0 0.0
      %2971 = vmatpush.msra.mxu0 0.0
      %2972 = vmatpush.msra.mxu0 0.0
      %2973 = vmatpush.msra.mxu0 0.0
      %2974 = vmatpush.msra.mxu0 0.0
      %2975 = vmatpush.msra.mxu0 %v2694
      %2976 = vmatpush.msra.mxu0 %v2691
      %2977 = vmatpush.msra.mxu0 %v2688
      %2978 = vmatpush.msra.mxu0 %v2685
      %2979 = vmatmul.f32.gmra.mxu0 %v2720
      %v2980 = vpop.f32.mrf.mxu0
      %v2981 = vadd.f32 %v2952, %v2980
      %2982 = vmatmul.f32.gmra.mxu0 %v2723
      %v2983 = vpop.f32.mrf.mxu0
      %v2984 = vadd.f32 %v2955, %v2983
      %2985 = vmatmul.f32.gmra.mxu0 %v2726
      %v2986 = vpop.f32.mrf.mxu0
      %v2987 = vadd.f32 %v2958, %v2986
      %2988 = vmatmul.f32.gmra.mxu0 %v2729
      %v2989 = vpop.f32.mrf.mxu0
      %v2990 = vadd.f32 %v2961, %v2989
      %2991 = vdwg.mxu0
      %v2992 = vmul.f32 %v2807, %v1415
      %v2993 = vmul.f32 %v2894, %v1416
      %v2994 = vmul.f32 %v2981, %v1417
      %v2995 = vmul.f32 %v2810, %v1415
      %v2996 = vmul.f32 %v2897, %v1416
      %v2997 = vmul.f32 %v2984, %v1417
      %v2998 = vmul.f32 %v2813, %v1415
      %v2999 = vmul.f32 %v2900, %v1416
      %v3000 = vmul.f32 %v2987, %v1417
      %v3001 = vmul.f32 %v2816, %v1415
      %v3002 = vmul.f32 %v2903, %v1416
      %v3003 = vmul.f32 %v2990, %v1417
      %v3004 = vadd.f32 %v2992, %v2993
      %v3005 = vadd.f32 %v3004, %v2994
      %3006 = vadd.xlane.f32.xlu0 %v3005
      %v3007 = vpop.xlane.xlu0 %3006
      %v3008 = vadd.f32 %v2995, %v2996
      %v3009 = vadd.f32 %v3008, %v2997
      %3010 = vadd.xlane.f32.xlu0 %v3009
      %v3011 = vpop.xlane.xlu0 %3010
      %v3012 = vadd.f32 %v2998, %v2999
      %v3013 = vadd.f32 %v3012, %v3000
      %3014 = vadd.xlane.f32.xlu0 %v3013
      %v3015 = vpop.xlane.xlu0 %3014
      %v3016 = vadd.f32 %v3001, %v3002
      %v3017 = vadd.f32 %v3016, %v3003
      %3018 = vadd.xlane.f32.xlu0 %v3017
      %v3019 = vpop.xlane.xlu0 %3018
      %v3020 = vmul.f32 %v2992, %v2992
      %v3021 = vmul.f32 %v2993, %v2993
      %v3022 = vmul.f32 %v2994, %v2994
      %v3023 = vmul.f32 %v2995, %v2995
      %v3024 = vmul.f32 %v2996, %v2996
      %v3025 = vmul.f32 %v2997, %v2997
      %v3026 = vmul.f32 %v2998, %v2998
      %v3027 = vmul.f32 %v2999, %v2999
      %v3028 = vmul.f32 %v3000, %v3000
      %v3029 = vmul.f32 %v3001, %v3001
      %v3030 = vmul.f32 %v3002, %v3002
      %v3031 = vmul.f32 %v3003, %v3003
      %v3032 = vadd.f32 %v3020, %v3021
      %v3033 = vadd.f32 %v3032, %v3022
      %3034 = vadd.xlane.f32.xlu0 %v3033
      %v3035 = vpop.xlane.xlu0 %3034
      %v3036 = vadd.f32 %v3023, %v3024
      %v3037 = vadd.f32 %v3036, %v3025
      %3038 = vadd.xlane.f32.xlu0 %v3037
      %v3039 = vpop.xlane.xlu0 %3038
      %v3040 = vadd.f32 %v3026, %v3027
      %v3041 = vadd.f32 %v3040, %v3028
      %3042 = vadd.xlane.f32.xlu0 %v3041
      %v3043 = vpop.xlane.xlu0 %3042
      %v3044 = vadd.f32 %v3029, %v3030
      %v3045 = vadd.f32 %v3044, %v3031
      %3046 = vadd.xlane.f32.xlu0 %v3045
      %v3047 = vpop.xlane.xlu0 %3046
      %3048 = vmatpush.msra.mxu0 0.0
      %3049 = vmatpush.msra.mxu0 0.0
      %3050 = vmatpush.msra.mxu0 0.0
      %3051 = vmatpush.msra.mxu0 0.0
      %3052 = vmatpush.msra.mxu0 0.0
      %3053 = vmatpush.msra.mxu0 0.0
      %3054 = vmatpush.msra.mxu0 0.0
      %3055 = vmatpush.msra.mxu0 0.0
      %3056 = vmatpush.msra.mxu0 0.0
      %3057 = vmatpush.msra.mxu0 0.0
      %3058 = vmatpush.msra.mxu0 0.0
      %3059 = vmatpush.msra.mxu0 0.0
      %3060 = vmatpush.msra.mxu0 %v3019
      %3061 = vmatpush.msra.mxu0 %v3015
      %3062 = vmatpush.msra.mxu0 %v3011
      %3063 = vmatpush.msra.mxu0 %v3007
      %3064 = vmatmul.f32.gmra.mxu0 %v1478
      %v3065 = vpop.f32.mrf.mxu0
      %v3066 = vadd.f32 0.0, %v3065
      %3067 = vmatmul.f32.gmra.mxu0 %v1481
      %v3068 = vpop.f32.mrf.mxu0
      %v3069 = vadd.f32 0.0, %v3068
      %3070 = vmatmul.f32.gmra.mxu0 %v1484
      %v3071 = vpop.f32.mrf.mxu0
      %v3072 = vadd.f32 0.0, %v3071
      %3073 = vmatmul.f32.gmra.mxu0 %v1487
      %v3074 = vpop.f32.mrf.mxu0
      %v3075 = vadd.f32 0.0, %v3074
      %3076 = vdwg.mxu0
      %v3077 = vmul.f32 %v3066, 0.0009765625
      %v3078 = vmul.f32 %v3069, 0.0009765625
      %v3079 = vmul.f32 %v3072, 0.0009765625
      %v3080 = vmul.f32 %v3075, 0.0009765625
      %3081 = vmatpush.msra.mxu0 0.0
      %3082 = vmatpush.msra.mxu0 0.0
      %3083 = vmatpush.msra.mxu0 0.0
      %3084 = vmatpush.msra.mxu0 0.0
      %3085 = vmatpush.msra.mxu0 0.0
      %3086 = vmatpush.msra.mxu0 0.0
      %3087 = vmatpush.msra.mxu0 0.0
      %3088 = vmatpush.msra.mxu0 0.0
      %3089 = vmatpush.msra.mxu0 0.0
      %3090 = vmatpush.msra.mxu0 0.0
      %3091 = vmatpush.msra.mxu0 0.0
      %3092 = vmatpush.msra.mxu0 0.0
      %3093 = vmatpush.msra.mxu0 %v3047
      %3094 = vmatpush.msra.mxu0 %v3043
      %3095 = vmatpush.msra.mxu0 %v3039
      %3096 = vmatpush.msra.mxu0 %v3035
      %3097 = vmatmul.f32.gmra.mxu0 %v1478
      %v3098 = vpop.f32.mrf.mxu0
      %v3099 = vadd.f32 0.0, %v3098
      %3100 = vmatmul.f32.gmra.mxu0 %v1481
      %v3101 = vpop.f32.mrf.mxu0
      %v3102 = vadd.f32 0.0, %v3101
      %3103 = vmatmul.f32.gmra.mxu0 %v1484
      %v3104 = vpop.f32.mrf.mxu0
      %v3105 = vadd.f32 0.0, %v3104
      %3106 = vmatmul.f32.gmra.mxu0 %v1487
      %v3107 = vpop.f32.mrf.mxu0
      %v3108 = vadd.f32 0.0, %v3107
      %3109 = vdwg.mxu0
      %v3110 = vmul.f32 %v3099, 0.0009765625
      %v3111 = vmul.f32 %v3102, 0.0009765625
      %v3112 = vmul.f32 %v3105, 0.0009765625
      %v3113 = vmul.f32 %v3108, 0.0009765625
      %v3114 = vmul.f32 %v3077, %v3077
      %v3115 = vmul.f32 %v3078, %v3078
      %v3116 = vmul.f32 %v3079, %v3079
      %v3117 = vmul.f32 %v3080, %v3080
      %v3118 = vsub.f32 %v3110, %v3114
      %v3119 = vsub.f32 %v3111, %v3115
      %v3120 = vsub.f32 %v3112, %v3116
      %v3121 = vsub.f32 %v3113, %v3117
      %v3122 = vmax.f32 %v3118, 0.0
      %v3123 = vmax.f32 %v3119, 0.0
      %v3124 = vmax.f32 %v3120, 0.0
      %v3125 = vmax.f32 %v3121, 0.0
      %v3126 = vadd.f32 %v3122, 1e-05
      %v3127 = vadd.f32 %v3123, 1e-05
      %v3128 = vadd.f32 %v3124, 1e-05
      %v3129 = vadd.f32 %v3125, 1e-05
      %v3130 = vrsqrt.pop %v3126
      %v3131 = vmul.f32 %v3130, %v3126
      %v3132 = vmul.f32 %v3131, %v3130
      %v3133 = vmul.f32 0.5, %v3132
      %v3134 = vsub.f32 1.5, %v3133
      %v3135 = vmul.f32 %v3130, %v3134
      %vm3136 = vweird.f32 %v3126
      %vm3137 = vweird.f32 %v3130
      %vm3138 = vmor %vm3136, %vm3137
      %v3139 = vsel %vm3138, %v3130, %v3135
      %v3140 = vrsqrt.pop %v3127
      %v3141 = vmul.f32 %v3140, %v3127
      %v3142 = vmul.f32 %v3141, %v3140
      %v3143 = vmul.f32 0.5, %v3142
      %v3144 = vsub.f32 1.5, %v3143
      %v3145 = vmul.f32 %v3140, %v3144
      %vm3146 = vweird.f32 %v3127
      %vm3147 = vweird.f32 %v3140
      %vm3148 = vmor %vm3146, %vm3147
      %v3149 = vsel %vm3148, %v3140, %v3145
      %v3150 = vrsqrt.pop %v3128
      %v3151 = vmul.f32 %v3150, %v3128
      %v3152 = vmul.f32 %v3151, %v3150
      %v3153 = vmul.f32 0.5, %v3152
      %v3154 = vsub.f32 1.5, %v3153
      %v3155 = vmul.f32 %v3150, %v3154
      %vm3156 = vweird.f32 %v3128
      %vm3157 = vweird.f32 %v3150
      %vm3158 = vmor %vm3156, %vm3157
      %v3159 = vsel %vm3158, %v3150, %v3155
      %v3160 = vrsqrt.pop %v3129
      %v3161 = vmul.f32 %v3160, %v3129
      %v3162 = vmul.f32 %v3161, %v3160
      %v3163 = vmul.f32 0.5, %v3162
      %v3164 = vsub.f32 1.5, %v3163
      %v3165 = vmul.f32 %v3160, %v3164
      %vm3166 = vweird.f32 %v3129
      %vm3167 = vweird.f32 %v3160
      %vm3168 = vmor %vm3166, %vm3167
      %v3169 = vsel %vm3168, %v3160, %v3165
      %v3170 = vld [vmem:[%s7] sm:$0xff]
      %v3171 = vld [vmem:[%s7 + $0x8] sm:$0xff]
      %v3172 = vld [vmem:[%s7 + $0x10] sm:$0xff]
      %v3173 = vld [vmem:[%s7 + $0x18] sm:$0xff]
      %v3174 = vmul.f32 %v3139, %v3170
      %v3175 = vmul.f32 %v3149, %v3171
      %v3176 = vmul.f32 %v3159, %v3172
      %v3177 = vmul.f32 %v3169, %v3173
      %v3178 = vld [vmem:[%s8] sm:$0xff]
      %v3179 = vld [vmem:[%s8 + $0x8] sm:$0xff]
      %v3180 = vld [vmem:[%s8 + $0x10] sm:$0xff]
      %v3181 = vld [vmem:[%s8 + $0x18] sm:$0xff]
      %v3182 = vmul.f32 %v3077, %v3174
      %v3183 = vmul.f32 %v3078, %v3175
      %v3184 = vmul.f32 %v3079, %v3176
      %v3185 = vmul.f32 %v3080, %v3177
      %v3186 = vsub.f32 %v3178, %v3182
      %v3187 = vsub.f32 %v3179, %v3183
      %v3188 = vsub.f32 %v3180, %v3184
      %v3189 = vsub.f32 %v3181, %v3185
      %3191 = vset.pattern.permute.xlu0 0
      %3192 = vperm.xlu0 %3191, %v3174
      %v3193 = vpop.permute.xlu0 %3192
      %3196 = vset.pattern.permute.xlu0 0
      %3197 = vperm.xlu0 %3196, %v3175
      %v3198 = vpop.permute.xlu0 %3197
      %3201 = vset.pattern.permute.xlu0 0
      %3202 = vperm.xlu0 %3201, %v3176
      %v3203 = vpop.permute.xlu0 %3202
      %3206 = vset.pattern.permute.xlu0 0
      %3207 = vperm.xlu0 %3206, %v3177
      %v3208 = vpop.permute.xlu0 %3207
      %v3210 = vmul.f32 %v2807, %v3193
      %v3211 = vmul.f32 %v2894, %v3193
      %v3212 = vmul.f32 %v2981, %v3193
      %v3213 = vmul.f32 %v2810, %v3198
      %v3214 = vmul.f32 %v2897, %v3198
      %v3215 = vmul.f32 %v2984, %v3198
      %v3216 = vmul.f32 %v2813, %v3203
      %v3217 = vmul.f32 %v2900, %v3203
      %v3218 = vmul.f32 %v2987, %v3203
      %v3219 = vmul.f32 %v2816, %v3208
      %v3220 = vmul.f32 %v2903, %v3208
      %v3221 = vmul.f32 %v2990, %v3208
      %3223 = vset.pattern.permute.xlu0 0
      %3224 = vperm.xlu0 %3223, %v3186
      %v3225 = vpop.permute.xlu0 %3224
      %3228 = vset.pattern.permute.xlu0 0
      %3229 = vperm.xlu0 %3228, %v3187
      %v3230 = vpop.permute.xlu0 %3229
      %3233 = vset.pattern.permute.xlu0 0
      %3234 = vperm.xlu0 %3233, %v3188
      %v3235 = vpop.permute.xlu0 %3234
      %3238 = vset.pattern.permute.xlu0 0
      %3239 = vperm.xlu0 %3238, %v3189
      %v3240 = vpop.permute.xlu0 %3239
      %v3242 = vadd.f32 %v3210, %v3225
      %v3243 = vadd.f32 %v3211, %v3225
      %v3244 = vadd.f32 %v3212, %v3225
      %v3245 = vadd.f32 %v3213, %v3230
      %v3246 = vadd.f32 %v3214, %v3230
      %v3247 = vadd.f32 %v3215, %v3230
      %v3248 = vadd.f32 %v3216, %v3235
      %v3249 = vadd.f32 %v3217, %v3235
      %v3250 = vadd.f32 %v3218, %v3235
      %v3251 = vadd.f32 %v3219, %v3240
      %v3252 = vadd.f32 %v3220, %v3240
      %v3253 = vadd.f32 %v3221, %v3240
      %v3254 = vadd.f32 %v3242, %v393
      %v3255 = vadd.f32 %v3243, %v394
      %v3256 = vadd.f32 %v3244, %v395
      %v3257 = vadd.f32 %v3245, %v398
      %v3258 = vadd.f32 %v3246, %v399
      %v3259 = vadd.f32 %v3247, %v400
      %v3260 = vadd.f32 %v3248, %v403
      %v3261 = vadd.f32 %v3249, %v404
      %v3262 = vadd.f32 %v3250, %v405
      %v3263 = vadd.f32 %v3251, %v408
      %v3264 = vadd.f32 %v3252, %v409
      %v3265 = vadd.f32 %v3253, %v410
      %v3266 = vxor.u32 %v3254, 2147483648
      %v3267 = vxor.u32 %v3255, 2147483648
      %v3268 = vxor.u32 %v3256, 2147483648
      %v3269 = vxor.u32 %v3257, 2147483648
      %v3270 = vxor.u32 %v3258, 2147483648
      %v3271 = vxor.u32 %v3259, 2147483648
      %v3272 = vxor.u32 %v3260, 2147483648
      %v3273 = vxor.u32 %v3261, 2147483648
      %v3274 = vxor.u32 %v3262, 2147483648
      %v3275 = vxor.u32 %v3263, 2147483648
      %v3276 = vxor.u32 %v3264, 2147483648
      %v3277 = vxor.u32 %v3265, 2147483648
      %v3278 = vmul.f32 %v3266, 1.442695
      %v3279 = vpow.pop %v3278
      %v3280 = vmul.f32 %v3267, 1.442695
      %v3281 = vpow.pop %v3280
      %v3282 = vmul.f32 %v3268, 1.442695
      %v3283 = vpow.pop %v3282
      %v3284 = vmul.f32 %v3269, 1.442695
      %v3285 = vpow.pop %v3284
      %v3286 = vmul.f32 %v3270, 1.442695
      %v3287 = vpow.pop %v3286
      %v3288 = vmul.f32 %v3271, 1.442695
      %v3289 = vpow.pop %v3288
      %v3290 = vmul.f32 %v3272, 1.442695
      %v3291 = vpow.pop %v3290
      %v3292 = vmul.f32 %v3273, 1.442695
      %v3293 = vpow.pop %v3292
      %v3294 = vmul.f32 %v3274, 1.442695
      %v3295 = vpow.pop %v3294
      %v3296 = vmul.f32 %v3275, 1.442695
      %v3297 = vpow.pop %v3296
      %v3298 = vmul.f32 %v3276, 1.442695
      %v3299 = vpow.pop %v3298
      %v3300 = vmul.f32 %v3277, 1.442695
      %v3301 = vpow.pop %v3300
      %v3302 = vadd.f32 %v3279, 1.0
      %v3303 = vadd.f32 %v3281, 1.0
      %v3304 = vadd.f32 %v3283, 1.0
      %v3305 = vadd.f32 %v3285, 1.0
      %v3306 = vadd.f32 %v3287, 1.0
      %v3307 = vadd.f32 %v3289, 1.0
      %v3308 = vadd.f32 %v3291, 1.0
      %v3309 = vadd.f32 %v3293, 1.0
      %v3310 = vadd.f32 %v3295, 1.0
      %v3311 = vadd.f32 %v3297, 1.0
      %v3312 = vadd.f32 %v3299, 1.0
      %v3313 = vadd.f32 %v3301, 1.0
      %v3314 = vrcp.pop %v3302
      %v3315 = vmul.f32 %v3302, %v3314
      %v3316 = vsub.f32 1.0, %v3315
      %v3317 = vmul.f32 %v3314, %v3316
      %v3318 = vadd.f32 %v3314, %v3317
      %vm3319 = vweird.f32 %v3302
      %vm3320 = vweird.f32 %v3314
      %vm3321 = vmor %vm3319, %vm3320
      %v3322 = vsel %vm3321, %v3314, %v3318
      %v3323 = vand.u32 2147483647, %v3302
      %vm3324 = vcmp.eq.f32.partialorder %v3323, 8.507059e+37
      %v3325 = vand.u32 %v3302, 2147483648
      %v3326 = vor.u32 1.1754944e-38, %v3325
      %v3327 = vsel %vm3324, %v3326, %v3322
      %v3328 = vmul.f32 1.0, %v3327
      %v3329 = vrcp.pop %v3303
      %v3330 = vmul.f32 %v3303, %v3329
      %v3331 = vsub.f32 1.0, %v3330
      %v3332 = vmul.f32 %v3329, %v3331
      %v3333 = vadd.f32 %v3329, %v3332
      %vm3334 = vweird.f32 %v3303
      %vm3335 = vweird.f32 %v3329
      %vm3336 = vmor %vm3334, %vm3335
      %v3337 = vsel %vm3336, %v3329, %v3333
      %v3338 = vand.u32 2147483647, %v3303
      %vm3339 = vcmp.eq.f32.partialorder %v3338, 8.507059e+37
      %v3340 = vand.u32 %v3303, 2147483648
      %v3341 = vor.u32 1.1754944e-38, %v3340
      %v3342 = vsel %vm3339, %v3341, %v3337
      %v3343 = vmul.f32 1.0, %v3342
      %v3344 = vrcp.pop %v3304
      %v3345 = vmul.f32 %v3304, %v3344
      %v3346 = vsub.f32 1.0, %v3345
      %v3347 = vmul.f32 %v3344, %v3346
      %v3348 = vadd.f32 %v3344, %v3347
      %vm3349 = vweird.f32 %v3304
      %vm3350 = vweird.f32 %v3344
      %vm3351 = vmor %vm3349, %vm3350
      %v3352 = vsel %vm3351, %v3344, %v3348
      %v3353 = vand.u32 2147483647, %v3304
      %vm3354 = vcmp.eq.f32.partialorder %v3353, 8.507059e+37
      %v3355 = vand.u32 %v3304, 2147483648
      %v3356 = vor.u32 1.1754944e-38, %v3355
      %v3357 = vsel %vm3354, %v3356, %v3352
      %v3358 = vmul.f32 1.0, %v3357
      %v3359 = vrcp.pop %v3305
      %v3360 = vmul.f32 %v3305, %v3359
      %v3361 = vsub.f32 1.0, %v3360
      %v3362 = vmul.f32 %v3359, %v3361
      %v3363 = vadd.f32 %v3359, %v3362
      %vm3364 = vweird.f32 %v3305
      %vm3365 = vweird.f32 %v3359
      %vm3366 = vmor %vm3364, %vm3365
      %v3367 = vsel %vm3366, %v3359, %v3363
      %v3368 = vand.u32 2147483647, %v3305
      %vm3369 = vcmp.eq.f32.partialorder %v3368, 8.507059e+37
      %v3370 = vand.u32 %v3305, 2147483648
      %v3371 = vor.u32 1.1754944e-38, %v3370
      %v3372 = vsel %vm3369, %v3371, %v3367
      %v3373 = vmul.f32 1.0, %v3372
      %v3374 = vrcp.pop %v3306
      %v3375 = vmul.f32 %v3306, %v3374
      %v3376 = vsub.f32 1.0, %v3375
      %v3377 = vmul.f32 %v3374, %v3376
      %v3378 = vadd.f32 %v3374, %v3377
      %vm3379 = vweird.f32 %v3306
      %vm3380 = vweird.f32 %v3374
      %vm3381 = vmor %vm3379, %vm3380
      %v3382 = vsel %vm3381, %v3374, %v3378
      %v3383 = vand.u32 2147483647, %v3306
      %vm3384 = vcmp.eq.f32.partialorder %v3383, 8.507059e+37
      %v3385 = vand.u32 %v3306, 2147483648
      %v3386 = vor.u32 1.1754944e-38, %v3385
      %v3387 = vsel %vm3384, %v3386, %v3382
      %v3388 = vmul.f32 1.0, %v3387
      %v3389 = vrcp.pop %v3307
      %v3390 = vmul.f32 %v3307, %v3389
      %v3391 = vsub.f32 1.0, %v3390
      %v3392 = vmul.f32 %v3389, %v3391
      %v3393 = vadd.f32 %v3389, %v3392
      %vm3394 = vweird.f32 %v3307
      %vm3395 = vweird.f32 %v3389
      %vm3396 = vmor %vm3394, %vm3395
      %v3397 = vsel %vm3396, %v3389, %v3393
      %v3398 = vand.u32 2147483647, %v3307
      %vm3399 = vcmp.eq.f32.partialorder %v3398, 8.507059e+37
      %v3400 = vand.u32 %v3307, 2147483648
      %v3401 = vor.u32 1.1754944e-38, %v3400
      %v3402 = vsel %vm3399, %v3401, %v3397
      %v3403 = vmul.f32 1.0, %v3402
      %v3404 = vrcp.pop %v3308
      %v3405 = vmul.f32 %v3308, %v3404
      %v3406 = vsub.f32 1.0, %v3405
      %v3407 = vmul.f32 %v3404, %v3406
      %v3408 = vadd.f32 %v3404, %v3407
      %vm3409 = vweird.f32 %v3308
      %vm3410 = vweird.f32 %v3404
      %vm3411 = vmor %vm3409, %vm3410
      %v3412 = vsel %vm3411, %v3404, %v3408
      %v3413 = vand.u32 2147483647, %v3308
      %vm3414 = vcmp.eq.f32.partialorder %v3413, 8.507059e+37
      %v3415 = vand.u32 %v3308, 2147483648
      %v3416 = vor.u32 1.1754944e-38, %v3415
      %v3417 = vsel %vm3414, %v3416, %v3412
      %v3418 = vmul.f32 1.0, %v3417
      %v3419 = vrcp.pop %v3309
      %v3420 = vmul.f32 %v3309, %v3419
      %v3421 = vsub.f32 1.0, %v3420
      %v3422 = vmul.f32 %v3419, %v3421
      %v3423 = vadd.f32 %v3419, %v3422
      %vm3424 = vweird.f32 %v3309
      %vm3425 = vweird.f32 %v3419
      %vm3426 = vmor %vm3424, %vm3425
      %v3427 = vsel %vm3426, %v3419, %v3423
      %v3428 = vand.u32 2147483647, %v3309
      %vm3429 = vcmp.eq.f32.partialorder %v3428, 8.507059e+37
      %v3430 = vand.u32 %v3309, 2147483648
      %v3431 = vor.u32 1.1754944e-38, %v3430
      %v3432 = vsel %vm3429, %v3431, %v3427
      %v3433 = vmul.f32 1.0, %v3432
      %v3434 = vrcp.pop %v3310
      %v3435 = vmul.f32 %v3310, %v3434
      %v3436 = vsub.f32 1.0, %v3435
      %v3437 = vmul.f32 %v3434, %v3436
      %v3438 = vadd.f32 %v3434, %v3437
      %vm3439 = vweird.f32 %v3310
      %vm3440 = vweird.f32 %v3434
      %vm3441 = vmor %vm3439, %vm3440
      %v3442 = vsel %vm3441, %v3434, %v3438
      %v3443 = vand.u32 2147483647, %v3310
      %vm3444 = vcmp.eq.f32.partialorder %v3443, 8.507059e+37
      %v3445 = vand.u32 %v3310, 2147483648
      %v3446 = vor.u32 1.1754944e-38, %v3445
      %v3447 = vsel %vm3444, %v3446, %v3442
      %v3448 = vmul.f32 1.0, %v3447
      %v3449 = vrcp.pop %v3311
      %v3450 = vmul.f32 %v3311, %v3449
      %v3451 = vsub.f32 1.0, %v3450
      %v3452 = vmul.f32 %v3449, %v3451
      %v3453 = vadd.f32 %v3449, %v3452
      %vm3454 = vweird.f32 %v3311
      %vm3455 = vweird.f32 %v3449
      %vm3456 = vmor %vm3454, %vm3455
      %v3457 = vsel %vm3456, %v3449, %v3453
      %v3458 = vand.u32 2147483647, %v3311
      %vm3459 = vcmp.eq.f32.partialorder %v3458, 8.507059e+37
      %v3460 = vand.u32 %v3311, 2147483648
      %v3461 = vor.u32 1.1754944e-38, %v3460
      %v3462 = vsel %vm3459, %v3461, %v3457
      %v3463 = vmul.f32 1.0, %v3462
      %v3464 = vrcp.pop %v3312
      %v3465 = vmul.f32 %v3312, %v3464
      %v3466 = vsub.f32 1.0, %v3465
      %v3467 = vmul.f32 %v3464, %v3466
      %v3468 = vadd.f32 %v3464, %v3467
      %vm3469 = vweird.f32 %v3312
      %vm3470 = vweird.f32 %v3464
      %vm3471 = vmor %vm3469, %vm3470
      %v3472 = vsel %vm3471, %v3464, %v3468
      %v3473 = vand.u32 2147483647, %v3312
      %vm3474 = vcmp.eq.f32.partialorder %v3473, 8.507059e+37
      %v3475 = vand.u32 %v3312, 2147483648
      %v3476 = vor.u32 1.1754944e-38, %v3475
      %v3477 = vsel %vm3474, %v3476, %v3472
      %v3478 = vmul.f32 1.0, %v3477
      %v3479 = vrcp.pop %v3313
      %v3480 = vmul.f32 %v3313, %v3479
      %v3481 = vsub.f32 1.0, %v3480
      %v3482 = vmul.f32 %v3479, %v3481
      %v3483 = vadd.f32 %v3479, %v3482
      %vm3484 = vweird.f32 %v3313
      %vm3485 = vweird.f32 %v3479
      %vm3486 = vmor %vm3484, %vm3485
      %v3487 = vsel %vm3486, %v3479, %v3483
      %v3488 = vand.u32 2147483647, %v3313
      %vm3489 = vcmp.eq.f32.partialorder %v3488, 8.507059e+37
      %v3490 = vand.u32 %v3313, 2147483648
      %v3491 = vor.u32 1.1754944e-38, %v3490
      %v3492 = vsel %vm3489, %v3491, %v3487
      %v3493 = vmul.f32 1.0, %v3492
      %v3494 = vmul.f32 %v3254, %v3328
      %v3495 = vmul.f32 %v3255, %v3343
      %v3496 = vmul.f32 %v3256, %v3358
      %v3497 = vmul.f32 %v3257, %v3373
      %v3498 = vmul.f32 %v3258, %v3388
      %v3499 = vmul.f32 %v3259, %v3403
      %v3500 = vmul.f32 %v3260, %v3418
      %v3501 = vmul.f32 %v3261, %v3433
      %v3502 = vmul.f32 %v3262, %v3448
      %v3503 = vmul.f32 %v3263, %v3463
      %v3504 = vmul.f32 %v3264, %v3478
      %v3505 = vmul.f32 %v3265, %v3493
      %v3506 = vmul.f32 %v3494, %v1415
      %v3507 = vmul.f32 %v3495, %v1416
      %v3508 = vmul.f32 %v3496, %v1417
      %v3509 = vmul.f32 %v3497, %v1415
      %v3510 = vmul.f32 %v3498, %v1416
      %v3511 = vmul.f32 %v3499, %v1417
      %v3512 = vmul.f32 %v3500, %v1415
      %v3513 = vmul.f32 %v3501, %v1416
      %v3514 = vmul.f32 %v3502, %v1417
      %v3515 = vmul.f32 %v3503, %v1415
      %v3516 = vmul.f32 %v3504, %v1416
      %v3517 = vmul.f32 %v3505, %v1417
      %3518 = vst [vmem:[%s386] sm:$0xff] 0.0
      %3519 = vst [vmem:[%s386 + $0x8] sm:$0xff] 0.0
      %3520 = vst [vmem:[%s386 + $0x10] sm:$0xff] 0.0
      %3521 = vst [vmem:[%s386 + $0x18] sm:$0xff] 0.0
      %3522 = vst [vmem:[%s386 + $0x20] sm:$0xff] 0.0
      %3523 = vst [vmem:[%s386 + $0x28] sm:$0xff] 0.0
      %3524 = vst [vmem:[%s386 + $0x30] sm:$0xff] 0.0
      %3525 = vst [vmem:[%s386 + $0x38] sm:$0xff] 0.0
      %3526 = vst [vmem:[%s386 + $0x40] sm:$0xff] 0.0
      %3527 = vst [vmem:[%s386 + $0x48] sm:$0xff] 0.0
      %3528 = vst [vmem:[%s386 + $0x50] sm:$0xff] 0.0
      %3529 = vst [vmem:[%s386 + $0x58] sm:$0xff] 0.0
      %3530 = vst [vmem:[%s386 + $0x60] sm:$0xff] 0.0
      %3531 = vst [vmem:[%s386 + $0x68] sm:$0xff] 0.0
      %3532 = vst [vmem:[%s386 + $0x70] sm:$0xff] 0.0
      %3533 = vst [vmem:[%s386 + $0x78] sm:$0xff] 0.0
      %3534 = vst [vmem:[%s386 + $0x80] sm:$0xff] 0.0
      %3535 = vst [vmem:[%s386 + $0x88] sm:$0xff] 0.0
      %3536 = vst [vmem:[%s386 + $0x90] sm:$0xff] 0.0
      %3537 = vst [vmem:[%s386 + $0x98] sm:$0xff] 0.0
      %3538 = vst [vmem:[%s386 + $0x8] sm:$0xff] %v3506
      %3539 = vst [vmem:[%s386 + $0x10] sm:$0xff] %v3507
      %3540 = vst [vmem:[%s386 + $0x18] sm:$0xff] %v3508
      %3541 = vst [vmem:[%s386 + $0x30] sm:$0xff] %v3509
      %3542 = vst [vmem:[%s386 + $0x38] sm:$0xff] %v3510
      %3543 = vst [vmem:[%s386 + $0x40] sm:$0xff] %v3511
      %3544 = vst [vmem:[%s386 + $0x58] sm:$0xff] %v3512
      %3545 = vst [vmem:[%s386 + $0x60] sm:$0xff] %v3513
      %3546 = vst [vmem:[%s386 + $0x68] sm:$0xff] %v3514
      %3547 = vst [vmem:[%s386 + $0x80] sm:$0xff] %v3515
      %3548 = vst [vmem:[%s386 + $0x88] sm:$0xff] %v3516
      %3549 = vst [vmem:[%s386 + $0x90] sm:$0xff] %v3517
      %p3550 = scmp.lt.s32.totalorder %s22, 1
      %s3551 = scalar_select %p3550, %s22, 1
      %s3552 = smul.addr %s3551, 20
      %s3553 = smul.addr %s3552, 8
      %s3554 = scalar_lea.vmem %s11, %s3553
      // Predicated region
      $region65: #{forward.3} parent=63 // pred_check
        %p3555 = pneg %p276
      $region66: #{forward.3} parent=63 // pred_check_branch
        %3557 = sbr.rel (%p3555) target = $region68
      $region67: #{forward.3} parent=63 // pred_region
        _
      $region68: #{forward.3} parent=63 // pred_fallthru
        _
    $region64: #{forward.3} parent=5 // pred_fallthru
      _
    %p3558 = scmp.le.s32.totalorder 2, %s17
    // Predicated region
    $region69: #{forward.3} parent=5 // pred_check
      %p3559 = pneg %p3558
    $region70: #{forward.3} parent=5 // pred_check_branch
      %3561 = sbr.rel (%p3559) target = $region72
    $region71: #{forward.3} parent=5 // pred_region
      %s3562 = ssub.s32 %s17, 2
      // Predicated region
      $region73: #{forward.3} parent=71 // pred_check
        %p3563 = pneg %p282
      $region74: #{forward.3} parent=71 // pred_check_branch
        %3565 = sbr.rel (%p3563) target = $region76
      $region75: #{forward.3} parent=71 // pred_region
        %p3566 = scmp.lt.s32.totalorder %s23, 1
        %s3567 = scalar_select %p3566, %s23, 1
        %s3568 = smul.addr %s3567, 20
        %s3569 = smul.addr %s3568, 8
        %s3570 = scalar_lea.vmem %s11, %s3569
      $region76: #{forward.3} parent=71 // pred_fallthru
        _
    $region72: #{forward.3} parent=5 // pred_fallthru
      _
  $region6: #{forward.3} parent=0 // loop_footer
    %s21 = sadd.s32 1, %s17
  $region7: #{forward.3} parent=0 // loop_footer_branch
    %16 = sbr.rel target = $region3
  $region8: #{forward.3} parent=0 // loop_exit
    _

</llo_original>
